<compile_context>
chip_gen: v6e
topology: v6e:2x2x1
jax: 0.10.0
libtpu: 0.0.40
codegen_flags: <defaults>
</compile_context>

<pallas_src>
import jax
import jax.numpy as jnp
from jax import lax
from jax.experimental import pallas as pl
from jax.experimental.pallas import tpu as pltpu

# ---- problem sizes (small, consistent with the module) ----
B = 2            # batch
C = 4            # channel (number of experts)
F = 16           # input_size per channel
A = 8            # output_size / action_size
H1 = 2048        # hidden layer 1 (Embedding hidden_layers=(2048, 2048))
H2 = 2048        # hidden layer 2
NS = 2           # H2 splits = grid steps along the "arbitrary" reduction axis
H2S = H2 // NS   # 1024


def dqn_experts_kernel(x_ref, w1_ref, b1_ref, w2_ref, b2_ref, w3t_ref,
                       b3_ref, g_ref, wg_ref, bg_ref, out_ref, acc_ref):
    """Fused shared-expert MLP + gating softmax + channel mixing.

    Grid axis 0 ("arbitrary") walks the H2 splits of W2/b2/W3; layer-3 partial
    Q-values accumulate in `acc_ref`; the epilogue runs on the last split.
    """
    s = pl.program_id(0)

    @pl.when(s == 0)
    def _():
        acc_ref[...] = jnp.zeros_like(acc_ref)

    # layer 1: (B*C, F) @ (F, H1) + b1, ReLU  (tiny; recomputed per split, hidden under DMA)
    h1 = jnp.maximum(
        jnp.dot(x_ref[...], w1_ref[...], preferred_element_type=jnp.float32)
        + b1_ref[...], 0.0)

    # layer 2 (this H2 split): (B*C, H1) @ (H1, H2S) + b2, ReLU
    h2 = jnp.maximum(
        jnp.dot(h1.astype(jnp.bfloat16), w2_ref[...],
                preferred_element_type=jnp.float32)
        + b2_ref[...], 0.0)

    # layer 3 partial: contract (B*C, H2S) with W3^T (A, H2S) over the last dim -> (B*C, A)
    acc_ref[...] += lax.dot_general(
        h2.astype(jnp.bfloat16), w3t_ref[...],
        dimension_numbers=(((1,), (1,)), ((), ())),
        preferred_element_type=jnp.float32)

    # epilogue on the final split: +b3, gating Linear + softmax, channel mixing
    @pl.when(s == pl.num_programs(0) - 1)
    def _():
        vals = acc_ref[...] + b3_ref[...]                                   # (B*C, A)

        logits = jnp.dot(g_ref[...], wg_ref[...],
                         preferred_element_type=jnp.float32) + bg_ref[...]  # (B, C)
        m = jnp.max(logits, axis=-1, keepdims=True)
        e = jnp.exp(logits - m)
        gate = e / jnp.sum(e, axis=-1, keepdims=True)                       # (B, C)

        vals3 = vals.reshape(B, C, A)
        out = jnp.zeros((B, A), jnp.float32)
        for c in range(C):                                                  # C small & static
            out = out + vals3[:, c, :] * gate[:, c:c + 1]
        out_ref[...] = out


_COST = pl.CostEstimate(
    flops=2 * (B * C) * (F * H1 + H1 * H2 + H2 * A) + 2 * B * (C * F) * C,
    transcendentals=B * C,
    bytes_accessed=(2 * (F * H1 + H1 * H2 + A * H2)          # bf16 weights (W2 dominates)
                    + 4 * (H1 + H2 + A + C)                   # f32 biases
                    + 2 * (B * C * F) + 4 * (B * C * F)       # expert x (bf16) + gating data
                    + 4 * (C * F) * C + 4 * B * A),           # Wg + output
)


@jax.jit
def dqn_experts_forward(data, params):
    """data: (B, C*F) float32 -> (B, A) float32"""
    w1, b1, w2, b2, w3t, b3, wg, bg = params
    x = data.reshape(B * C, F).astype(jnp.bfloat16)   # expert_data (shared expert input)
    g = data                                          # gating_data (batch, channel*input_size)

    return pl.pallas_call(
        dqn_experts_kernel,
        out_shape=jax.ShapeDtypeStruct((B, A), jnp.float32),
        grid_spec=pltpu.PrefetchScalarGridSpec(
            num_scalar_prefetch=0,
            grid=(NS,),
            in_specs=[
                pl.BlockSpec((B * C, F), lambda s: (0, 0)),   # x (bf16)
                pl.BlockSpec((F, H1),    lambda s: (0, 0)),   # W1 (bf16)
                pl.BlockSpec((1, H1),    lambda s: (0, 0)),   # b1 (f32)
                pl.BlockSpec((H1, H2S),  lambda s: (0, s)),   # W2 half (bf16, N-split)
                pl.BlockSpec((1, H2S),   lambda s: (0, s)),   # b2 half (f32)
                pl.BlockSpec((A, H2S),   lambda s: (0, s)),   # W3^T half (bf16, lane-dense)
                pl.BlockSpec((1, A),     lambda s: (0, 0)),   # b3 (f32)
                pl.BlockSpec((B, C * F), lambda s: (0, 0)),   # gating data (f32)
                pl.BlockSpec((C * F, C), lambda s: (0, 0)),   # Wg (f32)
                pl.BlockSpec((1, C),     lambda s: (0, 0)),   # bg (f32)
            ],
            out_specs=pl.BlockSpec((B, A), lambda s: (0, 0)),
            scratch_shapes=[pltpu.VMEM((B * C, A), jnp.float32)],
        ),
        compiler_params=pltpu.CompilerParams(
            dimension_semantics=("arbitrary",),
            vmem_limit_bytes=16 * 1024 * 1024),
        cost_estimate=_COST,
    )(x, w1, b1, w2, b2, w3t, b3, g, wg, bg)


def reference_forward(data, params):
    """Pure-JAX reference mirroring the PyTorch forward (same bf16 weight/activation casts)."""
    w1, b1, w2, b2, w3t, b3, wg, bg = params
    x = data.reshape(B * C, F).astype(jnp.bfloat16)
    h1 = jnp.maximum(jnp.dot(x, w1, preferred_element_type=jnp.float32) + b1, 0.0)
    h2 = jnp.maximum(jnp.dot(h1.astype(jnp.bfloat16), w2,
                             preferred_element_type=jnp.float32) + b2, 0.0)
    vals = (jnp.dot(h2.astype(jnp.bfloat16), w3t.T,
                    preferred_element_type=jnp.float32) + b3).reshape(B, C, A)
    gate = jax.nn.softmax(jnp.dot(data, wg) + bg, axis=-1)[:, :, None]      # (B, C, 1)
    return (vals * gate).sum(axis=1)                                        # (B, A)


def init_params(key):
    ks = jax.random.split(key, 8)

    def lin(kw, kb, fan_in, fan_out, w_dtype=jnp.float32):
        s = 1.0 / jnp.sqrt(fan_in)
        w = jax.random.uniform(kw, (fan_in, fan_out), jnp.float32, -s, s).astype(w_dtype)
        b = jax.random.uniform(kb, (1, fan_out), jnp.float32, -s, s)
        return w, b

    # expert weights in bf16 (halves the dominant HBM weight read); biases stay f32
    w1, b1 = lin(ks[0], ks[1], F, H1, jnp.bfloat16)
    w2, b2 = lin(ks[2], ks[3], H1, H2, jnp.bfloat16)
    w3, b3 = lin(ks[4], ks[5], H2, A, jnp.bfloat16)
    w3t = w3.T                                      # stored (A, H2): lane-dense HBM layout
    # gating network is tiny -> keep f32
    wg, bg = lin(ks[6], ks[7], C * F, C)
    return (w1, b1, w2, b2, w3t, b3, wg, bg)


if __name__ == "__main__":
    key = jax.random.PRNGKey(0)
    k_data, k_params = jax.random.split(key)
    data = jax.random.normal(k_data, (B, C * F), jnp.float32)   # (batch, channel*input_size)
    params = init_params(k_params)

    out = dqn_experts_forward(data, params)
    out = jax.block_until_ready(out)

    ref = reference_forward(data, params)
    assert out.shape == (B, A)
    assert jnp.allclose(out, ref, rtol=1e-2, atol=1e-2), (out, ref)

    print("KERNEL_OK")
</pallas_src>

<mosaic_0001>
module attributes {stable_mosaic.version = 11 : i64} {
  func.func @dqn_experts_kernel(%arg0: i32, %arg1: memref<8x16xbf16, #tpu.memory_space<vmem>>, %arg2: memref<16x2048xbf16, #tpu.memory_space<vmem>>, %arg3: memref<1x2048xf32, #tpu.memory_space<vmem>>, %arg4: memref<2048x1024xbf16, #tpu.memory_space<vmem>>, %arg5: memref<1x1024xf32, #tpu.memory_space<vmem>>, %arg6: memref<8x1024xbf16, #tpu.memory_space<vmem>>, %arg7: memref<1x8xf32, #tpu.memory_space<vmem>>, %arg8: memref<2x64xf32, #tpu.memory_space<vmem>>, %arg9: memref<64x4xf32, #tpu.memory_space<vmem>>, %arg10: memref<1x4xf32, #tpu.memory_space<vmem>>, %arg11: memref<2x8xf32, #tpu.memory_space<vmem>>, %arg12: memref<8x8xf32, #tpu.memory_space<vmem>>) attributes {dimension_semantics = [#tpu.dimension_semantics<arbitrary>], iteration_bounds = array<i64: 2>, scalar_prefetch = 0 : i64, scratch_operands = 1 : i64, tpu.core_type = #tpu.core_type<tc>, window_params = [{pipeline_mode = #tpu.pipeline_mode<synchronous>, transform_indices = @transform_0, window_bounds = array<i64: 8, 16>}, {pipeline_mode = #tpu.pipeline_mode<synchronous>, transform_indices = @transform_1, window_bounds = array<i64: 16, 2048>}, {pipeline_mode = #tpu.pipeline_mode<synchronous>, transform_indices = @transform_2, window_bounds = array<i64: 1, 2048>}, {transform_indices = @transform_3, window_bounds = array<i64: 2048, 1024>}, {transform_indices = @transform_4, window_bounds = array<i64: 1, 1024>}, {transform_indices = @transform_5, window_bounds = array<i64: 8, 1024>}, {pipeline_mode = #tpu.pipeline_mode<synchronous>, transform_indices = @transform_6, window_bounds = array<i64: 1, 8>}, {pipeline_mode = #tpu.pipeline_mode<synchronous>, transform_indices = @transform_7, window_bounds = array<i64: 2, 64>}, {pipeline_mode = #tpu.pipeline_mode<synchronous>, transform_indices = @transform_8, window_bounds = array<i64: 64, 4>}, {pipeline_mode = #tpu.pipeline_mode<synchronous>, transform_indices = @transform_9, window_bounds = array<i64: 1, 4>}, {pipeline_mode = #tpu.pipeline_mode<synchronous>, transform_indices = @transform_10, window_bounds = array<i64: 2, 8>}]} {
    %c0_i32 = arith.constant 0 : i32
    %0 = arith.cmpi eq, %arg0, %c0_i32 : i32
    %1 = arith.extui %0 : i1 to i32
    %c0_i32_0 = arith.constant 0 : i32
    %2 = arith.cmpi ne, %1, %c0_i32_0 : i32
    scf.if %2 {
      %cst_21 = arith.constant 0.000000e+00 : f32
      %28 = vector.broadcast %cst_21 : f32 to vector<8x8xf32>
      %c0_22 = arith.constant 0 : index
      %c0_23 = arith.constant 0 : index
      %29 = vector.load %arg12[%c0_22, %c0_23] : memref<8x8xf32, #tpu.memory_space<vmem>>, vector<8x8xf32>
      tpu.vector_store %arg12[%c0_22, %c0_23], %28 {strides = array<i32>} : memref<8x8xf32, #tpu.memory_space<vmem>>, vector<8x8xf32>,
    } else {
    }
    %c0 = arith.constant 0 : index
    %c0_1 = arith.constant 0 : index
    %3 = vector.load %arg1[%c0, %c0_1] : memref<8x16xbf16, #tpu.memory_space<vmem>>, vector<8x16xbf16>
    %c0_2 = arith.constant 0 : index
    %c0_3 = arith.constant 0 : index
    %4 = vector.load %arg2[%c0_2, %c0_3] : memref<16x2048xbf16, #tpu.memory_space<vmem>>, vector<16x2048xbf16>
    %cst = arith.constant dense<0.000000e+00> : vector<8x2048xf32>
    %5 = tpu.matmul %3, %4, %cst {dimension_numbers = #tpu.dot_dimension_numbers<[1], [0], [0], [1], [0, 0, 1, 1], [], []>} : vector<8x16xbf16>, vector<16x2048xbf16>, vector<8x2048xf32> -> vector<8x2048xf32>
    %c0_4 = arith.constant 0 : index
    %c0_5 = arith.constant 0 : index
    %6 = vector.load %arg3[%c0_4, %c0_5] : memref<1x2048xf32, #tpu.memory_space<vmem>>, vector<1x2048xf32>
    %7 = vector.broadcast %6 : vector<1x2048xf32> to vector<8x2048xf32>
    %8 = arith.addf %5, %7 : vector<8x2048xf32>
    %cst_6 = arith.constant 0.000000e+00 : f32
    %9 = vector.broadcast %cst_6 : f32 to vector<8x2048xf32>
    %10 = arith.maximumf %8, %9 : vector<8x2048xf32>
    %11 = arith.truncf %10 : vector<8x2048xf32> to vector<8x2048xbf16>
    %c0_7 = arith.constant 0 : index
    %c0_8 = arith.constant 0 : index
    %12 = vector.load %arg4[%c0_7, %c0_8] : memref<2048x1024xbf16, #tpu.memory_space<vmem>>, vector<2048x1024xbf16>
    %cst_9 = arith.constant dense<0.000000e+00> : vector<8x1024xf32>
    %13 = tpu.matmul %11, %12, %cst_9 {dimension_numbers = #tpu.dot_dimension_numbers<[1], [0], [0], [1], [0, 0, 1, 1], [], []>} : vector<8x2048xbf16>, vector<2048x1024xbf16>, vector<8x1024xf32> -> vector<8x1024xf32>
    %c0_10 = arith.constant 0 : index
    %c0_11 = arith.constant 0 : index
    %14 = vector.load %arg5[%c0_10, %c0_11] : memref<1x1024xf32, #tpu.memory_space<vmem>>, vector<1x1024xf32>
    %15 = vector.broadcast %14 : vector<1x1024xf32> to vector<8x1024xf32>
    %16 = arith.addf %13, %15 : vector<8x1024xf32>
    %cst_12 = arith.constant 0.000000e+00 : f32
    %17 = vector.broadcast %cst_12 : f32 to vector<8x1024xf32>
    %18 = arith.maximumf %16, %17 : vector<8x1024xf32>
    %c0_13 = arith.constant 0 : index
    %c0_14 = arith.constant 0 : index
    %19 = vector.load %arg12[%c0_13, %c0_14] : memref<8x8xf32, #tpu.memory_space<vmem>>, vector<8x8xf32>
    %20 = arith.truncf %18 : vector<8x1024xf32> to vector<8x1024xbf16>
    %c0_15 = arith.constant 0 : index
    %c0_16 = arith.constant 0 : index
    %21 = vector.load %arg6[%c0_15, %c0_16] : memref<8x1024xbf16, #tpu.memory_space<vmem>>, vector<8x1024xbf16>
    %cst_17 = arith.constant dense<0.000000e+00> : vector<8x8xf32>
    %22 = tpu.matmul %20, %21, %cst_17 {dimension_numbers = #tpu.dot_dimension_numbers<[1], [1], [0], [0], [0, 0, 1, 0], [], []>} : vector<8x1024xbf16>, vector<8x1024xbf16>, vector<8x8xf32> -> vector<8x8xf32>
    %23 = arith.addf %19, %22 : vector<8x8xf32>
    %c0_18 = arith.constant 0 : index
    %c0_19 = arith.constant 0 : index
    %24 = vector.load %arg12[%c0_18, %c0_19] : memref<8x8xf32, #tpu.memory_space<vmem>>, vector<8x8xf32>
    tpu.vector_store %arg12[%c0_18, %c0_19], %23 {strides = array<i32>} : memref<8x8xf32, #tpu.memory_space<vmem>>, vector<8x8xf32>,
    %c1_i32 = arith.constant 1 : i32
    %25 = arith.cmpi eq, %arg0, %c1_i32 : i32
    %26 = arith.extui %25 : i1 to i32
    %c0_i32_20 = arith.constant 0 : i32
    %27 = arith.cmpi ne, %26, %c0_i32_20 : i32
    scf.if %27 {
      %c0_21 = arith.constant 0 : index
      %c0_22 = arith.constant 0 : index
      %28 = vector.load %arg12[%c0_21, %c0_22] : memref<8x8xf32, #tpu.memory_space<vmem>>, vector<8x8xf32>
      %c0_23 = arith.constant 0 : index
      %c0_24 = arith.constant 0 : index
      %29 = vector.load %arg7[%c0_23, %c0_24] : memref<1x8xf32, #tpu.memory_space<vmem>>, vector<1x8xf32>
      %30 = vector.broadcast %29 : vector<1x8xf32> to vector<8x8xf32>
      %31 = arith.addf %28, %30 : vector<8x8xf32>
      %c0_25 = arith.constant 0 : index
      %c0_26 = arith.constant 0 : index
      %32 = vector.load %arg8[%c0_25, %c0_26] : memref<2x64xf32, #tpu.memory_space<vmem>>, vector<2x64xf32>
      %c0_27 = arith.constant 0 : index
      %c0_28 = arith.constant 0 : index
      %33 = vector.load %arg9[%c0_27, %c0_28] : memref<64x4xf32, #tpu.memory_space<vmem>>, vector<64x4xf32>
      %cst_29 = arith.constant dense<0.000000e+00> : vector<2x4xf32>
      %34 = tpu.matmul %32, %33, %cst_29 {dimension_numbers = #tpu.dot_dimension_numbers<[1], [0], [0], [1], [0, 0, 1, 1], [], []>} : vector<2x64xf32>, vector<64x4xf32>, vector<2x4xf32> -> vector<2x4xf32>
      %c0_30 = arith.constant 0 : index
      %c0_31 = arith.constant 0 : index
      %35 = vector.load %arg10[%c0_30, %c0_31] : memref<1x4xf32, #tpu.memory_space<vmem>>, vector<1x4xf32>
      %36 = vector.broadcast %35 : vector<1x4xf32> to vector<2x4xf32>
      %37 = arith.addf %34, %36 : vector<2x4xf32>
      %cst_32 = arith.constant dense<0xFF800000> : vector<2xf32>
      %38 = vector.multi_reduction <maximumf>, %37, %cst_32 [1] : vector<2x4xf32> to vector<2xf32>
      %39 = vector.shape_cast %38 : vector<2xf32> to vector<2x1xf32>
      %40 = vector.broadcast %39 : vector<2x1xf32> to vector<2x4xf32>
      %41 = arith.subf %37, %40 : vector<2x4xf32>
      %42 = math.exp %41 : vector<2x4xf32>
      %cst_33 = arith.constant dense<0.000000e+00> : vector<2xf32>
      %43 = vector.multi_reduction <add>, %42, %cst_33 [1] : vector<2x4xf32> to vector<2xf32>
      %44 = vector.shape_cast %43 : vector<2xf32> to vector<2x1xf32>
      %45 = vector.broadcast %44 : vector<2x1xf32> to vector<2x4xf32>
      %46 = arith.divf %42, %45 : vector<2x4xf32>
      %47 = vector.shape_cast %31 : vector<8x8xf32> to vector<2x4x8xf32>
      %cst_34 = arith.constant 0.000000e+00 : f32
      %48 = vector.broadcast %cst_34 : f32 to vector<2x8xf32>
      %49 = vector.extract_strided_slice %47 {offsets = [0, 0, 0], sizes = [2, 1, 8], strides = [1, 1, 1]} : vector<2x4x8xf32> to vector<2x1x8xf32>
      %50 = vector.shape_cast %49 : vector<2x1x8xf32> to vector<2x8xf32>
      %51 = vector.extract_strided_slice %46 {offsets = [0, 0], sizes = [2, 1], strides = [1, 1]} : vector<2x4xf32> to vector<2x1xf32>
      %52 = vector.broadcast %51 : vector<2x1xf32> to vector<2x8xf32>
      %53 = arith.mulf %50, %52 : vector<2x8xf32>
      %54 = arith.addf %48, %53 : vector<2x8xf32>
      %55 = vector.extract_strided_slice %47 {offsets = [0, 1, 0], sizes = [2, 1, 8], strides = [1, 1, 1]} : vector<2x4x8xf32> to vector<2x1x8xf32>
      %56 = vector.shape_cast %55 : vector<2x1x8xf32> to vector<2x8xf32>
      %57 = vector.extract_strided_slice %46 {offsets = [0, 1], sizes = [2, 1], strides = [1, 1]} : vector<2x4xf32> to vector<2x1xf32>
      %58 = vector.broadcast %57 : vector<2x1xf32> to vector<2x8xf32>
      %59 = arith.mulf %56, %58 : vector<2x8xf32>
      %60 = arith.addf %54, %59 : vector<2x8xf32>
      %61 = vector.extract_strided_slice %47 {offsets = [0, 2, 0], sizes = [2, 1, 8], strides = [1, 1, 1]} : vector<2x4x8xf32> to vector<2x1x8xf32>
      %62 = vector.shape_cast %61 : vector<2x1x8xf32> to vector<2x8xf32>
      %63 = vector.extract_strided_slice %46 {offsets = [0, 2], sizes = [2, 1], strides = [1, 1]} : vector<2x4xf32> to vector<2x1xf32>
      %64 = vector.broadcast %63 : vector<2x1xf32> to vector<2x8xf32>
      %65 = arith.mulf %62, %64 : vector<2x8xf32>
      %66 = arith.addf %60, %65 : vector<2x8xf32>
      %67 = vector.extract_strided_slice %47 {offsets = [0, 3, 0], sizes = [2, 1, 8], strides = [1, 1, 1]} : vector<2x4x8xf32> to vector<2x1x8xf32>
      %68 = vector.shape_cast %67 : vector<2x1x8xf32> to vector<2x8xf32>
      %69 = vector.extract_strided_slice %46 {offsets = [0, 3], sizes = [2, 1], strides = [1, 1]} : vector<2x4xf32> to vector<2x1xf32>
      %70 = vector.broadcast %69 : vector<2x1xf32> to vector<2x8xf32>
      %71 = arith.mulf %68, %70 : vector<2x8xf32>
      %72 = arith.addf %66, %71 : vector<2x8xf32>
      %c0_35 = arith.constant 0 : index
      %c0_36 = arith.constant 0 : index
      %73 = vector.load %arg11[%c0_35, %c0_36] : memref<2x8xf32, #tpu.memory_space<vmem>>, vector<2x8xf32>
      tpu.vector_store %arg11[%c0_35, %c0_36], %72 {strides = array<i32>} : memref<2x8xf32, #tpu.memory_space<vmem>>, vector<2x8xf32>,
    } else {
    }
    return
  }
  func.func @transform_0(%arg0: i32) -> (i32, i32) {
    %c0_i32 = arith.constant 0 : i32
    %c0_i32_0 = arith.constant 0 : i32
    %c0_i32_1 = arith.constant 0 : i32
    return %c0_i32, %c0_i32_0 : i32, i32
  }
  func.func @transform_1(%arg0: i32) -> (i32, i32) {
    %c0_i32 = arith.constant 0 : i32
    %c0_i32_0 = arith.constant 0 : i32
    %c0_i32_1 = arith.constant 0 : i32
    return %c0_i32, %c0_i32_0 : i32, i32
  }
  func.func @transform_2(%arg0: i32) -> (i32, i32) {
    %c0_i32 = arith.constant 0 : i32
    %c0_i32_0 = arith.constant 0 : i32
    %c0_i32_1 = arith.constant 0 : i32
    return %c0_i32, %c0_i32_0 : i32, i32
  }
  func.func @transform_3(%arg0: i32) -> (i32, i32) {
    %c0_i32 = arith.constant 0 : i32
    %c0_i32_0 = arith.constant 0 : i32
    return %c0_i32, %arg0 : i32, i32
  }
  func.func @transform_4(%arg0: i32) -> (i32, i32) {
    %c0_i32 = arith.constant 0 : i32
    %c0_i32_0 = arith.constant 0 : i32
    return %c0_i32, %arg0 : i32, i32
  }
  func.func @transform_5(%arg0: i32) -> (i32, i32) {
    %c0_i32 = arith.constant 0 : i32
    %c0_i32_0 = arith.constant 0 : i32
    return %c0_i32, %arg0 : i32, i32
  }
  func.func @transform_6(%arg0: i32) -> (i32, i32) {
    %c0_i32 = arith.constant 0 : i32
    %c0_i32_0 = arith.constant 0 : i32
    %c0_i32_1 = arith.constant 0 : i32
    return %c0_i32, %c0_i32_0 : i32, i32
  }
  func.func @transform_7(%arg0: i32) -> (i32, i32) {
    %c0_i32 = arith.constant 0 : i32
    %c0_i32_0 = arith.constant 0 : i32
    %c0_i32_1 = arith.constant 0 : i32
    return %c0_i32, %c0_i32_0 : i32, i32
  }
  func.func @transform_8(%arg0: i32) -> (i32, i32) {
    %c0_i32 = arith.constant 0 : i32
    %c0_i32_0 = arith.constant 0 : i32
    %c0_i32_1 = arith.constant 0 : i32
    return %c0_i32, %c0_i32_0 : i32, i32
  }
  func.func @transform_9(%arg0: i32) -> (i32, i32) {
    %c0_i32 = arith.constant 0 : i32
    %c0_i32_0 = arith.constant 0 : i32
    %c0_i32_1 = arith.constant 0 : i32
    return %c0_i32, %c0_i32_0 : i32, i32
  }
  func.func @transform_10(%arg0: i32) -> (i32, i32) {
    %c0_i32 = arith.constant 0 : i32
    %c0_i32_0 = arith.constant 0 : i32
    %c0_i32_1 = arith.constant 0 : i32
    return %c0_i32, %c0_i32_0 : i32, i32
  }
}

</mosaic_0001>

<llo_original>
// kernel: dqn_experts_forward.1
$region0: #{dqn_experts_forward.1}
  #allocation0 [shape = 'u32[]', space=smem, size = 0x4, offset = 0x4, fixed_abs, tag = 'smem constant byte address 0x4 - core index']
  #allocation1 [shape = 'u32[144,128]{1,0:T(1,128)}', space=vmem, size = 0x12000, scoped, tag = 'internal scratch']
  #allocation2 [shape = 'f32[8,8]{1,0:T(8,128)}', space=vmem, size = 0x1000, scoped, tag = 'scratch operand']
  %s0 = inlined_call_operand.vmem [shape: bf16[8,16], index: 0, kind: input, shape index: {}]
  %s1 = inlined_call_operand.hbm [shape: bf16[16,2048], index: 1, kind: input, shape index: {}]
  %s2 = inlined_call_operand.hbm [shape: f32[1,2048], index: 2, kind: input, shape index: {}]
  %s3 = inlined_call_operand.hbm [shape: bf16[2048,2048], index: 3, kind: input, shape index: {}]
  %s4 = inlined_call_operand.hbm [shape: f32[1,2048], index: 4, kind: input, shape index: {}]
  %s5 = inlined_call_operand.hbm [shape: bf16[8,2048], index: 5, kind: input, shape index: {}]
  %s6 = inlined_call_operand.hbm [shape: f32[1,8], index: 6, kind: input, shape index: {}]
  %s7 = inlined_call_operand.hbm [shape: f32[2,64], index: 7, kind: input, shape index: {}]
  %s8 = inlined_call_operand.vmem [shape: f32[64,4], index: 8, kind: input, shape index: {}]
  %s9 = inlined_call_operand.hbm [shape: f32[1,4], index: 9, kind: input, shape index: {}]
  %s10 = inlined_call_operand.hbm [shape: f32[2,8], index: 10, kind: output, shape index: {}]
  %s11 = sld [smem:[#allocation0]]
  $region113: #{dqn_experts_forward.1} parent=0
    _
  %s13 = ssub.s32 1, %s11
  %s14 = scalar_select 0, %s13, %s11
  $region1: #{dqn_experts_forward.1} parent=0
    #allocation3 [shape = 'u8[65536]{0}', space=vmem, size = 0x10000, scoped, tag = 'input window, operand 1, single buffered']
    #allocation4 [shape = 's32[2]{0}', space=sflag, size = 0x8, scoped, tag = 'scoped memory for dqn_experts_forward.1']
    #allocation5 [shape = 's32[2]{0}', space=sflag, size = 0x8, scoped, tag = 'scoped memory for dqn_experts_forward.1']
    #allocation6 [shape = 'u8[8192]{0}', space=vmem, size = 0x2000, scoped, tag = 'input window, operand 2, single buffered']
    #allocation7 [shape = 's32[1]{0}', space=sflag, size = 0x4, scoped, tag = 'scoped memory for dqn_experts_forward.1']
    #allocation8 [shape = 'u8[8388608]{0}', space=vmem, size = 0x800000, scoped, tag = 'input window, operand 3']
    #allocation9 [shape = 'u8[8192]{0}', space=vmem, size = 0x2000, scoped, tag = 'input window, operand 4']
    #allocation10 [shape = 'u8[32768]{0}', space=vmem, size = 0x8000, scoped, tag = 'input window, operand 5']
    #allocation11 [shape = 'u8[512]{0}', space=vmem, size = 0x400, scoped, tag = 'input window, operand 6, single buffered']
    #allocation12 [shape = 'u8[1024]{0}', space=vmem, size = 0x400, scoped, tag = 'input window, operand 7, single buffered']
    #allocation13 [shape = 's32[1]{0}', space=sflag, size = 0x4, scoped, tag = 'scoped memory for dqn_experts_forward.1']
    #allocation14 [shape = 'u8[512]{0}', space=vmem, size = 0x400, scoped, tag = 'input window, operand 9, single buffered']
    #allocation15 [shape = 'u8[1024]{0}', space=vmem, size = 0x400, scoped, tag = 'output window, operand 0, single buffered']
    %15 = vsyncpa [#allocation4], 0
    %16 = vsyncpa [#allocation7], 0
    %17 = vsyncpa [#allocation13], 0
    %18 = vsyncpa [#allocation5], 0
    loop: start=0, step=1, limit=4
    $region2: #{dqn_experts_forward.1} parent=1 // loop_pre_header
      _
    $region3: #{dqn_experts_forward.1} parent=1 // loop_header
      %s20 = sphi 0, %s24
      %p21 = scmp.ge.s32.totalorder %s20, 4
      %s28 = sphi 0, %s28
      %s30 = sphi 0, %s28
      %s31 = sphi 0, %s30
      %s45 = sphi 0, %s31
      %s49 = sphi 0, %s49
      %s51 = sphi 0, %s49
      %s52 = sphi 0, %s51
      %s66 = sphi 0, %s52
      %s70 = sphi 0, %s70
      %s72 = sphi 0, %s70
      %s73 = sphi 0, %s72
      %s87 = sphi 0, %s73
      %s93 = sphi 0, %s95
      %s96 = sphi 0, %s93
      %s97 = sphi 0, %s96
      %s113 = sphi 0, %s97
      %s119 = sphi 0, %s121
      %s122 = sphi 0, %s119
      %s123 = sphi 0, %s122
      %s139 = sphi 0, %s123
      %s145 = sphi 0, %s147
      %s148 = sphi 0, %s145
      %s149 = sphi 0, %s148
      %s165 = sphi 0, %s149
      %s169 = sphi 0, %s169
      %s171 = sphi 0, %s169
      %s172 = sphi 0, %s171
      %s186 = sphi 0, %s172
      %s190 = sphi 0, %s190
      %s192 = sphi 0, %s190
      %s193 = sphi 0, %s192
      %s207 = sphi 0, %s193
      %s211 = sphi 0, %s211
      %s213 = sphi 0, %s211
      %s214 = sphi 0, %s213
      %s228 = sphi 0, %s214
      %s232 = sphi 0, %s232
      %s234 = sphi 0, %s232
      %s235 = sphi 0, %s234
      %s249 = sphi 0, %s235
      %s253 = sphi 0, %s253
      %s255 = sphi 0, %s253
      %s256 = sphi 0, %s255
      %s270 = sphi 0, %s256
    $region4: #{dqn_experts_forward.1} parent=1 // loop_header_branch
      %23 = sbr.rel (%p21) target = $region8
    $region5: #{dqn_experts_forward.1} parent=1 // loop_body
      %s25 = ssub.s32 %s20, 1
      %s26 = ssub.s32 %s20, 2
      %s27 = sadd.s32 %s20, 1
      %s29 = sadd.s32 %s28, 1
      %p32 = scmp.eq.s32.totalorder %s20, 1
      %p33 = scmp.ne.s32.totalorder %s28, %s30
      %p34 = scmp.eq.s32.totalorder %s20, 0
      %p35 = por %p33, %p34
      %p36 = scmp.ne.s32.totalorder %s28, %s30
      %p37 = scmp.eq.s32.totalorder %s25, 1
      %p38 = por %p36, %p37
      %p39 = scmp.ne.s32.totalorder %s30, %s31
      %p40 = scmp.eq.s32.totalorder %s25, 0
      %p41 = por %p39, %p40
      %p42 = scmp.ne.s32.totalorder %s30, %s31
      %p43 = scmp.eq.s32.totalorder %s26, 1
      %p44 = por %p42, %p43
      %p46 = scmp.ne.s32.totalorder %s31, %s45
      %p47 = scmp.eq.s32.totalorder %s26, 0
      %p48 = por %p46, %p47
      %s50 = sadd.s32 %s49, 1
      %p53 = scmp.eq.s32.totalorder %s20, 1
      %p54 = scmp.ne.s32.totalorder %s49, %s51
      %p55 = scmp.eq.s32.totalorder %s20, 0
      %p56 = por %p54, %p55
      %p57 = scmp.ne.s32.totalorder %s49, %s51
      %p58 = scmp.eq.s32.totalorder %s25, 1
      %p59 = por %p57, %p58
      %p60 = scmp.ne.s32.totalorder %s51, %s52
      %p61 = scmp.eq.s32.totalorder %s25, 0
      %p62 = por %p60, %p61
      %p63 = scmp.ne.s32.totalorder %s51, %s52
      %p64 = scmp.eq.s32.totalorder %s26, 1
      %p65 = por %p63, %p64
      %p67 = scmp.ne.s32.totalorder %s52, %s66
      %p68 = scmp.eq.s32.totalorder %s26, 0
      %p69 = por %p67, %p68
      %s71 = sadd.s32 %s70, 1
      %p74 = scmp.eq.s32.totalorder %s20, 1
      %p75 = scmp.ne.s32.totalorder %s70, %s72
      %p76 = scmp.eq.s32.totalorder %s20, 0
      %p77 = por %p75, %p76
      %p78 = scmp.ne.s32.totalorder %s70, %s72
      %p79 = scmp.eq.s32.totalorder %s25, 1
      %p80 = por %p78, %p79
      %p81 = scmp.ne.s32.totalorder %s72, %s73
      %p82 = scmp.eq.s32.totalorder %s25, 0
      %p83 = por %p81, %p82
      %p84 = scmp.ne.s32.totalorder %s72, %s73
      %p85 = scmp.eq.s32.totalorder %s26, 1
      %p86 = por %p84, %p85
      %p88 = scmp.ne.s32.totalorder %s73, %s87
      %p89 = scmp.eq.s32.totalorder %s26, 0
      %p90 = por %p88, %p89
      %s91 = ssub.s32 %s20, %s27
      %p92 = scmp.eq.s32.totalorder %s91, 0
      %s94 = sadd.s32 %s93, 1
      %s95 = scalar_select %p92, %s93, %s94
      %p98 = pneg %p92
      %p99 = scmp.eq.s32.totalorder %s20, 1
      %p100 = por %p98, %p99
      %p101 = scmp.ne.s32.totalorder %s93, %s96
      %p102 = scmp.eq.s32.totalorder %s20, 0
      %p103 = por %p101, %p102
      %p104 = scmp.ne.s32.totalorder %s93, %s96
      %p105 = scmp.eq.s32.totalorder %s25, 1
      %p106 = por %p104, %p105
      %p107 = scmp.ne.s32.totalorder %s96, %s97
      %p108 = scmp.eq.s32.totalorder %s25, 0
      %p109 = por %p107, %p108
      %p110 = scmp.ne.s32.totalorder %s96, %s97
      %p111 = scmp.eq.s32.totalorder %s26, 1
      %p112 = por %p110, %p111
      %p114 = scmp.ne.s32.totalorder %s97, %s113
      %p115 = scmp.eq.s32.totalorder %s26, 0
      %p116 = por %p114, %p115
      %s117 = ssub.s32 %s20, %s27
      %p118 = scmp.eq.s32.totalorder %s117, 0
      %s120 = sadd.s32 %s119, 1
      %s121 = scalar_select %p118, %s119, %s120
      %p124 = pneg %p118
      %p125 = scmp.eq.s32.totalorder %s20, 1
      %p126 = por %p124, %p125
      %p127 = scmp.ne.s32.totalorder %s119, %s122
      %p128 = scmp.eq.s32.totalorder %s20, 0
      %p129 = por %p127, %p128
      %p130 = scmp.ne.s32.totalorder %s119, %s122
      %p131 = scmp.eq.s32.totalorder %s25, 1
      %p132 = por %p130, %p131
      %p133 = scmp.ne.s32.totalorder %s122, %s123
      %p134 = scmp.eq.s32.totalorder %s25, 0
      %p135 = por %p133, %p134
      %p136 = scmp.ne.s32.totalorder %s122, %s123
      %p137 = scmp.eq.s32.totalorder %s26, 1
      %p138 = por %p136, %p137
      %p140 = scmp.ne.s32.totalorder %s123, %s139
      %p141 = scmp.eq.s32.totalorder %s26, 0
      %p142 = por %p140, %p141
      %s143 = ssub.s32 %s20, %s27
      %p144 = scmp.eq.s32.totalorder %s143, 0
      %s146 = sadd.s32 %s145, 1
      %s147 = scalar_select %p144, %s145, %s146
      %p150 = pneg %p144
      %p151 = scmp.eq.s32.totalorder %s20, 1
      %p152 = por %p150, %p151
      %p153 = scmp.ne.s32.totalorder %s145, %s148
      %p154 = scmp.eq.s32.totalorder %s20, 0
      %p155 = por %p153, %p154
      %p156 = scmp.ne.s32.totalorder %s145, %s148
      %p157 = scmp.eq.s32.totalorder %s25, 1
      %p158 = por %p156, %p157
      %p159 = scmp.ne.s32.totalorder %s148, %s149
      %p160 = scmp.eq.s32.totalorder %s25, 0
      %p161 = por %p159, %p160
      %p162 = scmp.ne.s32.totalorder %s148, %s149
      %p163 = scmp.eq.s32.totalorder %s26, 1
      %p164 = por %p162, %p163
      %p166 = scmp.ne.s32.totalorder %s149, %s165
      %p167 = scmp.eq.s32.totalorder %s26, 0
      %p168 = por %p166, %p167
      %s170 = sadd.s32 %s169, 1
      %p173 = scmp.eq.s32.totalorder %s20, 1
      %p174 = scmp.ne.s32.totalorder %s169, %s171
      %p175 = scmp.eq.s32.totalorder %s20, 0
      %p176 = por %p174, %p175
      %p177 = scmp.ne.s32.totalorder %s169, %s171
      %p178 = scmp.eq.s32.totalorder %s25, 1
      %p179 = por %p177, %p178
      %p180 = scmp.ne.s32.totalorder %s171, %s172
      %p181 = scmp.eq.s32.totalorder %s25, 0
      %p182 = por %p180, %p181
      %p183 = scmp.ne.s32.totalorder %s171, %s172
      %p184 = scmp.eq.s32.totalorder %s26, 1
      %p185 = por %p183, %p184
      %p187 = scmp.ne.s32.totalorder %s172, %s186
      %p188 = scmp.eq.s32.totalorder %s26, 0
      %p189 = por %p187, %p188
      %s191 = sadd.s32 %s190, 1
      %p194 = scmp.eq.s32.totalorder %s20, 1
      %p195 = scmp.ne.s32.totalorder %s190, %s192
      %p196 = scmp.eq.s32.totalorder %s20, 0
      %p197 = por %p195, %p196
      %p198 = scmp.ne.s32.totalorder %s190, %s192
      %p199 = scmp.eq.s32.totalorder %s25, 1
      %p200 = por %p198, %p199
      %p201 = scmp.ne.s32.totalorder %s192, %s193
      %p202 = scmp.eq.s32.totalorder %s25, 0
      %p203 = por %p201, %p202
      %p204 = scmp.ne.s32.totalorder %s192, %s193
      %p205 = scmp.eq.s32.totalorder %s26, 1
      %p206 = por %p204, %p205
      %p208 = scmp.ne.s32.totalorder %s193, %s207
      %p209 = scmp.eq.s32.totalorder %s26, 0
      %p210 = por %p208, %p209
      %s212 = sadd.s32 %s211, 1
      %p215 = scmp.eq.s32.totalorder %s20, 1
      %p216 = scmp.ne.s32.totalorder %s211, %s213
      %p217 = scmp.eq.s32.totalorder %s20, 0
      %p218 = por %p216, %p217
      %p219 = scmp.ne.s32.totalorder %s211, %s213
      %p220 = scmp.eq.s32.totalorder %s25, 1
      %p221 = por %p219, %p220
      %p222 = scmp.ne.s32.totalorder %s213, %s214
      %p223 = scmp.eq.s32.totalorder %s25, 0
      %p224 = por %p222, %p223
      %p225 = scmp.ne.s32.totalorder %s213, %s214
      %p226 = scmp.eq.s32.totalorder %s26, 1
      %p227 = por %p225, %p226
      %p229 = scmp.ne.s32.totalorder %s214, %s228
      %p230 = scmp.eq.s32.totalorder %s26, 0
      %p231 = por %p229, %p230
      %s233 = sadd.s32 %s232, 1
      %p236 = scmp.eq.s32.totalorder %s20, 1
      %p237 = scmp.ne.s32.totalorder %s232, %s234
      %p238 = scmp.eq.s32.totalorder %s20, 0
      %p239 = por %p237, %p238
      %p240 = scmp.ne.s32.totalorder %s232, %s234
      %p241 = scmp.eq.s32.totalorder %s25, 1
      %p242 = por %p240, %p241
      %p243 = scmp.ne.s32.totalorder %s234, %s235
      %p244 = scmp.eq.s32.totalorder %s25, 0
      %p245 = por %p243, %p244
      %p246 = scmp.ne.s32.totalorder %s234, %s235
      %p247 = scmp.eq.s32.totalorder %s26, 1
      %p248 = por %p246, %p247
      %p250 = scmp.ne.s32.totalorder %s235, %s249
      %p251 = scmp.eq.s32.totalorder %s26, 0
      %p252 = por %p250, %p251
      %s254 = sadd.s32 %s253, 1
      %p257 = scmp.eq.s32.totalorder %s20, 1
      %p258 = scmp.ne.s32.totalorder %s253, %s255
      %p259 = scmp.eq.s32.totalorder %s20, 0
      %p260 = por %p258, %p259
      %p261 = scmp.ne.s32.totalorder %s253, %s255
      %p262 = scmp.eq.s32.totalorder %s25, 1
      %p263 = por %p261, %p262
      %p264 = scmp.ne.s32.totalorder %s255, %s256
      %p265 = scmp.eq.s32.totalorder %s25, 0
      %p266 = por %p264, %p265
      %p267 = scmp.ne.s32.totalorder %s255, %s256
      %p268 = scmp.eq.s32.totalorder %s26, 1
      %p269 = por %p267, %p268
      %p271 = scmp.ne.s32.totalorder %s256, %s270
      %p272 = scmp.eq.s32.totalorder %s26, 0
      %p273 = por %p271, %p272
      %p274 = scmp.le.s32.totalorder 1, %s20
      %p275 = scmp.lt.s32.totalorder %s20, 3
      %p276 = pnand %p274, %p275
      %p277 = pneg %p276
      // Predicated region
      $region9: #{dqn_experts_forward.1} parent=5 // pred_check
        _
      $region10: #{dqn_experts_forward.1} parent=5 // pred_check_branch
        %279 = sbr.rel (%p276) target = $region12
      $region11: #{dqn_experts_forward.1} parent=5 // pred_region
        %s280 = ssub.s32 %s20, 1
        // Predicated region
        $region13: #{dqn_experts_forward.1} parent=11 // pred_check
          %p281 = pneg %p41
        $region14: #{dqn_experts_forward.1} parent=11 // pred_check_branch
          %283 = sbr.rel (%p281) target = $region16
        $region15: #{dqn_experts_forward.1} parent=11 // pred_region
          _
        $region16: #{dqn_experts_forward.1} parent=11 // pred_fallthru
          _
        // Predicated region
        $region17: #{dqn_experts_forward.1} parent=11 // pred_check
          %p284 = pneg %p62
        $region18: #{dqn_experts_forward.1} parent=11 // pred_check_branch
          %286 = sbr.rel (%p284) target = $region20
        $region19: #{dqn_experts_forward.1} parent=11 // pred_region
          %s288 = ssub.s32 2048, 2048
          %289 = vsyncadd [#allocation4], %s288
          %s290 = sshll.u32 [#allocation3], 4
          %s291 = int_to_ptr.vmem [resolvable:$true] %s290
          %296 = dma.hbm_to_vmem [thread:$0]  %s1, 2048, %s291, [#allocation4], 1024, 1024, 64
        $region20: #{dqn_experts_forward.1} parent=11 // pred_fallthru
          _
        // Predicated region
        $region21: #{dqn_experts_forward.1} parent=11 // pred_check
          %p297 = pneg %p83
        $region22: #{dqn_experts_forward.1} parent=11 // pred_check_branch
          %299 = sbr.rel (%p297) target = $region24
        $region23: #{dqn_experts_forward.1} parent=11 // pred_region
          %s301 = ssub.s32 256, 256
          %302 = vsyncadd [#allocation7], %s301
          %s304 = sshll.u32 [#allocation6], 4
          %s305 = int_to_ptr.vmem [resolvable:$true] %s304
          %307 = dma.hbm_to_vmem [thread:$0]  %s2, 256, %s305, [#allocation7]
        $region24: #{dqn_experts_forward.1} parent=11 // pred_fallthru
          _
        // Predicated region
        $region25: #{dqn_experts_forward.1} parent=11 // pred_check
          %p308 = pneg %p182
        $region26: #{dqn_experts_forward.1} parent=11 // pred_check_branch
          %310 = sbr.rel (%p308) target = $region28
        $region27: #{dqn_experts_forward.1} parent=11 // pred_region
          %s312 = ssub.s32 16, 16
          %313 = vsyncadd [#allocation7], %s312
          %s315 = sshll.u32 [#allocation11], 4
          %s316 = int_to_ptr.vmem [resolvable:$true] %s315
          %318 = dma.hbm_to_vmem [thread:$0]  %s6, 16, %s316, [#allocation7]
        $region28: #{dqn_experts_forward.1} parent=11 // pred_fallthru
          _
        // Predicated region
        $region29: #{dqn_experts_forward.1} parent=11 // pred_check
          %p319 = pneg %p203
        $region30: #{dqn_experts_forward.1} parent=11 // pred_check_branch
          %321 = sbr.rel (%p319) target = $region32
        $region31: #{dqn_experts_forward.1} parent=11 // pred_region
          %s323 = ssub.s32 32, 32
          %324 = vsyncadd [#allocation13], %s323
          %s326 = sshll.u32 [#allocation12], 4
          %s327 = int_to_ptr.vmem [resolvable:$true] %s326
          %329 = dma.hbm_to_vmem [thread:$0]  %s7, 32, %s327, [#allocation13]
        $region32: #{dqn_experts_forward.1} parent=11 // pred_fallthru
          _
        // Predicated region
        $region33: #{dqn_experts_forward.1} parent=11 // pred_check
          %p330 = pneg %p224
        $region34: #{dqn_experts_forward.1} parent=11 // pred_check_branch
          %332 = sbr.rel (%p330) target = $region36
        $region35: #{dqn_experts_forward.1} parent=11 // pred_region
          _
        $region36: #{dqn_experts_forward.1} parent=11 // pred_fallthru
          _
        // Predicated region
        $region37: #{dqn_experts_forward.1} parent=11 // pred_check
          %p333 = pneg %p245
        $region38: #{dqn_experts_forward.1} parent=11 // pred_check_branch
          %335 = sbr.rel (%p333) target = $region40
        $region39: #{dqn_experts_forward.1} parent=11 // pred_region
          %s337 = ssub.s32 16, 16
          %338 = vsyncadd [#allocation13], %s337
          %s340 = sshll.u32 [#allocation14], 4
          %s341 = int_to_ptr.vmem [resolvable:$true] %s340
          %343 = dma.hbm_to_vmem [thread:$0]  %s9, 16, %s341, [#allocation13]
        $region40: #{dqn_experts_forward.1} parent=11 // pred_fallthru
          _
      $region12: #{dqn_experts_forward.1} parent=5 // pred_fallthru
        _
      %p344 = scmp.lt.s32.totalorder %s20, 2
      // Predicated region
      $region41: #{dqn_experts_forward.1} parent=5 // pred_check
        %p345 = pneg %p344
      $region42: #{dqn_experts_forward.1} parent=5 // pred_check_branch
        %347 = sbr.rel (%p345) target = $region44
      $region43: #{dqn_experts_forward.1} parent=5 // pred_region
        // Predicated region
        $region45: #{dqn_experts_forward.1} parent=43 // pred_check
          %p348 = pneg %p103
        $region46: #{dqn_experts_forward.1} parent=43 // pred_check_branch
          %350 = sbr.rel (%p348) target = $region48
        $region47: #{dqn_experts_forward.1} parent=43 // pred_region
          %s351 = sand.u32 %s20, 1
          %s352 = scalar_lea.sflag [#allocation4], %s351
          %s353 = sand.u32 %s93, 1
          %s354 = smul.addr %s353, 8192
          %s355 = scalar_lea.vmem [#allocation8], %s354
          %s356 = smul.u32 8, %s20
          %s358 = ssub.s32 131072, 131072
          %359 = vsyncadd %s352, %s358
          %s360 = smul.addr %s356, 64
          %s361 = scalar_lea.hbm %s3, %s360
          %s362 = sshll.u32 %s355, 4
          %s363 = int_to_ptr.vmem [resolvable:$true] %s362
          %368 = dma.hbm_to_vmem [thread:$0]  %s361, 131072, %s363, %s352, 1024, 512, 32
        $region48: #{dqn_experts_forward.1} parent=43 // pred_fallthru
          _
        // Predicated region
        $region49: #{dqn_experts_forward.1} parent=43 // pred_check
          %p369 = pneg %p129
        $region50: #{dqn_experts_forward.1} parent=43 // pred_check_branch
          %371 = sbr.rel (%p369) target = $region52
        $region51: #{dqn_experts_forward.1} parent=43 // pred_region
          %s372 = sand.u32 %s20, 1
          %s373 = scalar_lea.sflag [#allocation4], %s372
          %s374 = sand.u32 %s119, 1
          %s375 = smul.addr %s374, 8
          %s376 = scalar_lea.vmem [#allocation9], %s375
          %s377 = smul.u32 8, %s20
          %s379 = ssub.s32 128, 128
          %380 = vsyncadd %s373, %s379
          %s381 = smul.addr %s377, 16
          %s382 = scalar_lea.hbm %s4, %s381
          %s384 = sshll.u32 %s376, 4
          %s385 = int_to_ptr.vmem [resolvable:$true] %s384
          %387 = dma.hbm_to_vmem [thread:$0]  %s382, 128, %s385, %s373
        $region52: #{dqn_experts_forward.1} parent=43 // pred_fallthru
          _
        // Predicated region
        $region53: #{dqn_experts_forward.1} parent=43 // pred_check
          %p388 = pneg %p155
        $region54: #{dqn_experts_forward.1} parent=43 // pred_check_branch
          %390 = sbr.rel (%p388) target = $region56
        $region55: #{dqn_experts_forward.1} parent=43 // pred_region
          %s391 = sand.u32 %s20, 1
          %s392 = scalar_lea.sflag [#allocation4], %s391
          %s393 = sand.u32 %s145, 1
          %s394 = smul.addr %s393, 32
          %s395 = scalar_lea.vmem [#allocation10], %s394
          %s396 = smul.u32 8, %s20
          %s398 = ssub.s32 512, 512
          %399 = vsyncadd %s392, %s398
          %s400 = smul.addr %s396, 64
          %s401 = scalar_lea.hbm %s5, %s400
          %s403 = sshll.u32 %s395, 4
          %s404 = int_to_ptr.vmem [resolvable:$true] %s403
          %406 = dma.hbm_to_vmem [thread:$0]  %s401, 512, %s404, %s392
        $region56: #{dqn_experts_forward.1} parent=43 // pred_fallthru
          _
      $region44: #{dqn_experts_forward.1} parent=5 // pred_fallthru
        _
      %p407 = scmp.le.s32.totalorder 1, %s20
      %p408 = scmp.lt.s32.totalorder %s20, 3
      %p409 = pnand %p407, %p408
      %p410 = pneg %p409
      // Predicated region
      $region57: #{dqn_experts_forward.1} parent=5 // pred_check
        _
      $region58: #{dqn_experts_forward.1} parent=5 // pred_check_branch
        %412 = sbr.rel (%p409) target = $region60
      $region59: #{dqn_experts_forward.1} parent=5 // pred_region
        %s413 = ssub.s32 %s20, 1
        // Predicated region
        $region61: #{dqn_experts_forward.1} parent=59 // pred_check
          %p414 = pneg %p62
        $region62: #{dqn_experts_forward.1} parent=59 // pred_check_branch
          %416 = sbr.rel (%p414) target = $region64
        $region63: #{dqn_experts_forward.1} parent=59 // pred_region
          %417 = dma.done [#allocation4], 2048
        $region64: #{dqn_experts_forward.1} parent=59 // pred_fallthru
          _
        // Predicated region
        $region65: #{dqn_experts_forward.1} parent=59 // pred_check
          %p418 = pneg %p83
        $region66: #{dqn_experts_forward.1} parent=59 // pred_check_branch
          %420 = sbr.rel (%p418) target = $region68
        $region67: #{dqn_experts_forward.1} parent=59 // pred_region
          %421 = dma.done [#allocation7], 256
        $region68: #{dqn_experts_forward.1} parent=59 // pred_fallthru
          _
        %s422 = sand.u32 %s25, 1
        %s423 = scalar_lea.sflag [#allocation4], %s422
        %s424 = sand.u32 %s96, 1
        %s425 = smul.addr %s424, 8192
        %s426 = scalar_lea.vmem [#allocation8], %s425
        // Predicated region
        $region69: #{dqn_experts_forward.1} parent=59 // pred_check
          %p427 = pneg %p109
        $region70: #{dqn_experts_forward.1} parent=59 // pred_check_branch
          %429 = sbr.rel (%p427) target = $region72
        $region71: #{dqn_experts_forward.1} parent=59 // pred_region
          %430 = dma.done %s423, 131072
        $region72: #{dqn_experts_forward.1} parent=59 // pred_fallthru
          _
        %s431 = sand.u32 %s25, 1
        %s432 = scalar_lea.sflag [#allocation4], %s431
        %s433 = sand.u32 %s122, 1
        %s434 = smul.addr %s433, 8
        %s435 = scalar_lea.vmem [#allocation9], %s434
        // Predicated region
        $region73: #{dqn_experts_forward.1} parent=59 // pred_check
          %p436 = pneg %p135
        $region74: #{dqn_experts_forward.1} parent=59 // pred_check_branch
          %438 = sbr.rel (%p436) target = $region76
        $region75: #{dqn_experts_forward.1} parent=59 // pred_region
          %439 = dma.done %s432, 128
        $region76: #{dqn_experts_forward.1} parent=59 // pred_fallthru
          _
        %s440 = sand.u32 %s25, 1
        %s441 = scalar_lea.sflag [#allocation4], %s440
        %s442 = sand.u32 %s148, 1
        %s443 = smul.addr %s442, 32
        %s444 = scalar_lea.vmem [#allocation10], %s443
        // Predicated region
        $region77: #{dqn_experts_forward.1} parent=59 // pred_check
          %p445 = pneg %p161
        $region78: #{dqn_experts_forward.1} parent=59 // pred_check_branch
          %447 = sbr.rel (%p445) target = $region80
        $region79: #{dqn_experts_forward.1} parent=59 // pred_region
          %448 = dma.done %s441, 512
        $region80: #{dqn_experts_forward.1} parent=59 // pred_fallthru
          _
        // Predicated region
        $region81: #{dqn_experts_forward.1} parent=59 // pred_check
          %p449 = pneg %p182
        $region82: #{dqn_experts_forward.1} parent=59 // pred_check_branch
          %451 = sbr.rel (%p449) target = $region84
        $region83: #{dqn_experts_forward.1} parent=59 // pred_region
          %452 = dma.done [#allocation7], 16
        $region84: #{dqn_experts_forward.1} parent=59 // pred_fallthru
          _
        // Predicated region
        $region85: #{dqn_experts_forward.1} parent=59 // pred_check
          %p453 = pneg %p203
        $region86: #{dqn_experts_forward.1} parent=59 // pred_check_branch
          %455 = sbr.rel (%p453) target = $region88
        $region87: #{dqn_experts_forward.1} parent=59 // pred_region
          %456 = dma.done [#allocation13], 32
        $region88: #{dqn_experts_forward.1} parent=59 // pred_fallthru
          _
        // Predicated region
        $region89: #{dqn_experts_forward.1} parent=59 // pred_check
          %p457 = pneg %p245
        $region90: #{dqn_experts_forward.1} parent=59 // pred_check_branch
          %459 = sbr.rel (%p457) target = $region92
        $region91: #{dqn_experts_forward.1} parent=59 // pred_region
          %460 = dma.done [#allocation13], 16
        $region92: #{dqn_experts_forward.1} parent=59 // pred_fallthru
          _
        %p461 = pneg %p41
        %p462 = pneg %p38
        %p463 = pneg %p62
        %p464 = pneg %p59
        %p465 = pneg %p83
        %p466 = pneg %p80
        %s467 = sand.u32 %s25, 1
        %s468 = scalar_lea.sflag [#allocation4], %s467
        %s469 = sand.u32 %s96, 1
        %s470 = smul.addr %s469, 8192
        %s471 = scalar_lea.vmem [#allocation8], %s470
        %p472 = pneg %p109
        %p473 = pneg %p106
        %s474 = sand.u32 %s25, 1
        %s475 = scalar_lea.sflag [#allocation4], %s474
        %s476 = sand.u32 %s122, 1
        %s477 = smul.addr %s476, 8
        %s478 = scalar_lea.vmem [#allocation9], %s477
        %p479 = pneg %p135
        %p480 = pneg %p132
        %s481 = sand.u32 %s25, 1
        %s482 = scalar_lea.sflag [#allocation4], %s481
        %s483 = sand.u32 %s148, 1
        %s484 = smul.addr %s483, 32
        %s485 = scalar_lea.vmem [#allocation10], %s484
        %p486 = pneg %p161
        %p487 = pneg %p158
        %p488 = pneg %p182
        %p489 = pneg %p179
        %p490 = pneg %p203
        %p491 = pneg %p200
        %p492 = pneg %p224
        %p493 = pneg %p221
        %p494 = pneg %p245
        %p495 = pneg %p242
        %p496 = pneg %p266
        %p497 = pneg %p263
        %s498 = smul.u32 8, %s25
        %s499 = smul.u32 8, %s25
        %s500 = smul.u32 8, %s25
        %p502 = scmp.eq.s32.totalorder %s25, 0
        // Predicated region
        $region93: #{dqn_experts_forward.1} parent=59 // pred_check
          %p503 = pneg %p502
        $region94: #{dqn_experts_forward.1} parent=59 // pred_check_branch
          %505 = sbr.rel (%p503) target = $region96
        $region95: #{dqn_experts_forward.1} parent=59 // pred_region
          %vm506 = vcmask 64512
          %507 = vst.msk [vmem:[#allocation2] sm:$0xff] %vm506, 0.0
        $region96: #{dqn_experts_forward.1} parent=59 // pred_fallthru
          _
        %v508 = vld [vmem:[%s0] sm:$0xf]
        %v509 = vld [vmem:[#allocation3] sm:$0xff]
        %v510 = vld [vmem:[#allocation3 + $0x8] sm:$0xff]
        %v511 = vld [vmem:[#allocation3 + $0x10] sm:$0xff]
        %v512 = vld [vmem:[#allocation3 + $0x18] sm:$0xff]
        %v513 = vld [vmem:[#allocation3 + $0x20] sm:$0xff]
        %v514 = vld [vmem:[#allocation3 + $0x28] sm:$0xff]
        %v515 = vld [vmem:[#allocation3 + $0x30] sm:$0xff]
        %v516 = vld [vmem:[#allocation3 + $0x38] sm:$0xff]
        %v517 = vld [vmem:[#allocation3 + $0x40] sm:$0xff]
        %v518 = vld [vmem:[#allocation3 + $0x48] sm:$0xff]
        %v519 = vld [vmem:[#allocation3 + $0x50] sm:$0xff]
        %v520 = vld [vmem:[#allocation3 + $0x58] sm:$0xff]
        %v521 = vld [vmem:[#allocation3 + $0x60] sm:$0xff]
        %v522 = vld [vmem:[#allocation3 + $0x68] sm:$0xff]
        %v523 = vld [vmem:[#allocation3 + $0x70] sm:$0xff]
        %v524 = vld [vmem:[#allocation3 + $0x78] sm:$0xff]
        %v525 = vld [vmem:[#allocation6] sm:$0xff]
        %v526 = vld [vmem:[#allocation6 + $0x8] sm:$0xff]
        %v529 = vlaneseq
        %v530 = vshrl.u32 %v529, 7
        %v531 = vsub.s32 0, %v530
        %v532 = vrot.slane %v525, %v531
        %v533 = vlaneseq
        %v534 = vshrl.u32 %v533, 7
        %v535 = vsub.s32 1, %v534
        %v536 = vrot.slane %v525, %v535
        %v537 = vlaneseq
        %v538 = vshrl.u32 %v537, 7
        %v539 = vsub.s32 2, %v538
        %v540 = vrot.slane %v525, %v539
        %v541 = vlaneseq
        %v542 = vshrl.u32 %v541, 7
        %v543 = vsub.s32 3, %v542
        %v544 = vrot.slane %v525, %v543
        %v545 = vlaneseq
        %v546 = vshrl.u32 %v545, 7
        %v547 = vsub.s32 4, %v546
        %v548 = vrot.slane %v525, %v547
        %v549 = vlaneseq
        %v550 = vshrl.u32 %v549, 7
        %v551 = vsub.s32 5, %v550
        %v552 = vrot.slane %v525, %v551
        %v553 = vlaneseq
        %v554 = vshrl.u32 %v553, 7
        %v555 = vsub.s32 6, %v554
        %v556 = vrot.slane %v525, %v555
        %v557 = vlaneseq
        %v558 = vshrl.u32 %v557, 7
        %v559 = vsub.s32 7, %v558
        %v560 = vrot.slane %v525, %v559
        %v561 = vlaneseq
        %v562 = vshrl.u32 %v561, 7
        %v563 = vsub.s32 0, %v562
        %v564 = vrot.slane %v526, %v563
        %v565 = vlaneseq
        %v566 = vshrl.u32 %v565, 7
        %v567 = vsub.s32 1, %v566
        %v568 = vrot.slane %v526, %v567
        %v569 = vlaneseq
        %v570 = vshrl.u32 %v569, 7
        %v571 = vsub.s32 2, %v570
        %v572 = vrot.slane %v526, %v571
        %v573 = vlaneseq
        %v574 = vshrl.u32 %v573, 7
        %v575 = vsub.s32 3, %v574
        %v576 = vrot.slane %v526, %v575
        %v577 = vlaneseq
        %v578 = vshrl.u32 %v577, 7
        %v579 = vsub.s32 4, %v578
        %v580 = vrot.slane %v526, %v579
        %v581 = vlaneseq
        %v582 = vshrl.u32 %v581, 7
        %v583 = vsub.s32 5, %v582
        %v584 = vrot.slane %v526, %v583
        %v585 = vlaneseq
        %v586 = vshrl.u32 %v585, 7
        %v587 = vsub.s32 6, %v586
        %v588 = vrot.slane %v526, %v587
        %v589 = vlaneseq
        %v590 = vshrl.u32 %v589, 7
        %v591 = vsub.s32 7, %v590
        %v592 = vrot.slane %v526, %v591
        %v625 = vunpack.c.l.b16 %v509
        %v626 = vunpack.c.h.b16 %v509
        %v627 = vunpack.c.l.b16 %v510
        %v628 = vunpack.c.h.b16 %v510
        %v629 = vunpack.c.l.b16 %v511
        %v630 = vunpack.c.h.b16 %v511
        %v631 = vunpack.c.l.b16 %v512
        %v632 = vunpack.c.h.b16 %v512
        %v633 = vunpack.c.l.b16 %v513
        %v634 = vunpack.c.h.b16 %v513
        %v635 = vunpack.c.l.b16 %v514
        %v636 = vunpack.c.h.b16 %v514
        %v637 = vunpack.c.l.b16 %v515
        %v638 = vunpack.c.h.b16 %v515
        %v639 = vunpack.c.l.b16 %v516
        %v640 = vunpack.c.h.b16 %v516
        %v641 = vunpack.c.l.b16 %v517
        %v642 = vunpack.c.h.b16 %v517
        %v643 = vunpack.c.l.b16 %v518
        %v644 = vunpack.c.h.b16 %v518
        %v645 = vunpack.c.l.b16 %v519
        %v646 = vunpack.c.h.b16 %v519
        %v647 = vunpack.c.l.b16 %v520
        %v648 = vunpack.c.h.b16 %v520
        %v649 = vunpack.c.l.b16 %v521
        %v650 = vunpack.c.h.b16 %v521
        %v651 = vunpack.c.l.b16 %v522
        %v652 = vunpack.c.h.b16 %v522
        %v653 = vunpack.c.l.b16 %v523
        %v654 = vunpack.c.h.b16 %v523
        %v655 = vunpack.c.l.b16 %v524
        %v656 = vunpack.c.h.b16 %v524
        %v657 = vpack.c.b16 %v641, %v625
        %v658 = vpack.c.b16 %v642, %v626
        %v659 = vpack.c.b16 %v643, %v627
        %v660 = vpack.c.b16 %v644, %v628
        %v661 = vpack.c.b16 %v645, %v629
        %v662 = vpack.c.b16 %v646, %v630
        %v663 = vpack.c.b16 %v647, %v631
        %v664 = vpack.c.b16 %v648, %v632
        %v665 = vpack.c.b16 %v649, %v633
        %v666 = vpack.c.b16 %v650, %v634
        %v667 = vpack.c.b16 %v651, %v635
        %v668 = vpack.c.b16 %v652, %v636
        %v669 = vpack.c.b16 %v653, %v637
        %v670 = vpack.c.b16 %v654, %v638
        %v671 = vpack.c.b16 %v655, %v639
        %v672 = vpack.c.b16 %v656, %v640
        %vm689 = vcmask 130048
        %v691 = vsel %vm689, %v508, 0
        %693 = vmatprep.subr.bf16.mxu0 0
        %694 = vmatpush1.bf16.msra.mxu0 0
        %695 = vmatprep.subr.bf16.mxu0 0
        %696 = vmatpush1.bf16.msra.mxu0 0
        %697 = vmatprep.subr.bf16.mxu0 0
        %698 = vmatpush1.bf16.msra.mxu0 0
        %699 = vmatprep.subr.bf16.mxu0 0
        %700 = vmatpush1.bf16.msra.mxu0 0
        %701 = vmatprep.subr.bf16.mxu0 0
        %702 = vmatpush1.bf16.msra.mxu0 0
        %703 = vmatprep.subr.bf16.mxu0 0
        %704 = vmatpush1.bf16.msra.mxu0 0
        %705 = vmatprep.subr.bf16.mxu0 0
        %706 = vmatpush1.bf16.msra.mxu0 0
        %707 = vmatprep.subr.bf16.mxu0 %v658
        %708 = vmatpush1.bf16.msra.mxu0 %v657
        %709 = vmatprep.subr.bf16.mxu0 0
        %710 = vmatpush2.bf16.msra.mxu0 0
        %711 = vmatprep.subr.bf16.mxu0 0
        %712 = vmatpush2.bf16.msra.mxu0 0
        %713 = vmatprep.subr.bf16.mxu0 0
        %714 = vmatpush2.bf16.msra.mxu0 0
        %715 = vmatprep.subr.bf16.mxu0 0
        %716 = vmatpush2.bf16.msra.mxu0 0
        %717 = vmatprep.subr.bf16.mxu0 0
        %718 = vmatpush2.bf16.msra.mxu0 0
        %719 = vmatprep.subr.bf16.mxu0 0
        %720 = vmatpush2.bf16.msra.mxu0 0
        %721 = vmatprep.subr.bf16.mxu0 0
        %722 = vmatpush2.bf16.msra.mxu0 0
        %723 = vmatprep.subr.bf16.mxu0 0
        %724 = vmatpush2.bf16.msra.mxu0 0
        %725 = vmatprep.mubr.bf16.mxu0 0
        %726 = vmatmul.mubr.bf16.gmra.mxu0 %v691
        %v727 = vpop.f32.mrf.mxu0
        %v728 = vadd.f32 %v532, %v727
        %v729 = vpop.f32.mrf.mxu0
        %v730 = vadd.f32 %v536, %v729
        %v731 = vpop.f32.mrf.mxu0
        %v732 = vpop.f32.mrf.mxu0
        %733 = vdwg.mxu0
        %734 = vmatprep.subr.bf16.mxu0 0
        %735 = vmatpush1.bf16.msra.mxu0 0
        %736 = vmatprep.subr.bf16.mxu0 0
        %737 = vmatpush1.bf16.msra.mxu0 0
        %738 = vmatprep.subr.bf16.mxu0 0
        %739 = vmatpush1.bf16.msra.mxu0 0
        %740 = vmatprep.subr.bf16.mxu0 0
        %741 = vmatpush1.bf16.msra.mxu0 0
        %742 = vmatprep.subr.bf16.mxu0 0
        %743 = vmatpush1.bf16.msra.mxu0 0
        %744 = vmatprep.subr.bf16.mxu0 0
        %745 = vmatpush1.bf16.msra.mxu0 0
        %746 = vmatprep.subr.bf16.mxu0 0
        %747 = vmatpush1.bf16.msra.mxu0 0
        %748 = vmatprep.subr.bf16.mxu0 %v660
        %749 = vmatpush1.bf16.msra.mxu0 %v659
        %750 = vmatprep.subr.bf16.mxu0 0
        %751 = vmatpush2.bf16.msra.mxu0 0
        %752 = vmatprep.subr.bf16.mxu0 0
        %753 = vmatpush2.bf16.msra.mxu0 0
        %754 = vmatprep.subr.bf16.mxu0 0
        %755 = vmatpush2.bf16.msra.mxu0 0
        %756 = vmatprep.subr.bf16.mxu0 0
        %757 = vmatpush2.bf16.msra.mxu0 0
        %758 = vmatprep.subr.bf16.mxu0 0
        %759 = vmatpush2.bf16.msra.mxu0 0
        %760 = vmatprep.subr.bf16.mxu0 0
        %761 = vmatpush2.bf16.msra.mxu0 0
        %762 = vmatprep.subr.bf16.mxu0 0
        %763 = vmatpush2.bf16.msra.mxu0 0
        %764 = vmatprep.subr.bf16.mxu0 0
        %765 = vmatpush2.bf16.msra.mxu0 0
        %766 = vmatprep.mubr.bf16.mxu0 0
        %767 = vmatmul.mubr.bf16.gmra.mxu0 %v691
        %v768 = vpop.f32.mrf.mxu0
        %v769 = vadd.f32 %v540, %v768
        %v770 = vpop.f32.mrf.mxu0
        %v771 = vadd.f32 %v544, %v770
        %v772 = vpop.f32.mrf.mxu0
        %v773 = vpop.f32.mrf.mxu0
        %774 = vdwg.mxu0
        %775 = vmatprep.subr.bf16.mxu0 0
        %776 = vmatpush1.bf16.msra.mxu0 0
        %777 = vmatprep.subr.bf16.mxu0 0
        %778 = vmatpush1.bf16.msra.mxu0 0
        %779 = vmatprep.subr.bf16.mxu0 0
        %780 = vmatpush1.bf16.msra.mxu0 0
        %781 = vmatprep.subr.bf16.mxu0 0
        %782 = vmatpush1.bf16.msra.mxu0 0
        %783 = vmatprep.subr.bf16.mxu0 0
        %784 = vmatpush1.bf16.msra.mxu0 0
        %785 = vmatprep.subr.bf16.mxu0 0
        %786 = vmatpush1.bf16.msra.mxu0 0
        %787 = vmatprep.subr.bf16.mxu0 0
        %788 = vmatpush1.bf16.msra.mxu0 0
        %789 = vmatprep.subr.bf16.mxu0 %v662
        %790 = vmatpush1.bf16.msra.mxu0 %v661
        %791 = vmatprep.subr.bf16.mxu0 0
        %792 = vmatpush2.bf16.msra.mxu0 0
        %793 = vmatprep.subr.bf16.mxu0 0
        %794 = vmatpush2.bf16.msra.mxu0 0
        %795 = vmatprep.subr.bf16.mxu0 0
        %796 = vmatpush2.bf16.msra.mxu0 0
        %797 = vmatprep.subr.bf16.mxu0 0
        %798 = vmatpush2.bf16.msra.mxu0 0
        %799 = vmatprep.subr.bf16.mxu0 0
        %800 = vmatpush2.bf16.msra.mxu0 0
        %801 = vmatprep.subr.bf16.mxu0 0
        %802 = vmatpush2.bf16.msra.mxu0 0
        %803 = vmatprep.subr.bf16.mxu0 0
        %804 = vmatpush2.bf16.msra.mxu0 0
        %805 = vmatprep.subr.bf16.mxu0 0
        %806 = vmatpush2.bf16.msra.mxu0 0
        %807 = vmatprep.mubr.bf16.mxu0 0
        %808 = vmatmul.mubr.bf16.gmra.mxu0 %v691
        %v809 = vpop.f32.mrf.mxu0
        %v810 = vadd.f32 %v548, %v809
        %v811 = vpop.f32.mrf.mxu0
        %v812 = vadd.f32 %v552, %v811
        %v813 = vpop.f32.mrf.mxu0
        %v814 = vpop.f32.mrf.mxu0
        %815 = vdwg.mxu0
        %816 = vmatprep.subr.bf16.mxu0 0
        %817 = vmatpush1.bf16.msra.mxu0 0
        %818 = vmatprep.subr.bf16.mxu0 0
        %819 = vmatpush1.bf16.msra.mxu0 0
        %820 = vmatprep.subr.bf16.mxu0 0
        %821 = vmatpush1.bf16.msra.mxu0 0
        %822 = vmatprep.subr.bf16.mxu0 0
        %823 = vmatpush1.bf16.msra.mxu0 0
        %824 = vmatprep.subr.bf16.mxu0 0
        %825 = vmatpush1.bf16.msra.mxu0 0
        %826 = vmatprep.subr.bf16.mxu0 0
        %827 = vmatpush1.bf16.msra.mxu0 0
        %828 = vmatprep.subr.bf16.mxu0 0
        %829 = vmatpush1.bf16.msra.mxu0 0
        %830 = vmatprep.subr.bf16.mxu0 %v664
        %831 = vmatpush1.bf16.msra.mxu0 %v663
        %832 = vmatprep.subr.bf16.mxu0 0
        %833 = vmatpush2.bf16.msra.mxu0 0
        %834 = vmatprep.subr.bf16.mxu0 0
        %835 = vmatpush2.bf16.msra.mxu0 0
        %836 = vmatprep.subr.bf16.mxu0 0
        %837 = vmatpush2.bf16.msra.mxu0 0
        %838 = vmatprep.subr.bf16.mxu0 0
        %839 = vmatpush2.bf16.msra.mxu0 0
        %840 = vmatprep.subr.bf16.mxu0 0
        %841 = vmatpush2.bf16.msra.mxu0 0
        %842 = vmatprep.subr.bf16.mxu0 0
        %843 = vmatpush2.bf16.msra.mxu0 0
        %844 = vmatprep.subr.bf16.mxu0 0
        %845 = vmatpush2.bf16.msra.mxu0 0
        %846 = vmatprep.subr.bf16.mxu0 0
        %847 = vmatpush2.bf16.msra.mxu0 0
        %848 = vmatprep.mubr.bf16.mxu0 0
        %849 = vmatmul.mubr.bf16.gmra.mxu0 %v691
        %v850 = vpop.f32.mrf.mxu0
        %v851 = vadd.f32 %v556, %v850
        %v852 = vpop.f32.mrf.mxu0
        %v853 = vadd.f32 %v560, %v852
        %v854 = vpop.f32.mrf.mxu0
        %v855 = vpop.f32.mrf.mxu0
        %856 = vdwg.mxu0
        %857 = vmatprep.subr.bf16.mxu0 0
        %858 = vmatpush1.bf16.msra.mxu0 0
        %859 = vmatprep.subr.bf16.mxu0 0
        %860 = vmatpush1.bf16.msra.mxu0 0
        %861 = vmatprep.subr.bf16.mxu0 0
        %862 = vmatpush1.bf16.msra.mxu0 0
        %863 = vmatprep.subr.bf16.mxu0 0
        %864 = vmatpush1.bf16.msra.mxu0 0
        %865 = vmatprep.subr.bf16.mxu0 0
        %866 = vmatpush1.bf16.msra.mxu0 0
        %867 = vmatprep.subr.bf16.mxu0 0
        %868 = vmatpush1.bf16.msra.mxu0 0
        %869 = vmatprep.subr.bf16.mxu0 0
        %870 = vmatpush1.bf16.msra.mxu0 0
        %871 = vmatprep.subr.bf16.mxu0 %v666
        %872 = vmatpush1.bf16.msra.mxu0 %v665
        %873 = vmatprep.subr.bf16.mxu0 0
        %874 = vmatpush2.bf16.msra.mxu0 0
        %875 = vmatprep.subr.bf16.mxu0 0
        %876 = vmatpush2.bf16.msra.mxu0 0
        %877 = vmatprep.subr.bf16.mxu0 0
        %878 = vmatpush2.bf16.msra.mxu0 0
        %879 = vmatprep.subr.bf16.mxu0 0
        %880 = vmatpush2.bf16.msra.mxu0 0
        %881 = vmatprep.subr.bf16.mxu0 0
        %882 = vmatpush2.bf16.msra.mxu0 0
        %883 = vmatprep.subr.bf16.mxu0 0
        %884 = vmatpush2.bf16.msra.mxu0 0
        %885 = vmatprep.subr.bf16.mxu0 0
        %886 = vmatpush2.bf16.msra.mxu0 0
        %887 = vmatprep.subr.bf16.mxu0 0
        %888 = vmatpush2.bf16.msra.mxu0 0
        %889 = vmatprep.mubr.bf16.mxu0 0
        %890 = vmatmul.mubr.bf16.gmra.mxu0 %v691
        %v891 = vpop.f32.mrf.mxu0
        %v892 = vadd.f32 %v564, %v891
        %v893 = vpop.f32.mrf.mxu0
        %v894 = vadd.f32 %v568, %v893
        %v895 = vpop.f32.mrf.mxu0
        %v896 = vpop.f32.mrf.mxu0
        %897 = vdwg.mxu0
        %898 = vmatprep.subr.bf16.mxu0 0
        %899 = vmatpush1.bf16.msra.mxu0 0
        %900 = vmatprep.subr.bf16.mxu0 0
        %901 = vmatpush1.bf16.msra.mxu0 0
        %902 = vmatprep.subr.bf16.mxu0 0
        %903 = vmatpush1.bf16.msra.mxu0 0
        %904 = vmatprep.subr.bf16.mxu0 0
        %905 = vmatpush1.bf16.msra.mxu0 0
        %906 = vmatprep.subr.bf16.mxu0 0
        %907 = vmatpush1.bf16.msra.mxu0 0
        %908 = vmatprep.subr.bf16.mxu0 0
        %909 = vmatpush1.bf16.msra.mxu0 0
        %910 = vmatprep.subr.bf16.mxu0 0
        %911 = vmatpush1.bf16.msra.mxu0 0
        %912 = vmatprep.subr.bf16.mxu0 %v668
        %913 = vmatpush1.bf16.msra.mxu0 %v667
        %914 = vmatprep.subr.bf16.mxu0 0
        %915 = vmatpush2.bf16.msra.mxu0 0
        %916 = vmatprep.subr.bf16.mxu0 0
        %917 = vmatpush2.bf16.msra.mxu0 0
        %918 = vmatprep.subr.bf16.mxu0 0
        %919 = vmatpush2.bf16.msra.mxu0 0
        %920 = vmatprep.subr.bf16.mxu0 0
        %921 = vmatpush2.bf16.msra.mxu0 0
        %922 = vmatprep.subr.bf16.mxu0 0
        %923 = vmatpush2.bf16.msra.mxu0 0
        %924 = vmatprep.subr.bf16.mxu0 0
        %925 = vmatpush2.bf16.msra.mxu0 0
        %926 = vmatprep.subr.bf16.mxu0 0
        %927 = vmatpush2.bf16.msra.mxu0 0
        %928 = vmatprep.subr.bf16.mxu0 0
        %929 = vmatpush2.bf16.msra.mxu0 0
        %930 = vmatprep.mubr.bf16.mxu0 0
        %931 = vmatmul.mubr.bf16.gmra.mxu0 %v691
        %v932 = vpop.f32.mrf.mxu0
        %v933 = vadd.f32 %v572, %v932
        %v934 = vpop.f32.mrf.mxu0
        %v935 = vadd.f32 %v576, %v934
        %v936 = vpop.f32.mrf.mxu0
        %v937 = vpop.f32.mrf.mxu0
        %938 = vdwg.mxu0
        %939 = vmatprep.subr.bf16.mxu0 0
        %940 = vmatpush1.bf16.msra.mxu0 0
        %941 = vmatprep.subr.bf16.mxu0 0
        %942 = vmatpush1.bf16.msra.mxu0 0
        %943 = vmatprep.subr.bf16.mxu0 0
        %944 = vmatpush1.bf16.msra.mxu0 0
        %945 = vmatprep.subr.bf16.mxu0 0
        %946 = vmatpush1.bf16.msra.mxu0 0
        %947 = vmatprep.subr.bf16.mxu0 0
        %948 = vmatpush1.bf16.msra.mxu0 0
        %949 = vmatprep.subr.bf16.mxu0 0
        %950 = vmatpush1.bf16.msra.mxu0 0
        %951 = vmatprep.subr.bf16.mxu0 0
        %952 = vmatpush1.bf16.msra.mxu0 0
        %953 = vmatprep.subr.bf16.mxu0 %v670
        %954 = vmatpush1.bf16.msra.mxu0 %v669
        %955 = vmatprep.subr.bf16.mxu0 0
        %956 = vmatpush2.bf16.msra.mxu0 0
        %957 = vmatprep.subr.bf16.mxu0 0
        %958 = vmatpush2.bf16.msra.mxu0 0
        %959 = vmatprep.subr.bf16.mxu0 0
        %960 = vmatpush2.bf16.msra.mxu0 0
        %961 = vmatprep.subr.bf16.mxu0 0
        %962 = vmatpush2.bf16.msra.mxu0 0
        %963 = vmatprep.subr.bf16.mxu0 0
        %964 = vmatpush2.bf16.msra.mxu0 0
        %965 = vmatprep.subr.bf16.mxu0 0
        %966 = vmatpush2.bf16.msra.mxu0 0
        %967 = vmatprep.subr.bf16.mxu0 0
        %968 = vmatpush2.bf16.msra.mxu0 0
        %969 = vmatprep.subr.bf16.mxu0 0
        %970 = vmatpush2.bf16.msra.mxu0 0
        %971 = vmatprep.mubr.bf16.mxu0 0
        %972 = vmatmul.mubr.bf16.gmra.mxu0 %v691
        %v973 = vpop.f32.mrf.mxu0
        %v974 = vadd.f32 %v580, %v973
        %v975 = vpop.f32.mrf.mxu0
        %v976 = vadd.f32 %v584, %v975
        %v977 = vpop.f32.mrf.mxu0
        %v978 = vpop.f32.mrf.mxu0
        %979 = vdwg.mxu0
        %980 = vmatprep.subr.bf16.mxu0 0
        %981 = vmatpush1.bf16.msra.mxu0 0
        %982 = vmatprep.subr.bf16.mxu0 0
        %983 = vmatpush1.bf16.msra.mxu0 0
        %984 = vmatprep.subr.bf16.mxu0 0
        %985 = vmatpush1.bf16.msra.mxu0 0
        %986 = vmatprep.subr.bf16.mxu0 0
        %987 = vmatpush1.bf16.msra.mxu0 0
        %988 = vmatprep.subr.bf16.mxu0 0
        %989 = vmatpush1.bf16.msra.mxu0 0
        %990 = vmatprep.subr.bf16.mxu0 0
        %991 = vmatpush1.bf16.msra.mxu0 0
        %992 = vmatprep.subr.bf16.mxu0 0
        %993 = vmatpush1.bf16.msra.mxu0 0
        %994 = vmatprep.subr.bf16.mxu0 %v672
        %995 = vmatpush1.bf16.msra.mxu0 %v671
        %996 = vmatprep.subr.bf16.mxu0 0
        %997 = vmatpush2.bf16.msra.mxu0 0
        %998 = vmatprep.subr.bf16.mxu0 0
        %999 = vmatpush2.bf16.msra.mxu0 0
        %1000 = vmatprep.subr.bf16.mxu0 0
        %1001 = vmatpush2.bf16.msra.mxu0 0
        %1002 = vmatprep.subr.bf16.mxu0 0
        %1003 = vmatpush2.bf16.msra.mxu0 0
        %1004 = vmatprep.subr.bf16.mxu0 0
        %1005 = vmatpush2.bf16.msra.mxu0 0
        %1006 = vmatprep.subr.bf16.mxu0 0
        %1007 = vmatpush2.bf16.msra.mxu0 0
        %1008 = vmatprep.subr.bf16.mxu0 0
        %1009 = vmatpush2.bf16.msra.mxu0 0
        %1010 = vmatprep.subr.bf16.mxu0 0
        %1011 = vmatpush2.bf16.msra.mxu0 0
        %1012 = vmatprep.mubr.bf16.mxu0 0
        %1013 = vmatmul.mubr.bf16.gmra.mxu0 %v691
        %v1014 = vpop.f32.mrf.mxu0
        %v1015 = vadd.f32 %v588, %v1014
        %v1016 = vpop.f32.mrf.mxu0
        %v1017 = vadd.f32 %v592, %v1016
        %v1018 = vpop.f32.mrf.mxu0
        %v1019 = vpop.f32.mrf.mxu0
        %1020 = vdwg.mxu0
        %v1021 = vmax.f32 %v728, 0.0
        %v1022 = vmax.f32 %v730, 0.0
        %v1023 = vmax.f32 %v769, 0.0
        %v1024 = vmax.f32 %v771, 0.0
        %v1025 = vmax.f32 %v810, 0.0
        %v1026 = vmax.f32 %v812, 0.0
        %v1027 = vmax.f32 %v851, 0.0
        %v1028 = vmax.f32 %v853, 0.0
        %v1029 = vmax.f32 %v892, 0.0
        %v1030 = vmax.f32 %v894, 0.0
        %v1031 = vmax.f32 %v933, 0.0
        %v1032 = vmax.f32 %v935, 0.0
        %v1033 = vmax.f32 %v974, 0.0
        %v1034 = vmax.f32 %v976, 0.0
        %v1035 = vmax.f32 %v1015, 0.0
        %v1036 = vmax.f32 %v1017, 0.0
        %v1037 = vpack.c.bf16 %v1021, %v1021
        %v1038 = vpack.c.bf16 %v1022, %v1022
        %v1039 = vpack.c.bf16 %v1023, %v1023
        %v1040 = vpack.c.bf16 %v1024, %v1024
        %v1041 = vpack.c.bf16 %v1025, %v1025
        %v1042 = vpack.c.bf16 %v1026, %v1026
        %v1043 = vpack.c.bf16 %v1027, %v1027
        %v1044 = vpack.c.bf16 %v1028, %v1028
        %v1045 = vpack.c.bf16 %v1029, %v1029
        %v1046 = vpack.c.bf16 %v1030, %v1030
        %v1047 = vpack.c.bf16 %v1031, %v1031
        %v1048 = vpack.c.bf16 %v1032, %v1032
        %v1049 = vpack.c.bf16 %v1033, %v1033
        %v1050 = vpack.c.bf16 %v1034, %v1034
        %v1051 = vpack.c.bf16 %v1035, %v1035
        %v1052 = vpack.c.bf16 %v1036, %v1036
        %v1053 = vld [vmem:[%s426] sm:$0xff]
        %v1054 = vld [vmem:[%s426 + $0x8] sm:$0xff]
        %v1055 = vld [vmem:[%s426 + $0x10] sm:$0xff]
        %v1056 = vld [vmem:[%s426 + $0x18] sm:$0xff]
        %v1057 = vld [vmem:[%s426 + $0x20] sm:$0xff]
        %v1058 = vld [vmem:[%s426 + $0x28] sm:$0xff]
        %v1059 = vld [vmem:[%s426 + $0x30] sm:$0xff]
        %v1060 = vld [vmem:[%s426 + $0x38] sm:$0xff]
        %v1061 = vld [vmem:[%s426 + $0x40] sm:$0xff]
        %v1062 = vld [vmem:[%s426 + $0x48] sm:$0xff]
        %v1063 = vld [vmem:[%s426 + $0x50] sm:$0xff]
        %v1064 = vld [vmem:[%s426 + $0x58] sm:$0xff]
        %v1065 = vld [vmem:[%s426 + $0x60] sm:$0xff]
        %v1066 = vld [vmem:[%s426 + $0x68] sm:$0xff]
        %v1067 = vld [vmem:[%s426 + $0x70] sm:$0xff]
        %v1068 = vld [vmem:[%s426 + $0x78] sm:$0xff]
        %v1069 = vld [vmem:[%s426 + $0x80] sm:$0xff]
        %v1070 = vld [vmem:[%s426 + $0x88] sm:$0xff]
        %v1071 = vld [vmem:[%s426 + $0x90] sm:$0xff]
        %v1072 = vld [vmem:[%s426 + $0x98] sm:$0xff]
        %v1073 = vld [vmem:[%s426 + $0xa0] sm:$0xff]
        %v1074 = vld [vmem:[%s426 + $0xa8] sm:$0xff]
        %v1075 = vld [vmem:[%s426 + $0xb0] sm:$0xff]
        %v1076 = vld [vmem:[%s426 + $0xb8] sm:$0xff]
        %v1077 = vld [vmem:[%s426 + $0xc0] sm:$0xff]
        %v1078 = vld [vmem:[%s426 + $0xc8] sm:$0xff]
        %v1079 = vld [vmem:[%s426 + $0xd0] sm:$0xff]
        %v1080 = vld [vmem:[%s426 + $0xd8] sm:$0xff]
        %v1081 = vld [vmem:[%s426 + $0xe0] sm:$0xff]
        %v1082 = vld [vmem:[%s426 + $0xe8] sm:$0xff]
        %v1083 = vld [vmem:[%s426 + $0xf0] sm:$0xff]
        %v1084 = vld [vmem:[%s426 + $0xf8] sm:$0xff]
        %v1085 = vld [vmem:[%s426 + $0x100] sm:$0xff]
        %v1086 = vld [vmem:[%s426 + $0x108] sm:$0xff]
        %v1087 = vld [vmem:[%s426 + $0x110] sm:$0xff]
        %v1088 = vld [vmem:[%s426 + $0x118] sm:$0xff]
        %v1089 = vld [vmem:[%s426 + $0x120] sm:$0xff]
        %v1090 = vld [vmem:[%s426 + $0x128] sm:$0xff]
        %v1091 = vld [vmem:[%s426 + $0x130] sm:$0xff]
        %v1092 = vld [vmem:[%s426 + $0x138] sm:$0xff]
        %v1093 = vld [vmem:[%s426 + $0x140] sm:$0xff]
        %v1094 = vld [vmem:[%s426 + $0x148] sm:$0xff]
        %v1095 = vld [vmem:[%s426 + $0x150] sm:$0xff]
        %v1096 = vld [vmem:[%s426 + $0x158] sm:$0xff]
        %v1097 = vld [vmem:[%s426 + $0x160] sm:$0xff]
        %v1098 = vld [vmem:[%s426 + $0x168] sm:$0xff]
        %v1099 = vld [vmem:[%s426 + $0x170] sm:$0xff]
        %v1100 = vld [vmem:[%s426 + $0x178] sm:$0xff]
        %v1101 = vld [vmem:[%s426 + $0x180] sm:$0xff]
        %v1102 = vld [vmem:[%s426 + $0x188] sm:$0xff]
        %v1103 = vld [vmem:[%s426 + $0x190] sm:$0xff]
        %v1104 = vld [vmem:[%s426 + $0x198] sm:$0xff]
        %v1105 = vld [vmem:[%s426 + $0x1a0] sm:$0xff]
        %v1106 = vld [vmem:[%s426 + $0x1a8] sm:$0xff]
        %v1107 = vld [vmem:[%s426 + $0x1b0] sm:$0xff]
        %v1108 = vld [vmem:[%s426 + $0x1b8] sm:$0xff]
        %v1109 = vld [vmem:[%s426 + $0x1c0] sm:$0xff]
        %v1110 = vld [vmem:[%s426 + $0x1c8] sm:$0xff]
        %v1111 = vld [vmem:[%s426 + $0x1d0] sm:$0xff]
        %v1112 = vld [vmem:[%s426 + $0x1d8] sm:$0xff]
        %v1113 = vld [vmem:[%s426 + $0x1e0] sm:$0xff]
        %v1114 = vld [vmem:[%s426 + $0x1e8] sm:$0xff]
        %v1115 = vld [vmem:[%s426 + $0x1f0] sm:$0xff]
        %v1116 = vld [vmem:[%s426 + $0x1f8] sm:$0xff]
        %v1117 = vld [vmem:[%s426 + $0x200] sm:$0xff]
        %v1118 = vld [vmem:[%s426 + $0x208] sm:$0xff]
        %v1119 = vld [vmem:[%s426 + $0x210] sm:$0xff]
        %v1120 = vld [vmem:[%s426 + $0x218] sm:$0xff]
        %v1121 = vld [vmem:[%s426 + $0x220] sm:$0xff]
        %v1122 = vld [vmem:[%s426 + $0x228] sm:$0xff]
        %v1123 = vld [vmem:[%s426 + $0x230] sm:$0xff]
        %v1124 = vld [vmem:[%s426 + $0x238] sm:$0xff]
        %v1125 = vld [vmem:[%s426 + $0x240] sm:$0xff]
        %v1126 = vld [vmem:[%s426 + $0x248] sm:$0xff]
        %v1127 = vld [vmem:[%s426 + $0x250] sm:$0xff]
        %v1128 = vld [vmem:[%s426 + $0x258] sm:$0xff]
        %v1129 = vld [vmem:[%s426 + $0x260] sm:$0xff]
        %v1130 = vld [vmem:[%s426 + $0x268] sm:$0xff]
        %v1131 = vld [vmem:[%s426 + $0x270] sm:$0xff]
        %v1132 = vld [vmem:[%s426 + $0x278] sm:$0xff]
        %v1133 = vld [vmem:[%s426 + $0x280] sm:$0xff]
        %v1134 = vld [vmem:[%s426 + $0x288] sm:$0xff]
        %v1135 = vld [vmem:[%s426 + $0x290] sm:$0xff]
        %v1136 = vld [vmem:[%s426 + $0x298] sm:$0xff]
        %v1137 = vld [vmem:[%s426 + $0x2a0] sm:$0xff]
        %v1138 = vld [vmem:[%s426 + $0x2a8] sm:$0xff]
        %v1139 = vld [vmem:[%s426 + $0x2b0] sm:$0xff]
        %v1140 = vld [vmem:[%s426 + $0x2b8] sm:$0xff]
        %v1141 = vld [vmem:[%s426 + $0x2c0] sm:$0xff]
        %v1142 = vld [vmem:[%s426 + $0x2c8] sm:$0xff]
        %v1143 = vld [vmem:[%s426 + $0x2d0] sm:$0xff]
        %v1144 = vld [vmem:[%s426 + $0x2d8] sm:$0xff]
        %v1145 = vld [vmem:[%s426 + $0x2e0] sm:$0xff]
        %v1146 = vld [vmem:[%s426 + $0x2e8] sm:$0xff]
        %v1147 = vld [vmem:[%s426 + $0x2f0] sm:$0xff]
        %v1148 = vld [vmem:[%s426 + $0x2f8] sm:$0xff]
        %v1149 = vld [vmem:[%s426 + $0x300] sm:$0xff]
        %v1150 = vld [vmem:[%s426 + $0x308] sm:$0xff]
        %v1151 = vld [vmem:[%s426 + $0x310] sm:$0xff]
        %v1152 = vld [vmem:[%s426 + $0x318] sm:$0xff]
        %v1153 = vld [vmem:[%s426 + $0x320] sm:$0xff]
        %v1154 = vld [vmem:[%s426 + $0x328] sm:$0xff]
        %v1155 = vld [vmem:[%s426 + $0x330] sm:$0xff]
        %v1156 = vld [vmem:[%s426 + $0x338] sm:$0xff]
        %v1157 = vld [vmem:[%s426 + $0x340] sm:$0xff]
        %v1158 = vld [vmem:[%s426 + $0x348] sm:$0xff]
        %v1159 = vld [vmem:[%s426 + $0x350] sm:$0xff]
        %v1160 = vld [vmem:[%s426 + $0x358] sm:$0xff]
        %v1161 = vld [vmem:[%s426 + $0x360] sm:$0xff]
        %v1162 = vld [vmem:[%s426 + $0x368] sm:$0xff]
        %v1163 = vld [vmem:[%s426 + $0x370] sm:$0xff]
        %v1164 = vld [vmem:[%s426 + $0x378] sm:$0xff]
        %v1165 = vld [vmem:[%s426 + $0x380] sm:$0xff]
        %v1166 = vld [vmem:[%s426 + $0x388] sm:$0xff]
        %v1167 = vld [vmem:[%s426 + $0x390] sm:$0xff]
        %v1168 = vld [vmem:[%s426 + $0x398] sm:$0xff]
        %v1169 = vld [vmem:[%s426 + $0x3a0] sm:$0xff]
        %v1170 = vld [vmem:[%s426 + $0x3a8] sm:$0xff]
        %v1171 = vld [vmem:[%s426 + $0x3b0] sm:$0xff]
        %v1172 = vld [vmem:[%s426 + $0x3b8] sm:$0xff]
        %v1173 = vld [vmem:[%s426 + $0x3c0] sm:$0xff]
        %v1174 = vld [vmem:[%s426 + $0x3c8] sm:$0xff]
        %v1175 = vld [vmem:[%s426 + $0x3d0] sm:$0xff]
        %v1176 = vld [vmem:[%s426 + $0x3d8] sm:$0xff]
        %v1177 = vld [vmem:[%s426 + $0x3e0] sm:$0xff]
        %v1178 = vld [vmem:[%s426 + $0x3e8] sm:$0xff]
        %v1179 = vld [vmem:[%s426 + $0x3f0] sm:$0xff]
        %v1180 = vld [vmem:[%s426 + $0x3f8] sm:$0xff]
        %v1181 = vld [vmem:[%s426 + $0x400] sm:$0xff]
        %v1182 = vld [vmem:[%s426 + $0x408] sm:$0xff]
        %v1183 = vld [vmem:[%s426 + $0x410] sm:$0xff]
        %v1184 = vld [vmem:[%s426 + $0x418] sm:$0xff]
        %v1185 = vld [vmem:[%s426 + $0x420] sm:$0xff]
        %v1186 = vld [vmem:[%s426 + $0x428] sm:$0xff]
        %v1187 = vld [vmem:[%s426 + $0x430] sm:$0xff]
        %v1188 = vld [vmem:[%s426 + $0x438] sm:$0xff]
        %v1189 = vld [vmem:[%s426 + $0x440] sm:$0xff]
        %v1190 = vld [vmem:[%s426 + $0x448] sm:$0xff]
        %v1191 = vld [vmem:[%s426 + $0x450] sm:$0xff]
        %v1192 = vld [vmem:[%s426 + $0x458] sm:$0xff]
        %v1193 = vld [vmem:[%s426 + $0x460] sm:$0xff]
        %v1194 = vld [vmem:[%s426 + $0x468] sm:$0xff]
        %v1195 = vld [vmem:[%s426 + $0x470] sm:$0xff]
        %v1196 = vld [vmem:[%s426 + $0x478] sm:$0xff]
        %v1197 = vld [vmem:[%s426 + $0x480] sm:$0xff]
        %v1198 = vld [vmem:[%s426 + $0x488] sm:$0xff]
        %v1199 = vld [vmem:[%s426 + $0x490] sm:$0xff]
        %v1200 = vld [vmem:[%s426 + $0x498] sm:$0xff]
        %v1201 = vld [vmem:[%s426 + $0x4a0] sm:$0xff]
        %v1202 = vld [vmem:[%s426 + $0x4a8] sm:$0xff]
        %v1203 = vld [vmem:[%s426 + $0x4b0] sm:$0xff]
        %v1204 = vld [vmem:[%s426 + $0x4b8] sm:$0xff]
        %v1205 = vld [vmem:[%s426 + $0x4c0] sm:$0xff]
        %v1206 = vld [vmem:[%s426 + $0x4c8] sm:$0xff]
        %v1207 = vld [vmem:[%s426 + $0x4d0] sm:$0xff]
        %v1208 = vld [vmem:[%s426 + $0x4d8] sm:$0xff]
        %v1209 = vld [vmem:[%s426 + $0x4e0] sm:$0xff]
        %v1210 = vld [vmem:[%s426 + $0x4e8] sm:$0xff]
        %v1211 = vld [vmem:[%s426 + $0x4f0] sm:$0xff]
        %v1212 = vld [vmem:[%s426 + $0x4f8] sm:$0xff]
        %v1213 = vld [vmem:[%s426 + $0x500] sm:$0xff]
        %v1214 = vld [vmem:[%s426 + $0x508] sm:$0xff]
        %v1215 = vld [vmem:[%s426 + $0x510] sm:$0xff]
        %v1216 = vld [vmem:[%s426 + $0x518] sm:$0xff]
        %v1217 = vld [vmem:[%s426 + $0x520] sm:$0xff]
        %v1218 = vld [vmem:[%s426 + $0x528] sm:$0xff]
        %v1219 = vld [vmem:[%s426 + $0x530] sm:$0xff]
        %v1220 = vld [vmem:[%s426 + $0x538] sm:$0xff]
        %v1221 = vld [vmem:[%s426 + $0x540] sm:$0xff]
        %v1222 = vld [vmem:[%s426 + $0x548] sm:$0xff]
        %v1223 = vld [vmem:[%s426 + $0x550] sm:$0xff]
        %v1224 = vld [vmem:[%s426 + $0x558] sm:$0xff]
        %v1225 = vld [vmem:[%s426 + $0x560] sm:$0xff]
        %v1226 = vld [vmem:[%s426 + $0x568] sm:$0xff]
        %v1227 = vld [vmem:[%s426 + $0x570] sm:$0xff]
        %v1228 = vld [vmem:[%s426 + $0x578] sm:$0xff]
        %v1229 = vld [vmem:[%s426 + $0x580] sm:$0xff]
        %v1230 = vld [vmem:[%s426 + $0x588] sm:$0xff]
        %v1231 = vld [vmem:[%s426 + $0x590] sm:$0xff]
        %v1232 = vld [vmem:[%s426 + $0x598] sm:$0xff]
        %v1233 = vld [vmem:[%s426 + $0x5a0] sm:$0xff]
        %v1234 = vld [vmem:[%s426 + $0x5a8] sm:$0xff]
        %v1235 = vld [vmem:[%s426 + $0x5b0] sm:$0xff]
        %v1236 = vld [vmem:[%s426 + $0x5b8] sm:$0xff]
        %v1237 = vld [vmem:[%s426 + $0x5c0] sm:$0xff]
        %v1238 = vld [vmem:[%s426 + $0x5c8] sm:$0xff]
        %v1239 = vld [vmem:[%s426 + $0x5d0] sm:$0xff]
        %v1240 = vld [vmem:[%s426 + $0x5d8] sm:$0xff]
        %v1241 = vld [vmem:[%s426 + $0x5e0] sm:$0xff]
        %v1242 = vld [vmem:[%s426 + $0x5e8] sm:$0xff]
        %v1243 = vld [vmem:[%s426 + $0x5f0] sm:$0xff]
        %v1244 = vld [vmem:[%s426 + $0x5f8] sm:$0xff]
        %v1245 = vld [vmem:[%s426 + $0x600] sm:$0xff]
        %v1246 = vld [vmem:[%s426 + $0x608] sm:$0xff]
        %v1247 = vld [vmem:[%s426 + $0x610] sm:$0xff]
        %v1248 = vld [vmem:[%s426 + $0x618] sm:$0xff]
        %v1249 = vld [vmem:[%s426 + $0x620] sm:$0xff]
        %v1250 = vld [vmem:[%s426 + $0x628] sm:$0xff]
        %v1251 = vld [vmem:[%s426 + $0x630] sm:$0xff]
        %v1252 = vld [vmem:[%s426 + $0x638] sm:$0xff]
        %v1253 = vld [vmem:[%s426 + $0x640] sm:$0xff]
        %v1254 = vld [vmem:[%s426 + $0x648] sm:$0xff]
        %v1255 = vld [vmem:[%s426 + $0x650] sm:$0xff]
        %v1256 = vld [vmem:[%s426 + $0x658] sm:$0xff]
        %v1257 = vld [vmem:[%s426 + $0x660] sm:$0xff]
        %v1258 = vld [vmem:[%s426 + $0x668] sm:$0xff]
        %v1259 = vld [vmem:[%s426 + $0x670] sm:$0xff]
        %v1260 = vld [vmem:[%s426 + $0x678] sm:$0xff]
        %v1261 = vld [vmem:[%s426 + $0x680] sm:$0xff]
        %v1262 = vld [vmem:[%s426 + $0x688] sm:$0xff]
        %v1263 = vld [vmem:[%s426 + $0x690] sm:$0xff]
        %v1264 = vld [vmem:[%s426 + $0x698] sm:$0xff]
        %v1265 = vld [vmem:[%s426 + $0x6a0] sm:$0xff]
        %v1266 = vld [vmem:[%s426 + $0x6a8] sm:$0xff]
        %v1267 = vld [vmem:[%s426 + $0x6b0] sm:$0xff]
        %v1268 = vld [vmem:[%s426 + $0x6b8] sm:$0xff]
        %v1269 = vld [vmem:[%s426 + $0x6c0] sm:$0xff]
        %v1270 = vld [vmem:[%s426 + $0x6c8] sm:$0xff]
        %v1271 = vld [vmem:[%s426 + $0x6d0] sm:$0xff]
        %v1272 = vld [vmem:[%s426 + $0x6d8] sm:$0xff]
        %v1273 = vld [vmem:[%s426 + $0x6e0] sm:$0xff]
        %v1274 = vld [vmem:[%s426 + $0x6e8] sm:$0xff]
        %v1275 = vld [vmem:[%s426 + $0x6f0] sm:$0xff]
        %v1276 = vld [vmem:[%s426 + $0x6f8] sm:$0xff]
        %v1277 = vld [vmem:[%s426 + $0x700] sm:$0xff]
        %v1278 = vld [vmem:[%s426 + $0x708] sm:$0xff]
        %v1279 = vld [vmem:[%s426 + $0x710] sm:$0xff]
        %v1280 = vld [vmem:[%s426 + $0x718] sm:$0xff]
        %v1281 = vld [vmem:[%s426 + $0x720] sm:$0xff]
        %v1282 = vld [vmem:[%s426 + $0x728] sm:$0xff]
        %v1283 = vld [vmem:[%s426 + $0x730] sm:$0xff]
        %v1284 = vld [vmem:[%s426 + $0x738] sm:$0xff]
        %v1285 = vld [vmem:[%s426 + $0x740] sm:$0xff]
        %v1286 = vld [vmem:[%s426 + $0x748] sm:$0xff]
        %v1287 = vld [vmem:[%s426 + $0x750] sm:$0xff]
        %v1288 = vld [vmem:[%s426 + $0x758] sm:$0xff]
        %v1289 = vld [vmem:[%s426 + $0x760] sm:$0xff]
        %v1290 = vld [vmem:[%s426 + $0x768] sm:$0xff]
        %v1291 = vld [vmem:[%s426 + $0x770] sm:$0xff]
        %v1292 = vld [vmem:[%s426 + $0x778] sm:$0xff]
        %v1293 = vld [vmem:[%s426 + $0x780] sm:$0xff]
        %v1294 = vld [vmem:[%s426 + $0x788] sm:$0xff]
        %v1295 = vld [vmem:[%s426 + $0x790] sm:$0xff]
        %v1296 = vld [vmem:[%s426 + $0x798] sm:$0xff]
        %v1297 = vld [vmem:[%s426 + $0x7a0] sm:$0xff]
        %v1298 = vld [vmem:[%s426 + $0x7a8] sm:$0xff]
        %v1299 = vld [vmem:[%s426 + $0x7b0] sm:$0xff]
        %v1300 = vld [vmem:[%s426 + $0x7b8] sm:$0xff]
        %v1301 = vld [vmem:[%s426 + $0x7c0] sm:$0xff]
        %v1302 = vld [vmem:[%s426 + $0x7c8] sm:$0xff]
        %v1303 = vld [vmem:[%s426 + $0x7d0] sm:$0xff]
        %v1304 = vld [vmem:[%s426 + $0x7d8] sm:$0xff]
        %v1305 = vld [vmem:[%s426 + $0x7e0] sm:$0xff]
        %v1306 = vld [vmem:[%s426 + $0x7e8] sm:$0xff]
        %v1307 = vld [vmem:[%s426 + $0x7f0] sm:$0xff]
        %v1308 = vld [vmem:[%s426 + $0x7f8] sm:$0xff]
        %v1309 = vld [vmem:[%s426 + $0x800] sm:$0xff]
        %v1310 = vld [vmem:[%s426 + $0x808] sm:$0xff]
        %v1311 = vld [vmem:[%s426 + $0x810] sm:$0xff]
        %v1312 = vld [vmem:[%s426 + $0x818] sm:$0xff]
        %v1313 = vld [vmem:[%s426 + $0x820] sm:$0xff]
        %v1314 = vld [vmem:[%s426 + $0x828] sm:$0xff]
        %v1315 = vld [vmem:[%s426 + $0x830] sm:$0xff]
        %v1316 = vld [vmem:[%s426 + $0x838] sm:$0xff]
        %v1317 = vld [vmem:[%s426 + $0x840] sm:$0xff]
        %v1318 = vld [vmem:[%s426 + $0x848] sm:$0xff]
        %v1319 = vld [vmem:[%s426 + $0x850] sm:$0xff]
        %v1320 = vld [vmem:[%s426 + $0x858] sm:$0xff]
        %v1321 = vld [vmem:[%s426 + $0x860] sm:$0xff]
        %v1322 = vld [vmem:[%s426 + $0x868] sm:$0xff]
        %v1323 = vld [vmem:[%s426 + $0x870] sm:$0xff]
        %v1324 = vld [vmem:[%s426 + $0x878] sm:$0xff]
        %v1325 = vld [vmem:[%s426 + $0x880] sm:$0xff]
        %v1326 = vld [vmem:[%s426 + $0x888] sm:$0xff]
        %v1327 = vld [vmem:[%s426 + $0x890] sm:$0xff]
        %v1328 = vld [vmem:[%s426 + $0x898] sm:$0xff]
        %v1329 = vld [vmem:[%s426 + $0x8a0] sm:$0xff]
        %v1330 = vld [vmem:[%s426 + $0x8a8] sm:$0xff]
        %v1331 = vld [vmem:[%s426 + $0x8b0] sm:$0xff]
        %v1332 = vld [vmem:[%s426 + $0x8b8] sm:$0xff]
        %v1333 = vld [vmem:[%s426 + $0x8c0] sm:$0xff]
        %v1334 = vld [vmem:[%s426 + $0x8c8] sm:$0xff]
        %v1335 = vld [vmem:[%s426 + $0x8d0] sm:$0xff]
        %v1336 = vld [vmem:[%s426 + $0x8d8] sm:$0xff]
        %v1337 = vld [vmem:[%s426 + $0x8e0] sm:$0xff]
        %v1338 = vld [vmem:[%s426 + $0x8e8] sm:$0xff]
        %v1339 = vld [vmem:[%s426 + $0x8f0] sm:$0xff]
        %v1340 = vld [vmem:[%s426 + $0x8f8] sm:$0xff]
        %v1341 = vld [vmem:[%s426 + $0x900] sm:$0xff]
        %v1342 = vld [vmem:[%s426 + $0x908] sm:$0xff]
        %v1343 = vld [vmem:[%s426 + $0x910] sm:$0xff]
        %v1344 = vld [vmem:[%s426 + $0x918] sm:$0xff]
        %v1345 = vld [vmem:[%s426 + $0x920] sm:$0xff]
        %v1346 = vld [vmem:[%s426 + $0x928] sm:$0xff]
        %v1347 = vld [vmem:[%s426 + $0x930] sm:$0xff]
        %v1348 = vld [vmem:[%s426 + $0x938] sm:$0xff]
        %v1349 = vld [vmem:[%s426 + $0x940] sm:$0xff]
        %v1350 = vld [vmem:[%s426 + $0x948] sm:$0xff]
        %v1351 = vld [vmem:[%s426 + $0x950] sm:$0xff]
        %v1352 = vld [vmem:[%s426 + $0x958] sm:$0xff]
        %v1353 = vld [vmem:[%s426 + $0x960] sm:$0xff]
        %v1354 = vld [vmem:[%s426 + $0x968] sm:$0xff]
        %v1355 = vld [vmem:[%s426 + $0x970] sm:$0xff]
        %v1356 = vld [vmem:[%s426 + $0x978] sm:$0xff]
        %v1357 = vld [vmem:[%s426 + $0x980] sm:$0xff]
        %v1358 = vld [vmem:[%s426 + $0x988] sm:$0xff]
        %v1359 = vld [vmem:[%s426 + $0x990] sm:$0xff]
        %v1360 = vld [vmem:[%s426 + $0x998] sm:$0xff]
        %v1361 = vld [vmem:[%s426 + $0x9a0] sm:$0xff]
        %v1362 = vld [vmem:[%s426 + $0x9a8] sm:$0xff]
        %v1363 = vld [vmem:[%s426 + $0x9b0] sm:$0xff]
        %v1364 = vld [vmem:[%s426 + $0x9b8] sm:$0xff]
        %v1365 = vld [vmem:[%s426 + $0x9c0] sm:$0xff]
        %v1366 = vld [vmem:[%s426 + $0x9c8] sm:$0xff]
        %v1367 = vld [vmem:[%s426 + $0x9d0] sm:$0xff]
        %v1368 = vld [vmem:[%s426 + $0x9d8] sm:$0xff]
        %v1369 = vld [vmem:[%s426 + $0x9e0] sm:$0xff]
        %v1370 = vld [vmem:[%s426 + $0x9e8] sm:$0xff]
        %v1371 = vld [vmem:[%s426 + $0x9f0] sm:$0xff]
        %v1372 = vld [vmem:[%s426 + $0x9f8] sm:$0xff]
        %v1373 = vld [vmem:[%s426 + $0xa00] sm:$0xff]
        %v1374 = vld [vmem:[%s426 + $0xa08] sm:$0xff]
        %v1375 = vld [vmem:[%s426 + $0xa10] sm:$0xff]
        %v1376 = vld [vmem:[%s426 + $0xa18] sm:$0xff]
        %v1377 = vld [vmem:[%s426 + $0xa20] sm:$0xff]
        %v1378 = vld [vmem:[%s426 + $0xa28] sm:$0xff]
        %v1379 = vld [vmem:[%s426 + $0xa30] sm:$0xff]
        %v1380 = vld [vmem:[%s426 + $0xa38] sm:$0xff]
        %v1381 = vld [vmem:[%s426 + $0xa40] sm:$0xff]
        %v1382 = vld [vmem:[%s426 + $0xa48] sm:$0xff]
        %v1383 = vld [vmem:[%s426 + $0xa50] sm:$0xff]
        %v1384 = vld [vmem:[%s426 + $0xa58] sm:$0xff]
        %v1385 = vld [vmem:[%s426 + $0xa60] sm:$0xff]
        %v1386 = vld [vmem:[%s426 + $0xa68] sm:$0xff]
        %v1387 = vld [vmem:[%s426 + $0xa70] sm:$0xff]
        %v1388 = vld [vmem:[%s426 + $0xa78] sm:$0xff]
        %v1389 = vld [vmem:[%s426 + $0xa80] sm:$0xff]
        %v1390 = vld [vmem:[%s426 + $0xa88] sm:$0xff]
        %v1391 = vld [vmem:[%s426 + $0xa90] sm:$0xff]
        %v1392 = vld [vmem:[%s426 + $0xa98] sm:$0xff]
        %v1393 = vld [vmem:[%s426 + $0xaa0] sm:$0xff]
        %v1394 = vld [vmem:[%s426 + $0xaa8] sm:$0xff]
        %v1395 = vld [vmem:[%s426 + $0xab0] sm:$0xff]
        %v1396 = vld [vmem:[%s426 + $0xab8] sm:$0xff]
        %v1397 = vld [vmem:[%s426 + $0xac0] sm:$0xff]
        %v1398 = vld [vmem:[%s426 + $0xac8] sm:$0xff]
        %v1399 = vld [vmem:[%s426 + $0xad0] sm:$0xff]
        %v1400 = vld [vmem:[%s426 + $0xad8] sm:$0xff]
        %v1401 = vld [vmem:[%s426 + $0xae0] sm:$0xff]
        %v1402 = vld [vmem:[%s426 + $0xae8] sm:$0xff]
        %v1403 = vld [vmem:[%s426 + $0xaf0] sm:$0xff]
        %v1404 = vld [vmem:[%s426 + $0xaf8] sm:$0xff]
        %v1405 = vld [vmem:[%s426 + $0xb00] sm:$0xff]
        %v1406 = vld [vmem:[%s426 + $0xb08] sm:$0xff]
        %v1407 = vld [vmem:[%s426 + $0xb10] sm:$0xff]
        %v1408 = vld [vmem:[%s426 + $0xb18] sm:$0xff]
        %v1409 = vld [vmem:[%s426 + $0xb20] sm:$0xff]
        %v1410 = vld [vmem:[%s426 + $0xb28] sm:$0xff]
        %v1411 = vld [vmem:[%s426 + $0xb30] sm:$0xff]
        %v1412 = vld [vmem:[%s426 + $0xb38] sm:$0xff]
        %v1413 = vld [vmem:[%s426 + $0xb40] sm:$0xff]
        %v1414 = vld [vmem:[%s426 + $0xb48] sm:$0xff]
        %v1415 = vld [vmem:[%s426 + $0xb50] sm:$0xff]
        %v1416 = vld [vmem:[%s426 + $0xb58] sm:$0xff]
        %v1417 = vld [vmem:[%s426 + $0xb60] sm:$0xff]
        %v1418 = vld [vmem:[%s426 + $0xb68] sm:$0xff]
        %v1419 = vld [vmem:[%s426 + $0xb70] sm:$0xff]
        %v1420 = vld [vmem:[%s426 + $0xb78] sm:$0xff]
        %v1421 = vld [vmem:[%s426 + $0xb80] sm:$0xff]
        %v1422 = vld [vmem:[%s426 + $0xb88] sm:$0xff]
        %v1423 = vld [vmem:[%s426 + $0xb90] sm:$0xff]
        %v1424 = vld [vmem:[%s426 + $0xb98] sm:$0xff]
        %v1425 = vld [vmem:[%s426 + $0xba0] sm:$0xff]
        %v1426 = vld [vmem:[%s426 + $0xba8] sm:$0xff]
        %v1427 = vld [vmem:[%s426 + $0xbb0] sm:$0xff]
        %v1428 = vld [vmem:[%s426 + $0xbb8] sm:$0xff]
        %v1429 = vld [vmem:[%s426 + $0xbc0] sm:$0xff]
        %v1430 = vld [vmem:[%s426 + $0xbc8] sm:$0xff]
        %v1431 = vld [vmem:[%s426 + $0xbd0] sm:$0xff]
        %v1432 = vld [vmem:[%s426 + $0xbd8] sm:$0xff]
        %v1433 = vld [vmem:[%s426 + $0xbe0] sm:$0xff]
        %v1434 = vld [vmem:[%s426 + $0xbe8] sm:$0xff]
        %v1435 = vld [vmem:[%s426 + $0xbf0] sm:$0xff]
        %v1436 = vld [vmem:[%s426 + $0xbf8] sm:$0xff]
        %v1437 = vld [vmem:[%s426 + $0xc00] sm:$0xff]
        %v1438 = vld [vmem:[%s426 + $0xc08] sm:$0xff]
        %v1439 = vld [vmem:[%s426 + $0xc10] sm:$0xff]
        %v1440 = vld [vmem:[%s426 + $0xc18] sm:$0xff]
        %v1441 = vld [vmem:[%s426 + $0xc20] sm:$0xff]
        %v1442 = vld [vmem:[%s426 + $0xc28] sm:$0xff]
        %v1443 = vld [vmem:[%s426 + $0xc30] sm:$0xff]
        %v1444 = vld [vmem:[%s426 + $0xc38] sm:$0xff]
        %v1445 = vld [vmem:[%s426 + $0xc40] sm:$0xff]
        %v1446 = vld [vmem:[%s426 + $0xc48] sm:$0xff]
        %v1447 = vld [vmem:[%s426 + $0xc50] sm:$0xff]
        %v1448 = vld [vmem:[%s426 + $0xc58] sm:$0xff]
        %v1449 = vld [vmem:[%s426 + $0xc60] sm:$0xff]
        %v1450 = vld [vmem:[%s426 + $0xc68] sm:$0xff]
        %v1451 = vld [vmem:[%s426 + $0xc70] sm:$0xff]
        %v1452 = vld [vmem:[%s426 + $0xc78] sm:$0xff]
        %v1453 = vld [vmem:[%s426 + $0xc80] sm:$0xff]
        %v1454 = vld [vmem:[%s426 + $0xc88] sm:$0xff]
        %v1455 = vld [vmem:[%s426 + $0xc90] sm:$0xff]
        %v1456 = vld [vmem:[%s426 + $0xc98] sm:$0xff]
        %v1457 = vld [vmem:[%s426 + $0xca0] sm:$0xff]
        %v1458 = vld [vmem:[%s426 + $0xca8] sm:$0xff]
        %v1459 = vld [vmem:[%s426 + $0xcb0] sm:$0xff]
        %v1460 = vld [vmem:[%s426 + $0xcb8] sm:$0xff]
        %v1461 = vld [vmem:[%s426 + $0xcc0] sm:$0xff]
        %v1462 = vld [vmem:[%s426 + $0xcc8] sm:$0xff]
        %v1463 = vld [vmem:[%s426 + $0xcd0] sm:$0xff]
        %v1464 = vld [vmem:[%s426 + $0xcd8] sm:$0xff]
        %v1465 = vld [vmem:[%s426 + $0xce0] sm:$0xff]
        %v1466 = vld [vmem:[%s426 + $0xce8] sm:$0xff]
        %v1467 = vld [vmem:[%s426 + $0xcf0] sm:$0xff]
        %v1468 = vld [vmem:[%s426 + $0xcf8] sm:$0xff]
        %v1469 = vld [vmem:[%s426 + $0xd00] sm:$0xff]
        %v1470 = vld [vmem:[%s426 + $0xd08] sm:$0xff]
        %v1471 = vld [vmem:[%s426 + $0xd10] sm:$0xff]
        %v1472 = vld [vmem:[%s426 + $0xd18] sm:$0xff]
        %v1473 = vld [vmem:[%s426 + $0xd20] sm:$0xff]
        %v1474 = vld [vmem:[%s426 + $0xd28] sm:$0xff]
        %v1475 = vld [vmem:[%s426 + $0xd30] sm:$0xff]
        %v1476 = vld [vmem:[%s426 + $0xd38] sm:$0xff]
        %v1477 = vld [vmem:[%s426 + $0xd40] sm:$0xff]
        %v1478 = vld [vmem:[%s426 + $0xd48] sm:$0xff]
        %v1479 = vld [vmem:[%s426 + $0xd50] sm:$0xff]
        %v1480 = vld [vmem:[%s426 + $0xd58] sm:$0xff]
        %v1481 = vld [vmem:[%s426 + $0xd60] sm:$0xff]
        %v1482 = vld [vmem:[%s426 + $0xd68] sm:$0xff]
        %v1483 = vld [vmem:[%s426 + $0xd70] sm:$0xff]
        %v1484 = vld [vmem:[%s426 + $0xd78] sm:$0xff]
        %v1485 = vld [vmem:[%s426 + $0xd80] sm:$0xff]
        %v1486 = vld [vmem:[%s426 + $0xd88] sm:$0xff]
        %v1487 = vld [vmem:[%s426 + $0xd90] sm:$0xff]
        %v1488 = vld [vmem:[%s426 + $0xd98] sm:$0xff]
        %v1489 = vld [vmem:[%s426 + $0xda0] sm:$0xff]
        %v1490 = vld [vmem:[%s426 + $0xda8] sm:$0xff]
        %v1491 = vld [vmem:[%s426 + $0xdb0] sm:$0xff]
        %v1492 = vld [vmem:[%s426 + $0xdb8] sm:$0xff]
        %v1493 = vld [vmem:[%s426 + $0xdc0] sm:$0xff]
        %v1494 = vld [vmem:[%s426 + $0xdc8] sm:$0xff]
        %v1495 = vld [vmem:[%s426 + $0xdd0] sm:$0xff]
        %v1496 = vld [vmem:[%s426 + $0xdd8] sm:$0xff]
        %v1497 = vld [vmem:[%s426 + $0xde0] sm:$0xff]
        %v1498 = vld [vmem:[%s426 + $0xde8] sm:$0xff]
        %v1499 = vld [vmem:[%s426 + $0xdf0] sm:$0xff]
        %v1500 = vld [vmem:[%s426 + $0xdf8] sm:$0xff]
        %v1501 = vld [vmem:[%s426 + $0xe00] sm:$0xff]
        %v1502 = vld [vmem:[%s426 + $0xe08] sm:$0xff]
        %v1503 = vld [vmem:[%s426 + $0xe10] sm:$0xff]
        %v1504 = vld [vmem:[%s426 + $0xe18] sm:$0xff]
        %v1505 = vld [vmem:[%s426 + $0xe20] sm:$0xff]
        %v1506 = vld [vmem:[%s426 + $0xe28] sm:$0xff]
        %v1507 = vld [vmem:[%s426 + $0xe30] sm:$0xff]
        %v1508 = vld [vmem:[%s426 + $0xe38] sm:$0xff]
        %v1509 = vld [vmem:[%s426 + $0xe40] sm:$0xff]
        %v1510 = vld [vmem:[%s426 + $0xe48] sm:$0xff]
        %v1511 = vld [vmem:[%s426 + $0xe50] sm:$0xff]
        %v1512 = vld [vmem:[%s426 + $0xe58] sm:$0xff]
        %v1513 = vld [vmem:[%s426 + $0xe60] sm:$0xff]
        %v1514 = vld [vmem:[%s426 + $0xe68] sm:$0xff]
        %v1515 = vld [vmem:[%s426 + $0xe70] sm:$0xff]
        %v1516 = vld [vmem:[%s426 + $0xe78] sm:$0xff]
        %v1517 = vld [vmem:[%s426 + $0xe80] sm:$0xff]
        %v1518 = vld [vmem:[%s426 + $0xe88] sm:$0xff]
        %v1519 = vld [vmem:[%s426 + $0xe90] sm:$0xff]
        %v1520 = vld [vmem:[%s426 + $0xe98] sm:$0xff]
        %v1521 = vld [vmem:[%s426 + $0xea0] sm:$0xff]
        %v1522 = vld [vmem:[%s426 + $0xea8] sm:$0xff]
        %v1523 = vld [vmem:[%s426 + $0xeb0] sm:$0xff]
        %v1524 = vld [vmem:[%s426 + $0xeb8] sm:$0xff]
        %v1525 = vld [vmem:[%s426 + $0xec0] sm:$0xff]
        %v1526 = vld [vmem:[%s426 + $0xec8] sm:$0xff]
        %v1527 = vld [vmem:[%s426 + $0xed0] sm:$0xff]
        %v1528 = vld [vmem:[%s426 + $0xed8] sm:$0xff]
        %v1529 = vld [vmem:[%s426 + $0xee0] sm:$0xff]
        %v1530 = vld [vmem:[%s426 + $0xee8] sm:$0xff]
        %v1531 = vld [vmem:[%s426 + $0xef0] sm:$0xff]
        %v1532 = vld [vmem:[%s426 + $0xef8] sm:$0xff]
        %v1533 = vld [vmem:[%s426 + $0xf00] sm:$0xff]
        %v1534 = vld [vmem:[%s426 + $0xf08] sm:$0xff]
        %v1535 = vld [vmem:[%s426 + $0xf10] sm:$0xff]
        %v1536 = vld [vmem:[%s426 + $0xf18] sm:$0xff]
        %v1537 = vld [vmem:[%s426 + $0xf20] sm:$0xff]
        %v1538 = vld [vmem:[%s426 + $0xf28] sm:$0xff]
        %v1539 = vld [vmem:[%s426 + $0xf30] sm:$0xff]
        %v1540 = vld [vmem:[%s426 + $0xf38] sm:$0xff]
        %v1541 = vld [vmem:[%s426 + $0xf40] sm:$0xff]
        %v1542 = vld [vmem:[%s426 + $0xf48] sm:$0xff]
        %v1543 = vld [vmem:[%s426 + $0xf50] sm:$0xff]
        %v1544 = vld [vmem:[%s426 + $0xf58] sm:$0xff]
        %v1545 = vld [vmem:[%s426 + $0xf60] sm:$0xff]
        %v1546 = vld [vmem:[%s426 + $0xf68] sm:$0xff]
        %v1547 = vld [vmem:[%s426 + $0xf70] sm:$0xff]
        %v1548 = vld [vmem:[%s426 + $0xf78] sm:$0xff]
        %v1549 = vld [vmem:[%s426 + $0xf80] sm:$0xff]
        %v1550 = vld [vmem:[%s426 + $0xf88] sm:$0xff]
        %v1551 = vld [vmem:[%s426 + $0xf90] sm:$0xff]
        %v1552 = vld [vmem:[%s426 + $0xf98] sm:$0xff]
        %v1553 = vld [vmem:[%s426 + $0xfa0] sm:$0xff]
        %v1554 = vld [vmem:[%s426 + $0xfa8] sm:$0xff]
        %v1555 = vld [vmem:[%s426 + $0xfb0] sm:$0xff]
        %v1556 = vld [vmem:[%s426 + $0xfb8] sm:$0xff]
        %v1557 = vld [vmem:[%s426 + $0xfc0] sm:$0xff]
        %v1558 = vld [vmem:[%s426 + $0xfc8] sm:$0xff]
        %v1559 = vld [vmem:[%s426 + $0xfd0] sm:$0xff]
        %v1560 = vld [vmem:[%s426 + $0xfd8] sm:$0xff]
        %v1561 = vld [vmem:[%s426 + $0xfe0] sm:$0xff]
        %v1562 = vld [vmem:[%s426 + $0xfe8] sm:$0xff]
        %v1563 = vld [vmem:[%s426 + $0xff0] sm:$0xff]
        %v1564 = vld [vmem:[%s426 + $0xff8] sm:$0xff]
        %v1565 = vld [vmem:[%s426 + $0x1000] sm:$0xff]
        %v1566 = vld [vmem:[%s426 + $0x1008] sm:$0xff]
        %v1567 = vld [vmem:[%s426 + $0x1010] sm:$0xff]
        %v1568 = vld [vmem:[%s426 + $0x1018] sm:$0xff]
        %v1569 = vld [vmem:[%s426 + $0x1020] sm:$0xff]
        %v1570 = vld [vmem:[%s426 + $0x1028] sm:$0xff]
        %v1571 = vld [vmem:[%s426 + $0x1030] sm:$0xff]
        %v1572 = vld [vmem:[%s426 + $0x1038] sm:$0xff]
        %v1573 = vld [vmem:[%s426 + $0x1040] sm:$0xff]
        %v1574 = vld [vmem:[%s426 + $0x1048] sm:$0xff]
        %v1575 = vld [vmem:[%s426 + $0x1050] sm:$0xff]
        %v1576 = vld [vmem:[%s426 + $0x1058] sm:$0xff]
        %v1577 = vld [vmem:[%s426 + $0x1060] sm:$0xff]
        %v1578 = vld [vmem:[%s426 + $0x1068] sm:$0xff]
        %v1579 = vld [vmem:[%s426 + $0x1070] sm:$0xff]
        %v1580 = vld [vmem:[%s426 + $0x1078] sm:$0xff]
        %v1581 = vld [vmem:[%s426 + $0x1080] sm:$0xff]
        %v1582 = vld [vmem:[%s426 + $0x1088] sm:$0xff]
        %v1583 = vld [vmem:[%s426 + $0x1090] sm:$0xff]
        %v1584 = vld [vmem:[%s426 + $0x1098] sm:$0xff]
        %v1585 = vld [vmem:[%s426 + $0x10a0] sm:$0xff]
        %v1586 = vld [vmem:[%s426 + $0x10a8] sm:$0xff]
        %v1587 = vld [vmem:[%s426 + $0x10b0] sm:$0xff]
        %v1588 = vld [vmem:[%s426 + $0x10b8] sm:$0xff]
        %v1589 = vld [vmem:[%s426 + $0x10c0] sm:$0xff]
        %v1590 = vld [vmem:[%s426 + $0x10c8] sm:$0xff]
        %v1591 = vld [vmem:[%s426 + $0x10d0] sm:$0xff]
        %v1592 = vld [vmem:[%s426 + $0x10d8] sm:$0xff]
        %v1593 = vld [vmem:[%s426 + $0x10e0] sm:$0xff]
        %v1594 = vld [vmem:[%s426 + $0x10e8] sm:$0xff]
        %v1595 = vld [vmem:[%s426 + $0x10f0] sm:$0xff]
        %v1596 = vld [vmem:[%s426 + $0x10f8] sm:$0xff]
        %v1597 = vld [vmem:[%s426 + $0x1100] sm:$0xff]
        %v1598 = vld [vmem:[%s426 + $0x1108] sm:$0xff]
        %v1599 = vld [vmem:[%s426 + $0x1110] sm:$0xff]
        %v1600 = vld [vmem:[%s426 + $0x1118] sm:$0xff]
        %v1601 = vld [vmem:[%s426 + $0x1120] sm:$0xff]
        %v1602 = vld [vmem:[%s426 + $0x1128] sm:$0xff]
        %v1603 = vld [vmem:[%s426 + $0x1130] sm:$0xff]
        %v1604 = vld [vmem:[%s426 + $0x1138] sm:$0xff]
        %v1605 = vld [vmem:[%s426 + $0x1140] sm:$0xff]
        %v1606 = vld [vmem:[%s426 + $0x1148] sm:$0xff]
        %v1607 = vld [vmem:[%s426 + $0x1150] sm:$0xff]
        %v1608 = vld [vmem:[%s426 + $0x1158] sm:$0xff]
        %v1609 = vld [vmem:[%s426 + $0x1160] sm:$0xff]
        %v1610 = vld [vmem:[%s426 + $0x1168] sm:$0xff]
        %v1611 = vld [vmem:[%s426 + $0x1170] sm:$0xff]
        %v1612 = vld [vmem:[%s426 + $0x1178] sm:$0xff]
        %v1613 = vld [vmem:[%s426 + $0x1180] sm:$0xff]
        %v1614 = vld [vmem:[%s426 + $0x1188] sm:$0xff]
        %v1615 = vld [vmem:[%s426 + $0x1190] sm:$0xff]
        %v1616 = vld [vmem:[%s426 + $0x1198] sm:$0xff]
        %v1617 = vld [vmem:[%s426 + $0x11a0] sm:$0xff]
        %v1618 = vld [vmem:[%s426 + $0x11a8] sm:$0xff]
        %v1619 = vld [vmem:[%s426 + $0x11b0] sm:$0xff]
        %v1620 = vld [vmem:[%s426 + $0x11b8] sm:$0xff]
        %v1621 = vld [vmem:[%s426 + $0x11c0] sm:$0xff]
        %v1622 = vld [vmem:[%s426 + $0x11c8] sm:$0xff]
        %v1623 = vld [vmem:[%s426 + $0x11d0] sm:$0xff]
        %v1624 = vld [vmem:[%s426 + $0x11d8] sm:$0xff]
        %v1625 = vld [vmem:[%s426 + $0x11e0] sm:$0xff]
        %v1626 = vld [vmem:[%s426 + $0x11e8] sm:$0xff]
        %v1627 = vld [vmem:[%s426 + $0x11f0] sm:$0xff]
        %v1628 = vld [vmem:[%s426 + $0x11f8] sm:$0xff]
        %v1629 = vld [vmem:[%s426 + $0x1200] sm:$0xff]
        %v1630 = vld [vmem:[%s426 + $0x1208] sm:$0xff]
        %v1631 = vld [vmem:[%s426 + $0x1210] sm:$0xff]
        %v1632 = vld [vmem:[%s426 + $0x1218] sm:$0xff]
        %v1633 = vld [vmem:[%s426 + $0x1220] sm:$0xff]
        %v1634 = vld [vmem:[%s426 + $0x1228] sm:$0xff]
        %v1635 = vld [vmem:[%s426 + $0x1230] sm:$0xff]
        %v1636 = vld [vmem:[%s426 + $0x1238] sm:$0xff]
        %v1637 = vld [vmem:[%s426 + $0x1240] sm:$0xff]
        %v1638 = vld [vmem:[%s426 + $0x1248] sm:$0xff]
        %v1639 = vld [vmem:[%s426 + $0x1250] sm:$0xff]
        %v1640 = vld [vmem:[%s426 + $0x1258] sm:$0xff]
        %v1641 = vld [vmem:[%s426 + $0x1260] sm:$0xff]
        %v1642 = vld [vmem:[%s426 + $0x1268] sm:$0xff]
        %v1643 = vld [vmem:[%s426 + $0x1270] sm:$0xff]
        %v1644 = vld [vmem:[%s426 + $0x1278] sm:$0xff]
        %v1645 = vld [vmem:[%s426 + $0x1280] sm:$0xff]
        %v1646 = vld [vmem:[%s426 + $0x1288] sm:$0xff]
        %v1647 = vld [vmem:[%s426 + $0x1290] sm:$0xff]
        %v1648 = vld [vmem:[%s426 + $0x1298] sm:$0xff]
        %v1649 = vld [vmem:[%s426 + $0x12a0] sm:$0xff]
        %v1650 = vld [vmem:[%s426 + $0x12a8] sm:$0xff]
        %v1651 = vld [vmem:[%s426 + $0x12b0] sm:$0xff]
        %v1652 = vld [vmem:[%s426 + $0x12b8] sm:$0xff]
        %v1653 = vld [vmem:[%s426 + $0x12c0] sm:$0xff]
        %v1654 = vld [vmem:[%s426 + $0x12c8] sm:$0xff]
        %v1655 = vld [vmem:[%s426 + $0x12d0] sm:$0xff]
        %v1656 = vld [vmem:[%s426 + $0x12d8] sm:$0xff]
        %v1657 = vld [vmem:[%s426 + $0x12e0] sm:$0xff]
        %v1658 = vld [vmem:[%s426 + $0x12e8] sm:$0xff]
        %v1659 = vld [vmem:[%s426 + $0x12f0] sm:$0xff]
        %v1660 = vld [vmem:[%s426 + $0x12f8] sm:$0xff]
        %v1661 = vld [vmem:[%s426 + $0x1300] sm:$0xff]
        %v1662 = vld [vmem:[%s426 + $0x1308] sm:$0xff]
        %v1663 = vld [vmem:[%s426 + $0x1310] sm:$0xff]
        %v1664 = vld [vmem:[%s426 + $0x1318] sm:$0xff]
        %v1665 = vld [vmem:[%s426 + $0x1320] sm:$0xff]
        %v1666 = vld [vmem:[%s426 + $0x1328] sm:$0xff]
        %v1667 = vld [vmem:[%s426 + $0x1330] sm:$0xff]
        %v1668 = vld [vmem:[%s426 + $0x1338] sm:$0xff]
        %v1669 = vld [vmem:[%s426 + $0x1340] sm:$0xff]
        %v1670 = vld [vmem:[%s426 + $0x1348] sm:$0xff]
        %v1671 = vld [vmem:[%s426 + $0x1350] sm:$0xff]
        %v1672 = vld [vmem:[%s426 + $0x1358] sm:$0xff]
        %v1673 = vld [vmem:[%s426 + $0x1360] sm:$0xff]
        %v1674 = vld [vmem:[%s426 + $0x1368] sm:$0xff]
        %v1675 = vld [vmem:[%s426 + $0x1370] sm:$0xff]
        %v1676 = vld [vmem:[%s426 + $0x1378] sm:$0xff]
        %v1677 = vld [vmem:[%s426 + $0x1380] sm:$0xff]
        %v1678 = vld [vmem:[%s426 + $0x1388] sm:$0xff]
        %v1679 = vld [vmem:[%s426 + $0x1390] sm:$0xff]
        %v1680 = vld [vmem:[%s426 + $0x1398] sm:$0xff]
        %v1681 = vld [vmem:[%s426 + $0x13a0] sm:$0xff]
        %v1682 = vld [vmem:[%s426 + $0x13a8] sm:$0xff]
        %v1683 = vld [vmem:[%s426 + $0x13b0] sm:$0xff]
        %v1684 = vld [vmem:[%s426 + $0x13b8] sm:$0xff]
        %v1685 = vld [vmem:[%s426 + $0x13c0] sm:$0xff]
        %v1686 = vld [vmem:[%s426 + $0x13c8] sm:$0xff]
        %v1687 = vld [vmem:[%s426 + $0x13d0] sm:$0xff]
        %v1688 = vld [vmem:[%s426 + $0x13d8] sm:$0xff]
        %v1689 = vld [vmem:[%s426 + $0x13e0] sm:$0xff]
        %v1690 = vld [vmem:[%s426 + $0x13e8] sm:$0xff]
        %v1691 = vld [vmem:[%s426 + $0x13f0] sm:$0xff]
        %v1692 = vld [vmem:[%s426 + $0x13f8] sm:$0xff]
        %v1693 = vld [vmem:[%s426 + $0x1400] sm:$0xff]
        %v1694 = vld [vmem:[%s426 + $0x1408] sm:$0xff]
        %v1695 = vld [vmem:[%s426 + $0x1410] sm:$0xff]
        %v1696 = vld [vmem:[%s426 + $0x1418] sm:$0xff]
        %v1697 = vld [vmem:[%s426 + $0x1420] sm:$0xff]
        %v1698 = vld [vmem:[%s426 + $0x1428] sm:$0xff]
        %v1699 = vld [vmem:[%s426 + $0x1430] sm:$0xff]
        %v1700 = vld [vmem:[%s426 + $0x1438] sm:$0xff]
        %v1701 = vld [vmem:[%s426 + $0x1440] sm:$0xff]
        %v1702 = vld [vmem:[%s426 + $0x1448] sm:$0xff]
        %v1703 = vld [vmem:[%s426 + $0x1450] sm:$0xff]
        %v1704 = vld [vmem:[%s426 + $0x1458] sm:$0xff]
        %v1705 = vld [vmem:[%s426 + $0x1460] sm:$0xff]
        %v1706 = vld [vmem:[%s426 + $0x1468] sm:$0xff]
        %v1707 = vld [vmem:[%s426 + $0x1470] sm:$0xff]
        %v1708 = vld [vmem:[%s426 + $0x1478] sm:$0xff]
        %v1709 = vld [vmem:[%s426 + $0x1480] sm:$0xff]
        %v1710 = vld [vmem:[%s426 + $0x1488] sm:$0xff]
        %v1711 = vld [vmem:[%s426 + $0x1490] sm:$0xff]
        %v1712 = vld [vmem:[%s426 + $0x1498] sm:$0xff]
        %v1713 = vld [vmem:[%s426 + $0x14a0] sm:$0xff]
        %v1714 = vld [vmem:[%s426 + $0x14a8] sm:$0xff]
        %v1715 = vld [vmem:[%s426 + $0x14b0] sm:$0xff]
        %v1716 = vld [vmem:[%s426 + $0x14b8] sm:$0xff]
        %v1717 = vld [vmem:[%s426 + $0x14c0] sm:$0xff]
        %v1718 = vld [vmem:[%s426 + $0x14c8] sm:$0xff]
        %v1719 = vld [vmem:[%s426 + $0x14d0] sm:$0xff]
        %v1720 = vld [vmem:[%s426 + $0x14d8] sm:$0xff]
        %v1721 = vld [vmem:[%s426 + $0x14e0] sm:$0xff]
        %v1722 = vld [vmem:[%s426 + $0x14e8] sm:$0xff]
        %v1723 = vld [vmem:[%s426 + $0x14f0] sm:$0xff]
        %v1724 = vld [vmem:[%s426 + $0x14f8] sm:$0xff]
        %v1725 = vld [vmem:[%s426 + $0x1500] sm:$0xff]
        %v1726 = vld [vmem:[%s426 + $0x1508] sm:$0xff]
        %v1727 = vld [vmem:[%s426 + $0x1510] sm:$0xff]
        %v1728 = vld [vmem:[%s426 + $0x1518] sm:$0xff]
        %v1729 = vld [vmem:[%s426 + $0x1520] sm:$0xff]
        %v1730 = vld [vmem:[%s426 + $0x1528] sm:$0xff]
        %v1731 = vld [vmem:[%s426 + $0x1530] sm:$0xff]
        %v1732 = vld [vmem:[%s426 + $0x1538] sm:$0xff]
        %v1733 = vld [vmem:[%s426 + $0x1540] sm:$0xff]
        %v1734 = vld [vmem:[%s426 + $0x1548] sm:$0xff]
        %v1735 = vld [vmem:[%s426 + $0x1550] sm:$0xff]
        %v1736 = vld [vmem:[%s426 + $0x1558] sm:$0xff]
        %v1737 = vld [vmem:[%s426 + $0x1560] sm:$0xff]
        %v1738 = vld [vmem:[%s426 + $0x1568] sm:$0xff]
        %v1739 = vld [vmem:[%s426 + $0x1570] sm:$0xff]
        %v1740 = vld [vmem:[%s426 + $0x1578] sm:$0xff]
        %v1741 = vld [vmem:[%s426 + $0x1580] sm:$0xff]
        %v1742 = vld [vmem:[%s426 + $0x1588] sm:$0xff]
        %v1743 = vld [vmem:[%s426 + $0x1590] sm:$0xff]
        %v1744 = vld [vmem:[%s426 + $0x1598] sm:$0xff]
        %v1745 = vld [vmem:[%s426 + $0x15a0] sm:$0xff]
        %v1746 = vld [vmem:[%s426 + $0x15a8] sm:$0xff]
        %v1747 = vld [vmem:[%s426 + $0x15b0] sm:$0xff]
        %v1748 = vld [vmem:[%s426 + $0x15b8] sm:$0xff]
        %v1749 = vld [vmem:[%s426 + $0x15c0] sm:$0xff]
        %v1750 = vld [vmem:[%s426 + $0x15c8] sm:$0xff]
        %v1751 = vld [vmem:[%s426 + $0x15d0] sm:$0xff]
        %v1752 = vld [vmem:[%s426 + $0x15d8] sm:$0xff]
        %v1753 = vld [vmem:[%s426 + $0x15e0] sm:$0xff]
        %v1754 = vld [vmem:[%s426 + $0x15e8] sm:$0xff]
        %v1755 = vld [vmem:[%s426 + $0x15f0] sm:$0xff]
        %v1756 = vld [vmem:[%s426 + $0x15f8] sm:$0xff]
        %v1757 = vld [vmem:[%s426 + $0x1600] sm:$0xff]
        %v1758 = vld [vmem:[%s426 + $0x1608] sm:$0xff]
        %v1759 = vld [vmem:[%s426 + $0x1610] sm:$0xff]
        %v1760 = vld [vmem:[%s426 + $0x1618] sm:$0xff]
        %v1761 = vld [vmem:[%s426 + $0x1620] sm:$0xff]
        %v1762 = vld [vmem:[%s426 + $0x1628] sm:$0xff]
        %v1763 = vld [vmem:[%s426 + $0x1630] sm:$0xff]
        %v1764 = vld [vmem:[%s426 + $0x1638] sm:$0xff]
        %v1765 = vld [vmem:[%s426 + $0x1640] sm:$0xff]
        %v1766 = vld [vmem:[%s426 + $0x1648] sm:$0xff]
        %v1767 = vld [vmem:[%s426 + $0x1650] sm:$0xff]
        %v1768 = vld [vmem:[%s426 + $0x1658] sm:$0xff]
        %v1769 = vld [vmem:[%s426 + $0x1660] sm:$0xff]
        %v1770 = vld [vmem:[%s426 + $0x1668] sm:$0xff]
        %v1771 = vld [vmem:[%s426 + $0x1670] sm:$0xff]
        %v1772 = vld [vmem:[%s426 + $0x1678] sm:$0xff]
        %v1773 = vld [vmem:[%s426 + $0x1680] sm:$0xff]
        %v1774 = vld [vmem:[%s426 + $0x1688] sm:$0xff]
        %v1775 = vld [vmem:[%s426 + $0x1690] sm:$0xff]
        %v1776 = vld [vmem:[%s426 + $0x1698] sm:$0xff]
        %v1777 = vld [vmem:[%s426 + $0x16a0] sm:$0xff]
        %v1778 = vld [vmem:[%s426 + $0x16a8] sm:$0xff]
        %v1779 = vld [vmem:[%s426 + $0x16b0] sm:$0xff]
        %v1780 = vld [vmem:[%s426 + $0x16b8] sm:$0xff]
        %v1781 = vld [vmem:[%s426 + $0x16c0] sm:$0xff]
        %v1782 = vld [vmem:[%s426 + $0x16c8] sm:$0xff]
        %v1783 = vld [vmem:[%s426 + $0x16d0] sm:$0xff]
        %v1784 = vld [vmem:[%s426 + $0x16d8] sm:$0xff]
        %v1785 = vld [vmem:[%s426 + $0x16e0] sm:$0xff]
        %v1786 = vld [vmem:[%s426 + $0x16e8] sm:$0xff]
        %v1787 = vld [vmem:[%s426 + $0x16f0] sm:$0xff]
        %v1788 = vld [vmem:[%s426 + $0x16f8] sm:$0xff]
        %v1789 = vld [vmem:[%s426 + $0x1700] sm:$0xff]
        %v1790 = vld [vmem:[%s426 + $0x1708] sm:$0xff]
        %v1791 = vld [vmem:[%s426 + $0x1710] sm:$0xff]
        %v1792 = vld [vmem:[%s426 + $0x1718] sm:$0xff]
        %v1793 = vld [vmem:[%s426 + $0x1720] sm:$0xff]
        %v1794 = vld [vmem:[%s426 + $0x1728] sm:$0xff]
        %v1795 = vld [vmem:[%s426 + $0x1730] sm:$0xff]
        %v1796 = vld [vmem:[%s426 + $0x1738] sm:$0xff]
        %v1797 = vld [vmem:[%s426 + $0x1740] sm:$0xff]
        %v1798 = vld [vmem:[%s426 + $0x1748] sm:$0xff]
        %v1799 = vld [vmem:[%s426 + $0x1750] sm:$0xff]
        %v1800 = vld [vmem:[%s426 + $0x1758] sm:$0xff]
        %v1801 = vld [vmem:[%s426 + $0x1760] sm:$0xff]
        %v1802 = vld [vmem:[%s426 + $0x1768] sm:$0xff]
        %v1803 = vld [vmem:[%s426 + $0x1770] sm:$0xff]
        %v1804 = vld [vmem:[%s426 + $0x1778] sm:$0xff]
        %v1805 = vld [vmem:[%s426 + $0x1780] sm:$0xff]
        %v1806 = vld [vmem:[%s426 + $0x1788] sm:$0xff]
        %v1807 = vld [vmem:[%s426 + $0x1790] sm:$0xff]
        %v1808 = vld [vmem:[%s426 + $0x1798] sm:$0xff]
        %v1809 = vld [vmem:[%s426 + $0x17a0] sm:$0xff]
        %v1810 = vld [vmem:[%s426 + $0x17a8] sm:$0xff]
        %v1811 = vld [vmem:[%s426 + $0x17b0] sm:$0xff]
        %v1812 = vld [vmem:[%s426 + $0x17b8] sm:$0xff]
        %v1813 = vld [vmem:[%s426 + $0x17c0] sm:$0xff]
        %v1814 = vld [vmem:[%s426 + $0x17c8] sm:$0xff]
        %v1815 = vld [vmem:[%s426 + $0x17d0] sm:$0xff]
        %v1816 = vld [vmem:[%s426 + $0x17d8] sm:$0xff]
        %v1817 = vld [vmem:[%s426 + $0x17e0] sm:$0xff]
        %v1818 = vld [vmem:[%s426 + $0x17e8] sm:$0xff]
        %v1819 = vld [vmem:[%s426 + $0x17f0] sm:$0xff]
        %v1820 = vld [vmem:[%s426 + $0x17f8] sm:$0xff]
        %v1821 = vld [vmem:[%s426 + $0x1800] sm:$0xff]
        %v1822 = vld [vmem:[%s426 + $0x1808] sm:$0xff]
        %v1823 = vld [vmem:[%s426 + $0x1810] sm:$0xff]
        %v1824 = vld [vmem:[%s426 + $0x1818] sm:$0xff]
        %v1825 = vld [vmem:[%s426 + $0x1820] sm:$0xff]
        %v1826 = vld [vmem:[%s426 + $0x1828] sm:$0xff]
        %v1827 = vld [vmem:[%s426 + $0x1830] sm:$0xff]
        %v1828 = vld [vmem:[%s426 + $0x1838] sm:$0xff]
        %v1829 = vld [vmem:[%s426 + $0x1840] sm:$0xff]
        %v1830 = vld [vmem:[%s426 + $0x1848] sm:$0xff]
        %v1831 = vld [vmem:[%s426 + $0x1850] sm:$0xff]
        %v1832 = vld [vmem:[%s426 + $0x1858] sm:$0xff]
        %v1833 = vld [vmem:[%s426 + $0x1860] sm:$0xff]
        %v1834 = vld [vmem:[%s426 + $0x1868] sm:$0xff]
        %v1835 = vld [vmem:[%s426 + $0x1870] sm:$0xff]
        %v1836 = vld [vmem:[%s426 + $0x1878] sm:$0xff]
        %v1837 = vld [vmem:[%s426 + $0x1880] sm:$0xff]
        %v1838 = vld [vmem:[%s426 + $0x1888] sm:$0xff]
        %v1839 = vld [vmem:[%s426 + $0x1890] sm:$0xff]
        %v1840 = vld [vmem:[%s426 + $0x1898] sm:$0xff]
        %v1841 = vld [vmem:[%s426 + $0x18a0] sm:$0xff]
        %v1842 = vld [vmem:[%s426 + $0x18a8] sm:$0xff]
        %v1843 = vld [vmem:[%s426 + $0x18b0] sm:$0xff]
        %v1844 = vld [vmem:[%s426 + $0x18b8] sm:$0xff]
        %v1845 = vld [vmem:[%s426 + $0x18c0] sm:$0xff]
        %v1846 = vld [vmem:[%s426 + $0x18c8] sm:$0xff]
        %v1847 = vld [vmem:[%s426 + $0x18d0] sm:$0xff]
        %v1848 = vld [vmem:[%s426 + $0x18d8] sm:$0xff]
        %v1849 = vld [vmem:[%s426 + $0x18e0] sm:$0xff]
        %v1850 = vld [vmem:[%s426 + $0x18e8] sm:$0xff]
        %v1851 = vld [vmem:[%s426 + $0x18f0] sm:$0xff]
        %v1852 = vld [vmem:[%s426 + $0x18f8] sm:$0xff]
        %v1853 = vld [vmem:[%s426 + $0x1900] sm:$0xff]
        %v1854 = vld [vmem:[%s426 + $0x1908] sm:$0xff]
        %v1855 = vld [vmem:[%s426 + $0x1910] sm:$0xff]
        %v1856 = vld [vmem:[%s426 + $0x1918] sm:$0xff]
        %v1857 = vld [vmem:[%s426 + $0x1920] sm:$0xff]
        %v1858 = vld [vmem:[%s426 + $0x1928] sm:$0xff]
        %v1859 = vld [vmem:[%s426 + $0x1930] sm:$0xff]
        %v1860 = vld [vmem:[%s426 + $0x1938] sm:$0xff]
        %v1861 = vld [vmem:[%s426 + $0x1940] sm:$0xff]
        %v1862 = vld [vmem:[%s426 + $0x1948] sm:$0xff]
        %v1863 = vld [vmem:[%s426 + $0x1950] sm:$0xff]
        %v1864 = vld [vmem:[%s426 + $0x1958] sm:$0xff]
        %v1865 = vld [vmem:[%s426 + $0x1960] sm:$0xff]
        %v1866 = vld [vmem:[%s426 + $0x1968] sm:$0xff]
        %v1867 = vld [vmem:[%s426 + $0x1970] sm:$0xff]
        %v1868 = vld [vmem:[%s426 + $0x1978] sm:$0xff]
        %v1869 = vld [vmem:[%s426 + $0x1980] sm:$0xff]
        %v1870 = vld [vmem:[%s426 + $0x1988] sm:$0xff]
        %v1871 = vld [vmem:[%s426 + $0x1990] sm:$0xff]
        %v1872 = vld [vmem:[%s426 + $0x1998] sm:$0xff]
        %v1873 = vld [vmem:[%s426 + $0x19a0] sm:$0xff]
        %v1874 = vld [vmem:[%s426 + $0x19a8] sm:$0xff]
        %v1875 = vld [vmem:[%s426 + $0x19b0] sm:$0xff]
        %v1876 = vld [vmem:[%s426 + $0x19b8] sm:$0xff]
        %v1877 = vld [vmem:[%s426 + $0x19c0] sm:$0xff]
        %v1878 = vld [vmem:[%s426 + $0x19c8] sm:$0xff]
        %v1879 = vld [vmem:[%s426 + $0x19d0] sm:$0xff]
        %v1880 = vld [vmem:[%s426 + $0x19d8] sm:$0xff]
        %v1881 = vld [vmem:[%s426 + $0x19e0] sm:$0xff]
        %v1882 = vld [vmem:[%s426 + $0x19e8] sm:$0xff]
        %v1883 = vld [vmem:[%s426 + $0x19f0] sm:$0xff]
        %v1884 = vld [vmem:[%s426 + $0x19f8] sm:$0xff]
        %v1885 = vld [vmem:[%s426 + $0x1a00] sm:$0xff]
        %v1886 = vld [vmem:[%s426 + $0x1a08] sm:$0xff]
        %v1887 = vld [vmem:[%s426 + $0x1a10] sm:$0xff]
        %v1888 = vld [vmem:[%s426 + $0x1a18] sm:$0xff]
        %v1889 = vld [vmem:[%s426 + $0x1a20] sm:$0xff]
        %v1890 = vld [vmem:[%s426 + $0x1a28] sm:$0xff]
        %v1891 = vld [vmem:[%s426 + $0x1a30] sm:$0xff]
        %v1892 = vld [vmem:[%s426 + $0x1a38] sm:$0xff]
        %v1893 = vld [vmem:[%s426 + $0x1a40] sm:$0xff]
        %v1894 = vld [vmem:[%s426 + $0x1a48] sm:$0xff]
        %v1895 = vld [vmem:[%s426 + $0x1a50] sm:$0xff]
        %v1896 = vld [vmem:[%s426 + $0x1a58] sm:$0xff]
        %v1897 = vld [vmem:[%s426 + $0x1a60] sm:$0xff]
        %v1898 = vld [vmem:[%s426 + $0x1a68] sm:$0xff]
        %v1899 = vld [vmem:[%s426 + $0x1a70] sm:$0xff]
        %v1900 = vld [vmem:[%s426 + $0x1a78] sm:$0xff]
        %v1901 = vld [vmem:[%s426 + $0x1a80] sm:$0xff]
        %v1902 = vld [vmem:[%s426 + $0x1a88] sm:$0xff]
        %v1903 = vld [vmem:[%s426 + $0x1a90] sm:$0xff]
        %v1904 = vld [vmem:[%s426 + $0x1a98] sm:$0xff]
        %v1905 = vld [vmem:[%s426 + $0x1aa0] sm:$0xff]
        %v1906 = vld [vmem:[%s426 + $0x1aa8] sm:$0xff]
        %v1907 = vld [vmem:[%s426 + $0x1ab0] sm:$0xff]
        %v1908 = vld [vmem:[%s426 + $0x1ab8] sm:$0xff]
        %v1909 = vld [vmem:[%s426 + $0x1ac0] sm:$0xff]
        %v1910 = vld [vmem:[%s426 + $0x1ac8] sm:$0xff]
        %v1911 = vld [vmem:[%s426 + $0x1ad0] sm:$0xff]
        %v1912 = vld [vmem:[%s426 + $0x1ad8] sm:$0xff]
        %v1913 = vld [vmem:[%s426 + $0x1ae0] sm:$0xff]
        %v1914 = vld [vmem:[%s426 + $0x1ae8] sm:$0xff]
        %v1915 = vld [vmem:[%s426 + $0x1af0] sm:$0xff]
        %v1916 = vld [vmem:[%s426 + $0x1af8] sm:$0xff]
        %v1917 = vld [vmem:[%s426 + $0x1b00] sm:$0xff]
        %v1918 = vld [vmem:[%s426 + $0x1b08] sm:$0xff]
        %v1919 = vld [vmem:[%s426 + $0x1b10] sm:$0xff]
        %v1920 = vld [vmem:[%s426 + $0x1b18] sm:$0xff]
        %v1921 = vld [vmem:[%s426 + $0x1b20] sm:$0xff]
        %v1922 = vld [vmem:[%s426 + $0x1b28] sm:$0xff]
        %v1923 = vld [vmem:[%s426 + $0x1b30] sm:$0xff]
        %v1924 = vld [vmem:[%s426 + $0x1b38] sm:$0xff]
        %v1925 = vld [vmem:[%s426 + $0x1b40] sm:$0xff]
        %v1926 = vld [vmem:[%s426 + $0x1b48] sm:$0xff]
        %v1927 = vld [vmem:[%s426 + $0x1b50] sm:$0xff]
        %v1928 = vld [vmem:[%s426 + $0x1b58] sm:$0xff]
        %v1929 = vld [vmem:[%s426 + $0x1b60] sm:$0xff]
        %v1930 = vld [vmem:[%s426 + $0x1b68] sm:$0xff]
        %v1931 = vld [vmem:[%s426 + $0x1b70] sm:$0xff]
        %v1932 = vld [vmem:[%s426 + $0x1b78] sm:$0xff]
        %v1933 = vld [vmem:[%s426 + $0x1b80] sm:$0xff]
        %v1934 = vld [vmem:[%s426 + $0x1b88] sm:$0xff]
        %v1935 = vld [vmem:[%s426 + $0x1b90] sm:$0xff]
        %v1936 = vld [vmem:[%s426 + $0x1b98] sm:$0xff]
        %v1937 = vld [vmem:[%s426 + $0x1ba0] sm:$0xff]
        %v1938 = vld [vmem:[%s426 + $0x1ba8] sm:$0xff]
        %v1939 = vld [vmem:[%s426 + $0x1bb0] sm:$0xff]
        %v1940 = vld [vmem:[%s426 + $0x1bb8] sm:$0xff]
        %v1941 = vld [vmem:[%s426 + $0x1bc0] sm:$0xff]
        %v1942 = vld [vmem:[%s426 + $0x1bc8] sm:$0xff]
        %v1943 = vld [vmem:[%s426 + $0x1bd0] sm:$0xff]
        %v1944 = vld [vmem:[%s426 + $0x1bd8] sm:$0xff]
        %v1945 = vld [vmem:[%s426 + $0x1be0] sm:$0xff]
        %v1946 = vld [vmem:[%s426 + $0x1be8] sm:$0xff]
        %v1947 = vld [vmem:[%s426 + $0x1bf0] sm:$0xff]
        %v1948 = vld [vmem:[%s426 + $0x1bf8] sm:$0xff]
        %v1949 = vld [vmem:[%s426 + $0x1c00] sm:$0xff]
        %v1950 = vld [vmem:[%s426 + $0x1c08] sm:$0xff]
        %v1951 = vld [vmem:[%s426 + $0x1c10] sm:$0xff]
        %v1952 = vld [vmem:[%s426 + $0x1c18] sm:$0xff]
        %v1953 = vld [vmem:[%s426 + $0x1c20] sm:$0xff]
        %v1954 = vld [vmem:[%s426 + $0x1c28] sm:$0xff]
        %v1955 = vld [vmem:[%s426 + $0x1c30] sm:$0xff]
        %v1956 = vld [vmem:[%s426 + $0x1c38] sm:$0xff]
        %v1957 = vld [vmem:[%s426 + $0x1c40] sm:$0xff]
        %v1958 = vld [vmem:[%s426 + $0x1c48] sm:$0xff]
        %v1959 = vld [vmem:[%s426 + $0x1c50] sm:$0xff]
        %v1960 = vld [vmem:[%s426 + $0x1c58] sm:$0xff]
        %v1961 = vld [vmem:[%s426 + $0x1c60] sm:$0xff]
        %v1962 = vld [vmem:[%s426 + $0x1c68] sm:$0xff]
        %v1963 = vld [vmem:[%s426 + $0x1c70] sm:$0xff]
        %v1964 = vld [vmem:[%s426 + $0x1c78] sm:$0xff]
        %v1965 = vld [vmem:[%s426 + $0x1c80] sm:$0xff]
        %v1966 = vld [vmem:[%s426 + $0x1c88] sm:$0xff]
        %v1967 = vld [vmem:[%s426 + $0x1c90] sm:$0xff]
        %v1968 = vld [vmem:[%s426 + $0x1c98] sm:$0xff]
        %v1969 = vld [vmem:[%s426 + $0x1ca0] sm:$0xff]
        %v1970 = vld [vmem:[%s426 + $0x1ca8] sm:$0xff]
        %v1971 = vld [vmem:[%s426 + $0x1cb0] sm:$0xff]
        %v1972 = vld [vmem:[%s426 + $0x1cb8] sm:$0xff]
        %v1973 = vld [vmem:[%s426 + $0x1cc0] sm:$0xff]
        %v1974 = vld [vmem:[%s426 + $0x1cc8] sm:$0xff]
        %v1975 = vld [vmem:[%s426 + $0x1cd0] sm:$0xff]
        %v1976 = vld [vmem:[%s426 + $0x1cd8] sm:$0xff]
        %v1977 = vld [vmem:[%s426 + $0x1ce0] sm:$0xff]
        %v1978 = vld [vmem:[%s426 + $0x1ce8] sm:$0xff]
        %v1979 = vld [vmem:[%s426 + $0x1cf0] sm:$0xff]
        %v1980 = vld [vmem:[%s426 + $0x1cf8] sm:$0xff]
        %v1981 = vld [vmem:[%s426 + $0x1d00] sm:$0xff]
        %v1982 = vld [vmem:[%s426 + $0x1d08] sm:$0xff]
        %v1983 = vld [vmem:[%s426 + $0x1d10] sm:$0xff]
        %v1984 = vld [vmem:[%s426 + $0x1d18] sm:$0xff]
        %v1985 = vld [vmem:[%s426 + $0x1d20] sm:$0xff]
        %v1986 = vld [vmem:[%s426 + $0x1d28] sm:$0xff]
        %v1987 = vld [vmem:[%s426 + $0x1d30] sm:$0xff]
        %v1988 = vld [vmem:[%s426 + $0x1d38] sm:$0xff]
        %v1989 = vld [vmem:[%s426 + $0x1d40] sm:$0xff]
        %v1990 = vld [vmem:[%s426 + $0x1d48] sm:$0xff]
        %v1991 = vld [vmem:[%s426 + $0x1d50] sm:$0xff]
        %v1992 = vld [vmem:[%s426 + $0x1d58] sm:$0xff]
        %v1993 = vld [vmem:[%s426 + $0x1d60] sm:$0xff]
        %v1994 = vld [vmem:[%s426 + $0x1d68] sm:$0xff]
        %v1995 = vld [vmem:[%s426 + $0x1d70] sm:$0xff]
        %v1996 = vld [vmem:[%s426 + $0x1d78] sm:$0xff]
        %v1997 = vld [vmem:[%s426 + $0x1d80] sm:$0xff]
        %v1998 = vld [vmem:[%s426 + $0x1d88] sm:$0xff]
        %v1999 = vld [vmem:[%s426 + $0x1d90] sm:$0xff]
        %v2000 = vld [vmem:[%s426 + $0x1d98] sm:$0xff]
        %v2001 = vld [vmem:[%s426 + $0x1da0] sm:$0xff]
        %v2002 = vld [vmem:[%s426 + $0x1da8] sm:$0xff]
        %v2003 = vld [vmem:[%s426 + $0x1db0] sm:$0xff]
        %v2004 = vld [vmem:[%s426 + $0x1db8] sm:$0xff]
        %v2005 = vld [vmem:[%s426 + $0x1dc0] sm:$0xff]
        %v2006 = vld [vmem:[%s426 + $0x1dc8] sm:$0xff]
        %v2007 = vld [vmem:[%s426 + $0x1dd0] sm:$0xff]
        %v2008 = vld [vmem:[%s426 + $0x1dd8] sm:$0xff]
        %v2009 = vld [vmem:[%s426 + $0x1de0] sm:$0xff]
        %v2010 = vld [vmem:[%s426 + $0x1de8] sm:$0xff]
        %v2011 = vld [vmem:[%s426 + $0x1df0] sm:$0xff]
        %v2012 = vld [vmem:[%s426 + $0x1df8] sm:$0xff]
        %v2013 = vld [vmem:[%s426 + $0x1e00] sm:$0xff]
        %v2014 = vld [vmem:[%s426 + $0x1e08] sm:$0xff]
        %v2015 = vld [vmem:[%s426 + $0x1e10] sm:$0xff]
        %v2016 = vld [vmem:[%s426 + $0x1e18] sm:$0xff]
        %v2017 = vld [vmem:[%s426 + $0x1e20] sm:$0xff]
        %v2018 = vld [vmem:[%s426 + $0x1e28] sm:$0xff]
        %v2019 = vld [vmem:[%s426 + $0x1e30] sm:$0xff]
        %v2020 = vld [vmem:[%s426 + $0x1e38] sm:$0xff]
        %v2021 = vld [vmem:[%s426 + $0x1e40] sm:$0xff]
        %v2022 = vld [vmem:[%s426 + $0x1e48] sm:$0xff]
        %v2023 = vld [vmem:[%s426 + $0x1e50] sm:$0xff]
        %v2024 = vld [vmem:[%s426 + $0x1e58] sm:$0xff]
        %v2025 = vld [vmem:[%s426 + $0x1e60] sm:$0xff]
        %v2026 = vld [vmem:[%s426 + $0x1e68] sm:$0xff]
        %v2027 = vld [vmem:[%s426 + $0x1e70] sm:$0xff]
        %v2028 = vld [vmem:[%s426 + $0x1e78] sm:$0xff]
        %v2029 = vld [vmem:[%s426 + $0x1e80] sm:$0xff]
        %v2030 = vld [vmem:[%s426 + $0x1e88] sm:$0xff]
        %v2031 = vld [vmem:[%s426 + $0x1e90] sm:$0xff]
        %v2032 = vld [vmem:[%s426 + $0x1e98] sm:$0xff]
        %v2033 = vld [vmem:[%s426 + $0x1ea0] sm:$0xff]
        %v2034 = vld [vmem:[%s426 + $0x1ea8] sm:$0xff]
        %v2035 = vld [vmem:[%s426 + $0x1eb0] sm:$0xff]
        %v2036 = vld [vmem:[%s426 + $0x1eb8] sm:$0xff]
        %v2037 = vld [vmem:[%s426 + $0x1ec0] sm:$0xff]
        %v2038 = vld [vmem:[%s426 + $0x1ec8] sm:$0xff]
        %v2039 = vld [vmem:[%s426 + $0x1ed0] sm:$0xff]
        %v2040 = vld [vmem:[%s426 + $0x1ed8] sm:$0xff]
        %v2041 = vld [vmem:[%s426 + $0x1ee0] sm:$0xff]
        %v2042 = vld [vmem:[%s426 + $0x1ee8] sm:$0xff]
        %v2043 = vld [vmem:[%s426 + $0x1ef0] sm:$0xff]
        %v2044 = vld [vmem:[%s426 + $0x1ef8] sm:$0xff]
        %v2045 = vld [vmem:[%s426 + $0x1f00] sm:$0xff]
        %v2046 = vld [vmem:[%s426 + $0x1f08] sm:$0xff]
        %v2047 = vld [vmem:[%s426 + $0x1f10] sm:$0xff]
        %v2048 = vld [vmem:[%s426 + $0x1f18] sm:$0xff]
        %v2049 = vld [vmem:[%s426 + $0x1f20] sm:$0xff]
        %v2050 = vld [vmem:[%s426 + $0x1f28] sm:$0xff]
        %v2051 = vld [vmem:[%s426 + $0x1f30] sm:$0xff]
        %v2052 = vld [vmem:[%s426 + $0x1f38] sm:$0xff]
        %v2053 = vld [vmem:[%s426 + $0x1f40] sm:$0xff]
        %v2054 = vld [vmem:[%s426 + $0x1f48] sm:$0xff]
        %v2055 = vld [vmem:[%s426 + $0x1f50] sm:$0xff]
        %v2056 = vld [vmem:[%s426 + $0x1f58] sm:$0xff]
        %v2057 = vld [vmem:[%s426 + $0x1f60] sm:$0xff]
        %v2058 = vld [vmem:[%s426 + $0x1f68] sm:$0xff]
        %v2059 = vld [vmem:[%s426 + $0x1f70] sm:$0xff]
        %v2060 = vld [vmem:[%s426 + $0x1f78] sm:$0xff]
        %v2061 = vld [vmem:[%s426 + $0x1f80] sm:$0xff]
        %v2062 = vld [vmem:[%s426 + $0x1f88] sm:$0xff]
        %v2063 = vld [vmem:[%s426 + $0x1f90] sm:$0xff]
        %v2064 = vld [vmem:[%s426 + $0x1f98] sm:$0xff]
        %v2065 = vld [vmem:[%s426 + $0x1fa0] sm:$0xff]
        %v2066 = vld [vmem:[%s426 + $0x1fa8] sm:$0xff]
        %v2067 = vld [vmem:[%s426 + $0x1fb0] sm:$0xff]
        %v2068 = vld [vmem:[%s426 + $0x1fb8] sm:$0xff]
        %v2069 = vld [vmem:[%s426 + $0x1fc0] sm:$0xff]
        %v2070 = vld [vmem:[%s426 + $0x1fc8] sm:$0xff]
        %v2071 = vld [vmem:[%s426 + $0x1fd0] sm:$0xff]
        %v2072 = vld [vmem:[%s426 + $0x1fd8] sm:$0xff]
        %v2073 = vld [vmem:[%s426 + $0x1fe0] sm:$0xff]
        %v2074 = vld [vmem:[%s426 + $0x1fe8] sm:$0xff]
        %v2075 = vld [vmem:[%s426 + $0x1ff0] sm:$0xff]
        %v2076 = vld [vmem:[%s426 + $0x1ff8] sm:$0xff]
        %v2077 = vld [vmem:[%s435] sm:$0xff]
        %v2079 = vlaneseq
        %v2080 = vshrl.u32 %v2079, 7
        %v2081 = vsub.s32 0, %v2080
        %v2082 = vrot.slane %v2077, %v2081
        %v2083 = vlaneseq
        %v2084 = vshrl.u32 %v2083, 7
        %v2085 = vsub.s32 1, %v2084
        %v2086 = vrot.slane %v2077, %v2085
        %v2087 = vlaneseq
        %v2088 = vshrl.u32 %v2087, 7
        %v2089 = vsub.s32 2, %v2088
        %v2090 = vrot.slane %v2077, %v2089
        %v2091 = vlaneseq
        %v2092 = vshrl.u32 %v2091, 7
        %v2093 = vsub.s32 3, %v2092
        %v2094 = vrot.slane %v2077, %v2093
        %v2095 = vlaneseq
        %v2096 = vshrl.u32 %v2095, 7
        %v2097 = vsub.s32 4, %v2096
        %v2098 = vrot.slane %v2077, %v2097
        %v2099 = vlaneseq
        %v2100 = vshrl.u32 %v2099, 7
        %v2101 = vsub.s32 5, %v2100
        %v2102 = vrot.slane %v2077, %v2101
        %v2103 = vlaneseq
        %v2104 = vshrl.u32 %v2103, 7
        %v2105 = vsub.s32 6, %v2104
        %v2106 = vrot.slane %v2077, %v2105
        %v2107 = vlaneseq
        %v2108 = vshrl.u32 %v2107, 7
        %v2109 = vsub.s32 7, %v2108
        %v2110 = vrot.slane %v2077, %v2109
        %v3143 = vunpack.c.l.b16 %v1053
        %v3144 = vunpack.c.h.b16 %v1053
        %v3145 = vunpack.c.l.b16 %v1054
        %v3146 = vunpack.c.h.b16 %v1054
        %v3147 = vunpack.c.l.b16 %v1055
        %v3148 = vunpack.c.h.b16 %v1055
        %v3149 = vunpack.c.l.b16 %v1056
        %v3150 = vunpack.c.h.b16 %v1056
        %v3151 = vunpack.c.l.b16 %v1057
        %v3152 = vunpack.c.h.b16 %v1057
        %v3153 = vunpack.c.l.b16 %v1058
        %v3154 = vunpack.c.h.b16 %v1058
        %v3155 = vunpack.c.l.b16 %v1059
        %v3156 = vunpack.c.h.b16 %v1059
        %v3157 = vunpack.c.l.b16 %v1060
        %v3158 = vunpack.c.h.b16 %v1060
        %v3159 = vunpack.c.l.b16 %v1061
        %v3160 = vunpack.c.h.b16 %v1061
        %v3161 = vunpack.c.l.b16 %v1062
        %v3162 = vunpack.c.h.b16 %v1062
        %v3163 = vunpack.c.l.b16 %v1063
        %v3164 = vunpack.c.h.b16 %v1063
        %v3165 = vunpack.c.l.b16 %v1064
        %v3166 = vunpack.c.h.b16 %v1064
        %v3167 = vunpack.c.l.b16 %v1065
        %v3168 = vunpack.c.h.b16 %v1065
        %v3169 = vunpack.c.l.b16 %v1066
        %v3170 = vunpack.c.h.b16 %v1066
        %v3171 = vunpack.c.l.b16 %v1067
        %v3172 = vunpack.c.h.b16 %v1067
        %v3173 = vunpack.c.l.b16 %v1068
        %v3174 = vunpack.c.h.b16 %v1068
        %v3175 = vunpack.c.l.b16 %v1069
        %v3176 = vunpack.c.h.b16 %v1069
        %v3177 = vunpack.c.l.b16 %v1070
        %v3178 = vunpack.c.h.b16 %v1070
        %v3179 = vunpack.c.l.b16 %v1071
        %v3180 = vunpack.c.h.b16 %v1071
        %v3181 = vunpack.c.l.b16 %v1072
        %v3182 = vunpack.c.h.b16 %v1072
        %v3183 = vunpack.c.l.b16 %v1073
        %v3184 = vunpack.c.h.b16 %v1073
        %v3185 = vunpack.c.l.b16 %v1074
        %v3186 = vunpack.c.h.b16 %v1074
        %v3187 = vunpack.c.l.b16 %v1075
        %v3188 = vunpack.c.h.b16 %v1075
        %v3189 = vunpack.c.l.b16 %v1076
        %v3190 = vunpack.c.h.b16 %v1076
        %v3191 = vunpack.c.l.b16 %v1077
        %v3192 = vunpack.c.h.b16 %v1077
        %v3193 = vunpack.c.l.b16 %v1078
        %v3194 = vunpack.c.h.b16 %v1078
        %v3195 = vunpack.c.l.b16 %v1079
        %v3196 = vunpack.c.h.b16 %v1079
        %v3197 = vunpack.c.l.b16 %v1080
        %v3198 = vunpack.c.h.b16 %v1080
        %v3199 = vunpack.c.l.b16 %v1081
        %v3200 = vunpack.c.h.b16 %v1081
        %v3201 = vunpack.c.l.b16 %v1082
        %v3202 = vunpack.c.h.b16 %v1082
        %v3203 = vunpack.c.l.b16 %v1083
        %v3204 = vunpack.c.h.b16 %v1083
        %v3205 = vunpack.c.l.b16 %v1084
        %v3206 = vunpack.c.h.b16 %v1084
        %v3207 = vunpack.c.l.b16 %v1085
        %v3208 = vunpack.c.h.b16 %v1085
        %v3209 = vunpack.c.l.b16 %v1086
        %v3210 = vunpack.c.h.b16 %v1086
        %v3211 = vunpack.c.l.b16 %v1087
        %v3212 = vunpack.c.h.b16 %v1087
        %v3213 = vunpack.c.l.b16 %v1088
        %v3214 = vunpack.c.h.b16 %v1088
        %v3215 = vunpack.c.l.b16 %v1089
        %v3216 = vunpack.c.h.b16 %v1089
        %v3217 = vunpack.c.l.b16 %v1090
        %v3218 = vunpack.c.h.b16 %v1090
        %v3219 = vunpack.c.l.b16 %v1091
        %v3220 = vunpack.c.h.b16 %v1091
        %v3221 = vunpack.c.l.b16 %v1092
        %v3222 = vunpack.c.h.b16 %v1092
        %v3223 = vunpack.c.l.b16 %v1093
        %v3224 = vunpack.c.h.b16 %v1093
        %v3225 = vunpack.c.l.b16 %v1094
        %v3226 = vunpack.c.h.b16 %v1094
        %v3227 = vunpack.c.l.b16 %v1095
        %v3228 = vunpack.c.h.b16 %v1095
        %v3229 = vunpack.c.l.b16 %v1096
        %v3230 = vunpack.c.h.b16 %v1096
        %v3231 = vunpack.c.l.b16 %v1097
        %v3232 = vunpack.c.h.b16 %v1097
        %v3233 = vunpack.c.l.b16 %v1098
        %v3234 = vunpack.c.h.b16 %v1098
        %v3235 = vunpack.c.l.b16 %v1099
        %v3236 = vunpack.c.h.b16 %v1099
        %v3237 = vunpack.c.l.b16 %v1100
        %v3238 = vunpack.c.h.b16 %v1100
        %v3239 = vunpack.c.l.b16 %v1101
        %v3240 = vunpack.c.h.b16 %v1101
        %v3241 = vunpack.c.l.b16 %v1102
        %v3242 = vunpack.c.h.b16 %v1102
        %v3243 = vunpack.c.l.b16 %v1103
        %v3244 = vunpack.c.h.b16 %v1103
        %v3245 = vunpack.c.l.b16 %v1104
        %v3246 = vunpack.c.h.b16 %v1104
        %v3247 = vunpack.c.l.b16 %v1105
        %v3248 = vunpack.c.h.b16 %v1105
        %v3249 = vunpack.c.l.b16 %v1106
        %v3250 = vunpack.c.h.b16 %v1106
        %v3251 = vunpack.c.l.b16 %v1107
        %v3252 = vunpack.c.h.b16 %v1107
        %v3253 = vunpack.c.l.b16 %v1108
        %v3254 = vunpack.c.h.b16 %v1108
        %v3255 = vunpack.c.l.b16 %v1109
        %v3256 = vunpack.c.h.b16 %v1109
        %v3257 = vunpack.c.l.b16 %v1110
        %v3258 = vunpack.c.h.b16 %v1110
        %v3259 = vunpack.c.l.b16 %v1111
        %v3260 = vunpack.c.h.b16 %v1111
        %v3261 = vunpack.c.l.b16 %v1112
        %v3262 = vunpack.c.h.b16 %v1112
        %v3263 = vunpack.c.l.b16 %v1113
        %v3264 = vunpack.c.h.b16 %v1113
        %v3265 = vunpack.c.l.b16 %v1114
        %v3266 = vunpack.c.h.b16 %v1114
        %v3267 = vunpack.c.l.b16 %v1115
        %v3268 = vunpack.c.h.b16 %v1115
        %v3269 = vunpack.c.l.b16 %v1116
        %v3270 = vunpack.c.h.b16 %v1116
        %v3271 = vunpack.c.l.b16 %v1117
        %v3272 = vunpack.c.h.b16 %v1117
        %v3273 = vunpack.c.l.b16 %v1118
        %v3274 = vunpack.c.h.b16 %v1118
        %v3275 = vunpack.c.l.b16 %v1119
        %v3276 = vunpack.c.h.b16 %v1119
        %v3277 = vunpack.c.l.b16 %v1120
        %v3278 = vunpack.c.h.b16 %v1120
        %v3279 = vunpack.c.l.b16 %v1121
        %v3280 = vunpack.c.h.b16 %v1121
        %v3281 = vunpack.c.l.b16 %v1122
        %v3282 = vunpack.c.h.b16 %v1122
        %v3283 = vunpack.c.l.b16 %v1123
        %v3284 = vunpack.c.h.b16 %v1123
        %v3285 = vunpack.c.l.b16 %v1124
        %v3286 = vunpack.c.h.b16 %v1124
        %v3287 = vunpack.c.l.b16 %v1125
        %v3288 = vunpack.c.h.b16 %v1125
        %v3289 = vunpack.c.l.b16 %v1126
        %v3290 = vunpack.c.h.b16 %v1126
        %v3291 = vunpack.c.l.b16 %v1127
        %v3292 = vunpack.c.h.b16 %v1127
        %v3293 = vunpack.c.l.b16 %v1128
        %v3294 = vunpack.c.h.b16 %v1128
        %v3295 = vunpack.c.l.b16 %v1129
        %v3296 = vunpack.c.h.b16 %v1129
        %v3297 = vunpack.c.l.b16 %v1130
        %v3298 = vunpack.c.h.b16 %v1130
        %v3299 = vunpack.c.l.b16 %v1131
        %v3300 = vunpack.c.h.b16 %v1131
        %v3301 = vunpack.c.l.b16 %v1132
        %v3302 = vunpack.c.h.b16 %v1132
        %v3303 = vunpack.c.l.b16 %v1133
        %v3304 = vunpack.c.h.b16 %v1133
        %v3305 = vunpack.c.l.b16 %v1134
        %v3306 = vunpack.c.h.b16 %v1134
        %v3307 = vunpack.c.l.b16 %v1135
        %v3308 = vunpack.c.h.b16 %v1135
        %v3309 = vunpack.c.l.b16 %v1136
        %v3310 = vunpack.c.h.b16 %v1136
        %v3311 = vunpack.c.l.b16 %v1137
        %v3312 = vunpack.c.h.b16 %v1137
        %v3313 = vunpack.c.l.b16 %v1138
        %v3314 = vunpack.c.h.b16 %v1138
        %v3315 = vunpack.c.l.b16 %v1139
        %v3316 = vunpack.c.h.b16 %v1139
        %v3317 = vunpack.c.l.b16 %v1140
        %v3318 = vunpack.c.h.b16 %v1140
        %v3319 = vunpack.c.l.b16 %v1141
        %v3320 = vunpack.c.h.b16 %v1141
        %v3321 = vunpack.c.l.b16 %v1142
        %v3322 = vunpack.c.h.b16 %v1142
        %v3323 = vunpack.c.l.b16 %v1143
        %v3324 = vunpack.c.h.b16 %v1143
        %v3325 = vunpack.c.l.b16 %v1144
        %v3326 = vunpack.c.h.b16 %v1144
        %v3327 = vunpack.c.l.b16 %v1145
        %v3328 = vunpack.c.h.b16 %v1145
        %v3329 = vunpack.c.l.b16 %v1146
        %v3330 = vunpack.c.h.b16 %v1146
        %v3331 = vunpack.c.l.b16 %v1147
        %v3332 = vunpack.c.h.b16 %v1147
        %v3333 = vunpack.c.l.b16 %v1148
        %v3334 = vunpack.c.h.b16 %v1148
        %v3335 = vunpack.c.l.b16 %v1149
        %v3336 = vunpack.c.h.b16 %v1149
        %v3337 = vunpack.c.l.b16 %v1150
        %v3338 = vunpack.c.h.b16 %v1150
        %v3339 = vunpack.c.l.b16 %v1151
        %v3340 = vunpack.c.h.b16 %v1151
        %v3341 = vunpack.c.l.b16 %v1152
        %v3342 = vunpack.c.h.b16 %v1152
        %v3343 = vunpack.c.l.b16 %v1153
        %v3344 = vunpack.c.h.b16 %v1153
        %v3345 = vunpack.c.l.b16 %v1154
        %v3346 = vunpack.c.h.b16 %v1154
        %v3347 = vunpack.c.l.b16 %v1155
        %v3348 = vunpack.c.h.b16 %v1155
        %v3349 = vunpack.c.l.b16 %v1156
        %v3350 = vunpack.c.h.b16 %v1156
        %v3351 = vunpack.c.l.b16 %v1157
        %v3352 = vunpack.c.h.b16 %v1157
        %v3353 = vunpack.c.l.b16 %v1158
        %v3354 = vunpack.c.h.b16 %v1158
        %v3355 = vunpack.c.l.b16 %v1159
        %v3356 = vunpack.c.h.b16 %v1159
        %v3357 = vunpack.c.l.b16 %v1160
        %v3358 = vunpack.c.h.b16 %v1160
        %v3359 = vunpack.c.l.b16 %v1161
        %v3360 = vunpack.c.h.b16 %v1161
        %v3361 = vunpack.c.l.b16 %v1162
        %v3362 = vunpack.c.h.b16 %v1162
        %v3363 = vunpack.c.l.b16 %v1163
        %v3364 = vunpack.c.h.b16 %v1163
        %v3365 = vunpack.c.l.b16 %v1164
        %v3366 = vunpack.c.h.b16 %v1164
        %v3367 = vunpack.c.l.b16 %v1165
        %v3368 = vunpack.c.h.b16 %v1165
        %v3369 = vunpack.c.l.b16 %v1166
        %v3370 = vunpack.c.h.b16 %v1166
        %v3371 = vunpack.c.l.b16 %v1167
        %v3372 = vunpack.c.h.b16 %v1167
        %v3373 = vunpack.c.l.b16 %v1168
        %v3374 = vunpack.c.h.b16 %v1168
        %v3375 = vunpack.c.l.b16 %v1169
        %v3376 = vunpack.c.h.b16 %v1169
        %v3377 = vunpack.c.l.b16 %v1170
        %v3378 = vunpack.c.h.b16 %v1170
        %v3379 = vunpack.c.l.b16 %v1171
        %v3380 = vunpack.c.h.b16 %v1171
        %v3381 = vunpack.c.l.b16 %v1172
        %v3382 = vunpack.c.h.b16 %v1172
        %v3383 = vunpack.c.l.b16 %v1173
        %v3384 = vunpack.c.h.b16 %v1173
        %v3385 = vunpack.c.l.b16 %v1174
        %v3386 = vunpack.c.h.b16 %v1174
        %v3387 = vunpack.c.l.b16 %v1175
        %v3388 = vunpack.c.h.b16 %v1175
        %v3389 = vunpack.c.l.b16 %v1176
        %v3390 = vunpack.c.h.b16 %v1176
        %v3391 = vunpack.c.l.b16 %v1177
        %v3392 = vunpack.c.h.b16 %v1177
        %v3393 = vunpack.c.l.b16 %v1178
        %v3394 = vunpack.c.h.b16 %v1178
        %v3395 = vunpack.c.l.b16 %v1179
        %v3396 = vunpack.c.h.b16 %v1179
        %v3397 = vunpack.c.l.b16 %v1180
        %v3398 = vunpack.c.h.b16 %v1180
        %v3399 = vunpack.c.l.b16 %v1181
        %v3400 = vunpack.c.h.b16 %v1181
        %v3401 = vunpack.c.l.b16 %v1182
        %v3402 = vunpack.c.h.b16 %v1182
        %v3403 = vunpack.c.l.b16 %v1183
        %v3404 = vunpack.c.h.b16 %v1183
        %v3405 = vunpack.c.l.b16 %v1184
        %v3406 = vunpack.c.h.b16 %v1184
        %v3407 = vunpack.c.l.b16 %v1185
        %v3408 = vunpack.c.h.b16 %v1185
        %v3409 = vunpack.c.l.b16 %v1186
        %v3410 = vunpack.c.h.b16 %v1186
        %v3411 = vunpack.c.l.b16 %v1187
        %v3412 = vunpack.c.h.b16 %v1187
        %v3413 = vunpack.c.l.b16 %v1188
        %v3414 = vunpack.c.h.b16 %v1188
        %v3415 = vunpack.c.l.b16 %v1189
        %v3416 = vunpack.c.h.b16 %v1189
        %v3417 = vunpack.c.l.b16 %v1190
        %v3418 = vunpack.c.h.b16 %v1190
        %v3419 = vunpack.c.l.b16 %v1191
        %v3420 = vunpack.c.h.b16 %v1191
        %v3421 = vunpack.c.l.b16 %v1192
        %v3422 = vunpack.c.h.b16 %v1192
        %v3423 = vunpack.c.l.b16 %v1193
        %v3424 = vunpack.c.h.b16 %v1193
        %v3425 = vunpack.c.l.b16 %v1194
        %v3426 = vunpack.c.h.b16 %v1194
        %v3427 = vunpack.c.l.b16 %v1195
        %v3428 = vunpack.c.h.b16 %v1195
        %v3429 = vunpack.c.l.b16 %v1196
        %v3430 = vunpack.c.h.b16 %v1196
        %v3431 = vunpack.c.l.b16 %v1197
        %v3432 = vunpack.c.h.b16 %v1197
        %v3433 = vunpack.c.l.b16 %v1198
        %v3434 = vunpack.c.h.b16 %v1198
        %v3435 = vunpack.c.l.b16 %v1199
        %v3436 = vunpack.c.h.b16 %v1199
        %v3437 = vunpack.c.l.b16 %v1200
        %v3438 = vunpack.c.h.b16 %v1200
        %v3439 = vunpack.c.l.b16 %v1201
        %v3440 = vunpack.c.h.b16 %v1201
        %v3441 = vunpack.c.l.b16 %v1202
        %v3442 = vunpack.c.h.b16 %v1202
        %v3443 = vunpack.c.l.b16 %v1203
        %v3444 = vunpack.c.h.b16 %v1203
        %v3445 = vunpack.c.l.b16 %v1204
        %v3446 = vunpack.c.h.b16 %v1204
        %v3447 = vunpack.c.l.b16 %v1205
        %v3448 = vunpack.c.h.b16 %v1205
        %v3449 = vunpack.c.l.b16 %v1206
        %v3450 = vunpack.c.h.b16 %v1206
        %v3451 = vunpack.c.l.b16 %v1207
        %v3452 = vunpack.c.h.b16 %v1207
        %v3453 = vunpack.c.l.b16 %v1208
        %v3454 = vunpack.c.h.b16 %v1208
        %v3455 = vunpack.c.l.b16 %v1209
        %v3456 = vunpack.c.h.b16 %v1209
        %v3457 = vunpack.c.l.b16 %v1210
        %v3458 = vunpack.c.h.b16 %v1210
        %v3459 = vunpack.c.l.b16 %v1211
        %v3460 = vunpack.c.h.b16 %v1211
        %v3461 = vunpack.c.l.b16 %v1212
        %v3462 = vunpack.c.h.b16 %v1212
        %v3463 = vunpack.c.l.b16 %v1213
        %v3464 = vunpack.c.h.b16 %v1213
        %v3465 = vunpack.c.l.b16 %v1214
        %v3466 = vunpack.c.h.b16 %v1214
        %v3467 = vunpack.c.l.b16 %v1215
        %v3468 = vunpack.c.h.b16 %v1215
        %v3469 = vunpack.c.l.b16 %v1216
        %v3470 = vunpack.c.h.b16 %v1216
        %v3471 = vunpack.c.l.b16 %v1217
        %v3472 = vunpack.c.h.b16 %v1217
        %v3473 = vunpack.c.l.b16 %v1218
        %v3474 = vunpack.c.h.b16 %v1218
        %v3475 = vunpack.c.l.b16 %v1219
        %v3476 = vunpack.c.h.b16 %v1219
        %v3477 = vunpack.c.l.b16 %v1220
        %v3478 = vunpack.c.h.b16 %v1220
        %v3479 = vunpack.c.l.b16 %v1221
        %v3480 = vunpack.c.h.b16 %v1221
        %v3481 = vunpack.c.l.b16 %v1222
        %v3482 = vunpack.c.h.b16 %v1222
        %v3483 = vunpack.c.l.b16 %v1223
        %v3484 = vunpack.c.h.b16 %v1223
        %v3485 = vunpack.c.l.b16 %v1224
        %v3486 = vunpack.c.h.b16 %v1224
        %v3487 = vunpack.c.l.b16 %v1225
        %v3488 = vunpack.c.h.b16 %v1225
        %v3489 = vunpack.c.l.b16 %v1226
        %v3490 = vunpack.c.h.b16 %v1226
        %v3491 = vunpack.c.l.b16 %v1227
        %v3492 = vunpack.c.h.b16 %v1227
        %v3493 = vunpack.c.l.b16 %v1228
        %v3494 = vunpack.c.h.b16 %v1228
        %v3495 = vunpack.c.l.b16 %v1229
        %v3496 = vunpack.c.h.b16 %v1229
        %v3497 = vunpack.c.l.b16 %v1230
        %v3498 = vunpack.c.h.b16 %v1230
        %v3499 = vunpack.c.l.b16 %v1231
        %v3500 = vunpack.c.h.b16 %v1231
        %v3501 = vunpack.c.l.b16 %v1232
        %v3502 = vunpack.c.h.b16 %v1232
        %v3503 = vunpack.c.l.b16 %v1233
        %v3504 = vunpack.c.h.b16 %v1233
        %v3505 = vunpack.c.l.b16 %v1234
        %v3506 = vunpack.c.h.b16 %v1234
        %v3507 = vunpack.c.l.b16 %v1235
        %v3508 = vunpack.c.h.b16 %v1235
        %v3509 = vunpack.c.l.b16 %v1236
        %v3510 = vunpack.c.h.b16 %v1236
        %v3511 = vunpack.c.l.b16 %v1237
        %v3512 = vunpack.c.h.b16 %v1237
        %v3513 = vunpack.c.l.b16 %v1238
        %v3514 = vunpack.c.h.b16 %v1238
        %v3515 = vunpack.c.l.b16 %v1239
        %v3516 = vunpack.c.h.b16 %v1239
        %v3517 = vunpack.c.l.b16 %v1240
        %v3518 = vunpack.c.h.b16 %v1240
        %v3519 = vunpack.c.l.b16 %v1241
        %v3520 = vunpack.c.h.b16 %v1241
        %v3521 = vunpack.c.l.b16 %v1242
        %v3522 = vunpack.c.h.b16 %v1242
        %v3523 = vunpack.c.l.b16 %v1243
        %v3524 = vunpack.c.h.b16 %v1243
        %v3525 = vunpack.c.l.b16 %v1244
        %v3526 = vunpack.c.h.b16 %v1244
        %v3527 = vunpack.c.l.b16 %v1245
        %v3528 = vunpack.c.h.b16 %v1245
        %v3529 = vunpack.c.l.b16 %v1246
        %v3530 = vunpack.c.h.b16 %v1246
        %v3531 = vunpack.c.l.b16 %v1247
        %v3532 = vunpack.c.h.b16 %v1247
        %v3533 = vunpack.c.l.b16 %v1248
        %v3534 = vunpack.c.h.b16 %v1248
        %v3535 = vunpack.c.l.b16 %v1249
        %v3536 = vunpack.c.h.b16 %v1249
        %v3537 = vunpack.c.l.b16 %v1250
        %v3538 = vunpack.c.h.b16 %v1250
        %v3539 = vunpack.c.l.b16 %v1251
        %v3540 = vunpack.c.h.b16 %v1251
        %v3541 = vunpack.c.l.b16 %v1252
        %v3542 = vunpack.c.h.b16 %v1252
        %v3543 = vunpack.c.l.b16 %v1253
        %v3544 = vunpack.c.h.b16 %v1253
        %v3545 = vunpack.c.l.b16 %v1254
        %v3546 = vunpack.c.h.b16 %v1254
        %v3547 = vunpack.c.l.b16 %v1255
        %v3548 = vunpack.c.h.b16 %v1255
        %v3549 = vunpack.c.l.b16 %v1256
        %v3550 = vunpack.c.h.b16 %v1256
        %v3551 = vunpack.c.l.b16 %v1257
        %v3552 = vunpack.c.h.b16 %v1257
        %v3553 = vunpack.c.l.b16 %v1258
        %v3554 = vunpack.c.h.b16 %v1258
        %v3555 = vunpack.c.l.b16 %v1259
        %v3556 = vunpack.c.h.b16 %v1259
        %v3557 = vunpack.c.l.b16 %v1260
        %v3558 = vunpack.c.h.b16 %v1260
        %v3559 = vunpack.c.l.b16 %v1261
        %v3560 = vunpack.c.h.b16 %v1261
        %v3561 = vunpack.c.l.b16 %v1262
        %v3562 = vunpack.c.h.b16 %v1262
        %v3563 = vunpack.c.l.b16 %v1263
        %v3564 = vunpack.c.h.b16 %v1263
        %v3565 = vunpack.c.l.b16 %v1264
        %v3566 = vunpack.c.h.b16 %v1264
        %v3567 = vunpack.c.l.b16 %v1265
        %v3568 = vunpack.c.h.b16 %v1265
        %v3569 = vunpack.c.l.b16 %v1266
        %v3570 = vunpack.c.h.b16 %v1266
        %v3571 = vunpack.c.l.b16 %v1267
        %v3572 = vunpack.c.h.b16 %v1267
        %v3573 = vunpack.c.l.b16 %v1268
        %v3574 = vunpack.c.h.b16 %v1268
        %v3575 = vunpack.c.l.b16 %v1269
        %v3576 = vunpack.c.h.b16 %v1269
        %v3577 = vunpack.c.l.b16 %v1270
        %v3578 = vunpack.c.h.b16 %v1270
        %v3579 = vunpack.c.l.b16 %v1271
        %v3580 = vunpack.c.h.b16 %v1271
        %v3581 = vunpack.c.l.b16 %v1272
        %v3582 = vunpack.c.h.b16 %v1272
        %v3583 = vunpack.c.l.b16 %v1273
        %v3584 = vunpack.c.h.b16 %v1273
        %v3585 = vunpack.c.l.b16 %v1274
        %v3586 = vunpack.c.h.b16 %v1274
        %v3587 = vunpack.c.l.b16 %v1275
        %v3588 = vunpack.c.h.b16 %v1275
        %v3589 = vunpack.c.l.b16 %v1276
        %v3590 = vunpack.c.h.b16 %v1276
        %v3591 = vunpack.c.l.b16 %v1277
        %v3592 = vunpack.c.h.b16 %v1277
        %v3593 = vunpack.c.l.b16 %v1278
        %v3594 = vunpack.c.h.b16 %v1278
        %v3595 = vunpack.c.l.b16 %v1279
        %v3596 = vunpack.c.h.b16 %v1279
        %v3597 = vunpack.c.l.b16 %v1280
        %v3598 = vunpack.c.h.b16 %v1280
        %v3599 = vunpack.c.l.b16 %v1281
        %v3600 = vunpack.c.h.b16 %v1281
        %v3601 = vunpack.c.l.b16 %v1282
        %v3602 = vunpack.c.h.b16 %v1282
        %v3603 = vunpack.c.l.b16 %v1283
        %v3604 = vunpack.c.h.b16 %v1283
        %v3605 = vunpack.c.l.b16 %v1284
        %v3606 = vunpack.c.h.b16 %v1284
        %v3607 = vunpack.c.l.b16 %v1285
        %v3608 = vunpack.c.h.b16 %v1285
        %v3609 = vunpack.c.l.b16 %v1286
        %v3610 = vunpack.c.h.b16 %v1286
        %v3611 = vunpack.c.l.b16 %v1287
        %v3612 = vunpack.c.h.b16 %v1287
        %v3613 = vunpack.c.l.b16 %v1288
        %v3614 = vunpack.c.h.b16 %v1288
        %v3615 = vunpack.c.l.b16 %v1289
        %v3616 = vunpack.c.h.b16 %v1289
        %v3617 = vunpack.c.l.b16 %v1290
        %v3618 = vunpack.c.h.b16 %v1290
        %v3619 = vunpack.c.l.b16 %v1291
        %v3620 = vunpack.c.h.b16 %v1291
        %v3621 = vunpack.c.l.b16 %v1292
        %v3622 = vunpack.c.h.b16 %v1292
        %v3623 = vunpack.c.l.b16 %v1293
        %v3624 = vunpack.c.h.b16 %v1293
        %v3625 = vunpack.c.l.b16 %v1294
        %v3626 = vunpack.c.h.b16 %v1294
        %v3627 = vunpack.c.l.b16 %v1295
        %v3628 = vunpack.c.h.b16 %v1295
        %v3629 = vunpack.c.l.b16 %v1296
        %v3630 = vunpack.c.h.b16 %v1296
        %v3631 = vunpack.c.l.b16 %v1297
        %v3632 = vunpack.c.h.b16 %v1297
        %v3633 = vunpack.c.l.b16 %v1298
        %v3634 = vunpack.c.h.b16 %v1298
        %v3635 = vunpack.c.l.b16 %v1299
        %v3636 = vunpack.c.h.b16 %v1299
        %v3637 = vunpack.c.l.b16 %v1300
        %v3638 = vunpack.c.h.b16 %v1300
        %v3639 = vunpack.c.l.b16 %v1301
        %v3640 = vunpack.c.h.b16 %v1301
        %v3641 = vunpack.c.l.b16 %v1302
        %v3642 = vunpack.c.h.b16 %v1302
        %v3643 = vunpack.c.l.b16 %v1303
        %v3644 = vunpack.c.h.b16 %v1303
        %v3645 = vunpack.c.l.b16 %v1304
        %v3646 = vunpack.c.h.b16 %v1304
        %v3647 = vunpack.c.l.b16 %v1305
        %v3648 = vunpack.c.h.b16 %v1305
        %v3649 = vunpack.c.l.b16 %v1306
        %v3650 = vunpack.c.h.b16 %v1306
        %v3651 = vunpack.c.l.b16 %v1307
        %v3652 = vunpack.c.h.b16 %v1307
        %v3653 = vunpack.c.l.b16 %v1308
        %v3654 = vunpack.c.h.b16 %v1308
        %v3655 = vunpack.c.l.b16 %v1309
        %v3656 = vunpack.c.h.b16 %v1309
        %v3657 = vunpack.c.l.b16 %v1310
        %v3658 = vunpack.c.h.b16 %v1310
        %v3659 = vunpack.c.l.b16 %v1311
        %v3660 = vunpack.c.h.b16 %v1311
        %v3661 = vunpack.c.l.b16 %v1312
        %v3662 = vunpack.c.h.b16 %v1312
        %v3663 = vunpack.c.l.b16 %v1313
        %v3664 = vunpack.c.h.b16 %v1313
        %v3665 = vunpack.c.l.b16 %v1314
        %v3666 = vunpack.c.h.b16 %v1314
        %v3667 = vunpack.c.l.b16 %v1315
        %v3668 = vunpack.c.h.b16 %v1315
        %v3669 = vunpack.c.l.b16 %v1316
        %v3670 = vunpack.c.h.b16 %v1316
        %v3671 = vunpack.c.l.b16 %v1317
        %v3672 = vunpack.c.h.b16 %v1317
        %v3673 = vunpack.c.l.b16 %v1318
        %v3674 = vunpack.c.h.b16 %v1318
        %v3675 = vunpack.c.l.b16 %v1319
        %v3676 = vunpack.c.h.b16 %v1319
        %v3677 = vunpack.c.l.b16 %v1320
        %v3678 = vunpack.c.h.b16 %v1320
        %v3679 = vunpack.c.l.b16 %v1321
        %v3680 = vunpack.c.h.b16 %v1321
        %v3681 = vunpack.c.l.b16 %v1322
        %v3682 = vunpack.c.h.b16 %v1322
        %v3683 = vunpack.c.l.b16 %v1323
        %v3684 = vunpack.c.h.b16 %v1323
        %v3685 = vunpack.c.l.b16 %v1324
        %v3686 = vunpack.c.h.b16 %v1324
        %v3687 = vunpack.c.l.b16 %v1325
        %v3688 = vunpack.c.h.b16 %v1325
        %v3689 = vunpack.c.l.b16 %v1326
        %v3690 = vunpack.c.h.b16 %v1326
        %v3691 = vunpack.c.l.b16 %v1327
        %v3692 = vunpack.c.h.b16 %v1327
        %v3693 = vunpack.c.l.b16 %v1328
        %v3694 = vunpack.c.h.b16 %v1328
        %v3695 = vunpack.c.l.b16 %v1329
        %v3696 = vunpack.c.h.b16 %v1329
        %v3697 = vunpack.c.l.b16 %v1330
        %v3698 = vunpack.c.h.b16 %v1330
        %v3699 = vunpack.c.l.b16 %v1331
        %v3700 = vunpack.c.h.b16 %v1331
        %v3701 = vunpack.c.l.b16 %v1332
        %v3702 = vunpack.c.h.b16 %v1332
        %v3703 = vunpack.c.l.b16 %v1333
        %v3704 = vunpack.c.h.b16 %v1333
        %v3705 = vunpack.c.l.b16 %v1334
        %v3706 = vunpack.c.h.b16 %v1334
        %v3707 = vunpack.c.l.b16 %v1335
        %v3708 = vunpack.c.h.b16 %v1335
        %v3709 = vunpack.c.l.b16 %v1336
        %v3710 = vunpack.c.h.b16 %v1336
        %v3711 = vunpack.c.l.b16 %v1337
        %v3712 = vunpack.c.h.b16 %v1337
        %v3713 = vunpack.c.l.b16 %v1338
        %v3714 = vunpack.c.h.b16 %v1338
        %v3715 = vunpack.c.l.b16 %v1339
        %v3716 = vunpack.c.h.b16 %v1339
        %v3717 = vunpack.c.l.b16 %v1340
        %v3718 = vunpack.c.h.b16 %v1340
        %v3719 = vunpack.c.l.b16 %v1341
        %v3720 = vunpack.c.h.b16 %v1341
        %v3721 = vunpack.c.l.b16 %v1342
        %v3722 = vunpack.c.h.b16 %v1342
        %v3723 = vunpack.c.l.b16 %v1343
        %v3724 = vunpack.c.h.b16 %v1343
        %v3725 = vunpack.c.l.b16 %v1344
        %v3726 = vunpack.c.h.b16 %v1344
        %v3727 = vunpack.c.l.b16 %v1345
        %v3728 = vunpack.c.h.b16 %v1345
        %v3729 = vunpack.c.l.b16 %v1346
        %v3730 = vunpack.c.h.b16 %v1346
        %v3731 = vunpack.c.l.b16 %v1347
        %v3732 = vunpack.c.h.b16 %v1347
        %v3733 = vunpack.c.l.b16 %v1348
        %v3734 = vunpack.c.h.b16 %v1348
        %v3735 = vunpack.c.l.b16 %v1349
        %v3736 = vunpack.c.h.b16 %v1349
        %v3737 = vunpack.c.l.b16 %v1350
        %v3738 = vunpack.c.h.b16 %v1350
        %v3739 = vunpack.c.l.b16 %v1351
        %v3740 = vunpack.c.h.b16 %v1351
        %v3741 = vunpack.c.l.b16 %v1352
        %v3742 = vunpack.c.h.b16 %v1352
        %v3743 = vunpack.c.l.b16 %v1353
        %v3744 = vunpack.c.h.b16 %v1353
        %v3745 = vunpack.c.l.b16 %v1354
        %v3746 = vunpack.c.h.b16 %v1354
        %v3747 = vunpack.c.l.b16 %v1355
        %v3748 = vunpack.c.h.b16 %v1355
        %v3749 = vunpack.c.l.b16 %v1356
        %v3750 = vunpack.c.h.b16 %v1356
        %v3751 = vunpack.c.l.b16 %v1357
        %v3752 = vunpack.c.h.b16 %v1357
        %v3753 = vunpack.c.l.b16 %v1358
        %v3754 = vunpack.c.h.b16 %v1358
        %v3755 = vunpack.c.l.b16 %v1359
        %v3756 = vunpack.c.h.b16 %v1359
        %v3757 = vunpack.c.l.b16 %v1360
        %v3758 = vunpack.c.h.b16 %v1360
        %v3759 = vunpack.c.l.b16 %v1361
        %v3760 = vunpack.c.h.b16 %v1361
        %v3761 = vunpack.c.l.b16 %v1362
        %v3762 = vunpack.c.h.b16 %v1362
        %v3763 = vunpack.c.l.b16 %v1363
        %v3764 = vunpack.c.h.b16 %v1363
        %v3765 = vunpack.c.l.b16 %v1364
        %v3766 = vunpack.c.h.b16 %v1364
        %v3767 = vunpack.c.l.b16 %v1365
        %v3768 = vunpack.c.h.b16 %v1365
        %v3769 = vunpack.c.l.b16 %v1366
        %v3770 = vunpack.c.h.b16 %v1366
        %v3771 = vunpack.c.l.b16 %v1367
        %v3772 = vunpack.c.h.b16 %v1367
        %v3773 = vunpack.c.l.b16 %v1368
        %v3774 = vunpack.c.h.b16 %v1368
        %v3775 = vunpack.c.l.b16 %v1369
        %v3776 = vunpack.c.h.b16 %v1369
        %v3777 = vunpack.c.l.b16 %v1370
        %v3778 = vunpack.c.h.b16 %v1370
        %v3779 = vunpack.c.l.b16 %v1371
        %v3780 = vunpack.c.h.b16 %v1371
        %v3781 = vunpack.c.l.b16 %v1372
        %v3782 = vunpack.c.h.b16 %v1372
        %v3783 = vunpack.c.l.b16 %v1373
        %v3784 = vunpack.c.h.b16 %v1373
        %v3785 = vunpack.c.l.b16 %v1374
        %v3786 = vunpack.c.h.b16 %v1374
        %v3787 = vunpack.c.l.b16 %v1375
        %v3788 = vunpack.c.h.b16 %v1375
        %v3789 = vunpack.c.l.b16 %v1376
        %v3790 = vunpack.c.h.b16 %v1376
        %v3791 = vunpack.c.l.b16 %v1377
        %v3792 = vunpack.c.h.b16 %v1377
        %v3793 = vunpack.c.l.b16 %v1378
        %v3794 = vunpack.c.h.b16 %v1378
        %v3795 = vunpack.c.l.b16 %v1379
        %v3796 = vunpack.c.h.b16 %v1379
        %v3797 = vunpack.c.l.b16 %v1380
        %v3798 = vunpack.c.h.b16 %v1380
        %v3799 = vunpack.c.l.b16 %v1381
        %v3800 = vunpack.c.h.b16 %v1381
        %v3801 = vunpack.c.l.b16 %v1382
        %v3802 = vunpack.c.h.b16 %v1382
        %v3803 = vunpack.c.l.b16 %v1383
        %v3804 = vunpack.c.h.b16 %v1383
        %v3805 = vunpack.c.l.b16 %v1384
        %v3806 = vunpack.c.h.b16 %v1384
        %v3807 = vunpack.c.l.b16 %v1385
        %v3808 = vunpack.c.h.b16 %v1385
        %v3809 = vunpack.c.l.b16 %v1386
        %v3810 = vunpack.c.h.b16 %v1386
        %v3811 = vunpack.c.l.b16 %v1387
        %v3812 = vunpack.c.h.b16 %v1387
        %v3813 = vunpack.c.l.b16 %v1388
        %v3814 = vunpack.c.h.b16 %v1388
        %v3815 = vunpack.c.l.b16 %v1389
        %v3816 = vunpack.c.h.b16 %v1389
        %v3817 = vunpack.c.l.b16 %v1390
        %v3818 = vunpack.c.h.b16 %v1390
        %v3819 = vunpack.c.l.b16 %v1391
        %v3820 = vunpack.c.h.b16 %v1391
        %v3821 = vunpack.c.l.b16 %v1392
        %v3822 = vunpack.c.h.b16 %v1392
        %v3823 = vunpack.c.l.b16 %v1393
        %v3824 = vunpack.c.h.b16 %v1393
        %v3825 = vunpack.c.l.b16 %v1394
        %v3826 = vunpack.c.h.b16 %v1394
        %v3827 = vunpack.c.l.b16 %v1395
        %v3828 = vunpack.c.h.b16 %v1395
        %v3829 = vunpack.c.l.b16 %v1396
        %v3830 = vunpack.c.h.b16 %v1396
        %v3831 = vunpack.c.l.b16 %v1397
        %v3832 = vunpack.c.h.b16 %v1397
        %v3833 = vunpack.c.l.b16 %v1398
        %v3834 = vunpack.c.h.b16 %v1398
        %v3835 = vunpack.c.l.b16 %v1399
        %v3836 = vunpack.c.h.b16 %v1399
        %v3837 = vunpack.c.l.b16 %v1400
        %v3838 = vunpack.c.h.b16 %v1400
        %v3839 = vunpack.c.l.b16 %v1401
        %v3840 = vunpack.c.h.b16 %v1401
        %v3841 = vunpack.c.l.b16 %v1402
        %v3842 = vunpack.c.h.b16 %v1402
        %v3843 = vunpack.c.l.b16 %v1403
        %v3844 = vunpack.c.h.b16 %v1403
        %v3845 = vunpack.c.l.b16 %v1404
        %v3846 = vunpack.c.h.b16 %v1404
        %v3847 = vunpack.c.l.b16 %v1405
        %v3848 = vunpack.c.h.b16 %v1405
        %v3849 = vunpack.c.l.b16 %v1406
        %v3850 = vunpack.c.h.b16 %v1406
        %v3851 = vunpack.c.l.b16 %v1407
        %v3852 = vunpack.c.h.b16 %v1407
        %v3853 = vunpack.c.l.b16 %v1408
        %v3854 = vunpack.c.h.b16 %v1408
        %v3855 = vunpack.c.l.b16 %v1409
        %v3856 = vunpack.c.h.b16 %v1409
        %v3857 = vunpack.c.l.b16 %v1410
        %v3858 = vunpack.c.h.b16 %v1410
        %v3859 = vunpack.c.l.b16 %v1411
        %v3860 = vunpack.c.h.b16 %v1411
        %v3861 = vunpack.c.l.b16 %v1412
        %v3862 = vunpack.c.h.b16 %v1412
        %v3863 = vunpack.c.l.b16 %v1413
        %v3864 = vunpack.c.h.b16 %v1413
        %v3865 = vunpack.c.l.b16 %v1414
        %v3866 = vunpack.c.h.b16 %v1414
        %v3867 = vunpack.c.l.b16 %v1415
        %v3868 = vunpack.c.h.b16 %v1415
        %v3869 = vunpack.c.l.b16 %v1416
        %v3870 = vunpack.c.h.b16 %v1416
        %v3871 = vunpack.c.l.b16 %v1417
        %v3872 = vunpack.c.h.b16 %v1417
        %v3873 = vunpack.c.l.b16 %v1418
        %v3874 = vunpack.c.h.b16 %v1418
        %v3875 = vunpack.c.l.b16 %v1419
        %v3876 = vunpack.c.h.b16 %v1419
        %v3877 = vunpack.c.l.b16 %v1420
        %v3878 = vunpack.c.h.b16 %v1420
        %v3879 = vunpack.c.l.b16 %v1421
        %v3880 = vunpack.c.h.b16 %v1421
        %v3881 = vunpack.c.l.b16 %v1422
        %v3882 = vunpack.c.h.b16 %v1422
        %v3883 = vunpack.c.l.b16 %v1423
        %v3884 = vunpack.c.h.b16 %v1423
        %v3885 = vunpack.c.l.b16 %v1424
        %v3886 = vunpack.c.h.b16 %v1424
        %v3887 = vunpack.c.l.b16 %v1425
        %v3888 = vunpack.c.h.b16 %v1425
        %v3889 = vunpack.c.l.b16 %v1426
        %v3890 = vunpack.c.h.b16 %v1426
        %v3891 = vunpack.c.l.b16 %v1427
        %v3892 = vunpack.c.h.b16 %v1427
        %v3893 = vunpack.c.l.b16 %v1428
        %v3894 = vunpack.c.h.b16 %v1428
        %v3895 = vunpack.c.l.b16 %v1429
        %v3896 = vunpack.c.h.b16 %v1429
        %v3897 = vunpack.c.l.b16 %v1430
        %v3898 = vunpack.c.h.b16 %v1430
        %v3899 = vunpack.c.l.b16 %v1431
        %v3900 = vunpack.c.h.b16 %v1431
        %v3901 = vunpack.c.l.b16 %v1432
        %v3902 = vunpack.c.h.b16 %v1432
        %v3903 = vunpack.c.l.b16 %v1433
        %v3904 = vunpack.c.h.b16 %v1433
        %v3905 = vunpack.c.l.b16 %v1434
        %v3906 = vunpack.c.h.b16 %v1434
        %v3907 = vunpack.c.l.b16 %v1435
        %v3908 = vunpack.c.h.b16 %v1435
        %v3909 = vunpack.c.l.b16 %v1436
        %v3910 = vunpack.c.h.b16 %v1436
        %v3911 = vunpack.c.l.b16 %v1437
        %v3912 = vunpack.c.h.b16 %v1437
        %v3913 = vunpack.c.l.b16 %v1438
        %v3914 = vunpack.c.h.b16 %v1438
        %v3915 = vunpack.c.l.b16 %v1439
        %v3916 = vunpack.c.h.b16 %v1439
        %v3917 = vunpack.c.l.b16 %v1440
        %v3918 = vunpack.c.h.b16 %v1440
        %v3919 = vunpack.c.l.b16 %v1441
        %v3920 = vunpack.c.h.b16 %v1441
        %v3921 = vunpack.c.l.b16 %v1442
        %v3922 = vunpack.c.h.b16 %v1442
        %v3923 = vunpack.c.l.b16 %v1443
        %v3924 = vunpack.c.h.b16 %v1443
        %v3925 = vunpack.c.l.b16 %v1444
        %v3926 = vunpack.c.h.b16 %v1444
        %v3927 = vunpack.c.l.b16 %v1445
        %v3928 = vunpack.c.h.b16 %v1445
        %v3929 = vunpack.c.l.b16 %v1446
        %v3930 = vunpack.c.h.b16 %v1446
        %v3931 = vunpack.c.l.b16 %v1447
        %v3932 = vunpack.c.h.b16 %v1447
        %v3933 = vunpack.c.l.b16 %v1448
        %v3934 = vunpack.c.h.b16 %v1448
        %v3935 = vunpack.c.l.b16 %v1449
        %v3936 = vunpack.c.h.b16 %v1449
        %v3937 = vunpack.c.l.b16 %v1450
        %v3938 = vunpack.c.h.b16 %v1450
        %v3939 = vunpack.c.l.b16 %v1451
        %v3940 = vunpack.c.h.b16 %v1451
        %v3941 = vunpack.c.l.b16 %v1452
        %v3942 = vunpack.c.h.b16 %v1452
        %v3943 = vunpack.c.l.b16 %v1453
        %v3944 = vunpack.c.h.b16 %v1453
        %v3945 = vunpack.c.l.b16 %v1454
        %v3946 = vunpack.c.h.b16 %v1454
        %v3947 = vunpack.c.l.b16 %v1455
        %v3948 = vunpack.c.h.b16 %v1455
        %v3949 = vunpack.c.l.b16 %v1456
        %v3950 = vunpack.c.h.b16 %v1456
        %v3951 = vunpack.c.l.b16 %v1457
        %v3952 = vunpack.c.h.b16 %v1457
        %v3953 = vunpack.c.l.b16 %v1458
        %v3954 = vunpack.c.h.b16 %v1458
        %v3955 = vunpack.c.l.b16 %v1459
        %v3956 = vunpack.c.h.b16 %v1459
        %v3957 = vunpack.c.l.b16 %v1460
        %v3958 = vunpack.c.h.b16 %v1460
        %v3959 = vunpack.c.l.b16 %v1461
        %v3960 = vunpack.c.h.b16 %v1461
        %v3961 = vunpack.c.l.b16 %v1462
        %v3962 = vunpack.c.h.b16 %v1462
        %v3963 = vunpack.c.l.b16 %v1463
        %v3964 = vunpack.c.h.b16 %v1463
        %v3965 = vunpack.c.l.b16 %v1464
        %v3966 = vunpack.c.h.b16 %v1464
        %v3967 = vunpack.c.l.b16 %v1465
        %v3968 = vunpack.c.h.b16 %v1465
        %v3969 = vunpack.c.l.b16 %v1466
        %v3970 = vunpack.c.h.b16 %v1466
        %v3971 = vunpack.c.l.b16 %v1467
        %v3972 = vunpack.c.h.b16 %v1467
        %v3973 = vunpack.c.l.b16 %v1468
        %v3974 = vunpack.c.h.b16 %v1468
        %v3975 = vunpack.c.l.b16 %v1469
        %v3976 = vunpack.c.h.b16 %v1469
        %v3977 = vunpack.c.l.b16 %v1470
        %v3978 = vunpack.c.h.b16 %v1470
        %v3979 = vunpack.c.l.b16 %v1471
        %v3980 = vunpack.c.h.b16 %v1471
        %v3981 = vunpack.c.l.b16 %v1472
        %v3982 = vunpack.c.h.b16 %v1472
        %v3983 = vunpack.c.l.b16 %v1473
        %v3984 = vunpack.c.h.b16 %v1473
        %v3985 = vunpack.c.l.b16 %v1474
        %v3986 = vunpack.c.h.b16 %v1474
        %v3987 = vunpack.c.l.b16 %v1475
        %v3988 = vunpack.c.h.b16 %v1475
        %v3989 = vunpack.c.l.b16 %v1476
        %v3990 = vunpack.c.h.b16 %v1476
        %v3991 = vunpack.c.l.b16 %v1477
        %v3992 = vunpack.c.h.b16 %v1477
        %v3993 = vunpack.c.l.b16 %v1478
        %v3994 = vunpack.c.h.b16 %v1478
        %v3995 = vunpack.c.l.b16 %v1479
        %v3996 = vunpack.c.h.b16 %v1479
        %v3997 = vunpack.c.l.b16 %v1480
        %v3998 = vunpack.c.h.b16 %v1480
        %v3999 = vunpack.c.l.b16 %v1481
        %v4000 = vunpack.c.h.b16 %v1481
        %v4001 = vunpack.c.l.b16 %v1482
        %v4002 = vunpack.c.h.b16 %v1482
        %v4003 = vunpack.c.l.b16 %v1483
        %v4004 = vunpack.c.h.b16 %v1483
        %v4005 = vunpack.c.l.b16 %v1484
        %v4006 = vunpack.c.h.b16 %v1484
        %v4007 = vunpack.c.l.b16 %v1485
        %v4008 = vunpack.c.h.b16 %v1485
        %v4009 = vunpack.c.l.b16 %v1486
        %v4010 = vunpack.c.h.b16 %v1486
        %v4011 = vunpack.c.l.b16 %v1487
        %v4012 = vunpack.c.h.b16 %v1487
        %v4013 = vunpack.c.l.b16 %v1488
        %v4014 = vunpack.c.h.b16 %v1488
        %v4015 = vunpack.c.l.b16 %v1489
        %v4016 = vunpack.c.h.b16 %v1489
        %v4017 = vunpack.c.l.b16 %v1490
        %v4018 = vunpack.c.h.b16 %v1490
        %v4019 = vunpack.c.l.b16 %v1491
        %v4020 = vunpack.c.h.b16 %v1491
        %v4021 = vunpack.c.l.b16 %v1492
        %v4022 = vunpack.c.h.b16 %v1492
        %v4023 = vunpack.c.l.b16 %v1493
        %v4024 = vunpack.c.h.b16 %v1493
        %v4025 = vunpack.c.l.b16 %v1494
        %v4026 = vunpack.c.h.b16 %v1494
        %v4027 = vunpack.c.l.b16 %v1495
        %v4028 = vunpack.c.h.b16 %v1495
        %v4029 = vunpack.c.l.b16 %v1496
        %v4030 = vunpack.c.h.b16 %v1496
        %v4031 = vunpack.c.l.b16 %v1497
        %v4032 = vunpack.c.h.b16 %v1497
        %v4033 = vunpack.c.l.b16 %v1498
        %v4034 = vunpack.c.h.b16 %v1498
        %v4035 = vunpack.c.l.b16 %v1499
        %v4036 = vunpack.c.h.b16 %v1499
        %v4037 = vunpack.c.l.b16 %v1500
        %v4038 = vunpack.c.h.b16 %v1500
        %v4039 = vunpack.c.l.b16 %v1501
        %v4040 = vunpack.c.h.b16 %v1501
        %v4041 = vunpack.c.l.b16 %v1502
        %v4042 = vunpack.c.h.b16 %v1502
        %v4043 = vunpack.c.l.b16 %v1503
        %v4044 = vunpack.c.h.b16 %v1503
        %v4045 = vunpack.c.l.b16 %v1504
        %v4046 = vunpack.c.h.b16 %v1504
        %v4047 = vunpack.c.l.b16 %v1505
        %v4048 = vunpack.c.h.b16 %v1505
        %v4049 = vunpack.c.l.b16 %v1506
        %v4050 = vunpack.c.h.b16 %v1506
        %v4051 = vunpack.c.l.b16 %v1507
        %v4052 = vunpack.c.h.b16 %v1507
        %v4053 = vunpack.c.l.b16 %v1508
        %v4054 = vunpack.c.h.b16 %v1508
        %v4055 = vunpack.c.l.b16 %v1509
        %v4056 = vunpack.c.h.b16 %v1509
        %v4057 = vunpack.c.l.b16 %v1510
        %v4058 = vunpack.c.h.b16 %v1510
        %v4059 = vunpack.c.l.b16 %v1511
        %v4060 = vunpack.c.h.b16 %v1511
        %v4061 = vunpack.c.l.b16 %v1512
        %v4062 = vunpack.c.h.b16 %v1512
        %v4063 = vunpack.c.l.b16 %v1513
        %v4064 = vunpack.c.h.b16 %v1513
        %v4065 = vunpack.c.l.b16 %v1514
        %v4066 = vunpack.c.h.b16 %v1514
        %v4067 = vunpack.c.l.b16 %v1515
        %v4068 = vunpack.c.h.b16 %v1515
        %v4069 = vunpack.c.l.b16 %v1516
        %v4070 = vunpack.c.h.b16 %v1516
        %v4071 = vunpack.c.l.b16 %v1517
        %v4072 = vunpack.c.h.b16 %v1517
        %v4073 = vunpack.c.l.b16 %v1518
        %v4074 = vunpack.c.h.b16 %v1518
        %v4075 = vunpack.c.l.b16 %v1519
        %v4076 = vunpack.c.h.b16 %v1519
        %v4077 = vunpack.c.l.b16 %v1520
        %v4078 = vunpack.c.h.b16 %v1520
        %v4079 = vunpack.c.l.b16 %v1521
        %v4080 = vunpack.c.h.b16 %v1521
        %v4081 = vunpack.c.l.b16 %v1522
        %v4082 = vunpack.c.h.b16 %v1522
        %v4083 = vunpack.c.l.b16 %v1523
        %v4084 = vunpack.c.h.b16 %v1523
        %v4085 = vunpack.c.l.b16 %v1524
        %v4086 = vunpack.c.h.b16 %v1524
        %v4087 = vunpack.c.l.b16 %v1525
        %v4088 = vunpack.c.h.b16 %v1525
        %v4089 = vunpack.c.l.b16 %v1526
        %v4090 = vunpack.c.h.b16 %v1526
        %v4091 = vunpack.c.l.b16 %v1527
        %v4092 = vunpack.c.h.b16 %v1527
        %v4093 = vunpack.c.l.b16 %v1528
        %v4094 = vunpack.c.h.b16 %v1528
        %v4095 = vunpack.c.l.b16 %v1529
        %v4096 = vunpack.c.h.b16 %v1529
        %v4097 = vunpack.c.l.b16 %v1530
        %v4098 = vunpack.c.h.b16 %v1530
        %v4099 = vunpack.c.l.b16 %v1531
        %v4100 = vunpack.c.h.b16 %v1531
        %v4101 = vunpack.c.l.b16 %v1532
        %v4102 = vunpack.c.h.b16 %v1532
        %v4103 = vunpack.c.l.b16 %v1533
        %v4104 = vunpack.c.h.b16 %v1533
        %v4105 = vunpack.c.l.b16 %v1534
        %v4106 = vunpack.c.h.b16 %v1534
        %v4107 = vunpack.c.l.b16 %v1535
        %v4108 = vunpack.c.h.b16 %v1535
        %v4109 = vunpack.c.l.b16 %v1536
        %v4110 = vunpack.c.h.b16 %v1536
        %v4111 = vunpack.c.l.b16 %v1537
        %v4112 = vunpack.c.h.b16 %v1537
        %v4113 = vunpack.c.l.b16 %v1538
        %v4114 = vunpack.c.h.b16 %v1538
        %v4115 = vunpack.c.l.b16 %v1539
        %v4116 = vunpack.c.h.b16 %v1539
        %v4117 = vunpack.c.l.b16 %v1540
        %v4118 = vunpack.c.h.b16 %v1540
        %v4119 = vunpack.c.l.b16 %v1541
        %v4120 = vunpack.c.h.b16 %v1541
        %v4121 = vunpack.c.l.b16 %v1542
        %v4122 = vunpack.c.h.b16 %v1542
        %v4123 = vunpack.c.l.b16 %v1543
        %v4124 = vunpack.c.h.b16 %v1543
        %v4125 = vunpack.c.l.b16 %v1544
        %v4126 = vunpack.c.h.b16 %v1544
        %v4127 = vunpack.c.l.b16 %v1545
        %v4128 = vunpack.c.h.b16 %v1545
        %v4129 = vunpack.c.l.b16 %v1546
        %v4130 = vunpack.c.h.b16 %v1546
        %v4131 = vunpack.c.l.b16 %v1547
        %v4132 = vunpack.c.h.b16 %v1547
        %v4133 = vunpack.c.l.b16 %v1548
        %v4134 = vunpack.c.h.b16 %v1548
        %v4135 = vunpack.c.l.b16 %v1549
        %v4136 = vunpack.c.h.b16 %v1549
        %v4137 = vunpack.c.l.b16 %v1550
        %v4138 = vunpack.c.h.b16 %v1550
        %v4139 = vunpack.c.l.b16 %v1551
        %v4140 = vunpack.c.h.b16 %v1551
        %v4141 = vunpack.c.l.b16 %v1552
        %v4142 = vunpack.c.h.b16 %v1552
        %v4143 = vunpack.c.l.b16 %v1553
        %v4144 = vunpack.c.h.b16 %v1553
        %v4145 = vunpack.c.l.b16 %v1554
        %v4146 = vunpack.c.h.b16 %v1554
        %v4147 = vunpack.c.l.b16 %v1555
        %v4148 = vunpack.c.h.b16 %v1555
        %v4149 = vunpack.c.l.b16 %v1556
        %v4150 = vunpack.c.h.b16 %v1556
        %v4151 = vunpack.c.l.b16 %v1557
        %v4152 = vunpack.c.h.b16 %v1557
        %v4153 = vunpack.c.l.b16 %v1558
        %v4154 = vunpack.c.h.b16 %v1558
        %v4155 = vunpack.c.l.b16 %v1559
        %v4156 = vunpack.c.h.b16 %v1559
        %v4157 = vunpack.c.l.b16 %v1560
        %v4158 = vunpack.c.h.b16 %v1560
        %v4159 = vunpack.c.l.b16 %v1561
        %v4160 = vunpack.c.h.b16 %v1561
        %v4161 = vunpack.c.l.b16 %v1562
        %v4162 = vunpack.c.h.b16 %v1562
        %v4163 = vunpack.c.l.b16 %v1563
        %v4164 = vunpack.c.h.b16 %v1563
        %v4165 = vunpack.c.l.b16 %v1564
        %v4166 = vunpack.c.h.b16 %v1564
        %v4167 = vunpack.c.l.b16 %v1565
        %v4168 = vunpack.c.h.b16 %v1565
        %v4169 = vunpack.c.l.b16 %v1566
        %v4170 = vunpack.c.h.b16 %v1566
        %v4171 = vunpack.c.l.b16 %v1567
        %v4172 = vunpack.c.h.b16 %v1567
        %v4173 = vunpack.c.l.b16 %v1568
        %v4174 = vunpack.c.h.b16 %v1568
        %v4175 = vunpack.c.l.b16 %v1569
        %v4176 = vunpack.c.h.b16 %v1569
        %v4177 = vunpack.c.l.b16 %v1570
        %v4178 = vunpack.c.h.b16 %v1570
        %v4179 = vunpack.c.l.b16 %v1571
        %v4180 = vunpack.c.h.b16 %v1571
        %v4181 = vunpack.c.l.b16 %v1572
        %v4182 = vunpack.c.h.b16 %v1572
        %v4183 = vunpack.c.l.b16 %v1573
        %v4184 = vunpack.c.h.b16 %v1573
        %v4185 = vunpack.c.l.b16 %v1574
        %v4186 = vunpack.c.h.b16 %v1574
        %v4187 = vunpack.c.l.b16 %v1575
        %v4188 = vunpack.c.h.b16 %v1575
        %v4189 = vunpack.c.l.b16 %v1576
        %v4190 = vunpack.c.h.b16 %v1576
        %v4191 = vunpack.c.l.b16 %v1577
        %v4192 = vunpack.c.h.b16 %v1577
        %v4193 = vunpack.c.l.b16 %v1578
        %v4194 = vunpack.c.h.b16 %v1578
        %v4195 = vunpack.c.l.b16 %v1579
        %v4196 = vunpack.c.h.b16 %v1579
        %v4197 = vunpack.c.l.b16 %v1580
        %v4198 = vunpack.c.h.b16 %v1580
        %v4199 = vunpack.c.l.b16 %v1581
        %v4200 = vunpack.c.h.b16 %v1581
        %v4201 = vunpack.c.l.b16 %v1582
        %v4202 = vunpack.c.h.b16 %v1582
        %v4203 = vunpack.c.l.b16 %v1583
        %v4204 = vunpack.c.h.b16 %v1583
        %v4205 = vunpack.c.l.b16 %v1584
        %v4206 = vunpack.c.h.b16 %v1584
        %v4207 = vunpack.c.l.b16 %v1585
        %v4208 = vunpack.c.h.b16 %v1585
        %v4209 = vunpack.c.l.b16 %v1586
        %v4210 = vunpack.c.h.b16 %v1586
        %v4211 = vunpack.c.l.b16 %v1587
        %v4212 = vunpack.c.h.b16 %v1587
        %v4213 = vunpack.c.l.b16 %v1588
        %v4214 = vunpack.c.h.b16 %v1588
        %v4215 = vunpack.c.l.b16 %v1589
        %v4216 = vunpack.c.h.b16 %v1589
        %v4217 = vunpack.c.l.b16 %v1590
        %v4218 = vunpack.c.h.b16 %v1590
        %v4219 = vunpack.c.l.b16 %v1591
        %v4220 = vunpack.c.h.b16 %v1591
        %v4221 = vunpack.c.l.b16 %v1592
        %v4222 = vunpack.c.h.b16 %v1592
        %v4223 = vunpack.c.l.b16 %v1593
        %v4224 = vunpack.c.h.b16 %v1593
        %v4225 = vunpack.c.l.b16 %v1594
        %v4226 = vunpack.c.h.b16 %v1594
        %v4227 = vunpack.c.l.b16 %v1595
        %v4228 = vunpack.c.h.b16 %v1595
        %v4229 = vunpack.c.l.b16 %v1596
        %v4230 = vunpack.c.h.b16 %v1596
        %v4231 = vunpack.c.l.b16 %v1597
        %v4232 = vunpack.c.h.b16 %v1597
        %v4233 = vunpack.c.l.b16 %v1598
        %v4234 = vunpack.c.h.b16 %v1598
        %v4235 = vunpack.c.l.b16 %v1599
        %v4236 = vunpack.c.h.b16 %v1599
        %v4237 = vunpack.c.l.b16 %v1600
        %v4238 = vunpack.c.h.b16 %v1600
        %v4239 = vunpack.c.l.b16 %v1601
        %v4240 = vunpack.c.h.b16 %v1601
        %v4241 = vunpack.c.l.b16 %v1602
        %v4242 = vunpack.c.h.b16 %v1602
        %v4243 = vunpack.c.l.b16 %v1603
        %v4244 = vunpack.c.h.b16 %v1603
        %v4245 = vunpack.c.l.b16 %v1604
        %v4246 = vunpack.c.h.b16 %v1604
        %v4247 = vunpack.c.l.b16 %v1605
        %v4248 = vunpack.c.h.b16 %v1605
        %v4249 = vunpack.c.l.b16 %v1606
        %v4250 = vunpack.c.h.b16 %v1606
        %v4251 = vunpack.c.l.b16 %v1607
        %v4252 = vunpack.c.h.b16 %v1607
        %v4253 = vunpack.c.l.b16 %v1608
        %v4254 = vunpack.c.h.b16 %v1608
        %v4255 = vunpack.c.l.b16 %v1609
        %v4256 = vunpack.c.h.b16 %v1609
        %v4257 = vunpack.c.l.b16 %v1610
        %v4258 = vunpack.c.h.b16 %v1610
        %v4259 = vunpack.c.l.b16 %v1611
        %v4260 = vunpack.c.h.b16 %v1611
        %v4261 = vunpack.c.l.b16 %v1612
        %v4262 = vunpack.c.h.b16 %v1612
        %v4263 = vunpack.c.l.b16 %v1613
        %v4264 = vunpack.c.h.b16 %v1613
        %v4265 = vunpack.c.l.b16 %v1614
        %v4266 = vunpack.c.h.b16 %v1614
        %v4267 = vunpack.c.l.b16 %v1615
        %v4268 = vunpack.c.h.b16 %v1615
        %v4269 = vunpack.c.l.b16 %v1616
        %v4270 = vunpack.c.h.b16 %v1616
        %v4271 = vunpack.c.l.b16 %v1617
        %v4272 = vunpack.c.h.b16 %v1617
        %v4273 = vunpack.c.l.b16 %v1618
        %v4274 = vunpack.c.h.b16 %v1618
        %v4275 = vunpack.c.l.b16 %v1619
        %v4276 = vunpack.c.h.b16 %v1619
        %v4277 = vunpack.c.l.b16 %v1620
        %v4278 = vunpack.c.h.b16 %v1620
        %v4279 = vunpack.c.l.b16 %v1621
        %v4280 = vunpack.c.h.b16 %v1621
        %v4281 = vunpack.c.l.b16 %v1622
        %v4282 = vunpack.c.h.b16 %v1622
        %v4283 = vunpack.c.l.b16 %v1623
        %v4284 = vunpack.c.h.b16 %v1623
        %v4285 = vunpack.c.l.b16 %v1624
        %v4286 = vunpack.c.h.b16 %v1624
        %v4287 = vunpack.c.l.b16 %v1625
        %v4288 = vunpack.c.h.b16 %v1625
        %v4289 = vunpack.c.l.b16 %v1626
        %v4290 = vunpack.c.h.b16 %v1626
        %v4291 = vunpack.c.l.b16 %v1627
        %v4292 = vunpack.c.h.b16 %v1627
        %v4293 = vunpack.c.l.b16 %v1628
        %v4294 = vunpack.c.h.b16 %v1628
        %v4295 = vunpack.c.l.b16 %v1629
        %v4296 = vunpack.c.h.b16 %v1629
        %v4297 = vunpack.c.l.b16 %v1630
        %v4298 = vunpack.c.h.b16 %v1630
        %v4299 = vunpack.c.l.b16 %v1631
        %v4300 = vunpack.c.h.b16 %v1631
        %v4301 = vunpack.c.l.b16 %v1632
        %v4302 = vunpack.c.h.b16 %v1632
        %v4303 = vunpack.c.l.b16 %v1633
        %v4304 = vunpack.c.h.b16 %v1633
        %v4305 = vunpack.c.l.b16 %v1634
        %v4306 = vunpack.c.h.b16 %v1634
        %v4307 = vunpack.c.l.b16 %v1635
        %v4308 = vunpack.c.h.b16 %v1635
        %v4309 = vunpack.c.l.b16 %v1636
        %v4310 = vunpack.c.h.b16 %v1636
        %v4311 = vunpack.c.l.b16 %v1637
        %v4312 = vunpack.c.h.b16 %v1637
        %v4313 = vunpack.c.l.b16 %v1638
        %v4314 = vunpack.c.h.b16 %v1638
        %v4315 = vunpack.c.l.b16 %v1639
        %v4316 = vunpack.c.h.b16 %v1639
        %v4317 = vunpack.c.l.b16 %v1640
        %v4318 = vunpack.c.h.b16 %v1640
        %v4319 = vunpack.c.l.b16 %v1641
        %v4320 = vunpack.c.h.b16 %v1641
        %v4321 = vunpack.c.l.b16 %v1642
        %v4322 = vunpack.c.h.b16 %v1642
        %v4323 = vunpack.c.l.b16 %v1643
        %v4324 = vunpack.c.h.b16 %v1643
        %v4325 = vunpack.c.l.b16 %v1644
        %v4326 = vunpack.c.h.b16 %v1644
        %v4327 = vunpack.c.l.b16 %v1645
        %v4328 = vunpack.c.h.b16 %v1645
        %v4329 = vunpack.c.l.b16 %v1646
        %v4330 = vunpack.c.h.b16 %v1646
        %v4331 = vunpack.c.l.b16 %v1647
        %v4332 = vunpack.c.h.b16 %v1647
        %v4333 = vunpack.c.l.b16 %v1648
        %v4334 = vunpack.c.h.b16 %v1648
        %v4335 = vunpack.c.l.b16 %v1649
        %v4336 = vunpack.c.h.b16 %v1649
        %v4337 = vunpack.c.l.b16 %v1650
        %v4338 = vunpack.c.h.b16 %v1650
        %v4339 = vunpack.c.l.b16 %v1651
        %v4340 = vunpack.c.h.b16 %v1651
        %v4341 = vunpack.c.l.b16 %v1652
        %v4342 = vunpack.c.h.b16 %v1652
        %v4343 = vunpack.c.l.b16 %v1653
        %v4344 = vunpack.c.h.b16 %v1653
        %v4345 = vunpack.c.l.b16 %v1654
        %v4346 = vunpack.c.h.b16 %v1654
        %v4347 = vunpack.c.l.b16 %v1655
        %v4348 = vunpack.c.h.b16 %v1655
        %v4349 = vunpack.c.l.b16 %v1656
        %v4350 = vunpack.c.h.b16 %v1656
        %v4351 = vunpack.c.l.b16 %v1657
        %v4352 = vunpack.c.h.b16 %v1657
        %v4353 = vunpack.c.l.b16 %v1658
        %v4354 = vunpack.c.h.b16 %v1658
        %v4355 = vunpack.c.l.b16 %v1659
        %v4356 = vunpack.c.h.b16 %v1659
        %v4357 = vunpack.c.l.b16 %v1660
        %v4358 = vunpack.c.h.b16 %v1660
        %v4359 = vunpack.c.l.b16 %v1661
        %v4360 = vunpack.c.h.b16 %v1661
        %v4361 = vunpack.c.l.b16 %v1662
        %v4362 = vunpack.c.h.b16 %v1662
        %v4363 = vunpack.c.l.b16 %v1663
        %v4364 = vunpack.c.h.b16 %v1663
        %v4365 = vunpack.c.l.b16 %v1664
        %v4366 = vunpack.c.h.b16 %v1664
        %v4367 = vunpack.c.l.b16 %v1665
        %v4368 = vunpack.c.h.b16 %v1665
        %v4369 = vunpack.c.l.b16 %v1666
        %v4370 = vunpack.c.h.b16 %v1666
        %v4371 = vunpack.c.l.b16 %v1667
        %v4372 = vunpack.c.h.b16 %v1667
        %v4373 = vunpack.c.l.b16 %v1668
        %v4374 = vunpack.c.h.b16 %v1668
        %v4375 = vunpack.c.l.b16 %v1669
        %v4376 = vunpack.c.h.b16 %v1669
        %v4377 = vunpack.c.l.b16 %v1670
        %v4378 = vunpack.c.h.b16 %v1670
        %v4379 = vunpack.c.l.b16 %v1671
        %v4380 = vunpack.c.h.b16 %v1671
        %v4381 = vunpack.c.l.b16 %v1672
        %v4382 = vunpack.c.h.b16 %v1672
        %v4383 = vunpack.c.l.b16 %v1673
        %v4384 = vunpack.c.h.b16 %v1673
        %v4385 = vunpack.c.l.b16 %v1674
        %v4386 = vunpack.c.h.b16 %v1674
        %v4387 = vunpack.c.l.b16 %v1675
        %v4388 = vunpack.c.h.b16 %v1675
        %v4389 = vunpack.c.l.b16 %v1676
        %v4390 = vunpack.c.h.b16 %v1676
        %v4391 = vunpack.c.l.b16 %v1677
        %v4392 = vunpack.c.h.b16 %v1677
        %v4393 = vunpack.c.l.b16 %v1678
        %v4394 = vunpack.c.h.b16 %v1678
        %v4395 = vunpack.c.l.b16 %v1679
        %v4396 = vunpack.c.h.b16 %v1679
        %v4397 = vunpack.c.l.b16 %v1680
        %v4398 = vunpack.c.h.b16 %v1680
        %v4399 = vunpack.c.l.b16 %v1681
        %v4400 = vunpack.c.h.b16 %v1681
        %v4401 = vunpack.c.l.b16 %v1682
        %v4402 = vunpack.c.h.b16 %v1682
        %v4403 = vunpack.c.l.b16 %v1683
        %v4404 = vunpack.c.h.b16 %v1683
        %v4405 = vunpack.c.l.b16 %v1684
        %v4406 = vunpack.c.h.b16 %v1684
        %v4407 = vunpack.c.l.b16 %v1685
        %v4408 = vunpack.c.h.b16 %v1685
        %v4409 = vunpack.c.l.b16 %v1686
        %v4410 = vunpack.c.h.b16 %v1686
        %v4411 = vunpack.c.l.b16 %v1687
        %v4412 = vunpack.c.h.b16 %v1687
        %v4413 = vunpack.c.l.b16 %v1688
        %v4414 = vunpack.c.h.b16 %v1688
        %v4415 = vunpack.c.l.b16 %v1689
        %v4416 = vunpack.c.h.b16 %v1689
        %v4417 = vunpack.c.l.b16 %v1690
        %v4418 = vunpack.c.h.b16 %v1690
        %v4419 = vunpack.c.l.b16 %v1691
        %v4420 = vunpack.c.h.b16 %v1691
        %v4421 = vunpack.c.l.b16 %v1692
        %v4422 = vunpack.c.h.b16 %v1692
        %v4423 = vunpack.c.l.b16 %v1693
        %v4424 = vunpack.c.h.b16 %v1693
        %v4425 = vunpack.c.l.b16 %v1694
        %v4426 = vunpack.c.h.b16 %v1694
        %v4427 = vunpack.c.l.b16 %v1695
        %v4428 = vunpack.c.h.b16 %v1695
        %v4429 = vunpack.c.l.b16 %v1696
        %v4430 = vunpack.c.h.b16 %v1696
        %v4431 = vunpack.c.l.b16 %v1697
        %v4432 = vunpack.c.h.b16 %v1697
        %v4433 = vunpack.c.l.b16 %v1698
        %v4434 = vunpack.c.h.b16 %v1698
        %v4435 = vunpack.c.l.b16 %v1699
        %v4436 = vunpack.c.h.b16 %v1699
        %v4437 = vunpack.c.l.b16 %v1700
        %v4438 = vunpack.c.h.b16 %v1700
        %v4439 = vunpack.c.l.b16 %v1701
        %v4440 = vunpack.c.h.b16 %v1701
        %v4441 = vunpack.c.l.b16 %v1702
        %v4442 = vunpack.c.h.b16 %v1702
        %v4443 = vunpack.c.l.b16 %v1703
        %v4444 = vunpack.c.h.b16 %v1703
        %v4445 = vunpack.c.l.b16 %v1704
        %v4446 = vunpack.c.h.b16 %v1704
        %v4447 = vunpack.c.l.b16 %v1705
        %v4448 = vunpack.c.h.b16 %v1705
        %v4449 = vunpack.c.l.b16 %v1706
        %v4450 = vunpack.c.h.b16 %v1706
        %v4451 = vunpack.c.l.b16 %v1707
        %v4452 = vunpack.c.h.b16 %v1707
        %v4453 = vunpack.c.l.b16 %v1708
        %v4454 = vunpack.c.h.b16 %v1708
        %v4455 = vunpack.c.l.b16 %v1709
        %v4456 = vunpack.c.h.b16 %v1709
        %v4457 = vunpack.c.l.b16 %v1710
        %v4458 = vunpack.c.h.b16 %v1710
        %v4459 = vunpack.c.l.b16 %v1711
        %v4460 = vunpack.c.h.b16 %v1711
        %v4461 = vunpack.c.l.b16 %v1712
        %v4462 = vunpack.c.h.b16 %v1712
        %v4463 = vunpack.c.l.b16 %v1713
        %v4464 = vunpack.c.h.b16 %v1713
        %v4465 = vunpack.c.l.b16 %v1714
        %v4466 = vunpack.c.h.b16 %v1714
        %v4467 = vunpack.c.l.b16 %v1715
        %v4468 = vunpack.c.h.b16 %v1715
        %v4469 = vunpack.c.l.b16 %v1716
        %v4470 = vunpack.c.h.b16 %v1716
        %v4471 = vunpack.c.l.b16 %v1717
        %v4472 = vunpack.c.h.b16 %v1717
        %v4473 = vunpack.c.l.b16 %v1718
        %v4474 = vunpack.c.h.b16 %v1718
        %v4475 = vunpack.c.l.b16 %v1719
        %v4476 = vunpack.c.h.b16 %v1719
        %v4477 = vunpack.c.l.b16 %v1720
        %v4478 = vunpack.c.h.b16 %v1720
        %v4479 = vunpack.c.l.b16 %v1721
        %v4480 = vunpack.c.h.b16 %v1721
        %v4481 = vunpack.c.l.b16 %v1722
        %v4482 = vunpack.c.h.b16 %v1722
        %v4483 = vunpack.c.l.b16 %v1723
        %v4484 = vunpack.c.h.b16 %v1723
        %v4485 = vunpack.c.l.b16 %v1724
        %v4486 = vunpack.c.h.b16 %v1724
        %v4487 = vunpack.c.l.b16 %v1725
        %v4488 = vunpack.c.h.b16 %v1725
        %v4489 = vunpack.c.l.b16 %v1726
        %v4490 = vunpack.c.h.b16 %v1726
        %v4491 = vunpack.c.l.b16 %v1727
        %v4492 = vunpack.c.h.b16 %v1727
        %v4493 = vunpack.c.l.b16 %v1728
        %v4494 = vunpack.c.h.b16 %v1728
        %v4495 = vunpack.c.l.b16 %v1729
        %v4496 = vunpack.c.h.b16 %v1729
        %v4497 = vunpack.c.l.b16 %v1730
        %v4498 = vunpack.c.h.b16 %v1730
        %v4499 = vunpack.c.l.b16 %v1731
        %v4500 = vunpack.c.h.b16 %v1731
        %v4501 = vunpack.c.l.b16 %v1732
        %v4502 = vunpack.c.h.b16 %v1732
        %v4503 = vunpack.c.l.b16 %v1733
        %v4504 = vunpack.c.h.b16 %v1733
        %v4505 = vunpack.c.l.b16 %v1734
        %v4506 = vunpack.c.h.b16 %v1734
        %v4507 = vunpack.c.l.b16 %v1735
        %v4508 = vunpack.c.h.b16 %v1735
        %v4509 = vunpack.c.l.b16 %v1736
        %v4510 = vunpack.c.h.b16 %v1736
        %v4511 = vunpack.c.l.b16 %v1737
        %v4512 = vunpack.c.h.b16 %v1737
        %v4513 = vunpack.c.l.b16 %v1738
        %v4514 = vunpack.c.h.b16 %v1738
        %v4515 = vunpack.c.l.b16 %v1739
        %v4516 = vunpack.c.h.b16 %v1739
        %v4517 = vunpack.c.l.b16 %v1740
        %v4518 = vunpack.c.h.b16 %v1740
        %v4519 = vunpack.c.l.b16 %v1741
        %v4520 = vunpack.c.h.b16 %v1741
        %v4521 = vunpack.c.l.b16 %v1742
        %v4522 = vunpack.c.h.b16 %v1742
        %v4523 = vunpack.c.l.b16 %v1743
        %v4524 = vunpack.c.h.b16 %v1743
        %v4525 = vunpack.c.l.b16 %v1744
        %v4526 = vunpack.c.h.b16 %v1744
        %v4527 = vunpack.c.l.b16 %v1745
        %v4528 = vunpack.c.h.b16 %v1745
        %v4529 = vunpack.c.l.b16 %v1746
        %v4530 = vunpack.c.h.b16 %v1746
        %v4531 = vunpack.c.l.b16 %v1747
        %v4532 = vunpack.c.h.b16 %v1747
        %v4533 = vunpack.c.l.b16 %v1748
        %v4534 = vunpack.c.h.b16 %v1748
        %v4535 = vunpack.c.l.b16 %v1749
        %v4536 = vunpack.c.h.b16 %v1749
        %v4537 = vunpack.c.l.b16 %v1750
        %v4538 = vunpack.c.h.b16 %v1750
        %v4539 = vunpack.c.l.b16 %v1751
        %v4540 = vunpack.c.h.b16 %v1751
        %v4541 = vunpack.c.l.b16 %v1752
        %v4542 = vunpack.c.h.b16 %v1752
        %v4543 = vunpack.c.l.b16 %v1753
        %v4544 = vunpack.c.h.b16 %v1753
        %v4545 = vunpack.c.l.b16 %v1754
        %v4546 = vunpack.c.h.b16 %v1754
        %v4547 = vunpack.c.l.b16 %v1755
        %v4548 = vunpack.c.h.b16 %v1755
        %v4549 = vunpack.c.l.b16 %v1756
        %v4550 = vunpack.c.h.b16 %v1756
        %v4551 = vunpack.c.l.b16 %v1757
        %v4552 = vunpack.c.h.b16 %v1757
        %v4553 = vunpack.c.l.b16 %v1758
        %v4554 = vunpack.c.h.b16 %v1758
        %v4555 = vunpack.c.l.b16 %v1759
        %v4556 = vunpack.c.h.b16 %v1759
        %v4557 = vunpack.c.l.b16 %v1760
        %v4558 = vunpack.c.h.b16 %v1760
        %v4559 = vunpack.c.l.b16 %v1761
        %v4560 = vunpack.c.h.b16 %v1761
        %v4561 = vunpack.c.l.b16 %v1762
        %v4562 = vunpack.c.h.b16 %v1762
        %v4563 = vunpack.c.l.b16 %v1763
        %v4564 = vunpack.c.h.b16 %v1763
        %v4565 = vunpack.c.l.b16 %v1764
        %v4566 = vunpack.c.h.b16 %v1764
        %v4567 = vunpack.c.l.b16 %v1765
        %v4568 = vunpack.c.h.b16 %v1765
        %v4569 = vunpack.c.l.b16 %v1766
        %v4570 = vunpack.c.h.b16 %v1766
        %v4571 = vunpack.c.l.b16 %v1767
        %v4572 = vunpack.c.h.b16 %v1767
        %v4573 = vunpack.c.l.b16 %v1768
        %v4574 = vunpack.c.h.b16 %v1768
        %v4575 = vunpack.c.l.b16 %v1769
        %v4576 = vunpack.c.h.b16 %v1769
        %v4577 = vunpack.c.l.b16 %v1770
        %v4578 = vunpack.c.h.b16 %v1770
        %v4579 = vunpack.c.l.b16 %v1771
        %v4580 = vunpack.c.h.b16 %v1771
        %v4581 = vunpack.c.l.b16 %v1772
        %v4582 = vunpack.c.h.b16 %v1772
        %v4583 = vunpack.c.l.b16 %v1773
        %v4584 = vunpack.c.h.b16 %v1773
        %v4585 = vunpack.c.l.b16 %v1774
        %v4586 = vunpack.c.h.b16 %v1774
        %v4587 = vunpack.c.l.b16 %v1775
        %v4588 = vunpack.c.h.b16 %v1775
        %v4589 = vunpack.c.l.b16 %v1776
        %v4590 = vunpack.c.h.b16 %v1776
        %v4591 = vunpack.c.l.b16 %v1777
        %v4592 = vunpack.c.h.b16 %v1777
        %v4593 = vunpack.c.l.b16 %v1778
        %v4594 = vunpack.c.h.b16 %v1778
        %v4595 = vunpack.c.l.b16 %v1779
        %v4596 = vunpack.c.h.b16 %v1779
        %v4597 = vunpack.c.l.b16 %v1780
        %v4598 = vunpack.c.h.b16 %v1780
        %v4599 = vunpack.c.l.b16 %v1781
        %v4600 = vunpack.c.h.b16 %v1781
        %v4601 = vunpack.c.l.b16 %v1782
        %v4602 = vunpack.c.h.b16 %v1782
        %v4603 = vunpack.c.l.b16 %v1783
        %v4604 = vunpack.c.h.b16 %v1783
        %v4605 = vunpack.c.l.b16 %v1784
        %v4606 = vunpack.c.h.b16 %v1784
        %v4607 = vunpack.c.l.b16 %v1785
        %v4608 = vunpack.c.h.b16 %v1785
        %v4609 = vunpack.c.l.b16 %v1786
        %v4610 = vunpack.c.h.b16 %v1786
        %v4611 = vunpack.c.l.b16 %v1787
        %v4612 = vunpack.c.h.b16 %v1787
        %v4613 = vunpack.c.l.b16 %v1788
        %v4614 = vunpack.c.h.b16 %v1788
        %v4615 = vunpack.c.l.b16 %v1789
        %v4616 = vunpack.c.h.b16 %v1789
        %v4617 = vunpack.c.l.b16 %v1790
        %v4618 = vunpack.c.h.b16 %v1790
        %v4619 = vunpack.c.l.b16 %v1791
        %v4620 = vunpack.c.h.b16 %v1791
        %v4621 = vunpack.c.l.b16 %v1792
        %v4622 = vunpack.c.h.b16 %v1792
        %v4623 = vunpack.c.l.b16 %v1793
        %v4624 = vunpack.c.h.b16 %v1793
        %v4625 = vunpack.c.l.b16 %v1794
        %v4626 = vunpack.c.h.b16 %v1794
        %v4627 = vunpack.c.l.b16 %v1795
        %v4628 = vunpack.c.h.b16 %v1795
        %v4629 = vunpack.c.l.b16 %v1796
        %v4630 = vunpack.c.h.b16 %v1796
        %v4631 = vunpack.c.l.b16 %v1797
        %v4632 = vunpack.c.h.b16 %v1797
        %v4633 = vunpack.c.l.b16 %v1798
        %v4634 = vunpack.c.h.b16 %v1798
        %v4635 = vunpack.c.l.b16 %v1799
        %v4636 = vunpack.c.h.b16 %v1799
        %v4637 = vunpack.c.l.b16 %v1800
        %v4638 = vunpack.c.h.b16 %v1800
        %v4639 = vunpack.c.l.b16 %v1801
        %v4640 = vunpack.c.h.b16 %v1801
        %v4641 = vunpack.c.l.b16 %v1802
        %v4642 = vunpack.c.h.b16 %v1802
        %v4643 = vunpack.c.l.b16 %v1803
        %v4644 = vunpack.c.h.b16 %v1803
        %v4645 = vunpack.c.l.b16 %v1804
        %v4646 = vunpack.c.h.b16 %v1804
        %v4647 = vunpack.c.l.b16 %v1805
        %v4648 = vunpack.c.h.b16 %v1805
        %v4649 = vunpack.c.l.b16 %v1806
        %v4650 = vunpack.c.h.b16 %v1806
        %v4651 = vunpack.c.l.b16 %v1807
        %v4652 = vunpack.c.h.b16 %v1807
        %v4653 = vunpack.c.l.b16 %v1808
        %v4654 = vunpack.c.h.b16 %v1808
        %v4655 = vunpack.c.l.b16 %v1809
        %v4656 = vunpack.c.h.b16 %v1809
        %v4657 = vunpack.c.l.b16 %v1810
        %v4658 = vunpack.c.h.b16 %v1810
        %v4659 = vunpack.c.l.b16 %v1811
        %v4660 = vunpack.c.h.b16 %v1811
        %v4661 = vunpack.c.l.b16 %v1812
        %v4662 = vunpack.c.h.b16 %v1812
        %v4663 = vunpack.c.l.b16 %v1813
        %v4664 = vunpack.c.h.b16 %v1813
        %v4665 = vunpack.c.l.b16 %v1814
        %v4666 = vunpack.c.h.b16 %v1814
        %v4667 = vunpack.c.l.b16 %v1815
        %v4668 = vunpack.c.h.b16 %v1815
        %v4669 = vunpack.c.l.b16 %v1816
        %v4670 = vunpack.c.h.b16 %v1816
        %v4671 = vunpack.c.l.b16 %v1817
        %v4672 = vunpack.c.h.b16 %v1817
        %v4673 = vunpack.c.l.b16 %v1818
        %v4674 = vunpack.c.h.b16 %v1818
        %v4675 = vunpack.c.l.b16 %v1819
        %v4676 = vunpack.c.h.b16 %v1819
        %v4677 = vunpack.c.l.b16 %v1820
        %v4678 = vunpack.c.h.b16 %v1820
        %v4679 = vunpack.c.l.b16 %v1821
        %v4680 = vunpack.c.h.b16 %v1821
        %v4681 = vunpack.c.l.b16 %v1822
        %v4682 = vunpack.c.h.b16 %v1822
        %v4683 = vunpack.c.l.b16 %v1823
        %v4684 = vunpack.c.h.b16 %v1823
        %v4685 = vunpack.c.l.b16 %v1824
        %v4686 = vunpack.c.h.b16 %v1824
        %v4687 = vunpack.c.l.b16 %v1825
        %v4688 = vunpack.c.h.b16 %v1825
        %v4689 = vunpack.c.l.b16 %v1826
        %v4690 = vunpack.c.h.b16 %v1826
        %v4691 = vunpack.c.l.b16 %v1827
        %v4692 = vunpack.c.h.b16 %v1827
        %v4693 = vunpack.c.l.b16 %v1828
        %v4694 = vunpack.c.h.b16 %v1828
        %v4695 = vunpack.c.l.b16 %v1829
        %v4696 = vunpack.c.h.b16 %v1829
        %v4697 = vunpack.c.l.b16 %v1830
        %v4698 = vunpack.c.h.b16 %v1830
        %v4699 = vunpack.c.l.b16 %v1831
        %v4700 = vunpack.c.h.b16 %v1831
        %v4701 = vunpack.c.l.b16 %v1832
        %v4702 = vunpack.c.h.b16 %v1832
        %v4703 = vunpack.c.l.b16 %v1833
        %v4704 = vunpack.c.h.b16 %v1833
        %v4705 = vunpack.c.l.b16 %v1834
        %v4706 = vunpack.c.h.b16 %v1834
        %v4707 = vunpack.c.l.b16 %v1835
        %v4708 = vunpack.c.h.b16 %v1835
        %v4709 = vunpack.c.l.b16 %v1836
        %v4710 = vunpack.c.h.b16 %v1836
        %v4711 = vunpack.c.l.b16 %v1837
        %v4712 = vunpack.c.h.b16 %v1837
        %v4713 = vunpack.c.l.b16 %v1838
        %v4714 = vunpack.c.h.b16 %v1838
        %v4715 = vunpack.c.l.b16 %v1839
        %v4716 = vunpack.c.h.b16 %v1839
        %v4717 = vunpack.c.l.b16 %v1840
        %v4718 = vunpack.c.h.b16 %v1840
        %v4719 = vunpack.c.l.b16 %v1841
        %v4720 = vunpack.c.h.b16 %v1841
        %v4721 = vunpack.c.l.b16 %v1842
        %v4722 = vunpack.c.h.b16 %v1842
        %v4723 = vunpack.c.l.b16 %v1843
        %v4724 = vunpack.c.h.b16 %v1843
        %v4725 = vunpack.c.l.b16 %v1844
        %v4726 = vunpack.c.h.b16 %v1844
        %v4727 = vunpack.c.l.b16 %v1845
        %v4728 = vunpack.c.h.b16 %v1845
        %v4729 = vunpack.c.l.b16 %v1846
        %v4730 = vunpack.c.h.b16 %v1846
        %v4731 = vunpack.c.l.b16 %v1847
        %v4732 = vunpack.c.h.b16 %v1847
        %v4733 = vunpack.c.l.b16 %v1848
        %v4734 = vunpack.c.h.b16 %v1848
        %v4735 = vunpack.c.l.b16 %v1849
        %v4736 = vunpack.c.h.b16 %v1849
        %v4737 = vunpack.c.l.b16 %v1850
        %v4738 = vunpack.c.h.b16 %v1850
        %v4739 = vunpack.c.l.b16 %v1851
        %v4740 = vunpack.c.h.b16 %v1851
        %v4741 = vunpack.c.l.b16 %v1852
        %v4742 = vunpack.c.h.b16 %v1852
        %v4743 = vunpack.c.l.b16 %v1853
        %v4744 = vunpack.c.h.b16 %v1853
        %v4745 = vunpack.c.l.b16 %v1854
        %v4746 = vunpack.c.h.b16 %v1854
        %v4747 = vunpack.c.l.b16 %v1855
        %v4748 = vunpack.c.h.b16 %v1855
        %v4749 = vunpack.c.l.b16 %v1856
        %v4750 = vunpack.c.h.b16 %v1856
        %v4751 = vunpack.c.l.b16 %v1857
        %v4752 = vunpack.c.h.b16 %v1857
        %v4753 = vunpack.c.l.b16 %v1858
        %v4754 = vunpack.c.h.b16 %v1858
        %v4755 = vunpack.c.l.b16 %v1859
        %v4756 = vunpack.c.h.b16 %v1859
        %v4757 = vunpack.c.l.b16 %v1860
        %v4758 = vunpack.c.h.b16 %v1860
        %v4759 = vunpack.c.l.b16 %v1861
        %v4760 = vunpack.c.h.b16 %v1861
        %v4761 = vunpack.c.l.b16 %v1862
        %v4762 = vunpack.c.h.b16 %v1862
        %v4763 = vunpack.c.l.b16 %v1863
        %v4764 = vunpack.c.h.b16 %v1863
        %v4765 = vunpack.c.l.b16 %v1864
        %v4766 = vunpack.c.h.b16 %v1864
        %v4767 = vunpack.c.l.b16 %v1865
        %v4768 = vunpack.c.h.b16 %v1865
        %v4769 = vunpack.c.l.b16 %v1866
        %v4770 = vunpack.c.h.b16 %v1866
        %v4771 = vunpack.c.l.b16 %v1867
        %v4772 = vunpack.c.h.b16 %v1867
        %v4773 = vunpack.c.l.b16 %v1868
        %v4774 = vunpack.c.h.b16 %v1868
        %v4775 = vunpack.c.l.b16 %v1869
        %v4776 = vunpack.c.h.b16 %v1869
        %v4777 = vunpack.c.l.b16 %v1870
        %v4778 = vunpack.c.h.b16 %v1870
        %v4779 = vunpack.c.l.b16 %v1871
        %v4780 = vunpack.c.h.b16 %v1871
        %v4781 = vunpack.c.l.b16 %v1872
        %v4782 = vunpack.c.h.b16 %v1872
        %v4783 = vunpack.c.l.b16 %v1873
        %v4784 = vunpack.c.h.b16 %v1873
        %v4785 = vunpack.c.l.b16 %v1874
        %v4786 = vunpack.c.h.b16 %v1874
        %v4787 = vunpack.c.l.b16 %v1875
        %v4788 = vunpack.c.h.b16 %v1875
        %v4789 = vunpack.c.l.b16 %v1876
        %v4790 = vunpack.c.h.b16 %v1876
        %v4791 = vunpack.c.l.b16 %v1877
        %v4792 = vunpack.c.h.b16 %v1877
        %v4793 = vunpack.c.l.b16 %v1878
        %v4794 = vunpack.c.h.b16 %v1878
        %v4795 = vunpack.c.l.b16 %v1879
        %v4796 = vunpack.c.h.b16 %v1879
        %v4797 = vunpack.c.l.b16 %v1880
        %v4798 = vunpack.c.h.b16 %v1880
        %v4799 = vunpack.c.l.b16 %v1881
        %v4800 = vunpack.c.h.b16 %v1881
        %v4801 = vunpack.c.l.b16 %v1882
        %v4802 = vunpack.c.h.b16 %v1882
        %v4803 = vunpack.c.l.b16 %v1883
        %v4804 = vunpack.c.h.b16 %v1883
        %v4805 = vunpack.c.l.b16 %v1884
        %v4806 = vunpack.c.h.b16 %v1884
        %v4807 = vunpack.c.l.b16 %v1885
        %v4808 = vunpack.c.h.b16 %v1885
        %v4809 = vunpack.c.l.b16 %v1886
        %v4810 = vunpack.c.h.b16 %v1886
        %v4811 = vunpack.c.l.b16 %v1887
        %v4812 = vunpack.c.h.b16 %v1887
        %v4813 = vunpack.c.l.b16 %v1888
        %v4814 = vunpack.c.h.b16 %v1888
        %v4815 = vunpack.c.l.b16 %v1889
        %v4816 = vunpack.c.h.b16 %v1889
        %v4817 = vunpack.c.l.b16 %v1890
        %v4818 = vunpack.c.h.b16 %v1890
        %v4819 = vunpack.c.l.b16 %v1891
        %v4820 = vunpack.c.h.b16 %v1891
        %v4821 = vunpack.c.l.b16 %v1892
        %v4822 = vunpack.c.h.b16 %v1892
        %v4823 = vunpack.c.l.b16 %v1893
        %v4824 = vunpack.c.h.b16 %v1893
        %v4825 = vunpack.c.l.b16 %v1894
        %v4826 = vunpack.c.h.b16 %v1894
        %v4827 = vunpack.c.l.b16 %v1895
        %v4828 = vunpack.c.h.b16 %v1895
        %v4829 = vunpack.c.l.b16 %v1896
        %v4830 = vunpack.c.h.b16 %v1896
        %v4831 = vunpack.c.l.b16 %v1897
        %v4832 = vunpack.c.h.b16 %v1897
        %v4833 = vunpack.c.l.b16 %v1898
        %v4834 = vunpack.c.h.b16 %v1898
        %v4835 = vunpack.c.l.b16 %v1899
        %v4836 = vunpack.c.h.b16 %v1899
        %v4837 = vunpack.c.l.b16 %v1900
        %v4838 = vunpack.c.h.b16 %v1900
        %v4839 = vunpack.c.l.b16 %v1901
        %v4840 = vunpack.c.h.b16 %v1901
        %v4841 = vunpack.c.l.b16 %v1902
        %v4842 = vunpack.c.h.b16 %v1902
        %v4843 = vunpack.c.l.b16 %v1903
        %v4844 = vunpack.c.h.b16 %v1903
        %v4845 = vunpack.c.l.b16 %v1904
        %v4846 = vunpack.c.h.b16 %v1904
        %v4847 = vunpack.c.l.b16 %v1905
        %v4848 = vunpack.c.h.b16 %v1905
        %v4849 = vunpack.c.l.b16 %v1906
        %v4850 = vunpack.c.h.b16 %v1906
        %v4851 = vunpack.c.l.b16 %v1907
        %v4852 = vunpack.c.h.b16 %v1907
        %v4853 = vunpack.c.l.b16 %v1908
        %v4854 = vunpack.c.h.b16 %v1908
        %v4855 = vunpack.c.l.b16 %v1909
        %v4856 = vunpack.c.h.b16 %v1909
        %v4857 = vunpack.c.l.b16 %v1910
        %v4858 = vunpack.c.h.b16 %v1910
        %v4859 = vunpack.c.l.b16 %v1911
        %v4860 = vunpack.c.h.b16 %v1911
        %v4861 = vunpack.c.l.b16 %v1912
        %v4862 = vunpack.c.h.b16 %v1912
        %v4863 = vunpack.c.l.b16 %v1913
        %v4864 = vunpack.c.h.b16 %v1913
        %v4865 = vunpack.c.l.b16 %v1914
        %v4866 = vunpack.c.h.b16 %v1914
        %v4867 = vunpack.c.l.b16 %v1915
        %v4868 = vunpack.c.h.b16 %v1915
        %v4869 = vunpack.c.l.b16 %v1916
        %v4870 = vunpack.c.h.b16 %v1916
        %v4871 = vunpack.c.l.b16 %v1917
        %v4872 = vunpack.c.h.b16 %v1917
        %v4873 = vunpack.c.l.b16 %v1918
        %v4874 = vunpack.c.h.b16 %v1918
        %v4875 = vunpack.c.l.b16 %v1919
        %v4876 = vunpack.c.h.b16 %v1919
        %v4877 = vunpack.c.l.b16 %v1920
        %v4878 = vunpack.c.h.b16 %v1920
        %v4879 = vunpack.c.l.b16 %v1921
        %v4880 = vunpack.c.h.b16 %v1921
        %v4881 = vunpack.c.l.b16 %v1922
        %v4882 = vunpack.c.h.b16 %v1922
        %v4883 = vunpack.c.l.b16 %v1923
        %v4884 = vunpack.c.h.b16 %v1923
        %v4885 = vunpack.c.l.b16 %v1924
        %v4886 = vunpack.c.h.b16 %v1924
        %v4887 = vunpack.c.l.b16 %v1925
        %v4888 = vunpack.c.h.b16 %v1925
        %v4889 = vunpack.c.l.b16 %v1926
        %v4890 = vunpack.c.h.b16 %v1926
        %v4891 = vunpack.c.l.b16 %v1927
        %v4892 = vunpack.c.h.b16 %v1927
        %v4893 = vunpack.c.l.b16 %v1928
        %v4894 = vunpack.c.h.b16 %v1928
        %v4895 = vunpack.c.l.b16 %v1929
        %v4896 = vunpack.c.h.b16 %v1929
        %v4897 = vunpack.c.l.b16 %v1930
        %v4898 = vunpack.c.h.b16 %v1930
        %v4899 = vunpack.c.l.b16 %v1931
        %v4900 = vunpack.c.h.b16 %v1931
        %v4901 = vunpack.c.l.b16 %v1932
        %v4902 = vunpack.c.h.b16 %v1932
        %v4903 = vunpack.c.l.b16 %v1933
        %v4904 = vunpack.c.h.b16 %v1933
        %v4905 = vunpack.c.l.b16 %v1934
        %v4906 = vunpack.c.h.b16 %v1934
        %v4907 = vunpack.c.l.b16 %v1935
        %v4908 = vunpack.c.h.b16 %v1935
        %v4909 = vunpack.c.l.b16 %v1936
        %v4910 = vunpack.c.h.b16 %v1936
        %v4911 = vunpack.c.l.b16 %v1937
        %v4912 = vunpack.c.h.b16 %v1937
        %v4913 = vunpack.c.l.b16 %v1938
        %v4914 = vunpack.c.h.b16 %v1938
        %v4915 = vunpack.c.l.b16 %v1939
        %v4916 = vunpack.c.h.b16 %v1939
        %v4917 = vunpack.c.l.b16 %v1940
        %v4918 = vunpack.c.h.b16 %v1940
        %v4919 = vunpack.c.l.b16 %v1941
        %v4920 = vunpack.c.h.b16 %v1941
        %v4921 = vunpack.c.l.b16 %v1942
        %v4922 = vunpack.c.h.b16 %v1942
        %v4923 = vunpack.c.l.b16 %v1943
        %v4924 = vunpack.c.h.b16 %v1943
        %v4925 = vunpack.c.l.b16 %v1944
        %v4926 = vunpack.c.h.b16 %v1944
        %v4927 = vunpack.c.l.b16 %v1945
        %v4928 = vunpack.c.h.b16 %v1945
        %v4929 = vunpack.c.l.b16 %v1946
        %v4930 = vunpack.c.h.b16 %v1946
        %v4931 = vunpack.c.l.b16 %v1947
        %v4932 = vunpack.c.h.b16 %v1947
        %v4933 = vunpack.c.l.b16 %v1948
        %v4934 = vunpack.c.h.b16 %v1948
        %v4935 = vunpack.c.l.b16 %v1949
        %v4936 = vunpack.c.h.b16 %v1949
        %v4937 = vunpack.c.l.b16 %v1950
        %v4938 = vunpack.c.h.b16 %v1950
        %v4939 = vunpack.c.l.b16 %v1951
        %v4940 = vunpack.c.h.b16 %v1951
        %v4941 = vunpack.c.l.b16 %v1952
        %v4942 = vunpack.c.h.b16 %v1952
        %v4943 = vunpack.c.l.b16 %v1953
        %v4944 = vunpack.c.h.b16 %v1953
        %v4945 = vunpack.c.l.b16 %v1954
        %v4946 = vunpack.c.h.b16 %v1954
        %v4947 = vunpack.c.l.b16 %v1955
        %v4948 = vunpack.c.h.b16 %v1955
        %v4949 = vunpack.c.l.b16 %v1956
        %v4950 = vunpack.c.h.b16 %v1956
        %v4951 = vunpack.c.l.b16 %v1957
        %v4952 = vunpack.c.h.b16 %v1957
        %v4953 = vunpack.c.l.b16 %v1958
        %v4954 = vunpack.c.h.b16 %v1958
        %v4955 = vunpack.c.l.b16 %v1959
        %v4956 = vunpack.c.h.b16 %v1959
        %v4957 = vunpack.c.l.b16 %v1960
        %v4958 = vunpack.c.h.b16 %v1960
        %v4959 = vunpack.c.l.b16 %v1961
        %v4960 = vunpack.c.h.b16 %v1961
        %v4961 = vunpack.c.l.b16 %v1962
        %v4962 = vunpack.c.h.b16 %v1962
        %v4963 = vunpack.c.l.b16 %v1963
        %v4964 = vunpack.c.h.b16 %v1963
        %v4965 = vunpack.c.l.b16 %v1964
        %v4966 = vunpack.c.h.b16 %v1964
        %v4967 = vunpack.c.l.b16 %v1965
        %v4968 = vunpack.c.h.b16 %v1965
        %v4969 = vunpack.c.l.b16 %v1966
        %v4970 = vunpack.c.h.b16 %v1966
        %v4971 = vunpack.c.l.b16 %v1967
        %v4972 = vunpack.c.h.b16 %v1967
        %v4973 = vunpack.c.l.b16 %v1968
        %v4974 = vunpack.c.h.b16 %v1968
        %v4975 = vunpack.c.l.b16 %v1969
        %v4976 = vunpack.c.h.b16 %v1969
        %v4977 = vunpack.c.l.b16 %v1970
        %v4978 = vunpack.c.h.b16 %v1970
        %v4979 = vunpack.c.l.b16 %v1971
        %v4980 = vunpack.c.h.b16 %v1971
        %v4981 = vunpack.c.l.b16 %v1972
        %v4982 = vunpack.c.h.b16 %v1972
        %v4983 = vunpack.c.l.b16 %v1973
        %v4984 = vunpack.c.h.b16 %v1973
        %v4985 = vunpack.c.l.b16 %v1974
        %v4986 = vunpack.c.h.b16 %v1974
        %v4987 = vunpack.c.l.b16 %v1975
        %v4988 = vunpack.c.h.b16 %v1975
        %v4989 = vunpack.c.l.b16 %v1976
        %v4990 = vunpack.c.h.b16 %v1976
        %v4991 = vunpack.c.l.b16 %v1977
        %v4992 = vunpack.c.h.b16 %v1977
        %v4993 = vunpack.c.l.b16 %v1978
        %v4994 = vunpack.c.h.b16 %v1978
        %v4995 = vunpack.c.l.b16 %v1979
        %v4996 = vunpack.c.h.b16 %v1979
        %v4997 = vunpack.c.l.b16 %v1980
        %v4998 = vunpack.c.h.b16 %v1980
        %v4999 = vunpack.c.l.b16 %v1981
        %v5000 = vunpack.c.h.b16 %v1981
        %v5001 = vunpack.c.l.b16 %v1982
        %v5002 = vunpack.c.h.b16 %v1982
        %v5003 = vunpack.c.l.b16 %v1983
        %v5004 = vunpack.c.h.b16 %v1983
        %v5005 = vunpack.c.l.b16 %v1984
        %v5006 = vunpack.c.h.b16 %v1984
        %v5007 = vunpack.c.l.b16 %v1985
        %v5008 = vunpack.c.h.b16 %v1985
        %v5009 = vunpack.c.l.b16 %v1986
        %v5010 = vunpack.c.h.b16 %v1986
        %v5011 = vunpack.c.l.b16 %v1987
        %v5012 = vunpack.c.h.b16 %v1987
        %v5013 = vunpack.c.l.b16 %v1988
        %v5014 = vunpack.c.h.b16 %v1988
        %v5015 = vunpack.c.l.b16 %v1989
        %v5016 = vunpack.c.h.b16 %v1989
        %v5017 = vunpack.c.l.b16 %v1990
        %v5018 = vunpack.c.h.b16 %v1990
        %v5019 = vunpack.c.l.b16 %v1991
        %v5020 = vunpack.c.h.b16 %v1991
        %v5021 = vunpack.c.l.b16 %v1992
        %v5022 = vunpack.c.h.b16 %v1992
        %v5023 = vunpack.c.l.b16 %v1993
        %v5024 = vunpack.c.h.b16 %v1993
        %v5025 = vunpack.c.l.b16 %v1994
        %v5026 = vunpack.c.h.b16 %v1994
        %v5027 = vunpack.c.l.b16 %v1995
        %v5028 = vunpack.c.h.b16 %v1995
        %v5029 = vunpack.c.l.b16 %v1996
        %v5030 = vunpack.c.h.b16 %v1996
        %v5031 = vunpack.c.l.b16 %v1997
        %v5032 = vunpack.c.h.b16 %v1997
        %v5033 = vunpack.c.l.b16 %v1998
        %v5034 = vunpack.c.h.b16 %v1998
        %v5035 = vunpack.c.l.b16 %v1999
        %v5036 = vunpack.c.h.b16 %v1999
        %v5037 = vunpack.c.l.b16 %v2000
        %v5038 = vunpack.c.h.b16 %v2000
        %v5039 = vunpack.c.l.b16 %v2001
        %v5040 = vunpack.c.h.b16 %v2001
        %v5041 = vunpack.c.l.b16 %v2002
        %v5042 = vunpack.c.h.b16 %v2002
        %v5043 = vunpack.c.l.b16 %v2003
        %v5044 = vunpack.c.h.b16 %v2003
        %v5045 = vunpack.c.l.b16 %v2004
        %v5046 = vunpack.c.h.b16 %v2004
        %v5047 = vunpack.c.l.b16 %v2005
        %v5048 = vunpack.c.h.b16 %v2005
        %v5049 = vunpack.c.l.b16 %v2006
        %v5050 = vunpack.c.h.b16 %v2006
        %v5051 = vunpack.c.l.b16 %v2007
        %v5052 = vunpack.c.h.b16 %v2007
        %v5053 = vunpack.c.l.b16 %v2008
        %v5054 = vunpack.c.h.b16 %v2008
        %v5055 = vunpack.c.l.b16 %v2009
        %v5056 = vunpack.c.h.b16 %v2009
        %v5057 = vunpack.c.l.b16 %v2010
        %v5058 = vunpack.c.h.b16 %v2010
        %v5059 = vunpack.c.l.b16 %v2011
        %v5060 = vunpack.c.h.b16 %v2011
        %v5061 = vunpack.c.l.b16 %v2012
        %v5062 = vunpack.c.h.b16 %v2012
        %v5063 = vunpack.c.l.b16 %v2013
        %v5064 = vunpack.c.h.b16 %v2013
        %v5065 = vunpack.c.l.b16 %v2014
        %v5066 = vunpack.c.h.b16 %v2014
        %v5067 = vunpack.c.l.b16 %v2015
        %v5068 = vunpack.c.h.b16 %v2015
        %v5069 = vunpack.c.l.b16 %v2016
        %v5070 = vunpack.c.h.b16 %v2016
        %v5071 = vunpack.c.l.b16 %v2017
        %v5072 = vunpack.c.h.b16 %v2017
        %v5073 = vunpack.c.l.b16 %v2018
        %v5074 = vunpack.c.h.b16 %v2018
        %v5075 = vunpack.c.l.b16 %v2019
        %v5076 = vunpack.c.h.b16 %v2019
        %v5077 = vunpack.c.l.b16 %v2020
        %v5078 = vunpack.c.h.b16 %v2020
        %v5079 = vunpack.c.l.b16 %v2021
        %v5080 = vunpack.c.h.b16 %v2021
        %v5081 = vunpack.c.l.b16 %v2022
        %v5082 = vunpack.c.h.b16 %v2022
        %v5083 = vunpack.c.l.b16 %v2023
        %v5084 = vunpack.c.h.b16 %v2023
        %v5085 = vunpack.c.l.b16 %v2024
        %v5086 = vunpack.c.h.b16 %v2024
        %v5087 = vunpack.c.l.b16 %v2025
        %v5088 = vunpack.c.h.b16 %v2025
        %v5089 = vunpack.c.l.b16 %v2026
        %v5090 = vunpack.c.h.b16 %v2026
        %v5091 = vunpack.c.l.b16 %v2027
        %v5092 = vunpack.c.h.b16 %v2027
        %v5093 = vunpack.c.l.b16 %v2028
        %v5094 = vunpack.c.h.b16 %v2028
        %v5095 = vunpack.c.l.b16 %v2029
        %v5096 = vunpack.c.h.b16 %v2029
        %v5097 = vunpack.c.l.b16 %v2030
        %v5098 = vunpack.c.h.b16 %v2030
        %v5099 = vunpack.c.l.b16 %v2031
        %v5100 = vunpack.c.h.b16 %v2031
        %v5101 = vunpack.c.l.b16 %v2032
        %v5102 = vunpack.c.h.b16 %v2032
        %v5103 = vunpack.c.l.b16 %v2033
        %v5104 = vunpack.c.h.b16 %v2033
        %v5105 = vunpack.c.l.b16 %v2034
        %v5106 = vunpack.c.h.b16 %v2034
        %v5107 = vunpack.c.l.b16 %v2035
        %v5108 = vunpack.c.h.b16 %v2035
        %v5109 = vunpack.c.l.b16 %v2036
        %v5110 = vunpack.c.h.b16 %v2036
        %v5111 = vunpack.c.l.b16 %v2037
        %v5112 = vunpack.c.h.b16 %v2037
        %v5113 = vunpack.c.l.b16 %v2038
        %v5114 = vunpack.c.h.b16 %v2038
        %v5115 = vunpack.c.l.b16 %v2039
        %v5116 = vunpack.c.h.b16 %v2039
        %v5117 = vunpack.c.l.b16 %v2040
        %v5118 = vunpack.c.h.b16 %v2040
        %v5119 = vunpack.c.l.b16 %v2041
        %v5120 = vunpack.c.h.b16 %v2041
        %v5121 = vunpack.c.l.b16 %v2042
        %v5122 = vunpack.c.h.b16 %v2042
        %v5123 = vunpack.c.l.b16 %v2043
        %v5124 = vunpack.c.h.b16 %v2043
        %v5125 = vunpack.c.l.b16 %v2044
        %v5126 = vunpack.c.h.b16 %v2044
        %v5127 = vunpack.c.l.b16 %v2045
        %v5128 = vunpack.c.h.b16 %v2045
        %v5129 = vunpack.c.l.b16 %v2046
        %v5130 = vunpack.c.h.b16 %v2046
        %v5131 = vunpack.c.l.b16 %v2047
        %v5132 = vunpack.c.h.b16 %v2047
        %v5133 = vunpack.c.l.b16 %v2048
        %v5134 = vunpack.c.h.b16 %v2048
        %v5135 = vunpack.c.l.b16 %v2049
        %v5136 = vunpack.c.h.b16 %v2049
        %v5137 = vunpack.c.l.b16 %v2050
        %v5138 = vunpack.c.h.b16 %v2050
        %v5139 = vunpack.c.l.b16 %v2051
        %v5140 = vunpack.c.h.b16 %v2051
        %v5141 = vunpack.c.l.b16 %v2052
        %v5142 = vunpack.c.h.b16 %v2052
        %v5143 = vunpack.c.l.b16 %v2053
        %v5144 = vunpack.c.h.b16 %v2053
        %v5145 = vunpack.c.l.b16 %v2054
        %v5146 = vunpack.c.h.b16 %v2054
        %v5147 = vunpack.c.l.b16 %v2055
        %v5148 = vunpack.c.h.b16 %v2055
        %v5149 = vunpack.c.l.b16 %v2056
        %v5150 = vunpack.c.h.b16 %v2056
        %v5151 = vunpack.c.l.b16 %v2057
        %v5152 = vunpack.c.h.b16 %v2057
        %v5153 = vunpack.c.l.b16 %v2058
        %v5154 = vunpack.c.h.b16 %v2058
        %v5155 = vunpack.c.l.b16 %v2059
        %v5156 = vunpack.c.h.b16 %v2059
        %v5157 = vunpack.c.l.b16 %v2060
        %v5158 = vunpack.c.h.b16 %v2060
        %v5159 = vunpack.c.l.b16 %v2061
        %v5160 = vunpack.c.h.b16 %v2061
        %v5161 = vunpack.c.l.b16 %v2062
        %v5162 = vunpack.c.h.b16 %v2062
        %v5163 = vunpack.c.l.b16 %v2063
        %v5164 = vunpack.c.h.b16 %v2063
        %v5165 = vunpack.c.l.b16 %v2064
        %v5166 = vunpack.c.h.b16 %v2064
        %v5167 = vunpack.c.l.b16 %v2065
        %v5168 = vunpack.c.h.b16 %v2065
        %v5169 = vunpack.c.l.b16 %v2066
        %v5170 = vunpack.c.h.b16 %v2066
        %v5171 = vunpack.c.l.b16 %v2067
        %v5172 = vunpack.c.h.b16 %v2067
        %v5173 = vunpack.c.l.b16 %v2068
        %v5174 = vunpack.c.h.b16 %v2068
        %v5175 = vunpack.c.l.b16 %v2069
        %v5176 = vunpack.c.h.b16 %v2069
        %v5177 = vunpack.c.l.b16 %v2070
        %v5178 = vunpack.c.h.b16 %v2070
        %v5179 = vunpack.c.l.b16 %v2071
        %v5180 = vunpack.c.h.b16 %v2071
        %v5181 = vunpack.c.l.b16 %v2072
        %v5182 = vunpack.c.h.b16 %v2072
        %v5183 = vunpack.c.l.b16 %v2073
        %v5184 = vunpack.c.h.b16 %v2073
        %v5185 = vunpack.c.l.b16 %v2074
        %v5186 = vunpack.c.h.b16 %v2074
        %v5187 = vunpack.c.l.b16 %v2075
        %v5188 = vunpack.c.h.b16 %v2075
        %v5189 = vunpack.c.l.b16 %v2076
        %v5190 = vunpack.c.h.b16 %v2076
        %v5191 = vpack.c.b16 %v3151, %v3143
        %v5192 = vpack.c.b16 %v3152, %v3144
        %v5193 = vpack.c.b16 %v3153, %v3145
        %v5194 = vpack.c.b16 %v3154, %v3146
        %v5195 = vpack.c.b16 %v3155, %v3147
        %v5196 = vpack.c.b16 %v3156, %v3148
        %v5197 = vpack.c.b16 %v3157, %v3149
        %v5198 = vpack.c.b16 %v3158, %v3150
        %v5199 = vpack.c.b16 %v3167, %v3159
        %v5200 = vpack.c.b16 %v3168, %v3160
        %v5201 = vpack.c.b16 %v3169, %v3161
        %v5202 = vpack.c.b16 %v3170, %v3162
        %v5203 = vpack.c.b16 %v3171, %v3163
        %v5204 = vpack.c.b16 %v3172, %v3164
        %v5205 = vpack.c.b16 %v3173, %v3165
        %v5206 = vpack.c.b16 %v3174, %v3166
        %v5207 = vpack.c.b16 %v3183, %v3175
        %v5208 = vpack.c.b16 %v3184, %v3176
        %v5209 = vpack.c.b16 %v3185, %v3177
        %v5210 = vpack.c.b16 %v3186, %v3178
        %v5211 = vpack.c.b16 %v3187, %v3179
        %v5212 = vpack.c.b16 %v3188, %v3180
        %v5213 = vpack.c.b16 %v3189, %v3181
        %v5214 = vpack.c.b16 %v3190, %v3182
        %v5215 = vpack.c.b16 %v3199, %v3191
        %v5216 = vpack.c.b16 %v3200, %v3192
        %v5217 = vpack.c.b16 %v3201, %v3193
        %v5218 = vpack.c.b16 %v3202, %v3194
        %v5219 = vpack.c.b16 %v3203, %v3195
        %v5220 = vpack.c.b16 %v3204, %v3196
        %v5221 = vpack.c.b16 %v3205, %v3197
        %v5222 = vpack.c.b16 %v3206, %v3198
        %v5223 = vpack.c.b16 %v3215, %v3207
        %v5224 = vpack.c.b16 %v3216, %v3208
        %v5225 = vpack.c.b16 %v3217, %v3209
        %v5226 = vpack.c.b16 %v3218, %v3210
        %v5227 = vpack.c.b16 %v3219, %v3211
        %v5228 = vpack.c.b16 %v3220, %v3212
        %v5229 = vpack.c.b16 %v3221, %v3213
        %v5230 = vpack.c.b16 %v3222, %v3214
        %v5231 = vpack.c.b16 %v3231, %v3223
        %v5232 = vpack.c.b16 %v3232, %v3224
        %v5233 = vpack.c.b16 %v3233, %v3225
        %v5234 = vpack.c.b16 %v3234, %v3226
        %v5235 = vpack.c.b16 %v3235, %v3227
        %v5236 = vpack.c.b16 %v3236, %v3228
        %v5237 = vpack.c.b16 %v3237, %v3229
        %v5238 = vpack.c.b16 %v3238, %v3230
        %v5239 = vpack.c.b16 %v3247, %v3239
        %v5240 = vpack.c.b16 %v3248, %v3240
        %v5241 = vpack.c.b16 %v3249, %v3241
        %v5242 = vpack.c.b16 %v3250, %v3242
        %v5243 = vpack.c.b16 %v3251, %v3243
        %v5244 = vpack.c.b16 %v3252, %v3244
        %v5245 = vpack.c.b16 %v3253, %v3245
        %v5246 = vpack.c.b16 %v3254, %v3246
        %v5247 = vpack.c.b16 %v3263, %v3255
        %v5248 = vpack.c.b16 %v3264, %v3256
        %v5249 = vpack.c.b16 %v3265, %v3257
        %v5250 = vpack.c.b16 %v3266, %v3258
        %v5251 = vpack.c.b16 %v3267, %v3259
        %v5252 = vpack.c.b16 %v3268, %v3260
        %v5253 = vpack.c.b16 %v3269, %v3261
        %v5254 = vpack.c.b16 %v3270, %v3262
        %v5255 = vpack.c.b16 %v3279, %v3271
        %v5256 = vpack.c.b16 %v3280, %v3272
        %v5257 = vpack.c.b16 %v3281, %v3273
        %v5258 = vpack.c.b16 %v3282, %v3274
        %v5259 = vpack.c.b16 %v3283, %v3275
        %v5260 = vpack.c.b16 %v3284, %v3276
        %v5261 = vpack.c.b16 %v3285, %v3277
        %v5262 = vpack.c.b16 %v3286, %v3278
        %v5263 = vpack.c.b16 %v3295, %v3287
        %v5264 = vpack.c.b16 %v3296, %v3288
        %v5265 = vpack.c.b16 %v3297, %v3289
        %v5266 = vpack.c.b16 %v3298, %v3290
        %v5267 = vpack.c.b16 %v3299, %v3291
        %v5268 = vpack.c.b16 %v3300, %v3292
        %v5269 = vpack.c.b16 %v3301, %v3293
        %v5270 = vpack.c.b16 %v3302, %v3294
        %v5271 = vpack.c.b16 %v3311, %v3303
        %v5272 = vpack.c.b16 %v3312, %v3304
        %v5273 = vpack.c.b16 %v3313, %v3305
        %v5274 = vpack.c.b16 %v3314, %v3306
        %v5275 = vpack.c.b16 %v3315, %v3307
        %v5276 = vpack.c.b16 %v3316, %v3308
        %v5277 = vpack.c.b16 %v3317, %v3309
        %v5278 = vpack.c.b16 %v3318, %v3310
        %v5279 = vpack.c.b16 %v3327, %v3319
        %v5280 = vpack.c.b16 %v3328, %v3320
        %v5281 = vpack.c.b16 %v3329, %v3321
        %v5282 = vpack.c.b16 %v3330, %v3322
        %v5283 = vpack.c.b16 %v3331, %v3323
        %v5284 = vpack.c.b16 %v3332, %v3324
        %v5285 = vpack.c.b16 %v3333, %v3325
        %v5286 = vpack.c.b16 %v3334, %v3326
        %v5287 = vpack.c.b16 %v3343, %v3335
        %v5288 = vpack.c.b16 %v3344, %v3336
        %v5289 = vpack.c.b16 %v3345, %v3337
        %v5290 = vpack.c.b16 %v3346, %v3338
        %v5291 = vpack.c.b16 %v3347, %v3339
        %v5292 = vpack.c.b16 %v3348, %v3340
        %v5293 = vpack.c.b16 %v3349, %v3341
        %v5294 = vpack.c.b16 %v3350, %v3342
        %v5295 = vpack.c.b16 %v3359, %v3351
        %v5296 = vpack.c.b16 %v3360, %v3352
        %v5297 = vpack.c.b16 %v3361, %v3353
        %v5298 = vpack.c.b16 %v3362, %v3354
        %v5299 = vpack.c.b16 %v3363, %v3355
        %v5300 = vpack.c.b16 %v3364, %v3356
        %v5301 = vpack.c.b16 %v3365, %v3357
        %v5302 = vpack.c.b16 %v3366, %v3358
        %v5303 = vpack.c.b16 %v3375, %v3367
        %v5304 = vpack.c.b16 %v3376, %v3368
        %v5305 = vpack.c.b16 %v3377, %v3369
        %v5306 = vpack.c.b16 %v3378, %v3370
        %v5307 = vpack.c.b16 %v3379, %v3371
        %v5308 = vpack.c.b16 %v3380, %v3372
        %v5309 = vpack.c.b16 %v3381, %v3373
        %v5310 = vpack.c.b16 %v3382, %v3374
        %v5311 = vpack.c.b16 %v3391, %v3383
        %v5312 = vpack.c.b16 %v3392, %v3384
        %v5313 = vpack.c.b16 %v3393, %v3385
        %v5314 = vpack.c.b16 %v3394, %v3386
        %v5315 = vpack.c.b16 %v3395, %v3387
        %v5316 = vpack.c.b16 %v3396, %v3388
        %v5317 = vpack.c.b16 %v3397, %v3389
        %v5318 = vpack.c.b16 %v3398, %v3390
        %v5319 = vpack.c.b16 %v3407, %v3399
        %v5320 = vpack.c.b16 %v3408, %v3400
        %v5321 = vpack.c.b16 %v3409, %v3401
        %v5322 = vpack.c.b16 %v3410, %v3402
        %v5323 = vpack.c.b16 %v3411, %v3403
        %v5324 = vpack.c.b16 %v3412, %v3404
        %v5325 = vpack.c.b16 %v3413, %v3405
        %v5326 = vpack.c.b16 %v3414, %v3406
        %v5327 = vpack.c.b16 %v3423, %v3415
        %v5328 = vpack.c.b16 %v3424, %v3416
        %v5329 = vpack.c.b16 %v3425, %v3417
        %v5330 = vpack.c.b16 %v3426, %v3418
        %v5331 = vpack.c.b16 %v3427, %v3419
        %v5332 = vpack.c.b16 %v3428, %v3420
        %v5333 = vpack.c.b16 %v3429, %v3421
        %v5334 = vpack.c.b16 %v3430, %v3422
        %v5335 = vpack.c.b16 %v3439, %v3431
        %v5336 = vpack.c.b16 %v3440, %v3432
        %v5337 = vpack.c.b16 %v3441, %v3433
        %v5338 = vpack.c.b16 %v3442, %v3434
        %v5339 = vpack.c.b16 %v3443, %v3435
        %v5340 = vpack.c.b16 %v3444, %v3436
        %v5341 = vpack.c.b16 %v3445, %v3437
        %v5342 = vpack.c.b16 %v3446, %v3438
        %v5343 = vpack.c.b16 %v3455, %v3447
        %v5344 = vpack.c.b16 %v3456, %v3448
        %v5345 = vpack.c.b16 %v3457, %v3449
        %v5346 = vpack.c.b16 %v3458, %v3450
        %v5347 = vpack.c.b16 %v3459, %v3451
        %v5348 = vpack.c.b16 %v3460, %v3452
        %v5349 = vpack.c.b16 %v3461, %v3453
        %v5350 = vpack.c.b16 %v3462, %v3454
        %v5351 = vpack.c.b16 %v3471, %v3463
        %v5352 = vpack.c.b16 %v3472, %v3464
        %v5353 = vpack.c.b16 %v3473, %v3465
        %v5354 = vpack.c.b16 %v3474, %v3466
        %v5355 = vpack.c.b16 %v3475, %v3467
        %v5356 = vpack.c.b16 %v3476, %v3468
        %v5357 = vpack.c.b16 %v3477, %v3469
        %v5358 = vpack.c.b16 %v3478, %v3470
        %v5359 = vpack.c.b16 %v3487, %v3479
        %v5360 = vpack.c.b16 %v3488, %v3480
        %v5361 = vpack.c.b16 %v3489, %v3481
        %v5362 = vpack.c.b16 %v3490, %v3482
        %v5363 = vpack.c.b16 %v3491, %v3483
        %v5364 = vpack.c.b16 %v3492, %v3484
        %v5365 = vpack.c.b16 %v3493, %v3485
        %v5366 = vpack.c.b16 %v3494, %v3486
        %v5367 = vpack.c.b16 %v3503, %v3495
        %v5368 = vpack.c.b16 %v3504, %v3496
        %v5369 = vpack.c.b16 %v3505, %v3497
        %v5370 = vpack.c.b16 %v3506, %v3498
        %v5371 = vpack.c.b16 %v3507, %v3499
        %v5372 = vpack.c.b16 %v3508, %v3500
        %v5373 = vpack.c.b16 %v3509, %v3501
        %v5374 = vpack.c.b16 %v3510, %v3502
        %v5375 = vpack.c.b16 %v3519, %v3511
        %v5376 = vpack.c.b16 %v3520, %v3512
        %v5377 = vpack.c.b16 %v3521, %v3513
        %v5378 = vpack.c.b16 %v3522, %v3514
        %v5379 = vpack.c.b16 %v3523, %v3515
        %v5380 = vpack.c.b16 %v3524, %v3516
        %v5381 = vpack.c.b16 %v3525, %v3517
        %v5382 = vpack.c.b16 %v3526, %v3518
        %v5383 = vpack.c.b16 %v3535, %v3527
        %v5384 = vpack.c.b16 %v3536, %v3528
        %v5385 = vpack.c.b16 %v3537, %v3529
        %v5386 = vpack.c.b16 %v3538, %v3530
        %v5387 = vpack.c.b16 %v3539, %v3531
        %v5388 = vpack.c.b16 %v3540, %v3532
        %v5389 = vpack.c.b16 %v3541, %v3533
        %v5390 = vpack.c.b16 %v3542, %v3534
        %v5391 = vpack.c.b16 %v3551, %v3543
        %v5392 = vpack.c.b16 %v3552, %v3544
        %v5393 = vpack.c.b16 %v3553, %v3545
        %v5394 = vpack.c.b16 %v3554, %v3546
        %v5395 = vpack.c.b16 %v3555, %v3547
        %v5396 = vpack.c.b16 %v3556, %v3548
        %v5397 = vpack.c.b16 %v3557, %v3549
        %v5398 = vpack.c.b16 %v3558, %v3550
        %v5399 = vpack.c.b16 %v3567, %v3559
        %v5400 = vpack.c.b16 %v3568, %v3560
        %v5401 = vpack.c.b16 %v3569, %v3561
        %v5402 = vpack.c.b16 %v3570, %v3562
        %v5403 = vpack.c.b16 %v3571, %v3563
        %v5404 = vpack.c.b16 %v3572, %v3564
        %v5405 = vpack.c.b16 %v3573, %v3565
        %v5406 = vpack.c.b16 %v3574, %v3566
        %v5407 = vpack.c.b16 %v3583, %v3575
        %v5408 = vpack.c.b16 %v3584, %v3576
        %v5409 = vpack.c.b16 %v3585, %v3577
        %v5410 = vpack.c.b16 %v3586, %v3578
        %v5411 = vpack.c.b16 %v3587, %v3579
        %v5412 = vpack.c.b16 %v3588, %v3580
        %v5413 = vpack.c.b16 %v3589, %v3581
        %v5414 = vpack.c.b16 %v3590, %v3582
        %v5415 = vpack.c.b16 %v3599, %v3591
        %v5416 = vpack.c.b16 %v3600, %v3592
        %v5417 = vpack.c.b16 %v3601, %v3593
        %v5418 = vpack.c.b16 %v3602, %v3594
        %v5419 = vpack.c.b16 %v3603, %v3595
        %v5420 = vpack.c.b16 %v3604, %v3596
        %v5421 = vpack.c.b16 %v3605, %v3597
        %v5422 = vpack.c.b16 %v3606, %v3598
        %v5423 = vpack.c.b16 %v3615, %v3607
        %v5424 = vpack.c.b16 %v3616, %v3608
        %v5425 = vpack.c.b16 %v3617, %v3609
        %v5426 = vpack.c.b16 %v3618, %v3610
        %v5427 = vpack.c.b16 %v3619, %v3611
        %v5428 = vpack.c.b16 %v3620, %v3612
        %v5429 = vpack.c.b16 %v3621, %v3613
        %v5430 = vpack.c.b16 %v3622, %v3614
        %v5431 = vpack.c.b16 %v3631, %v3623
        %v5432 = vpack.c.b16 %v3632, %v3624
        %v5433 = vpack.c.b16 %v3633, %v3625
        %v5434 = vpack.c.b16 %v3634, %v3626
        %v5435 = vpack.c.b16 %v3635, %v3627
        %v5436 = vpack.c.b16 %v3636, %v3628
        %v5437 = vpack.c.b16 %v3637, %v3629
        %v5438 = vpack.c.b16 %v3638, %v3630
        %v5439 = vpack.c.b16 %v3647, %v3639
        %v5440 = vpack.c.b16 %v3648, %v3640
        %v5441 = vpack.c.b16 %v3649, %v3641
        %v5442 = vpack.c.b16 %v3650, %v3642
        %v5443 = vpack.c.b16 %v3651, %v3643
        %v5444 = vpack.c.b16 %v3652, %v3644
        %v5445 = vpack.c.b16 %v3653, %v3645
        %v5446 = vpack.c.b16 %v3654, %v3646
        %v5447 = vpack.c.b16 %v3663, %v3655
        %v5448 = vpack.c.b16 %v3664, %v3656
        %v5449 = vpack.c.b16 %v3665, %v3657
        %v5450 = vpack.c.b16 %v3666, %v3658
        %v5451 = vpack.c.b16 %v3667, %v3659
        %v5452 = vpack.c.b16 %v3668, %v3660
        %v5453 = vpack.c.b16 %v3669, %v3661
        %v5454 = vpack.c.b16 %v3670, %v3662
        %v5455 = vpack.c.b16 %v3679, %v3671
        %v5456 = vpack.c.b16 %v3680, %v3672
        %v5457 = vpack.c.b16 %v3681, %v3673
        %v5458 = vpack.c.b16 %v3682, %v3674
        %v5459 = vpack.c.b16 %v3683, %v3675
        %v5460 = vpack.c.b16 %v3684, %v3676
        %v5461 = vpack.c.b16 %v3685, %v3677
        %v5462 = vpack.c.b16 %v3686, %v3678
        %v5463 = vpack.c.b16 %v3695, %v3687
        %v5464 = vpack.c.b16 %v3696, %v3688
        %v5465 = vpack.c.b16 %v3697, %v3689
        %v5466 = vpack.c.b16 %v3698, %v3690
        %v5467 = vpack.c.b16 %v3699, %v3691
        %v5468 = vpack.c.b16 %v3700, %v3692
        %v5469 = vpack.c.b16 %v3701, %v3693
        %v5470 = vpack.c.b16 %v3702, %v3694
        %v5471 = vpack.c.b16 %v3711, %v3703
        %v5472 = vpack.c.b16 %v3712, %v3704
        %v5473 = vpack.c.b16 %v3713, %v3705
        %v5474 = vpack.c.b16 %v3714, %v3706
        %v5475 = vpack.c.b16 %v3715, %v3707
        %v5476 = vpack.c.b16 %v3716, %v3708
        %v5477 = vpack.c.b16 %v3717, %v3709
        %v5478 = vpack.c.b16 %v3718, %v3710
        %v5479 = vpack.c.b16 %v3727, %v3719
        %v5480 = vpack.c.b16 %v3728, %v3720
        %v5481 = vpack.c.b16 %v3729, %v3721
        %v5482 = vpack.c.b16 %v3730, %v3722
        %v5483 = vpack.c.b16 %v3731, %v3723
        %v5484 = vpack.c.b16 %v3732, %v3724
        %v5485 = vpack.c.b16 %v3733, %v3725
        %v5486 = vpack.c.b16 %v3734, %v3726
        %v5487 = vpack.c.b16 %v3743, %v3735
        %v5488 = vpack.c.b16 %v3744, %v3736
        %v5489 = vpack.c.b16 %v3745, %v3737
        %v5490 = vpack.c.b16 %v3746, %v3738
        %v5491 = vpack.c.b16 %v3747, %v3739
        %v5492 = vpack.c.b16 %v3748, %v3740
        %v5493 = vpack.c.b16 %v3749, %v3741
        %v5494 = vpack.c.b16 %v3750, %v3742
        %v5495 = vpack.c.b16 %v3759, %v3751
        %v5496 = vpack.c.b16 %v3760, %v3752
        %v5497 = vpack.c.b16 %v3761, %v3753
        %v5498 = vpack.c.b16 %v3762, %v3754
        %v5499 = vpack.c.b16 %v3763, %v3755
        %v5500 = vpack.c.b16 %v3764, %v3756
        %v5501 = vpack.c.b16 %v3765, %v3757
        %v5502 = vpack.c.b16 %v3766, %v3758
        %v5503 = vpack.c.b16 %v3775, %v3767
        %v5504 = vpack.c.b16 %v3776, %v3768
        %v5505 = vpack.c.b16 %v3777, %v3769
        %v5506 = vpack.c.b16 %v3778, %v3770
        %v5507 = vpack.c.b16 %v3779, %v3771
        %v5508 = vpack.c.b16 %v3780, %v3772
        %v5509 = vpack.c.b16 %v3781, %v3773
        %v5510 = vpack.c.b16 %v3782, %v3774
        %v5511 = vpack.c.b16 %v3791, %v3783
        %v5512 = vpack.c.b16 %v3792, %v3784
        %v5513 = vpack.c.b16 %v3793, %v3785
        %v5514 = vpack.c.b16 %v3794, %v3786
        %v5515 = vpack.c.b16 %v3795, %v3787
        %v5516 = vpack.c.b16 %v3796, %v3788
        %v5517 = vpack.c.b16 %v3797, %v3789
        %v5518 = vpack.c.b16 %v3798, %v3790
        %v5519 = vpack.c.b16 %v3807, %v3799
        %v5520 = vpack.c.b16 %v3808, %v3800
        %v5521 = vpack.c.b16 %v3809, %v3801
        %v5522 = vpack.c.b16 %v3810, %v3802
        %v5523 = vpack.c.b16 %v3811, %v3803
        %v5524 = vpack.c.b16 %v3812, %v3804
        %v5525 = vpack.c.b16 %v3813, %v3805
        %v5526 = vpack.c.b16 %v3814, %v3806
        %v5527 = vpack.c.b16 %v3823, %v3815
        %v5528 = vpack.c.b16 %v3824, %v3816
        %v5529 = vpack.c.b16 %v3825, %v3817
        %v5530 = vpack.c.b16 %v3826, %v3818
        %v5531 = vpack.c.b16 %v3827, %v3819
        %v5532 = vpack.c.b16 %v3828, %v3820
        %v5533 = vpack.c.b16 %v3829, %v3821
        %v5534 = vpack.c.b16 %v3830, %v3822
        %v5535 = vpack.c.b16 %v3839, %v3831
        %v5536 = vpack.c.b16 %v3840, %v3832
        %v5537 = vpack.c.b16 %v3841, %v3833
        %v5538 = vpack.c.b16 %v3842, %v3834
        %v5539 = vpack.c.b16 %v3843, %v3835
        %v5540 = vpack.c.b16 %v3844, %v3836
        %v5541 = vpack.c.b16 %v3845, %v3837
        %v5542 = vpack.c.b16 %v3846, %v3838
        %v5543 = vpack.c.b16 %v3855, %v3847
        %v5544 = vpack.c.b16 %v3856, %v3848
        %v5545 = vpack.c.b16 %v3857, %v3849
        %v5546 = vpack.c.b16 %v3858, %v3850
        %v5547 = vpack.c.b16 %v3859, %v3851
        %v5548 = vpack.c.b16 %v3860, %v3852
        %v5549 = vpack.c.b16 %v3861, %v3853
        %v5550 = vpack.c.b16 %v3862, %v3854
        %v5551 = vpack.c.b16 %v3871, %v3863
        %v5552 = vpack.c.b16 %v3872, %v3864
        %v5553 = vpack.c.b16 %v3873, %v3865
        %v5554 = vpack.c.b16 %v3874, %v3866
        %v5555 = vpack.c.b16 %v3875, %v3867
        %v5556 = vpack.c.b16 %v3876, %v3868
        %v5557 = vpack.c.b16 %v3877, %v3869
        %v5558 = vpack.c.b16 %v3878, %v3870
        %v5559 = vpack.c.b16 %v3887, %v3879
        %v5560 = vpack.c.b16 %v3888, %v3880
        %v5561 = vpack.c.b16 %v3889, %v3881
        %v5562 = vpack.c.b16 %v3890, %v3882
        %v5563 = vpack.c.b16 %v3891, %v3883
        %v5564 = vpack.c.b16 %v3892, %v3884
        %v5565 = vpack.c.b16 %v3893, %v3885
        %v5566 = vpack.c.b16 %v3894, %v3886
        %v5567 = vpack.c.b16 %v3903, %v3895
        %v5568 = vpack.c.b16 %v3904, %v3896
        %v5569 = vpack.c.b16 %v3905, %v3897
        %v5570 = vpack.c.b16 %v3906, %v3898
        %v5571 = vpack.c.b16 %v3907, %v3899
        %v5572 = vpack.c.b16 %v3908, %v3900
        %v5573 = vpack.c.b16 %v3909, %v3901
        %v5574 = vpack.c.b16 %v3910, %v3902
        %v5575 = vpack.c.b16 %v3919, %v3911
        %v5576 = vpack.c.b16 %v3920, %v3912
        %v5577 = vpack.c.b16 %v3921, %v3913
        %v5578 = vpack.c.b16 %v3922, %v3914
        %v5579 = vpack.c.b16 %v3923, %v3915
        %v5580 = vpack.c.b16 %v3924, %v3916
        %v5581 = vpack.c.b16 %v3925, %v3917
        %v5582 = vpack.c.b16 %v3926, %v3918
        %v5583 = vpack.c.b16 %v3935, %v3927
        %v5584 = vpack.c.b16 %v3936, %v3928
        %v5585 = vpack.c.b16 %v3937, %v3929
        %v5586 = vpack.c.b16 %v3938, %v3930
        %v5587 = vpack.c.b16 %v3939, %v3931
        %v5588 = vpack.c.b16 %v3940, %v3932
        %v5589 = vpack.c.b16 %v3941, %v3933
        %v5590 = vpack.c.b16 %v3942, %v3934
        %v5591 = vpack.c.b16 %v3951, %v3943
        %v5592 = vpack.c.b16 %v3952, %v3944
        %v5593 = vpack.c.b16 %v3953, %v3945
        %v5594 = vpack.c.b16 %v3954, %v3946
        %v5595 = vpack.c.b16 %v3955, %v3947
        %v5596 = vpack.c.b16 %v3956, %v3948
        %v5597 = vpack.c.b16 %v3957, %v3949
        %v5598 = vpack.c.b16 %v3958, %v3950
        %v5599 = vpack.c.b16 %v3967, %v3959
        %v5600 = vpack.c.b16 %v3968, %v3960
        %v5601 = vpack.c.b16 %v3969, %v3961
        %v5602 = vpack.c.b16 %v3970, %v3962
        %v5603 = vpack.c.b16 %v3971, %v3963
        %v5604 = vpack.c.b16 %v3972, %v3964
        %v5605 = vpack.c.b16 %v3973, %v3965
        %v5606 = vpack.c.b16 %v3974, %v3966
        %v5607 = vpack.c.b16 %v3983, %v3975
        %v5608 = vpack.c.b16 %v3984, %v3976
        %v5609 = vpack.c.b16 %v3985, %v3977
        %v5610 = vpack.c.b16 %v3986, %v3978
        %v5611 = vpack.c.b16 %v3987, %v3979
        %v5612 = vpack.c.b16 %v3988, %v3980
        %v5613 = vpack.c.b16 %v3989, %v3981
        %v5614 = vpack.c.b16 %v3990, %v3982
        %v5615 = vpack.c.b16 %v3999, %v3991
        %v5616 = vpack.c.b16 %v4000, %v3992
        %v5617 = vpack.c.b16 %v4001, %v3993
        %v5618 = vpack.c.b16 %v4002, %v3994
        %v5619 = vpack.c.b16 %v4003, %v3995
        %v5620 = vpack.c.b16 %v4004, %v3996
        %v5621 = vpack.c.b16 %v4005, %v3997
        %v5622 = vpack.c.b16 %v4006, %v3998
        %v5623 = vpack.c.b16 %v4015, %v4007
        %v5624 = vpack.c.b16 %v4016, %v4008
        %v5625 = vpack.c.b16 %v4017, %v4009
        %v5626 = vpack.c.b16 %v4018, %v4010
        %v5627 = vpack.c.b16 %v4019, %v4011
        %v5628 = vpack.c.b16 %v4020, %v4012
        %v5629 = vpack.c.b16 %v4021, %v4013
        %v5630 = vpack.c.b16 %v4022, %v4014
        %v5631 = vpack.c.b16 %v4031, %v4023
        %v5632 = vpack.c.b16 %v4032, %v4024
        %v5633 = vpack.c.b16 %v4033, %v4025
        %v5634 = vpack.c.b16 %v4034, %v4026
        %v5635 = vpack.c.b16 %v4035, %v4027
        %v5636 = vpack.c.b16 %v4036, %v4028
        %v5637 = vpack.c.b16 %v4037, %v4029
        %v5638 = vpack.c.b16 %v4038, %v4030
        %v5639 = vpack.c.b16 %v4047, %v4039
        %v5640 = vpack.c.b16 %v4048, %v4040
        %v5641 = vpack.c.b16 %v4049, %v4041
        %v5642 = vpack.c.b16 %v4050, %v4042
        %v5643 = vpack.c.b16 %v4051, %v4043
        %v5644 = vpack.c.b16 %v4052, %v4044
        %v5645 = vpack.c.b16 %v4053, %v4045
        %v5646 = vpack.c.b16 %v4054, %v4046
        %v5647 = vpack.c.b16 %v4063, %v4055
        %v5648 = vpack.c.b16 %v4064, %v4056
        %v5649 = vpack.c.b16 %v4065, %v4057
        %v5650 = vpack.c.b16 %v4066, %v4058
        %v5651 = vpack.c.b16 %v4067, %v4059
        %v5652 = vpack.c.b16 %v4068, %v4060
        %v5653 = vpack.c.b16 %v4069, %v4061
        %v5654 = vpack.c.b16 %v4070, %v4062
        %v5655 = vpack.c.b16 %v4079, %v4071
        %v5656 = vpack.c.b16 %v4080, %v4072
        %v5657 = vpack.c.b16 %v4081, %v4073
        %v5658 = vpack.c.b16 %v4082, %v4074
        %v5659 = vpack.c.b16 %v4083, %v4075
        %v5660 = vpack.c.b16 %v4084, %v4076
        %v5661 = vpack.c.b16 %v4085, %v4077
        %v5662 = vpack.c.b16 %v4086, %v4078
        %v5663 = vpack.c.b16 %v4095, %v4087
        %v5664 = vpack.c.b16 %v4096, %v4088
        %v5665 = vpack.c.b16 %v4097, %v4089
        %v5666 = vpack.c.b16 %v4098, %v4090
        %v5667 = vpack.c.b16 %v4099, %v4091
        %v5668 = vpack.c.b16 %v4100, %v4092
        %v5669 = vpack.c.b16 %v4101, %v4093
        %v5670 = vpack.c.b16 %v4102, %v4094
        %v5671 = vpack.c.b16 %v4111, %v4103
        %v5672 = vpack.c.b16 %v4112, %v4104
        %v5673 = vpack.c.b16 %v4113, %v4105
        %v5674 = vpack.c.b16 %v4114, %v4106
        %v5675 = vpack.c.b16 %v4115, %v4107
        %v5676 = vpack.c.b16 %v4116, %v4108
        %v5677 = vpack.c.b16 %v4117, %v4109
        %v5678 = vpack.c.b16 %v4118, %v4110
        %v5679 = vpack.c.b16 %v4127, %v4119
        %v5680 = vpack.c.b16 %v4128, %v4120
        %v5681 = vpack.c.b16 %v4129, %v4121
        %v5682 = vpack.c.b16 %v4130, %v4122
        %v5683 = vpack.c.b16 %v4131, %v4123
        %v5684 = vpack.c.b16 %v4132, %v4124
        %v5685 = vpack.c.b16 %v4133, %v4125
        %v5686 = vpack.c.b16 %v4134, %v4126
        %v5687 = vpack.c.b16 %v4143, %v4135
        %v5688 = vpack.c.b16 %v4144, %v4136
        %v5689 = vpack.c.b16 %v4145, %v4137
        %v5690 = vpack.c.b16 %v4146, %v4138
        %v5691 = vpack.c.b16 %v4147, %v4139
        %v5692 = vpack.c.b16 %v4148, %v4140
        %v5693 = vpack.c.b16 %v4149, %v4141
        %v5694 = vpack.c.b16 %v4150, %v4142
        %v5695 = vpack.c.b16 %v4159, %v4151
        %v5696 = vpack.c.b16 %v4160, %v4152
        %v5697 = vpack.c.b16 %v4161, %v4153
        %v5698 = vpack.c.b16 %v4162, %v4154
        %v5699 = vpack.c.b16 %v4163, %v4155
        %v5700 = vpack.c.b16 %v4164, %v4156
        %v5701 = vpack.c.b16 %v4165, %v4157
        %v5702 = vpack.c.b16 %v4166, %v4158
        %v5703 = vpack.c.b16 %v4175, %v4167
        %v5704 = vpack.c.b16 %v4176, %v4168
        %v5705 = vpack.c.b16 %v4177, %v4169
        %v5706 = vpack.c.b16 %v4178, %v4170
        %v5707 = vpack.c.b16 %v4179, %v4171
        %v5708 = vpack.c.b16 %v4180, %v4172
        %v5709 = vpack.c.b16 %v4181, %v4173
        %v5710 = vpack.c.b16 %v4182, %v4174
        %v5711 = vpack.c.b16 %v4191, %v4183
        %v5712 = vpack.c.b16 %v4192, %v4184
        %v5713 = vpack.c.b16 %v4193, %v4185
        %v5714 = vpack.c.b16 %v4194, %v4186
        %v5715 = vpack.c.b16 %v4195, %v4187
        %v5716 = vpack.c.b16 %v4196, %v4188
        %v5717 = vpack.c.b16 %v4197, %v4189
        %v5718 = vpack.c.b16 %v4198, %v4190
        %v5719 = vpack.c.b16 %v4207, %v4199
        %v5720 = vpack.c.b16 %v4208, %v4200
        %v5721 = vpack.c.b16 %v4209, %v4201
        %v5722 = vpack.c.b16 %v4210, %v4202
        %v5723 = vpack.c.b16 %v4211, %v4203
        %v5724 = vpack.c.b16 %v4212, %v4204
        %v5725 = vpack.c.b16 %v4213, %v4205
        %v5726 = vpack.c.b16 %v4214, %v4206
        %v5727 = vpack.c.b16 %v4223, %v4215
        %v5728 = vpack.c.b16 %v4224, %v4216
        %v5729 = vpack.c.b16 %v4225, %v4217
        %v5730 = vpack.c.b16 %v4226, %v4218
        %v5731 = vpack.c.b16 %v4227, %v4219
        %v5732 = vpack.c.b16 %v4228, %v4220
        %v5733 = vpack.c.b16 %v4229, %v4221
        %v5734 = vpack.c.b16 %v4230, %v4222
        %v5735 = vpack.c.b16 %v4239, %v4231
        %v5736 = vpack.c.b16 %v4240, %v4232
        %v5737 = vpack.c.b16 %v4241, %v4233
        %v5738 = vpack.c.b16 %v4242, %v4234
        %v5739 = vpack.c.b16 %v4243, %v4235
        %v5740 = vpack.c.b16 %v4244, %v4236
        %v5741 = vpack.c.b16 %v4245, %v4237
        %v5742 = vpack.c.b16 %v4246, %v4238
        %v5743 = vpack.c.b16 %v4255, %v4247
        %v5744 = vpack.c.b16 %v4256, %v4248
        %v5745 = vpack.c.b16 %v4257, %v4249
        %v5746 = vpack.c.b16 %v4258, %v4250
        %v5747 = vpack.c.b16 %v4259, %v4251
        %v5748 = vpack.c.b16 %v4260, %v4252
        %v5749 = vpack.c.b16 %v4261, %v4253
        %v5750 = vpack.c.b16 %v4262, %v4254
        %v5751 = vpack.c.b16 %v4271, %v4263
        %v5752 = vpack.c.b16 %v4272, %v4264
        %v5753 = vpack.c.b16 %v4273, %v4265
        %v5754 = vpack.c.b16 %v4274, %v4266
        %v5755 = vpack.c.b16 %v4275, %v4267
        %v5756 = vpack.c.b16 %v4276, %v4268
        %v5757 = vpack.c.b16 %v4277, %v4269
        %v5758 = vpack.c.b16 %v4278, %v4270
        %v5759 = vpack.c.b16 %v4287, %v4279
        %v5760 = vpack.c.b16 %v4288, %v4280
        %v5761 = vpack.c.b16 %v4289, %v4281
        %v5762 = vpack.c.b16 %v4290, %v4282
        %v5763 = vpack.c.b16 %v4291, %v4283
        %v5764 = vpack.c.b16 %v4292, %v4284
        %v5765 = vpack.c.b16 %v4293, %v4285
        %v5766 = vpack.c.b16 %v4294, %v4286
        %v5767 = vpack.c.b16 %v4303, %v4295
        %v5768 = vpack.c.b16 %v4304, %v4296
        %v5769 = vpack.c.b16 %v4305, %v4297
        %v5770 = vpack.c.b16 %v4306, %v4298
        %v5771 = vpack.c.b16 %v4307, %v4299
        %v5772 = vpack.c.b16 %v4308, %v4300
        %v5773 = vpack.c.b16 %v4309, %v4301
        %v5774 = vpack.c.b16 %v4310, %v4302
        %v5775 = vpack.c.b16 %v4319, %v4311
        %v5776 = vpack.c.b16 %v4320, %v4312
        %v5777 = vpack.c.b16 %v4321, %v4313
        %v5778 = vpack.c.b16 %v4322, %v4314
        %v5779 = vpack.c.b16 %v4323, %v4315
        %v5780 = vpack.c.b16 %v4324, %v4316
        %v5781 = vpack.c.b16 %v4325, %v4317
        %v5782 = vpack.c.b16 %v4326, %v4318
        %v5783 = vpack.c.b16 %v4335, %v4327
        %v5784 = vpack.c.b16 %v4336, %v4328
        %v5785 = vpack.c.b16 %v4337, %v4329
        %v5786 = vpack.c.b16 %v4338, %v4330
        %v5787 = vpack.c.b16 %v4339, %v4331
        %v5788 = vpack.c.b16 %v4340, %v4332
        %v5789 = vpack.c.b16 %v4341, %v4333
        %v5790 = vpack.c.b16 %v4342, %v4334
        %v5791 = vpack.c.b16 %v4351, %v4343
        %v5792 = vpack.c.b16 %v4352, %v4344
        %v5793 = vpack.c.b16 %v4353, %v4345
        %v5794 = vpack.c.b16 %v4354, %v4346
        %v5795 = vpack.c.b16 %v4355, %v4347
        %v5796 = vpack.c.b16 %v4356, %v4348
        %v5797 = vpack.c.b16 %v4357, %v4349
        %v5798 = vpack.c.b16 %v4358, %v4350
        %v5799 = vpack.c.b16 %v4367, %v4359
        %v5800 = vpack.c.b16 %v4368, %v4360
        %v5801 = vpack.c.b16 %v4369, %v4361
        %v5802 = vpack.c.b16 %v4370, %v4362
        %v5803 = vpack.c.b16 %v4371, %v4363
        %v5804 = vpack.c.b16 %v4372, %v4364
        %v5805 = vpack.c.b16 %v4373, %v4365
        %v5806 = vpack.c.b16 %v4374, %v4366
        %v5807 = vpack.c.b16 %v4383, %v4375
        %v5808 = vpack.c.b16 %v4384, %v4376
        %v5809 = vpack.c.b16 %v4385, %v4377
        %v5810 = vpack.c.b16 %v4386, %v4378
        %v5811 = vpack.c.b16 %v4387, %v4379
        %v5812 = vpack.c.b16 %v4388, %v4380
        %v5813 = vpack.c.b16 %v4389, %v4381
        %v5814 = vpack.c.b16 %v4390, %v4382
        %v5815 = vpack.c.b16 %v4399, %v4391
        %v5816 = vpack.c.b16 %v4400, %v4392
        %v5817 = vpack.c.b16 %v4401, %v4393
        %v5818 = vpack.c.b16 %v4402, %v4394
        %v5819 = vpack.c.b16 %v4403, %v4395
        %v5820 = vpack.c.b16 %v4404, %v4396
        %v5821 = vpack.c.b16 %v4405, %v4397
        %v5822 = vpack.c.b16 %v4406, %v4398
        %v5823 = vpack.c.b16 %v4415, %v4407
        %v5824 = vpack.c.b16 %v4416, %v4408
        %v5825 = vpack.c.b16 %v4417, %v4409
        %v5826 = vpack.c.b16 %v4418, %v4410
        %v5827 = vpack.c.b16 %v4419, %v4411
        %v5828 = vpack.c.b16 %v4420, %v4412
        %v5829 = vpack.c.b16 %v4421, %v4413
        %v5830 = vpack.c.b16 %v4422, %v4414
        %v5831 = vpack.c.b16 %v4431, %v4423
        %v5832 = vpack.c.b16 %v4432, %v4424
        %v5833 = vpack.c.b16 %v4433, %v4425
        %v5834 = vpack.c.b16 %v4434, %v4426
        %v5835 = vpack.c.b16 %v4435, %v4427
        %v5836 = vpack.c.b16 %v4436, %v4428
        %v5837 = vpack.c.b16 %v4437, %v4429
        %v5838 = vpack.c.b16 %v4438, %v4430
        %v5839 = vpack.c.b16 %v4447, %v4439
        %v5840 = vpack.c.b16 %v4448, %v4440
        %v5841 = vpack.c.b16 %v4449, %v4441
        %v5842 = vpack.c.b16 %v4450, %v4442
        %v5843 = vpack.c.b16 %v4451, %v4443
        %v5844 = vpack.c.b16 %v4452, %v4444
        %v5845 = vpack.c.b16 %v4453, %v4445
        %v5846 = vpack.c.b16 %v4454, %v4446
        %v5847 = vpack.c.b16 %v4463, %v4455
        %v5848 = vpack.c.b16 %v4464, %v4456
        %v5849 = vpack.c.b16 %v4465, %v4457
        %v5850 = vpack.c.b16 %v4466, %v4458
        %v5851 = vpack.c.b16 %v4467, %v4459
        %v5852 = vpack.c.b16 %v4468, %v4460
        %v5853 = vpack.c.b16 %v4469, %v4461
        %v5854 = vpack.c.b16 %v4470, %v4462
        %v5855 = vpack.c.b16 %v4479, %v4471
        %v5856 = vpack.c.b16 %v4480, %v4472
        %v5857 = vpack.c.b16 %v4481, %v4473
        %v5858 = vpack.c.b16 %v4482, %v4474
        %v5859 = vpack.c.b16 %v4483, %v4475
        %v5860 = vpack.c.b16 %v4484, %v4476
        %v5861 = vpack.c.b16 %v4485, %v4477
        %v5862 = vpack.c.b16 %v4486, %v4478
        %v5863 = vpack.c.b16 %v4495, %v4487
        %v5864 = vpack.c.b16 %v4496, %v4488
        %v5865 = vpack.c.b16 %v4497, %v4489
        %v5866 = vpack.c.b16 %v4498, %v4490
        %v5867 = vpack.c.b16 %v4499, %v4491
        %v5868 = vpack.c.b16 %v4500, %v4492
        %v5869 = vpack.c.b16 %v4501, %v4493
        %v5870 = vpack.c.b16 %v4502, %v4494
        %v5871 = vpack.c.b16 %v4511, %v4503
        %v5872 = vpack.c.b16 %v4512, %v4504
        %v5873 = vpack.c.b16 %v4513, %v4505
        %v5874 = vpack.c.b16 %v4514, %v4506
        %v5875 = vpack.c.b16 %v4515, %v4507
        %v5876 = vpack.c.b16 %v4516, %v4508
        %v5877 = vpack.c.b16 %v4517, %v4509
        %v5878 = vpack.c.b16 %v4518, %v4510
        %v5879 = vpack.c.b16 %v4527, %v4519
        %v5880 = vpack.c.b16 %v4528, %v4520
        %v5881 = vpack.c.b16 %v4529, %v4521
        %v5882 = vpack.c.b16 %v4530, %v4522
        %v5883 = vpack.c.b16 %v4531, %v4523
        %v5884 = vpack.c.b16 %v4532, %v4524
        %v5885 = vpack.c.b16 %v4533, %v4525
        %v5886 = vpack.c.b16 %v4534, %v4526
        %v5887 = vpack.c.b16 %v4543, %v4535
        %v5888 = vpack.c.b16 %v4544, %v4536
        %v5889 = vpack.c.b16 %v4545, %v4537
        %v5890 = vpack.c.b16 %v4546, %v4538
        %v5891 = vpack.c.b16 %v4547, %v4539
        %v5892 = vpack.c.b16 %v4548, %v4540
        %v5893 = vpack.c.b16 %v4549, %v4541
        %v5894 = vpack.c.b16 %v4550, %v4542
        %v5895 = vpack.c.b16 %v4559, %v4551
        %v5896 = vpack.c.b16 %v4560, %v4552
        %v5897 = vpack.c.b16 %v4561, %v4553
        %v5898 = vpack.c.b16 %v4562, %v4554
        %v5899 = vpack.c.b16 %v4563, %v4555
        %v5900 = vpack.c.b16 %v4564, %v4556
        %v5901 = vpack.c.b16 %v4565, %v4557
        %v5902 = vpack.c.b16 %v4566, %v4558
        %v5903 = vpack.c.b16 %v4575, %v4567
        %v5904 = vpack.c.b16 %v4576, %v4568
        %v5905 = vpack.c.b16 %v4577, %v4569
        %v5906 = vpack.c.b16 %v4578, %v4570
        %v5907 = vpack.c.b16 %v4579, %v4571
        %v5908 = vpack.c.b16 %v4580, %v4572
        %v5909 = vpack.c.b16 %v4581, %v4573
        %v5910 = vpack.c.b16 %v4582, %v4574
        %v5911 = vpack.c.b16 %v4591, %v4583
        %v5912 = vpack.c.b16 %v4592, %v4584
        %v5913 = vpack.c.b16 %v4593, %v4585
        %v5914 = vpack.c.b16 %v4594, %v4586
        %v5915 = vpack.c.b16 %v4595, %v4587
        %v5916 = vpack.c.b16 %v4596, %v4588
        %v5917 = vpack.c.b16 %v4597, %v4589
        %v5918 = vpack.c.b16 %v4598, %v4590
        %v5919 = vpack.c.b16 %v4607, %v4599
        %v5920 = vpack.c.b16 %v4608, %v4600
        %v5921 = vpack.c.b16 %v4609, %v4601
        %v5922 = vpack.c.b16 %v4610, %v4602
        %v5923 = vpack.c.b16 %v4611, %v4603
        %v5924 = vpack.c.b16 %v4612, %v4604
        %v5925 = vpack.c.b16 %v4613, %v4605
        %v5926 = vpack.c.b16 %v4614, %v4606
        %v5927 = vpack.c.b16 %v4623, %v4615
        %v5928 = vpack.c.b16 %v4624, %v4616
        %v5929 = vpack.c.b16 %v4625, %v4617
        %v5930 = vpack.c.b16 %v4626, %v4618
        %v5931 = vpack.c.b16 %v4627, %v4619
        %v5932 = vpack.c.b16 %v4628, %v4620
        %v5933 = vpack.c.b16 %v4629, %v4621
        %v5934 = vpack.c.b16 %v4630, %v4622
        %v5935 = vpack.c.b16 %v4639, %v4631
        %v5936 = vpack.c.b16 %v4640, %v4632
        %v5937 = vpack.c.b16 %v4641, %v4633
        %v5938 = vpack.c.b16 %v4642, %v4634
        %v5939 = vpack.c.b16 %v4643, %v4635
        %v5940 = vpack.c.b16 %v4644, %v4636
        %v5941 = vpack.c.b16 %v4645, %v4637
        %v5942 = vpack.c.b16 %v4646, %v4638
        %v5943 = vpack.c.b16 %v4655, %v4647
        %v5944 = vpack.c.b16 %v4656, %v4648
        %v5945 = vpack.c.b16 %v4657, %v4649
        %v5946 = vpack.c.b16 %v4658, %v4650
        %v5947 = vpack.c.b16 %v4659, %v4651
        %v5948 = vpack.c.b16 %v4660, %v4652
        %v5949 = vpack.c.b16 %v4661, %v4653
        %v5950 = vpack.c.b16 %v4662, %v4654
        %v5951 = vpack.c.b16 %v4671, %v4663
        %v5952 = vpack.c.b16 %v4672, %v4664
        %v5953 = vpack.c.b16 %v4673, %v4665
        %v5954 = vpack.c.b16 %v4674, %v4666
        %v5955 = vpack.c.b16 %v4675, %v4667
        %v5956 = vpack.c.b16 %v4676, %v4668
        %v5957 = vpack.c.b16 %v4677, %v4669
        %v5958 = vpack.c.b16 %v4678, %v4670
        %v5959 = vpack.c.b16 %v4687, %v4679
        %v5960 = vpack.c.b16 %v4688, %v4680
        %v5961 = vpack.c.b16 %v4689, %v4681
        %v5962 = vpack.c.b16 %v4690, %v4682
        %v5963 = vpack.c.b16 %v4691, %v4683
        %v5964 = vpack.c.b16 %v4692, %v4684
        %v5965 = vpack.c.b16 %v4693, %v4685
        %v5966 = vpack.c.b16 %v4694, %v4686
        %v5967 = vpack.c.b16 %v4703, %v4695
        %v5968 = vpack.c.b16 %v4704, %v4696
        %v5969 = vpack.c.b16 %v4705, %v4697
        %v5970 = vpack.c.b16 %v4706, %v4698
        %v5971 = vpack.c.b16 %v4707, %v4699
        %v5972 = vpack.c.b16 %v4708, %v4700
        %v5973 = vpack.c.b16 %v4709, %v4701
        %v5974 = vpack.c.b16 %v4710, %v4702
        %v5975 = vpack.c.b16 %v4719, %v4711
        %v5976 = vpack.c.b16 %v4720, %v4712
        %v5977 = vpack.c.b16 %v4721, %v4713
        %v5978 = vpack.c.b16 %v4722, %v4714
        %v5979 = vpack.c.b16 %v4723, %v4715
        %v5980 = vpack.c.b16 %v4724, %v4716
        %v5981 = vpack.c.b16 %v4725, %v4717
        %v5982 = vpack.c.b16 %v4726, %v4718
        %v5983 = vpack.c.b16 %v4735, %v4727
        %v5984 = vpack.c.b16 %v4736, %v4728
        %v5985 = vpack.c.b16 %v4737, %v4729
        %v5986 = vpack.c.b16 %v4738, %v4730
        %v5987 = vpack.c.b16 %v4739, %v4731
        %v5988 = vpack.c.b16 %v4740, %v4732
        %v5989 = vpack.c.b16 %v4741, %v4733
        %v5990 = vpack.c.b16 %v4742, %v4734
        %v5991 = vpack.c.b16 %v4751, %v4743
        %v5992 = vpack.c.b16 %v4752, %v4744
        %v5993 = vpack.c.b16 %v4753, %v4745
        %v5994 = vpack.c.b16 %v4754, %v4746
        %v5995 = vpack.c.b16 %v4755, %v4747
        %v5996 = vpack.c.b16 %v4756, %v4748
        %v5997 = vpack.c.b16 %v4757, %v4749
        %v5998 = vpack.c.b16 %v4758, %v4750
        %v5999 = vpack.c.b16 %v4767, %v4759
        %v6000 = vpack.c.b16 %v4768, %v4760
        %v6001 = vpack.c.b16 %v4769, %v4761
        %v6002 = vpack.c.b16 %v4770, %v4762
        %v6003 = vpack.c.b16 %v4771, %v4763
        %v6004 = vpack.c.b16 %v4772, %v4764
        %v6005 = vpack.c.b16 %v4773, %v4765
        %v6006 = vpack.c.b16 %v4774, %v4766
        %v6007 = vpack.c.b16 %v4783, %v4775
        %v6008 = vpack.c.b16 %v4784, %v4776
        %v6009 = vpack.c.b16 %v4785, %v4777
        %v6010 = vpack.c.b16 %v4786, %v4778
        %v6011 = vpack.c.b16 %v4787, %v4779
        %v6012 = vpack.c.b16 %v4788, %v4780
        %v6013 = vpack.c.b16 %v4789, %v4781
        %v6014 = vpack.c.b16 %v4790, %v4782
        %v6015 = vpack.c.b16 %v4799, %v4791
        %v6016 = vpack.c.b16 %v4800, %v4792
        %v6017 = vpack.c.b16 %v4801, %v4793
        %v6018 = vpack.c.b16 %v4802, %v4794
        %v6019 = vpack.c.b16 %v4803, %v4795
        %v6020 = vpack.c.b16 %v4804, %v4796
        %v6021 = vpack.c.b16 %v4805, %v4797
        %v6022 = vpack.c.b16 %v4806, %v4798
        %v6023 = vpack.c.b16 %v4815, %v4807
        %v6024 = vpack.c.b16 %v4816, %v4808
        %v6025 = vpack.c.b16 %v4817, %v4809
        %v6026 = vpack.c.b16 %v4818, %v4810
        %v6027 = vpack.c.b16 %v4819, %v4811
        %v6028 = vpack.c.b16 %v4820, %v4812
        %v6029 = vpack.c.b16 %v4821, %v4813
        %v6030 = vpack.c.b16 %v4822, %v4814
        %v6031 = vpack.c.b16 %v4831, %v4823
        %v6032 = vpack.c.b16 %v4832, %v4824
        %v6033 = vpack.c.b16 %v4833, %v4825
        %v6034 = vpack.c.b16 %v4834, %v4826
        %v6035 = vpack.c.b16 %v4835, %v4827
        %v6036 = vpack.c.b16 %v4836, %v4828
        %v6037 = vpack.c.b16 %v4837, %v4829
        %v6038 = vpack.c.b16 %v4838, %v4830
        %v6039 = vpack.c.b16 %v4847, %v4839
        %v6040 = vpack.c.b16 %v4848, %v4840
        %v6041 = vpack.c.b16 %v4849, %v4841
        %v6042 = vpack.c.b16 %v4850, %v4842
        %v6043 = vpack.c.b16 %v4851, %v4843
        %v6044 = vpack.c.b16 %v4852, %v4844
        %v6045 = vpack.c.b16 %v4853, %v4845
        %v6046 = vpack.c.b16 %v4854, %v4846
        %v6047 = vpack.c.b16 %v4863, %v4855
        %v6048 = vpack.c.b16 %v4864, %v4856
        %v6049 = vpack.c.b16 %v4865, %v4857
        %v6050 = vpack.c.b16 %v4866, %v4858
        %v6051 = vpack.c.b16 %v4867, %v4859
        %v6052 = vpack.c.b16 %v4868, %v4860
        %v6053 = vpack.c.b16 %v4869, %v4861
        %v6054 = vpack.c.b16 %v4870, %v4862
        %v6055 = vpack.c.b16 %v4879, %v4871
        %v6056 = vpack.c.b16 %v4880, %v4872
        %v6057 = vpack.c.b16 %v4881, %v4873
        %v6058 = vpack.c.b16 %v4882, %v4874
        %v6059 = vpack.c.b16 %v4883, %v4875
        %v6060 = vpack.c.b16 %v4884, %v4876
        %v6061 = vpack.c.b16 %v4885, %v4877
        %v6062 = vpack.c.b16 %v4886, %v4878
        %v6063 = vpack.c.b16 %v4895, %v4887
        %v6064 = vpack.c.b16 %v4896, %v4888
        %v6065 = vpack.c.b16 %v4897, %v4889
        %v6066 = vpack.c.b16 %v4898, %v4890
        %v6067 = vpack.c.b16 %v4899, %v4891
        %v6068 = vpack.c.b16 %v4900, %v4892
        %v6069 = vpack.c.b16 %v4901, %v4893
        %v6070 = vpack.c.b16 %v4902, %v4894
        %v6071 = vpack.c.b16 %v4911, %v4903
        %v6072 = vpack.c.b16 %v4912, %v4904
        %v6073 = vpack.c.b16 %v4913, %v4905
        %v6074 = vpack.c.b16 %v4914, %v4906
        %v6075 = vpack.c.b16 %v4915, %v4907
        %v6076 = vpack.c.b16 %v4916, %v4908
        %v6077 = vpack.c.b16 %v4917, %v4909
        %v6078 = vpack.c.b16 %v4918, %v4910
        %v6079 = vpack.c.b16 %v4927, %v4919
        %v6080 = vpack.c.b16 %v4928, %v4920
        %v6081 = vpack.c.b16 %v4929, %v4921
        %v6082 = vpack.c.b16 %v4930, %v4922
        %v6083 = vpack.c.b16 %v4931, %v4923
        %v6084 = vpack.c.b16 %v4932, %v4924
        %v6085 = vpack.c.b16 %v4933, %v4925
        %v6086 = vpack.c.b16 %v4934, %v4926
        %v6087 = vpack.c.b16 %v4943, %v4935
        %v6088 = vpack.c.b16 %v4944, %v4936
        %v6089 = vpack.c.b16 %v4945, %v4937
        %v6090 = vpack.c.b16 %v4946, %v4938
        %v6091 = vpack.c.b16 %v4947, %v4939
        %v6092 = vpack.c.b16 %v4948, %v4940
        %v6093 = vpack.c.b16 %v4949, %v4941
        %v6094 = vpack.c.b16 %v4950, %v4942
        %v6095 = vpack.c.b16 %v4959, %v4951
        %v6096 = vpack.c.b16 %v4960, %v4952
        %v6097 = vpack.c.b16 %v4961, %v4953
        %v6098 = vpack.c.b16 %v4962, %v4954
        %v6099 = vpack.c.b16 %v4963, %v4955
        %v6100 = vpack.c.b16 %v4964, %v4956
        %v6101 = vpack.c.b16 %v4965, %v4957
        %v6102 = vpack.c.b16 %v4966, %v4958
        %v6103 = vpack.c.b16 %v4975, %v4967
        %v6104 = vpack.c.b16 %v4976, %v4968
        %v6105 = vpack.c.b16 %v4977, %v4969
        %v6106 = vpack.c.b16 %v4978, %v4970
        %v6107 = vpack.c.b16 %v4979, %v4971
        %v6108 = vpack.c.b16 %v4980, %v4972
        %v6109 = vpack.c.b16 %v4981, %v4973
        %v6110 = vpack.c.b16 %v4982, %v4974
        %v6111 = vpack.c.b16 %v4991, %v4983
        %v6112 = vpack.c.b16 %v4992, %v4984
        %v6113 = vpack.c.b16 %v4993, %v4985
        %v6114 = vpack.c.b16 %v4994, %v4986
        %v6115 = vpack.c.b16 %v4995, %v4987
        %v6116 = vpack.c.b16 %v4996, %v4988
        %v6117 = vpack.c.b16 %v4997, %v4989
        %v6118 = vpack.c.b16 %v4998, %v4990
        %v6119 = vpack.c.b16 %v5007, %v4999
        %v6120 = vpack.c.b16 %v5008, %v5000
        %v6121 = vpack.c.b16 %v5009, %v5001
        %v6122 = vpack.c.b16 %v5010, %v5002
        %v6123 = vpack.c.b16 %v5011, %v5003
        %v6124 = vpack.c.b16 %v5012, %v5004
        %v6125 = vpack.c.b16 %v5013, %v5005
        %v6126 = vpack.c.b16 %v5014, %v5006
        %v6127 = vpack.c.b16 %v5023, %v5015
        %v6128 = vpack.c.b16 %v5024, %v5016
        %v6129 = vpack.c.b16 %v5025, %v5017
        %v6130 = vpack.c.b16 %v5026, %v5018
        %v6131 = vpack.c.b16 %v5027, %v5019
        %v6132 = vpack.c.b16 %v5028, %v5020
        %v6133 = vpack.c.b16 %v5029, %v5021
        %v6134 = vpack.c.b16 %v5030, %v5022
        %v6135 = vpack.c.b16 %v5039, %v5031
        %v6136 = vpack.c.b16 %v5040, %v5032
        %v6137 = vpack.c.b16 %v5041, %v5033
        %v6138 = vpack.c.b16 %v5042, %v5034
        %v6139 = vpack.c.b16 %v5043, %v5035
        %v6140 = vpack.c.b16 %v5044, %v5036
        %v6141 = vpack.c.b16 %v5045, %v5037
        %v6142 = vpack.c.b16 %v5046, %v5038
        %v6143 = vpack.c.b16 %v5055, %v5047
        %v6144 = vpack.c.b16 %v5056, %v5048
        %v6145 = vpack.c.b16 %v5057, %v5049
        %v6146 = vpack.c.b16 %v5058, %v5050
        %v6147 = vpack.c.b16 %v5059, %v5051
        %v6148 = vpack.c.b16 %v5060, %v5052
        %v6149 = vpack.c.b16 %v5061, %v5053
        %v6150 = vpack.c.b16 %v5062, %v5054
        %v6151 = vpack.c.b16 %v5071, %v5063
        %v6152 = vpack.c.b16 %v5072, %v5064
        %v6153 = vpack.c.b16 %v5073, %v5065
        %v6154 = vpack.c.b16 %v5074, %v5066
        %v6155 = vpack.c.b16 %v5075, %v5067
        %v6156 = vpack.c.b16 %v5076, %v5068
        %v6157 = vpack.c.b16 %v5077, %v5069
        %v6158 = vpack.c.b16 %v5078, %v5070
        %v6159 = vpack.c.b16 %v5087, %v5079
        %v6160 = vpack.c.b16 %v5088, %v5080
        %v6161 = vpack.c.b16 %v5089, %v5081
        %v6162 = vpack.c.b16 %v5090, %v5082
        %v6163 = vpack.c.b16 %v5091, %v5083
        %v6164 = vpack.c.b16 %v5092, %v5084
        %v6165 = vpack.c.b16 %v5093, %v5085
        %v6166 = vpack.c.b16 %v5094, %v5086
        %v6167 = vpack.c.b16 %v5103, %v5095
        %v6168 = vpack.c.b16 %v5104, %v5096
        %v6169 = vpack.c.b16 %v5105, %v5097
        %v6170 = vpack.c.b16 %v5106, %v5098
        %v6171 = vpack.c.b16 %v5107, %v5099
        %v6172 = vpack.c.b16 %v5108, %v5100
        %v6173 = vpack.c.b16 %v5109, %v5101
        %v6174 = vpack.c.b16 %v5110, %v5102
        %v6175 = vpack.c.b16 %v5119, %v5111
        %v6176 = vpack.c.b16 %v5120, %v5112
        %v6177 = vpack.c.b16 %v5121, %v5113
        %v6178 = vpack.c.b16 %v5122, %v5114
        %v6179 = vpack.c.b16 %v5123, %v5115
        %v6180 = vpack.c.b16 %v5124, %v5116
        %v6181 = vpack.c.b16 %v5125, %v5117
        %v6182 = vpack.c.b16 %v5126, %v5118
        %v6183 = vpack.c.b16 %v5135, %v5127
        %v6184 = vpack.c.b16 %v5136, %v5128
        %v6185 = vpack.c.b16 %v5137, %v5129
        %v6186 = vpack.c.b16 %v5138, %v5130
        %v6187 = vpack.c.b16 %v5139, %v5131
        %v6188 = vpack.c.b16 %v5140, %v5132
        %v6189 = vpack.c.b16 %v5141, %v5133
        %v6190 = vpack.c.b16 %v5142, %v5134
        %v6191 = vpack.c.b16 %v5151, %v5143
        %v6192 = vpack.c.b16 %v5152, %v5144
        %v6193 = vpack.c.b16 %v5153, %v5145
        %v6194 = vpack.c.b16 %v5154, %v5146
        %v6195 = vpack.c.b16 %v5155, %v5147
        %v6196 = vpack.c.b16 %v5156, %v5148
        %v6197 = vpack.c.b16 %v5157, %v5149
        %v6198 = vpack.c.b16 %v5158, %v5150
        %v6199 = vpack.c.b16 %v5167, %v5159
        %v6200 = vpack.c.b16 %v5168, %v5160
        %v6201 = vpack.c.b16 %v5169, %v5161
        %v6202 = vpack.c.b16 %v5170, %v5162
        %v6203 = vpack.c.b16 %v5171, %v5163
        %v6204 = vpack.c.b16 %v5172, %v5164
        %v6205 = vpack.c.b16 %v5173, %v5165
        %v6206 = vpack.c.b16 %v5174, %v5166
        %v6207 = vpack.c.b16 %v5183, %v5175
        %v6208 = vpack.c.b16 %v5184, %v5176
        %v6209 = vpack.c.b16 %v5185, %v5177
        %v6210 = vpack.c.b16 %v5186, %v5178
        %v6211 = vpack.c.b16 %v5187, %v5179
        %v6212 = vpack.c.b16 %v5188, %v5180
        %v6213 = vpack.c.b16 %v5189, %v5181
        %v6214 = vpack.c.b16 %v5190, %v5182
        %7239 = vmatprep.subr.bf16.mxu0 %v5248
        %7240 = vmatpush1.bf16.msra.mxu0 %v5247
        %7241 = vmatprep.subr.bf16.mxu0 %v5240
        %7242 = vmatpush1.bf16.msra.mxu0 %v5239
        %7243 = vmatprep.subr.bf16.mxu0 %v5232
        %7244 = vmatpush1.bf16.msra.mxu0 %v5231
        %7245 = vmatprep.subr.bf16.mxu0 %v5224
        %7246 = vmatpush1.bf16.msra.mxu0 %v5223
        %7247 = vmatprep.subr.bf16.mxu0 %v5216
        %7248 = vmatpush1.bf16.msra.mxu0 %v5215
        %7249 = vmatprep.subr.bf16.mxu0 %v5208
        %7250 = vmatpush1.bf16.msra.mxu0 %v5207
        %7251 = vmatprep.subr.bf16.mxu0 %v5200
        %7252 = vmatpush1.bf16.msra.mxu0 %v5199
        %7253 = vmatprep.subr.bf16.mxu0 %v5192
        %7254 = vmatpush1.bf16.msra.mxu0 %v5191
        %7255 = vmatprep.subr.bf16.mxu0 %v5312
        %7256 = vmatpush2.bf16.msra.mxu0 %v5311
        %7257 = vmatprep.subr.bf16.mxu0 %v5304
        %7258 = vmatpush2.bf16.msra.mxu0 %v5303
        %7259 = vmatprep.subr.bf16.mxu0 %v5296
        %7260 = vmatpush2.bf16.msra.mxu0 %v5295
        %7261 = vmatprep.subr.bf16.mxu0 %v5288
        %7262 = vmatpush2.bf16.msra.mxu0 %v5287
        %7263 = vmatprep.subr.bf16.mxu0 %v5280
        %7264 = vmatpush2.bf16.msra.mxu0 %v5279
        %7265 = vmatprep.subr.bf16.mxu0 %v5272
        %7266 = vmatpush2.bf16.msra.mxu0 %v5271
        %7267 = vmatprep.subr.bf16.mxu0 %v5264
        %7268 = vmatpush2.bf16.msra.mxu0 %v5263
        %7269 = vmatprep.subr.bf16.mxu0 %v5256
        %7270 = vmatpush2.bf16.msra.mxu0 %v5255
        %7271 = vmatprep.mubr.bf16.mxu0 %v1038
        %7272 = vmatmul.mubr.bf16.gmra.mxu0 %v1037
        %v7273 = vpop.f32.mrf.mxu0
        %v7274 = vadd.f32 %v2082, %v7273
        %v7275 = vpop.f32.mrf.mxu0
        %v7276 = vadd.f32 %v2086, %v7275
        %v7277 = vpop.f32.mrf.mxu0
        %v7278 = vpop.f32.mrf.mxu0
        %7279 = vdwg.mxu0
        %7280 = vmatprep.subr.bf16.mxu0 %v5376
        %7281 = vmatpush1.bf16.msra.mxu0 %v5375
        %7282 = vmatprep.subr.bf16.mxu0 %v5368
        %7283 = vmatpush1.bf16.msra.mxu0 %v5367
        %7284 = vmatprep.subr.bf16.mxu0 %v5360
        %7285 = vmatpush1.bf16.msra.mxu0 %v5359
        %7286 = vmatprep.subr.bf16.mxu0 %v5352
        %7287 = vmatpush1.bf16.msra.mxu0 %v5351
        %7288 = vmatprep.subr.bf16.mxu0 %v5344
        %7289 = vmatpush1.bf16.msra.mxu0 %v5343
        %7290 = vmatprep.subr.bf16.mxu0 %v5336
        %7291 = vmatpush1.bf16.msra.mxu0 %v5335
        %7292 = vmatprep.subr.bf16.mxu0 %v5328
        %7293 = vmatpush1.bf16.msra.mxu0 %v5327
        %7294 = vmatprep.subr.bf16.mxu0 %v5320
        %7295 = vmatpush1.bf16.msra.mxu0 %v5319
        %7296 = vmatprep.subr.bf16.mxu0 %v5440
        %7297 = vmatpush2.bf16.msra.mxu0 %v5439
        %7298 = vmatprep.subr.bf16.mxu0 %v5432
        %7299 = vmatpush2.bf16.msra.mxu0 %v5431
        %7300 = vmatprep.subr.bf16.mxu0 %v5424
        %7301 = vmatpush2.bf16.msra.mxu0 %v5423
        %7302 = vmatprep.subr.bf16.mxu0 %v5416
        %7303 = vmatpush2.bf16.msra.mxu0 %v5415
        %7304 = vmatprep.subr.bf16.mxu0 %v5408
        %7305 = vmatpush2.bf16.msra.mxu0 %v5407
        %7306 = vmatprep.subr.bf16.mxu0 %v5400
        %7307 = vmatpush2.bf16.msra.mxu0 %v5399
        %7308 = vmatprep.subr.bf16.mxu0 %v5392
        %7309 = vmatpush2.bf16.msra.mxu0 %v5391
        %7310 = vmatprep.subr.bf16.mxu0 %v5384
        %7311 = vmatpush2.bf16.msra.mxu0 %v5383
        %7312 = vmatprep.mubr.bf16.mxu0 %v1040
        %7313 = vmatmul.mubr.bf16.gmra.mxu0 %v1039
        %v7314 = vpop.f32.mrf.mxu0
        %v7315 = vadd.f32 %v7274, %v7314
        %v7316 = vpop.f32.mrf.mxu0
        %v7317 = vadd.f32 %v7276, %v7316
        %v7318 = vpop.f32.mrf.mxu0
        %v7319 = vpop.f32.mrf.mxu0
        %7320 = vdwg.mxu0
        %7321 = vmatprep.subr.bf16.mxu0 %v5504
        %7322 = vmatpush1.bf16.msra.mxu0 %v5503
        %7323 = vmatprep.subr.bf16.mxu0 %v5496
        %7324 = vmatpush1.bf16.msra.mxu0 %v5495
        %7325 = vmatprep.subr.bf16.mxu0 %v5488
        %7326 = vmatpush1.bf16.msra.mxu0 %v5487
        %7327 = vmatprep.subr.bf16.mxu0 %v5480
        %7328 = vmatpush1.bf16.msra.mxu0 %v5479
        %7329 = vmatprep.subr.bf16.mxu0 %v5472
        %7330 = vmatpush1.bf16.msra.mxu0 %v5471
        %7331 = vmatprep.subr.bf16.mxu0 %v5464
        %7332 = vmatpush1.bf16.msra.mxu0 %v5463
        %7333 = vmatprep.subr.bf16.mxu0 %v5456
        %7334 = vmatpush1.bf16.msra.mxu0 %v5455
        %7335 = vmatprep.subr.bf16.mxu0 %v5448
        %7336 = vmatpush1.bf16.msra.mxu0 %v5447
        %7337 = vmatprep.subr.bf16.mxu0 %v5568
        %7338 = vmatpush2.bf16.msra.mxu0 %v5567
        %7339 = vmatprep.subr.bf16.mxu0 %v5560
        %7340 = vmatpush2.bf16.msra.mxu0 %v5559
        %7341 = vmatprep.subr.bf16.mxu0 %v5552
        %7342 = vmatpush2.bf16.msra.mxu0 %v5551
        %7343 = vmatprep.subr.bf16.mxu0 %v5544
        %7344 = vmatpush2.bf16.msra.mxu0 %v5543
        %7345 = vmatprep.subr.bf16.mxu0 %v5536
        %7346 = vmatpush2.bf16.msra.mxu0 %v5535
        %7347 = vmatprep.subr.bf16.mxu0 %v5528
        %7348 = vmatpush2.bf16.msra.mxu0 %v5527
        %7349 = vmatprep.subr.bf16.mxu0 %v5520
        %7350 = vmatpush2.bf16.msra.mxu0 %v5519
        %7351 = vmatprep.subr.bf16.mxu0 %v5512
        %7352 = vmatpush2.bf16.msra.mxu0 %v5511
        %7353 = vmatprep.mubr.bf16.mxu0 %v1042
        %7354 = vmatmul.mubr.bf16.gmra.mxu0 %v1041
        %v7355 = vpop.f32.mrf.mxu0
        %v7356 = vadd.f32 %v7315, %v7355
        %v7357 = vpop.f32.mrf.mxu0
        %v7358 = vadd.f32 %v7317, %v7357
        %v7359 = vpop.f32.mrf.mxu0
        %v7360 = vpop.f32.mrf.mxu0
        %7361 = vdwg.mxu0
        %7362 = vmatprep.subr.bf16.mxu0 %v5632
        %7363 = vmatpush1.bf16.msra.mxu0 %v5631
        %7364 = vmatprep.subr.bf16.mxu0 %v5624
        %7365 = vmatpush1.bf16.msra.mxu0 %v5623
        %7366 = vmatprep.subr.bf16.mxu0 %v5616
        %7367 = vmatpush1.bf16.msra.mxu0 %v5615
        %7368 = vmatprep.subr.bf16.mxu0 %v5608
        %7369 = vmatpush1.bf16.msra.mxu0 %v5607
        %7370 = vmatprep.subr.bf16.mxu0 %v5600
        %7371 = vmatpush1.bf16.msra.mxu0 %v5599
        %7372 = vmatprep.subr.bf16.mxu0 %v5592
        %7373 = vmatpush1.bf16.msra.mxu0 %v5591
        %7374 = vmatprep.subr.bf16.mxu0 %v5584
        %7375 = vmatpush1.bf16.msra.mxu0 %v5583
        %7376 = vmatprep.subr.bf16.mxu0 %v5576
        %7377 = vmatpush1.bf16.msra.mxu0 %v5575
        %7378 = vmatprep.subr.bf16.mxu0 %v5696
        %7379 = vmatpush2.bf16.msra.mxu0 %v5695
        %7380 = vmatprep.subr.bf16.mxu0 %v5688
        %7381 = vmatpush2.bf16.msra.mxu0 %v5687
        %7382 = vmatprep.subr.bf16.mxu0 %v5680
        %7383 = vmatpush2.bf16.msra.mxu0 %v5679
        %7384 = vmatprep.subr.bf16.mxu0 %v5672
        %7385 = vmatpush2.bf16.msra.mxu0 %v5671
        %7386 = vmatprep.subr.bf16.mxu0 %v5664
        %7387 = vmatpush2.bf16.msra.mxu0 %v5663
        %7388 = vmatprep.subr.bf16.mxu0 %v5656
        %7389 = vmatpush2.bf16.msra.mxu0 %v5655
        %7390 = vmatprep.subr.bf16.mxu0 %v5648
        %7391 = vmatpush2.bf16.msra.mxu0 %v5647
        %7392 = vmatprep.subr.bf16.mxu0 %v5640
        %7393 = vmatpush2.bf16.msra.mxu0 %v5639
        %7394 = vmatprep.mubr.bf16.mxu0 %v1044
        %7395 = vmatmul.mubr.bf16.gmra.mxu0 %v1043
        %v7396 = vpop.f32.mrf.mxu0
        %v7397 = vadd.f32 %v7356, %v7396
        %v7398 = vpop.f32.mrf.mxu0
        %v7399 = vadd.f32 %v7358, %v7398
        %v7400 = vpop.f32.mrf.mxu0
        %v7401 = vpop.f32.mrf.mxu0
        %7402 = vdwg.mxu0
        %7403 = vmatprep.subr.bf16.mxu0 %v5760
        %7404 = vmatpush1.bf16.msra.mxu0 %v5759
        %7405 = vmatprep.subr.bf16.mxu0 %v5752
        %7406 = vmatpush1.bf16.msra.mxu0 %v5751
        %7407 = vmatprep.subr.bf16.mxu0 %v5744
        %7408 = vmatpush1.bf16.msra.mxu0 %v5743
        %7409 = vmatprep.subr.bf16.mxu0 %v5736
        %7410 = vmatpush1.bf16.msra.mxu0 %v5735
        %7411 = vmatprep.subr.bf16.mxu0 %v5728
        %7412 = vmatpush1.bf16.msra.mxu0 %v5727
        %7413 = vmatprep.subr.bf16.mxu0 %v5720
        %7414 = vmatpush1.bf16.msra.mxu0 %v5719
        %7415 = vmatprep.subr.bf16.mxu0 %v5712
        %7416 = vmatpush1.bf16.msra.mxu0 %v5711
        %7417 = vmatprep.subr.bf16.mxu0 %v5704
        %7418 = vmatpush1.bf16.msra.mxu0 %v5703
        %7419 = vmatprep.subr.bf16.mxu0 %v5824
        %7420 = vmatpush2.bf16.msra.mxu0 %v5823
        %7421 = vmatprep.subr.bf16.mxu0 %v5816
        %7422 = vmatpush2.bf16.msra.mxu0 %v5815
        %7423 = vmatprep.subr.bf16.mxu0 %v5808
        %7424 = vmatpush2.bf16.msra.mxu0 %v5807
        %7425 = vmatprep.subr.bf16.mxu0 %v5800
        %7426 = vmatpush2.bf16.msra.mxu0 %v5799
        %7427 = vmatprep.subr.bf16.mxu0 %v5792
        %7428 = vmatpush2.bf16.msra.mxu0 %v5791
        %7429 = vmatprep.subr.bf16.mxu0 %v5784
        %7430 = vmatpush2.bf16.msra.mxu0 %v5783
        %7431 = vmatprep.subr.bf16.mxu0 %v5776
        %7432 = vmatpush2.bf16.msra.mxu0 %v5775
        %7433 = vmatprep.subr.bf16.mxu0 %v5768
        %7434 = vmatpush2.bf16.msra.mxu0 %v5767
        %7435 = vmatprep.mubr.bf16.mxu0 %v1046
        %7436 = vmatmul.mubr.bf16.gmra.mxu0 %v1045
        %v7437 = vpop.f32.mrf.mxu0
        %v7438 = vadd.f32 %v7397, %v7437
        %v7439 = vpop.f32.mrf.mxu0
        %v7440 = vadd.f32 %v7399, %v7439
        %v7441 = vpop.f32.mrf.mxu0
        %v7442 = vpop.f32.mrf.mxu0
        %7443 = vdwg.mxu0
        %7444 = vmatprep.subr.bf16.mxu0 %v5888
        %7445 = vmatpush1.bf16.msra.mxu0 %v5887
        %7446 = vmatprep.subr.bf16.mxu0 %v5880
        %7447 = vmatpush1.bf16.msra.mxu0 %v5879
        %7448 = vmatprep.subr.bf16.mxu0 %v5872
        %7449 = vmatpush1.bf16.msra.mxu0 %v5871
        %7450 = vmatprep.subr.bf16.mxu0 %v5864
        %7451 = vmatpush1.bf16.msra.mxu0 %v5863
        %7452 = vmatprep.subr.bf16.mxu0 %v5856
        %7453 = vmatpush1.bf16.msra.mxu0 %v5855
        %7454 = vmatprep.subr.bf16.mxu0 %v5848
        %7455 = vmatpush1.bf16.msra.mxu0 %v5847
        %7456 = vmatprep.subr.bf16.mxu0 %v5840
        %7457 = vmatpush1.bf16.msra.mxu0 %v5839
        %7458 = vmatprep.subr.bf16.mxu0 %v5832
        %7459 = vmatpush1.bf16.msra.mxu0 %v5831
        %7460 = vmatprep.subr.bf16.mxu0 %v5952
        %7461 = vmatpush2.bf16.msra.mxu0 %v5951
        %7462 = vmatprep.subr.bf16.mxu0 %v5944
        %7463 = vmatpush2.bf16.msra.mxu0 %v5943
        %7464 = vmatprep.subr.bf16.mxu0 %v5936
        %7465 = vmatpush2.bf16.msra.mxu0 %v5935
        %7466 = vmatprep.subr.bf16.mxu0 %v5928
        %7467 = vmatpush2.bf16.msra.mxu0 %v5927
        %7468 = vmatprep.subr.bf16.mxu0 %v5920
        %7469 = vmatpush2.bf16.msra.mxu0 %v5919
        %7470 = vmatprep.subr.bf16.mxu0 %v5912
        %7471 = vmatpush2.bf16.msra.mxu0 %v5911
        %7472 = vmatprep.subr.bf16.mxu0 %v5904
        %7473 = vmatpush2.bf16.msra.mxu0 %v5903
        %7474 = vmatprep.subr.bf16.mxu0 %v5896
        %7475 = vmatpush2.bf16.msra.mxu0 %v5895
        %7476 = vmatprep.mubr.bf16.mxu0 %v1048
        %7477 = vmatmul.mubr.bf16.gmra.mxu0 %v1047
        %v7478 = vpop.f32.mrf.mxu0
        %v7479 = vadd.f32 %v7438, %v7478
        %v7480 = vpop.f32.mrf.mxu0
        %v7481 = vadd.f32 %v7440, %v7480
        %v7482 = vpop.f32.mrf.mxu0
        %v7483 = vpop.f32.mrf.mxu0
        %7484 = vdwg.mxu0
        %7485 = vmatprep.subr.bf16.mxu0 %v6016
        %7486 = vmatpush1.bf16.msra.mxu0 %v6015
        %7487 = vmatprep.subr.bf16.mxu0 %v6008
        %7488 = vmatpush1.bf16.msra.mxu0 %v6007
        %7489 = vmatprep.subr.bf16.mxu0 %v6000
        %7490 = vmatpush1.bf16.msra.mxu0 %v5999
        %7491 = vmatprep.subr.bf16.mxu0 %v5992
        %7492 = vmatpush1.bf16.msra.mxu0 %v5991
        %7493 = vmatprep.subr.bf16.mxu0 %v5984
        %7494 = vmatpush1.bf16.msra.mxu0 %v5983
        %7495 = vmatprep.subr.bf16.mxu0 %v5976
        %7496 = vmatpush1.bf16.msra.mxu0 %v5975
        %7497 = vmatprep.subr.bf16.mxu0 %v5968
        %7498 = vmatpush1.bf16.msra.mxu0 %v5967
        %7499 = vmatprep.subr.bf16.mxu0 %v5960
        %7500 = vmatpush1.bf16.msra.mxu0 %v5959
        %7501 = vmatprep.subr.bf16.mxu0 %v6080
        %7502 = vmatpush2.bf16.msra.mxu0 %v6079
        %7503 = vmatprep.subr.bf16.mxu0 %v6072
        %7504 = vmatpush2.bf16.msra.mxu0 %v6071
        %7505 = vmatprep.subr.bf16.mxu0 %v6064
        %7506 = vmatpush2.bf16.msra.mxu0 %v6063
        %7507 = vmatprep.subr.bf16.mxu0 %v6056
        %7508 = vmatpush2.bf16.msra.mxu0 %v6055
        %7509 = vmatprep.subr.bf16.mxu0 %v6048
        %7510 = vmatpush2.bf16.msra.mxu0 %v6047
        %7511 = vmatprep.subr.bf16.mxu0 %v6040
        %7512 = vmatpush2.bf16.msra.mxu0 %v6039
        %7513 = vmatprep.subr.bf16.mxu0 %v6032
        %7514 = vmatpush2.bf16.msra.mxu0 %v6031
        %7515 = vmatprep.subr.bf16.mxu0 %v6024
        %7516 = vmatpush2.bf16.msra.mxu0 %v6023
        %7517 = vmatprep.mubr.bf16.mxu0 %v1050
        %7518 = vmatmul.mubr.bf16.gmra.mxu0 %v1049
        %v7519 = vpop.f32.mrf.mxu0
        %v7520 = vadd.f32 %v7479, %v7519
        %v7521 = vpop.f32.mrf.mxu0
        %v7522 = vadd.f32 %v7481, %v7521
        %v7523 = vpop.f32.mrf.mxu0
        %v7524 = vpop.f32.mrf.mxu0
        %7525 = vdwg.mxu0
        %7526 = vmatprep.subr.bf16.mxu0 %v6144
        %7527 = vmatpush1.bf16.msra.mxu0 %v6143
        %7528 = vmatprep.subr.bf16.mxu0 %v6136
        %7529 = vmatpush1.bf16.msra.mxu0 %v6135
        %7530 = vmatprep.subr.bf16.mxu0 %v6128
        %7531 = vmatpush1.bf16.msra.mxu0 %v6127
        %7532 = vmatprep.subr.bf16.mxu0 %v6120
        %7533 = vmatpush1.bf16.msra.mxu0 %v6119
        %7534 = vmatprep.subr.bf16.mxu0 %v6112
        %7535 = vmatpush1.bf16.msra.mxu0 %v6111
        %7536 = vmatprep.subr.bf16.mxu0 %v6104
        %7537 = vmatpush1.bf16.msra.mxu0 %v6103
        %7538 = vmatprep.subr.bf16.mxu0 %v6096
        %7539 = vmatpush1.bf16.msra.mxu0 %v6095
        %7540 = vmatprep.subr.bf16.mxu0 %v6088
        %7541 = vmatpush1.bf16.msra.mxu0 %v6087
        %7542 = vmatprep.subr.bf16.mxu0 %v6208
        %7543 = vmatpush2.bf16.msra.mxu0 %v6207
        %7544 = vmatprep.subr.bf16.mxu0 %v6200
        %7545 = vmatpush2.bf16.msra.mxu0 %v6199
        %7546 = vmatprep.subr.bf16.mxu0 %v6192
        %7547 = vmatpush2.bf16.msra.mxu0 %v6191
        %7548 = vmatprep.subr.bf16.mxu0 %v6184
        %7549 = vmatpush2.bf16.msra.mxu0 %v6183
        %7550 = vmatprep.subr.bf16.mxu0 %v6176
        %7551 = vmatpush2.bf16.msra.mxu0 %v6175
        %7552 = vmatprep.subr.bf16.mxu0 %v6168
        %7553 = vmatpush2.bf16.msra.mxu0 %v6167
        %7554 = vmatprep.subr.bf16.mxu0 %v6160
        %7555 = vmatpush2.bf16.msra.mxu0 %v6159
        %7556 = vmatprep.subr.bf16.mxu0 %v6152
        %7557 = vmatpush2.bf16.msra.mxu0 %v6151
        %7558 = vmatprep.mubr.bf16.mxu0 %v1052
        %7559 = vmatmul.mubr.bf16.gmra.mxu0 %v1051
        %v7560 = vpop.f32.mrf.mxu0
        %v7561 = vadd.f32 %v7520, %v7560
        %v7562 = vpop.f32.mrf.mxu0
        %v7563 = vadd.f32 %v7522, %v7562
        %v7564 = vpop.f32.mrf.mxu0
        %v7565 = vpop.f32.mrf.mxu0
        %7566 = vdwg.mxu0
        %7567 = vmatprep.subr.bf16.mxu0 %v5250
        %7568 = vmatpush1.bf16.msra.mxu0 %v5249
        %7569 = vmatprep.subr.bf16.mxu0 %v5242
        %7570 = vmatpush1.bf16.msra.mxu0 %v5241
        %7571 = vmatprep.subr.bf16.mxu0 %v5234
        %7572 = vmatpush1.bf16.msra.mxu0 %v5233
        %7573 = vmatprep.subr.bf16.mxu0 %v5226
        %7574 = vmatpush1.bf16.msra.mxu0 %v5225
        %7575 = vmatprep.subr.bf16.mxu0 %v5218
        %7576 = vmatpush1.bf16.msra.mxu0 %v5217
        %7577 = vmatprep.subr.bf16.mxu0 %v5210
        %7578 = vmatpush1.bf16.msra.mxu0 %v5209
        %7579 = vmatprep.subr.bf16.mxu0 %v5202
        %7580 = vmatpush1.bf16.msra.mxu0 %v5201
        %7581 = vmatprep.subr.bf16.mxu0 %v5194
        %7582 = vmatpush1.bf16.msra.mxu0 %v5193
        %7583 = vmatprep.subr.bf16.mxu0 %v5314
        %7584 = vmatpush2.bf16.msra.mxu0 %v5313
        %7585 = vmatprep.subr.bf16.mxu0 %v5306
        %7586 = vmatpush2.bf16.msra.mxu0 %v5305
        %7587 = vmatprep.subr.bf16.mxu0 %v5298
        %7588 = vmatpush2.bf16.msra.mxu0 %v5297
        %7589 = vmatprep.subr.bf16.mxu0 %v5290
        %7590 = vmatpush2.bf16.msra.mxu0 %v5289
        %7591 = vmatprep.subr.bf16.mxu0 %v5282
        %7592 = vmatpush2.bf16.msra.mxu0 %v5281
        %7593 = vmatprep.subr.bf16.mxu0 %v5274
        %7594 = vmatpush2.bf16.msra.mxu0 %v5273
        %7595 = vmatprep.subr.bf16.mxu0 %v5266
        %7596 = vmatpush2.bf16.msra.mxu0 %v5265
        %7597 = vmatprep.subr.bf16.mxu0 %v5258
        %7598 = vmatpush2.bf16.msra.mxu0 %v5257
        %7599 = vmatprep.mubr.bf16.mxu0 %v1038
        %7600 = vmatmul.mubr.bf16.gmra.mxu0 %v1037
        %v7601 = vpop.f32.mrf.mxu0
        %v7602 = vadd.f32 %v2090, %v7601
        %v7603 = vpop.f32.mrf.mxu0
        %v7604 = vadd.f32 %v2094, %v7603
        %v7605 = vpop.f32.mrf.mxu0
        %v7606 = vpop.f32.mrf.mxu0
        %7607 = vdwg.mxu0
        %7608 = vmatprep.subr.bf16.mxu0 %v5378
        %7609 = vmatpush1.bf16.msra.mxu0 %v5377
        %7610 = vmatprep.subr.bf16.mxu0 %v5370
        %7611 = vmatpush1.bf16.msra.mxu0 %v5369
        %7612 = vmatprep.subr.bf16.mxu0 %v5362
        %7613 = vmatpush1.bf16.msra.mxu0 %v5361
        %7614 = vmatprep.subr.bf16.mxu0 %v5354
        %7615 = vmatpush1.bf16.msra.mxu0 %v5353
        %7616 = vmatprep.subr.bf16.mxu0 %v5346
        %7617 = vmatpush1.bf16.msra.mxu0 %v5345
        %7618 = vmatprep.subr.bf16.mxu0 %v5338
        %7619 = vmatpush1.bf16.msra.mxu0 %v5337
        %7620 = vmatprep.subr.bf16.mxu0 %v5330
        %7621 = vmatpush1.bf16.msra.mxu0 %v5329
        %7622 = vmatprep.subr.bf16.mxu0 %v5322
        %7623 = vmatpush1.bf16.msra.mxu0 %v5321
        %7624 = vmatprep.subr.bf16.mxu0 %v5442
        %7625 = vmatpush2.bf16.msra.mxu0 %v5441
        %7626 = vmatprep.subr.bf16.mxu0 %v5434
        %7627 = vmatpush2.bf16.msra.mxu0 %v5433
        %7628 = vmatprep.subr.bf16.mxu0 %v5426
        %7629 = vmatpush2.bf16.msra.mxu0 %v5425
        %7630 = vmatprep.subr.bf16.mxu0 %v5418
        %7631 = vmatpush2.bf16.msra.mxu0 %v5417
        %7632 = vmatprep.subr.bf16.mxu0 %v5410
        %7633 = vmatpush2.bf16.msra.mxu0 %v5409
        %7634 = vmatprep.subr.bf16.mxu0 %v5402
        %7635 = vmatpush2.bf16.msra.mxu0 %v5401
        %7636 = vmatprep.subr.bf16.mxu0 %v5394
        %7637 = vmatpush2.bf16.msra.mxu0 %v5393
        %7638 = vmatprep.subr.bf16.mxu0 %v5386
        %7639 = vmatpush2.bf16.msra.mxu0 %v5385
        %7640 = vmatprep.mubr.bf16.mxu0 %v1040
        %7641 = vmatmul.mubr.bf16.gmra.mxu0 %v1039
        %v7642 = vpop.f32.mrf.mxu0
        %v7643 = vadd.f32 %v7602, %v7642
        %v7644 = vpop.f32.mrf.mxu0
        %v7645 = vadd.f32 %v7604, %v7644
        %v7646 = vpop.f32.mrf.mxu0
        %v7647 = vpop.f32.mrf.mxu0
        %7648 = vdwg.mxu0
        %7649 = vmatprep.subr.bf16.mxu0 %v5506
        %7650 = vmatpush1.bf16.msra.mxu0 %v5505
        %7651 = vmatprep.subr.bf16.mxu0 %v5498
        %7652 = vmatpush1.bf16.msra.mxu0 %v5497
        %7653 = vmatprep.subr.bf16.mxu0 %v5490
        %7654 = vmatpush1.bf16.msra.mxu0 %v5489
        %7655 = vmatprep.subr.bf16.mxu0 %v5482
        %7656 = vmatpush1.bf16.msra.mxu0 %v5481
        %7657 = vmatprep.subr.bf16.mxu0 %v5474
        %7658 = vmatpush1.bf16.msra.mxu0 %v5473
        %7659 = vmatprep.subr.bf16.mxu0 %v5466
        %7660 = vmatpush1.bf16.msra.mxu0 %v5465
        %7661 = vmatprep.subr.bf16.mxu0 %v5458
        %7662 = vmatpush1.bf16.msra.mxu0 %v5457
        %7663 = vmatprep.subr.bf16.mxu0 %v5450
        %7664 = vmatpush1.bf16.msra.mxu0 %v5449
        %7665 = vmatprep.subr.bf16.mxu0 %v5570
        %7666 = vmatpush2.bf16.msra.mxu0 %v5569
        %7667 = vmatprep.subr.bf16.mxu0 %v5562
        %7668 = vmatpush2.bf16.msra.mxu0 %v5561
        %7669 = vmatprep.subr.bf16.mxu0 %v5554
        %7670 = vmatpush2.bf16.msra.mxu0 %v5553
        %7671 = vmatprep.subr.bf16.mxu0 %v5546
        %7672 = vmatpush2.bf16.msra.mxu0 %v5545
        %7673 = vmatprep.subr.bf16.mxu0 %v5538
        %7674 = vmatpush2.bf16.msra.mxu0 %v5537
        %7675 = vmatprep.subr.bf16.mxu0 %v5530
        %7676 = vmatpush2.bf16.msra.mxu0 %v5529
        %7677 = vmatprep.subr.bf16.mxu0 %v5522
        %7678 = vmatpush2.bf16.msra.mxu0 %v5521
        %7679 = vmatprep.subr.bf16.mxu0 %v5514
        %7680 = vmatpush2.bf16.msra.mxu0 %v5513
        %7681 = vmatprep.mubr.bf16.mxu0 %v1042
        %7682 = vmatmul.mubr.bf16.gmra.mxu0 %v1041
        %v7683 = vpop.f32.mrf.mxu0
        %v7684 = vadd.f32 %v7643, %v7683
        %v7685 = vpop.f32.mrf.mxu0
        %v7686 = vadd.f32 %v7645, %v7685
        %v7687 = vpop.f32.mrf.mxu0
        %v7688 = vpop.f32.mrf.mxu0
        %7689 = vdwg.mxu0
        %7690 = vmatprep.subr.bf16.mxu0 %v5634
        %7691 = vmatpush1.bf16.msra.mxu0 %v5633
        %7692 = vmatprep.subr.bf16.mxu0 %v5626
        %7693 = vmatpush1.bf16.msra.mxu0 %v5625
        %7694 = vmatprep.subr.bf16.mxu0 %v5618
        %7695 = vmatpush1.bf16.msra.mxu0 %v5617
        %7696 = vmatprep.subr.bf16.mxu0 %v5610
        %7697 = vmatpush1.bf16.msra.mxu0 %v5609
        %7698 = vmatprep.subr.bf16.mxu0 %v5602
        %7699 = vmatpush1.bf16.msra.mxu0 %v5601
        %7700 = vmatprep.subr.bf16.mxu0 %v5594
        %7701 = vmatpush1.bf16.msra.mxu0 %v5593
        %7702 = vmatprep.subr.bf16.mxu0 %v5586
        %7703 = vmatpush1.bf16.msra.mxu0 %v5585
        %7704 = vmatprep.subr.bf16.mxu0 %v5578
        %7705 = vmatpush1.bf16.msra.mxu0 %v5577
        %7706 = vmatprep.subr.bf16.mxu0 %v5698
        %7707 = vmatpush2.bf16.msra.mxu0 %v5697
        %7708 = vmatprep.subr.bf16.mxu0 %v5690
        %7709 = vmatpush2.bf16.msra.mxu0 %v5689
        %7710 = vmatprep.subr.bf16.mxu0 %v5682
        %7711 = vmatpush2.bf16.msra.mxu0 %v5681
        %7712 = vmatprep.subr.bf16.mxu0 %v5674
        %7713 = vmatpush2.bf16.msra.mxu0 %v5673
        %7714 = vmatprep.subr.bf16.mxu0 %v5666
        %7715 = vmatpush2.bf16.msra.mxu0 %v5665
        %7716 = vmatprep.subr.bf16.mxu0 %v5658
        %7717 = vmatpush2.bf16.msra.mxu0 %v5657
        %7718 = vmatprep.subr.bf16.mxu0 %v5650
        %7719 = vmatpush2.bf16.msra.mxu0 %v5649
        %7720 = vmatprep.subr.bf16.mxu0 %v5642
        %7721 = vmatpush2.bf16.msra.mxu0 %v5641
        %7722 = vmatprep.mubr.bf16.mxu0 %v1044
        %7723 = vmatmul.mubr.bf16.gmra.mxu0 %v1043
        %v7724 = vpop.f32.mrf.mxu0
        %v7725 = vadd.f32 %v7684, %v7724
        %v7726 = vpop.f32.mrf.mxu0
        %v7727 = vadd.f32 %v7686, %v7726
        %v7728 = vpop.f32.mrf.mxu0
        %v7729 = vpop.f32.mrf.mxu0
        %7730 = vdwg.mxu0
        %7731 = vmatprep.subr.bf16.mxu0 %v5762
        %7732 = vmatpush1.bf16.msra.mxu0 %v5761
        %7733 = vmatprep.subr.bf16.mxu0 %v5754
        %7734 = vmatpush1.bf16.msra.mxu0 %v5753
        %7735 = vmatprep.subr.bf16.mxu0 %v5746
        %7736 = vmatpush1.bf16.msra.mxu0 %v5745
        %7737 = vmatprep.subr.bf16.mxu0 %v5738
        %7738 = vmatpush1.bf16.msra.mxu0 %v5737
        %7739 = vmatprep.subr.bf16.mxu0 %v5730
        %7740 = vmatpush1.bf16.msra.mxu0 %v5729
        %7741 = vmatprep.subr.bf16.mxu0 %v5722
        %7742 = vmatpush1.bf16.msra.mxu0 %v5721
        %7743 = vmatprep.subr.bf16.mxu0 %v5714
        %7744 = vmatpush1.bf16.msra.mxu0 %v5713
        %7745 = vmatprep.subr.bf16.mxu0 %v5706
        %7746 = vmatpush1.bf16.msra.mxu0 %v5705
        %7747 = vmatprep.subr.bf16.mxu0 %v5826
        %7748 = vmatpush2.bf16.msra.mxu0 %v5825
        %7749 = vmatprep.subr.bf16.mxu0 %v5818
        %7750 = vmatpush2.bf16.msra.mxu0 %v5817
        %7751 = vmatprep.subr.bf16.mxu0 %v5810
        %7752 = vmatpush2.bf16.msra.mxu0 %v5809
        %7753 = vmatprep.subr.bf16.mxu0 %v5802
        %7754 = vmatpush2.bf16.msra.mxu0 %v5801
        %7755 = vmatprep.subr.bf16.mxu0 %v5794
        %7756 = vmatpush2.bf16.msra.mxu0 %v5793
        %7757 = vmatprep.subr.bf16.mxu0 %v5786
        %7758 = vmatpush2.bf16.msra.mxu0 %v5785
        %7759 = vmatprep.subr.bf16.mxu0 %v5778
        %7760 = vmatpush2.bf16.msra.mxu0 %v5777
        %7761 = vmatprep.subr.bf16.mxu0 %v5770
        %7762 = vmatpush2.bf16.msra.mxu0 %v5769
        %7763 = vmatprep.mubr.bf16.mxu0 %v1046
        %7764 = vmatmul.mubr.bf16.gmra.mxu0 %v1045
        %v7765 = vpop.f32.mrf.mxu0
        %v7766 = vadd.f32 %v7725, %v7765
        %v7767 = vpop.f32.mrf.mxu0
        %v7768 = vadd.f32 %v7727, %v7767
        %v7769 = vpop.f32.mrf.mxu0
        %v7770 = vpop.f32.mrf.mxu0
        %7771 = vdwg.mxu0
        %7772 = vmatprep.subr.bf16.mxu0 %v5890
        %7773 = vmatpush1.bf16.msra.mxu0 %v5889
        %7774 = vmatprep.subr.bf16.mxu0 %v5882
        %7775 = vmatpush1.bf16.msra.mxu0 %v5881
        %7776 = vmatprep.subr.bf16.mxu0 %v5874
        %7777 = vmatpush1.bf16.msra.mxu0 %v5873
        %7778 = vmatprep.subr.bf16.mxu0 %v5866
        %7779 = vmatpush1.bf16.msra.mxu0 %v5865
        %7780 = vmatprep.subr.bf16.mxu0 %v5858
        %7781 = vmatpush1.bf16.msra.mxu0 %v5857
        %7782 = vmatprep.subr.bf16.mxu0 %v5850
        %7783 = vmatpush1.bf16.msra.mxu0 %v5849
        %7784 = vmatprep.subr.bf16.mxu0 %v5842
        %7785 = vmatpush1.bf16.msra.mxu0 %v5841
        %7786 = vmatprep.subr.bf16.mxu0 %v5834
        %7787 = vmatpush1.bf16.msra.mxu0 %v5833
        %7788 = vmatprep.subr.bf16.mxu0 %v5954
        %7789 = vmatpush2.bf16.msra.mxu0 %v5953
        %7790 = vmatprep.subr.bf16.mxu0 %v5946
        %7791 = vmatpush2.bf16.msra.mxu0 %v5945
        %7792 = vmatprep.subr.bf16.mxu0 %v5938
        %7793 = vmatpush2.bf16.msra.mxu0 %v5937
        %7794 = vmatprep.subr.bf16.mxu0 %v5930
        %7795 = vmatpush2.bf16.msra.mxu0 %v5929
        %7796 = vmatprep.subr.bf16.mxu0 %v5922
        %7797 = vmatpush2.bf16.msra.mxu0 %v5921
        %7798 = vmatprep.subr.bf16.mxu0 %v5914
        %7799 = vmatpush2.bf16.msra.mxu0 %v5913
        %7800 = vmatprep.subr.bf16.mxu0 %v5906
        %7801 = vmatpush2.bf16.msra.mxu0 %v5905
        %7802 = vmatprep.subr.bf16.mxu0 %v5898
        %7803 = vmatpush2.bf16.msra.mxu0 %v5897
        %7804 = vmatprep.mubr.bf16.mxu0 %v1048
        %7805 = vmatmul.mubr.bf16.gmra.mxu0 %v1047
        %v7806 = vpop.f32.mrf.mxu0
        %v7807 = vadd.f32 %v7766, %v7806
        %v7808 = vpop.f32.mrf.mxu0
        %v7809 = vadd.f32 %v7768, %v7808
        %v7810 = vpop.f32.mrf.mxu0
        %v7811 = vpop.f32.mrf.mxu0
        %7812 = vdwg.mxu0
        %7813 = vmatprep.subr.bf16.mxu0 %v6018
        %7814 = vmatpush1.bf16.msra.mxu0 %v6017
        %7815 = vmatprep.subr.bf16.mxu0 %v6010
        %7816 = vmatpush1.bf16.msra.mxu0 %v6009
        %7817 = vmatprep.subr.bf16.mxu0 %v6002
        %7818 = vmatpush1.bf16.msra.mxu0 %v6001
        %7819 = vmatprep.subr.bf16.mxu0 %v5994
        %7820 = vmatpush1.bf16.msra.mxu0 %v5993
        %7821 = vmatprep.subr.bf16.mxu0 %v5986
        %7822 = vmatpush1.bf16.msra.mxu0 %v5985
        %7823 = vmatprep.subr.bf16.mxu0 %v5978
        %7824 = vmatpush1.bf16.msra.mxu0 %v5977
        %7825 = vmatprep.subr.bf16.mxu0 %v5970
        %7826 = vmatpush1.bf16.msra.mxu0 %v5969
        %7827 = vmatprep.subr.bf16.mxu0 %v5962
        %7828 = vmatpush1.bf16.msra.mxu0 %v5961
        %7829 = vmatprep.subr.bf16.mxu0 %v6082
        %7830 = vmatpush2.bf16.msra.mxu0 %v6081
        %7831 = vmatprep.subr.bf16.mxu0 %v6074
        %7832 = vmatpush2.bf16.msra.mxu0 %v6073
        %7833 = vmatprep.subr.bf16.mxu0 %v6066
        %7834 = vmatpush2.bf16.msra.mxu0 %v6065
        %7835 = vmatprep.subr.bf16.mxu0 %v6058
        %7836 = vmatpush2.bf16.msra.mxu0 %v6057
        %7837 = vmatprep.subr.bf16.mxu0 %v6050
        %7838 = vmatpush2.bf16.msra.mxu0 %v6049
        %7839 = vmatprep.subr.bf16.mxu0 %v6042
        %7840 = vmatpush2.bf16.msra.mxu0 %v6041
        %7841 = vmatprep.subr.bf16.mxu0 %v6034
        %7842 = vmatpush2.bf16.msra.mxu0 %v6033
        %7843 = vmatprep.subr.bf16.mxu0 %v6026
        %7844 = vmatpush2.bf16.msra.mxu0 %v6025
        %7845 = vmatprep.mubr.bf16.mxu0 %v1050
        %7846 = vmatmul.mubr.bf16.gmra.mxu0 %v1049
        %v7847 = vpop.f32.mrf.mxu0
        %v7848 = vadd.f32 %v7807, %v7847
        %v7849 = vpop.f32.mrf.mxu0
        %v7850 = vadd.f32 %v7809, %v7849
        %v7851 = vpop.f32.mrf.mxu0
        %v7852 = vpop.f32.mrf.mxu0
        %7853 = vdwg.mxu0
        %7854 = vmatprep.subr.bf16.mxu0 %v6146
        %7855 = vmatpush1.bf16.msra.mxu0 %v6145
        %7856 = vmatprep.subr.bf16.mxu0 %v6138
        %7857 = vmatpush1.bf16.msra.mxu0 %v6137
        %7858 = vmatprep.subr.bf16.mxu0 %v6130
        %7859 = vmatpush1.bf16.msra.mxu0 %v6129
        %7860 = vmatprep.subr.bf16.mxu0 %v6122
        %7861 = vmatpush1.bf16.msra.mxu0 %v6121
        %7862 = vmatprep.subr.bf16.mxu0 %v6114
        %7863 = vmatpush1.bf16.msra.mxu0 %v6113
        %7864 = vmatprep.subr.bf16.mxu0 %v6106
        %7865 = vmatpush1.bf16.msra.mxu0 %v6105
        %7866 = vmatprep.subr.bf16.mxu0 %v6098
        %7867 = vmatpush1.bf16.msra.mxu0 %v6097
        %7868 = vmatprep.subr.bf16.mxu0 %v6090
        %7869 = vmatpush1.bf16.msra.mxu0 %v6089
        %7870 = vmatprep.subr.bf16.mxu0 %v6210
        %7871 = vmatpush2.bf16.msra.mxu0 %v6209
        %7872 = vmatprep.subr.bf16.mxu0 %v6202
        %7873 = vmatpush2.bf16.msra.mxu0 %v6201
        %7874 = vmatprep.subr.bf16.mxu0 %v6194
        %7875 = vmatpush2.bf16.msra.mxu0 %v6193
        %7876 = vmatprep.subr.bf16.mxu0 %v6186
        %7877 = vmatpush2.bf16.msra.mxu0 %v6185
        %7878 = vmatprep.subr.bf16.mxu0 %v6178
        %7879 = vmatpush2.bf16.msra.mxu0 %v6177
        %7880 = vmatprep.subr.bf16.mxu0 %v6170
        %7881 = vmatpush2.bf16.msra.mxu0 %v6169
        %7882 = vmatprep.subr.bf16.mxu0 %v6162
        %7883 = vmatpush2.bf16.msra.mxu0 %v6161
        %7884 = vmatprep.subr.bf16.mxu0 %v6154
        %7885 = vmatpush2.bf16.msra.mxu0 %v6153
        %7886 = vmatprep.mubr.bf16.mxu0 %v1052
        %7887 = vmatmul.mubr.bf16.gmra.mxu0 %v1051
        %v7888 = vpop.f32.mrf.mxu0
        %v7889 = vadd.f32 %v7848, %v7888
        %v7890 = vpop.f32.mrf.mxu0
        %v7891 = vadd.f32 %v7850, %v7890
        %v7892 = vpop.f32.mrf.mxu0
        %v7893 = vpop.f32.mrf.mxu0
        %7894 = vdwg.mxu0
        %7895 = vmatprep.subr.bf16.mxu0 %v5252
        %7896 = vmatpush1.bf16.msra.mxu0 %v5251
        %7897 = vmatprep.subr.bf16.mxu0 %v5244
        %7898 = vmatpush1.bf16.msra.mxu0 %v5243
        %7899 = vmatprep.subr.bf16.mxu0 %v5236
        %7900 = vmatpush1.bf16.msra.mxu0 %v5235
        %7901 = vmatprep.subr.bf16.mxu0 %v5228
        %7902 = vmatpush1.bf16.msra.mxu0 %v5227
        %7903 = vmatprep.subr.bf16.mxu0 %v5220
        %7904 = vmatpush1.bf16.msra.mxu0 %v5219
        %7905 = vmatprep.subr.bf16.mxu0 %v5212
        %7906 = vmatpush1.bf16.msra.mxu0 %v5211
        %7907 = vmatprep.subr.bf16.mxu0 %v5204
        %7908 = vmatpush1.bf16.msra.mxu0 %v5203
        %7909 = vmatprep.subr.bf16.mxu0 %v5196
        %7910 = vmatpush1.bf16.msra.mxu0 %v5195
        %7911 = vmatprep.subr.bf16.mxu0 %v5316
        %7912 = vmatpush2.bf16.msra.mxu0 %v5315
        %7913 = vmatprep.subr.bf16.mxu0 %v5308
        %7914 = vmatpush2.bf16.msra.mxu0 %v5307
        %7915 = vmatprep.subr.bf16.mxu0 %v5300
        %7916 = vmatpush2.bf16.msra.mxu0 %v5299
        %7917 = vmatprep.subr.bf16.mxu0 %v5292
        %7918 = vmatpush2.bf16.msra.mxu0 %v5291
        %7919 = vmatprep.subr.bf16.mxu0 %v5284
        %7920 = vmatpush2.bf16.msra.mxu0 %v5283
        %7921 = vmatprep.subr.bf16.mxu0 %v5276
        %7922 = vmatpush2.bf16.msra.mxu0 %v5275
        %7923 = vmatprep.subr.bf16.mxu0 %v5268
        %7924 = vmatpush2.bf16.msra.mxu0 %v5267
        %7925 = vmatprep.subr.bf16.mxu0 %v5260
        %7926 = vmatpush2.bf16.msra.mxu0 %v5259
        %7927 = vmatprep.mubr.bf16.mxu0 %v1038
        %7928 = vmatmul.mubr.bf16.gmra.mxu0 %v1037
        %v7929 = vpop.f32.mrf.mxu0
        %v7930 = vadd.f32 %v2098, %v7929
        %v7931 = vpop.f32.mrf.mxu0
        %v7932 = vadd.f32 %v2102, %v7931
        %v7933 = vpop.f32.mrf.mxu0
        %v7934 = vpop.f32.mrf.mxu0
        %7935 = vdwg.mxu0
        %7936 = vmatprep.subr.bf16.mxu0 %v5380
        %7937 = vmatpush1.bf16.msra.mxu0 %v5379
        %7938 = vmatprep.subr.bf16.mxu0 %v5372
        %7939 = vmatpush1.bf16.msra.mxu0 %v5371
        %7940 = vmatprep.subr.bf16.mxu0 %v5364
        %7941 = vmatpush1.bf16.msra.mxu0 %v5363
        %7942 = vmatprep.subr.bf16.mxu0 %v5356
        %7943 = vmatpush1.bf16.msra.mxu0 %v5355
        %7944 = vmatprep.subr.bf16.mxu0 %v5348
        %7945 = vmatpush1.bf16.msra.mxu0 %v5347
        %7946 = vmatprep.subr.bf16.mxu0 %v5340
        %7947 = vmatpush1.bf16.msra.mxu0 %v5339
        %7948 = vmatprep.subr.bf16.mxu0 %v5332
        %7949 = vmatpush1.bf16.msra.mxu0 %v5331
        %7950 = vmatprep.subr.bf16.mxu0 %v5324
        %7951 = vmatpush1.bf16.msra.mxu0 %v5323
        %7952 = vmatprep.subr.bf16.mxu0 %v5444
        %7953 = vmatpush2.bf16.msra.mxu0 %v5443
        %7954 = vmatprep.subr.bf16.mxu0 %v5436
        %7955 = vmatpush2.bf16.msra.mxu0 %v5435
        %7956 = vmatprep.subr.bf16.mxu0 %v5428
        %7957 = vmatpush2.bf16.msra.mxu0 %v5427
        %7958 = vmatprep.subr.bf16.mxu0 %v5420
        %7959 = vmatpush2.bf16.msra.mxu0 %v5419
        %7960 = vmatprep.subr.bf16.mxu0 %v5412
        %7961 = vmatpush2.bf16.msra.mxu0 %v5411
        %7962 = vmatprep.subr.bf16.mxu0 %v5404
        %7963 = vmatpush2.bf16.msra.mxu0 %v5403
        %7964 = vmatprep.subr.bf16.mxu0 %v5396
        %7965 = vmatpush2.bf16.msra.mxu0 %v5395
        %7966 = vmatprep.subr.bf16.mxu0 %v5388
        %7967 = vmatpush2.bf16.msra.mxu0 %v5387
        %7968 = vmatprep.mubr.bf16.mxu0 %v1040
        %7969 = vmatmul.mubr.bf16.gmra.mxu0 %v1039
        %v7970 = vpop.f32.mrf.mxu0
        %v7971 = vadd.f32 %v7930, %v7970
        %v7972 = vpop.f32.mrf.mxu0
        %v7973 = vadd.f32 %v7932, %v7972
        %v7974 = vpop.f32.mrf.mxu0
        %v7975 = vpop.f32.mrf.mxu0
        %7976 = vdwg.mxu0
        %7977 = vmatprep.subr.bf16.mxu0 %v5508
        %7978 = vmatpush1.bf16.msra.mxu0 %v5507
        %7979 = vmatprep.subr.bf16.mxu0 %v5500
        %7980 = vmatpush1.bf16.msra.mxu0 %v5499
        %7981 = vmatprep.subr.bf16.mxu0 %v5492
        %7982 = vmatpush1.bf16.msra.mxu0 %v5491
        %7983 = vmatprep.subr.bf16.mxu0 %v5484
        %7984 = vmatpush1.bf16.msra.mxu0 %v5483
        %7985 = vmatprep.subr.bf16.mxu0 %v5476
        %7986 = vmatpush1.bf16.msra.mxu0 %v5475
        %7987 = vmatprep.subr.bf16.mxu0 %v5468
        %7988 = vmatpush1.bf16.msra.mxu0 %v5467
        %7989 = vmatprep.subr.bf16.mxu0 %v5460
        %7990 = vmatpush1.bf16.msra.mxu0 %v5459
        %7991 = vmatprep.subr.bf16.mxu0 %v5452
        %7992 = vmatpush1.bf16.msra.mxu0 %v5451
        %7993 = vmatprep.subr.bf16.mxu0 %v5572
        %7994 = vmatpush2.bf16.msra.mxu0 %v5571
        %7995 = vmatprep.subr.bf16.mxu0 %v5564
        %7996 = vmatpush2.bf16.msra.mxu0 %v5563
        %7997 = vmatprep.subr.bf16.mxu0 %v5556
        %7998 = vmatpush2.bf16.msra.mxu0 %v5555
        %7999 = vmatprep.subr.bf16.mxu0 %v5548
        %8000 = vmatpush2.bf16.msra.mxu0 %v5547
        %8001 = vmatprep.subr.bf16.mxu0 %v5540
        %8002 = vmatpush2.bf16.msra.mxu0 %v5539
        %8003 = vmatprep.subr.bf16.mxu0 %v5532
        %8004 = vmatpush2.bf16.msra.mxu0 %v5531
        %8005 = vmatprep.subr.bf16.mxu0 %v5524
        %8006 = vmatpush2.bf16.msra.mxu0 %v5523
        %8007 = vmatprep.subr.bf16.mxu0 %v5516
        %8008 = vmatpush2.bf16.msra.mxu0 %v5515
        %8009 = vmatprep.mubr.bf16.mxu0 %v1042
        %8010 = vmatmul.mubr.bf16.gmra.mxu0 %v1041
        %v8011 = vpop.f32.mrf.mxu0
        %v8012 = vadd.f32 %v7971, %v8011
        %v8013 = vpop.f32.mrf.mxu0
        %v8014 = vadd.f32 %v7973, %v8013
        %v8015 = vpop.f32.mrf.mxu0
        %v8016 = vpop.f32.mrf.mxu0
        %8017 = vdwg.mxu0
        %8018 = vmatprep.subr.bf16.mxu0 %v5636
        %8019 = vmatpush1.bf16.msra.mxu0 %v5635
        %8020 = vmatprep.subr.bf16.mxu0 %v5628
        %8021 = vmatpush1.bf16.msra.mxu0 %v5627
        %8022 = vmatprep.subr.bf16.mxu0 %v5620
        %8023 = vmatpush1.bf16.msra.mxu0 %v5619
        %8024 = vmatprep.subr.bf16.mxu0 %v5612
        %8025 = vmatpush1.bf16.msra.mxu0 %v5611
        %8026 = vmatprep.subr.bf16.mxu0 %v5604
        %8027 = vmatpush1.bf16.msra.mxu0 %v5603
        %8028 = vmatprep.subr.bf16.mxu0 %v5596
        %8029 = vmatpush1.bf16.msra.mxu0 %v5595
        %8030 = vmatprep.subr.bf16.mxu0 %v5588
        %8031 = vmatpush1.bf16.msra.mxu0 %v5587
        %8032 = vmatprep.subr.bf16.mxu0 %v5580
        %8033 = vmatpush1.bf16.msra.mxu0 %v5579
        %8034 = vmatprep.subr.bf16.mxu0 %v5700
        %8035 = vmatpush2.bf16.msra.mxu0 %v5699
        %8036 = vmatprep.subr.bf16.mxu0 %v5692
        %8037 = vmatpush2.bf16.msra.mxu0 %v5691
        %8038 = vmatprep.subr.bf16.mxu0 %v5684
        %8039 = vmatpush2.bf16.msra.mxu0 %v5683
        %8040 = vmatprep.subr.bf16.mxu0 %v5676
        %8041 = vmatpush2.bf16.msra.mxu0 %v5675
        %8042 = vmatprep.subr.bf16.mxu0 %v5668
        %8043 = vmatpush2.bf16.msra.mxu0 %v5667
        %8044 = vmatprep.subr.bf16.mxu0 %v5660
        %8045 = vmatpush2.bf16.msra.mxu0 %v5659
        %8046 = vmatprep.subr.bf16.mxu0 %v5652
        %8047 = vmatpush2.bf16.msra.mxu0 %v5651
        %8048 = vmatprep.subr.bf16.mxu0 %v5644
        %8049 = vmatpush2.bf16.msra.mxu0 %v5643
        %8050 = vmatprep.mubr.bf16.mxu0 %v1044
        %8051 = vmatmul.mubr.bf16.gmra.mxu0 %v1043
        %v8052 = vpop.f32.mrf.mxu0
        %v8053 = vadd.f32 %v8012, %v8052
        %v8054 = vpop.f32.mrf.mxu0
        %v8055 = vadd.f32 %v8014, %v8054
        %v8056 = vpop.f32.mrf.mxu0
        %v8057 = vpop.f32.mrf.mxu0
        %8058 = vdwg.mxu0
        %8059 = vmatprep.subr.bf16.mxu0 %v5764
        %8060 = vmatpush1.bf16.msra.mxu0 %v5763
        %8061 = vmatprep.subr.bf16.mxu0 %v5756
        %8062 = vmatpush1.bf16.msra.mxu0 %v5755
        %8063 = vmatprep.subr.bf16.mxu0 %v5748
        %8064 = vmatpush1.bf16.msra.mxu0 %v5747
        %8065 = vmatprep.subr.bf16.mxu0 %v5740
        %8066 = vmatpush1.bf16.msra.mxu0 %v5739
        %8067 = vmatprep.subr.bf16.mxu0 %v5732
        %8068 = vmatpush1.bf16.msra.mxu0 %v5731
        %8069 = vmatprep.subr.bf16.mxu0 %v5724
        %8070 = vmatpush1.bf16.msra.mxu0 %v5723
        %8071 = vmatprep.subr.bf16.mxu0 %v5716
        %8072 = vmatpush1.bf16.msra.mxu0 %v5715
        %8073 = vmatprep.subr.bf16.mxu0 %v5708
        %8074 = vmatpush1.bf16.msra.mxu0 %v5707
        %8075 = vmatprep.subr.bf16.mxu0 %v5828
        %8076 = vmatpush2.bf16.msra.mxu0 %v5827
        %8077 = vmatprep.subr.bf16.mxu0 %v5820
        %8078 = vmatpush2.bf16.msra.mxu0 %v5819
        %8079 = vmatprep.subr.bf16.mxu0 %v5812
        %8080 = vmatpush2.bf16.msra.mxu0 %v5811
        %8081 = vmatprep.subr.bf16.mxu0 %v5804
        %8082 = vmatpush2.bf16.msra.mxu0 %v5803
        %8083 = vmatprep.subr.bf16.mxu0 %v5796
        %8084 = vmatpush2.bf16.msra.mxu0 %v5795
        %8085 = vmatprep.subr.bf16.mxu0 %v5788
        %8086 = vmatpush2.bf16.msra.mxu0 %v5787
        %8087 = vmatprep.subr.bf16.mxu0 %v5780
        %8088 = vmatpush2.bf16.msra.mxu0 %v5779
        %8089 = vmatprep.subr.bf16.mxu0 %v5772
        %8090 = vmatpush2.bf16.msra.mxu0 %v5771
        %8091 = vmatprep.mubr.bf16.mxu0 %v1046
        %8092 = vmatmul.mubr.bf16.gmra.mxu0 %v1045
        %v8093 = vpop.f32.mrf.mxu0
        %v8094 = vadd.f32 %v8053, %v8093
        %v8095 = vpop.f32.mrf.mxu0
        %v8096 = vadd.f32 %v8055, %v8095
        %v8097 = vpop.f32.mrf.mxu0
        %v8098 = vpop.f32.mrf.mxu0
        %8099 = vdwg.mxu0
        %8100 = vmatprep.subr.bf16.mxu0 %v5892
        %8101 = vmatpush1.bf16.msra.mxu0 %v5891
        %8102 = vmatprep.subr.bf16.mxu0 %v5884
        %8103 = vmatpush1.bf16.msra.mxu0 %v5883
        %8104 = vmatprep.subr.bf16.mxu0 %v5876
        %8105 = vmatpush1.bf16.msra.mxu0 %v5875
        %8106 = vmatprep.subr.bf16.mxu0 %v5868
        %8107 = vmatpush1.bf16.msra.mxu0 %v5867
        %8108 = vmatprep.subr.bf16.mxu0 %v5860
        %8109 = vmatpush1.bf16.msra.mxu0 %v5859
        %8110 = vmatprep.subr.bf16.mxu0 %v5852
        %8111 = vmatpush1.bf16.msra.mxu0 %v5851
        %8112 = vmatprep.subr.bf16.mxu0 %v5844
        %8113 = vmatpush1.bf16.msra.mxu0 %v5843
        %8114 = vmatprep.subr.bf16.mxu0 %v5836
        %8115 = vmatpush1.bf16.msra.mxu0 %v5835
        %8116 = vmatprep.subr.bf16.mxu0 %v5956
        %8117 = vmatpush2.bf16.msra.mxu0 %v5955
        %8118 = vmatprep.subr.bf16.mxu0 %v5948
        %8119 = vmatpush2.bf16.msra.mxu0 %v5947
        %8120 = vmatprep.subr.bf16.mxu0 %v5940
        %8121 = vmatpush2.bf16.msra.mxu0 %v5939
        %8122 = vmatprep.subr.bf16.mxu0 %v5932
        %8123 = vmatpush2.bf16.msra.mxu0 %v5931
        %8124 = vmatprep.subr.bf16.mxu0 %v5924
        %8125 = vmatpush2.bf16.msra.mxu0 %v5923
        %8126 = vmatprep.subr.bf16.mxu0 %v5916
        %8127 = vmatpush2.bf16.msra.mxu0 %v5915
        %8128 = vmatprep.subr.bf16.mxu0 %v5908
        %8129 = vmatpush2.bf16.msra.mxu0 %v5907
        %8130 = vmatprep.subr.bf16.mxu0 %v5900
        %8131 = vmatpush2.bf16.msra.mxu0 %v5899
        %8132 = vmatprep.mubr.bf16.mxu0 %v1048
        %8133 = vmatmul.mubr.bf16.gmra.mxu0 %v1047
        %v8134 = vpop.f32.mrf.mxu0
        %v8135 = vadd.f32 %v8094, %v8134
        %v8136 = vpop.f32.mrf.mxu0
        %v8137 = vadd.f32 %v8096, %v8136
        %v8138 = vpop.f32.mrf.mxu0
        %v8139 = vpop.f32.mrf.mxu0
        %8140 = vdwg.mxu0
        %8141 = vmatprep.subr.bf16.mxu0 %v6020
        %8142 = vmatpush1.bf16.msra.mxu0 %v6019
        %8143 = vmatprep.subr.bf16.mxu0 %v6012
        %8144 = vmatpush1.bf16.msra.mxu0 %v6011
        %8145 = vmatprep.subr.bf16.mxu0 %v6004
        %8146 = vmatpush1.bf16.msra.mxu0 %v6003
        %8147 = vmatprep.subr.bf16.mxu0 %v5996
        %8148 = vmatpush1.bf16.msra.mxu0 %v5995
        %8149 = vmatprep.subr.bf16.mxu0 %v5988
        %8150 = vmatpush1.bf16.msra.mxu0 %v5987
        %8151 = vmatprep.subr.bf16.mxu0 %v5980
        %8152 = vmatpush1.bf16.msra.mxu0 %v5979
        %8153 = vmatprep.subr.bf16.mxu0 %v5972
        %8154 = vmatpush1.bf16.msra.mxu0 %v5971
        %8155 = vmatprep.subr.bf16.mxu0 %v5964
        %8156 = vmatpush1.bf16.msra.mxu0 %v5963
        %8157 = vmatprep.subr.bf16.mxu0 %v6084
        %8158 = vmatpush2.bf16.msra.mxu0 %v6083
        %8159 = vmatprep.subr.bf16.mxu0 %v6076
        %8160 = vmatpush2.bf16.msra.mxu0 %v6075
        %8161 = vmatprep.subr.bf16.mxu0 %v6068
        %8162 = vmatpush2.bf16.msra.mxu0 %v6067
        %8163 = vmatprep.subr.bf16.mxu0 %v6060
        %8164 = vmatpush2.bf16.msra.mxu0 %v6059
        %8165 = vmatprep.subr.bf16.mxu0 %v6052
        %8166 = vmatpush2.bf16.msra.mxu0 %v6051
        %8167 = vmatprep.subr.bf16.mxu0 %v6044
        %8168 = vmatpush2.bf16.msra.mxu0 %v6043
        %8169 = vmatprep.subr.bf16.mxu0 %v6036
        %8170 = vmatpush2.bf16.msra.mxu0 %v6035
        %8171 = vmatprep.subr.bf16.mxu0 %v6028
        %8172 = vmatpush2.bf16.msra.mxu0 %v6027
        %8173 = vmatprep.mubr.bf16.mxu0 %v1050
        %8174 = vmatmul.mubr.bf16.gmra.mxu0 %v1049
        %v8175 = vpop.f32.mrf.mxu0
        %v8176 = vadd.f32 %v8135, %v8175
        %v8177 = vpop.f32.mrf.mxu0
        %v8178 = vadd.f32 %v8137, %v8177
        %v8179 = vpop.f32.mrf.mxu0
        %v8180 = vpop.f32.mrf.mxu0
        %8181 = vdwg.mxu0
        %8182 = vmatprep.subr.bf16.mxu0 %v6148
        %8183 = vmatpush1.bf16.msra.mxu0 %v6147
        %8184 = vmatprep.subr.bf16.mxu0 %v6140
        %8185 = vmatpush1.bf16.msra.mxu0 %v6139
        %8186 = vmatprep.subr.bf16.mxu0 %v6132
        %8187 = vmatpush1.bf16.msra.mxu0 %v6131
        %8188 = vmatprep.subr.bf16.mxu0 %v6124
        %8189 = vmatpush1.bf16.msra.mxu0 %v6123
        %8190 = vmatprep.subr.bf16.mxu0 %v6116
        %8191 = vmatpush1.bf16.msra.mxu0 %v6115
        %8192 = vmatprep.subr.bf16.mxu0 %v6108
        %8193 = vmatpush1.bf16.msra.mxu0 %v6107
        %8194 = vmatprep.subr.bf16.mxu0 %v6100
        %8195 = vmatpush1.bf16.msra.mxu0 %v6099
        %8196 = vmatprep.subr.bf16.mxu0 %v6092
        %8197 = vmatpush1.bf16.msra.mxu0 %v6091
        %8198 = vmatprep.subr.bf16.mxu0 %v6212
        %8199 = vmatpush2.bf16.msra.mxu0 %v6211
        %8200 = vmatprep.subr.bf16.mxu0 %v6204
        %8201 = vmatpush2.bf16.msra.mxu0 %v6203
        %8202 = vmatprep.subr.bf16.mxu0 %v6196
        %8203 = vmatpush2.bf16.msra.mxu0 %v6195
        %8204 = vmatprep.subr.bf16.mxu0 %v6188
        %8205 = vmatpush2.bf16.msra.mxu0 %v6187
        %8206 = vmatprep.subr.bf16.mxu0 %v6180
        %8207 = vmatpush2.bf16.msra.mxu0 %v6179
        %8208 = vmatprep.subr.bf16.mxu0 %v6172
        %8209 = vmatpush2.bf16.msra.mxu0 %v6171
        %8210 = vmatprep.subr.bf16.mxu0 %v6164
        %8211 = vmatpush2.bf16.msra.mxu0 %v6163
        %8212 = vmatprep.subr.bf16.mxu0 %v6156
        %8213 = vmatpush2.bf16.msra.mxu0 %v6155
        %8214 = vmatprep.mubr.bf16.mxu0 %v1052
        %8215 = vmatmul.mubr.bf16.gmra.mxu0 %v1051
        %v8216 = vpop.f32.mrf.mxu0
        %v8217 = vadd.f32 %v8176, %v8216
        %v8218 = vpop.f32.mrf.mxu0
        %v8219 = vadd.f32 %v8178, %v8218
        %v8220 = vpop.f32.mrf.mxu0
        %v8221 = vpop.f32.mrf.mxu0
        %8222 = vdwg.mxu0
        %8223 = vmatprep.subr.bf16.mxu0 %v5254
        %8224 = vmatpush1.bf16.msra.mxu0 %v5253
        %8225 = vmatprep.subr.bf16.mxu0 %v5246
        %8226 = vmatpush1.bf16.msra.mxu0 %v5245
        %8227 = vmatprep.subr.bf16.mxu0 %v5238
        %8228 = vmatpush1.bf16.msra.mxu0 %v5237
        %8229 = vmatprep.subr.bf16.mxu0 %v5230
        %8230 = vmatpush1.bf16.msra.mxu0 %v5229
        %8231 = vmatprep.subr.bf16.mxu0 %v5222
        %8232 = vmatpush1.bf16.msra.mxu0 %v5221
        %8233 = vmatprep.subr.bf16.mxu0 %v5214
        %8234 = vmatpush1.bf16.msra.mxu0 %v5213
        %8235 = vmatprep.subr.bf16.mxu0 %v5206
        %8236 = vmatpush1.bf16.msra.mxu0 %v5205
        %8237 = vmatprep.subr.bf16.mxu0 %v5198
        %8238 = vmatpush1.bf16.msra.mxu0 %v5197
        %8239 = vmatprep.subr.bf16.mxu0 %v5318
        %8240 = vmatpush2.bf16.msra.mxu0 %v5317
        %8241 = vmatprep.subr.bf16.mxu0 %v5310
        %8242 = vmatpush2.bf16.msra.mxu0 %v5309
        %8243 = vmatprep.subr.bf16.mxu0 %v5302
        %8244 = vmatpush2.bf16.msra.mxu0 %v5301
        %8245 = vmatprep.subr.bf16.mxu0 %v5294
        %8246 = vmatpush2.bf16.msra.mxu0 %v5293
        %8247 = vmatprep.subr.bf16.mxu0 %v5286
        %8248 = vmatpush2.bf16.msra.mxu0 %v5285
        %8249 = vmatprep.subr.bf16.mxu0 %v5278
        %8250 = vmatpush2.bf16.msra.mxu0 %v5277
        %8251 = vmatprep.subr.bf16.mxu0 %v5270
        %8252 = vmatpush2.bf16.msra.mxu0 %v5269
        %8253 = vmatprep.subr.bf16.mxu0 %v5262
        %8254 = vmatpush2.bf16.msra.mxu0 %v5261
        %8255 = vmatprep.mubr.bf16.mxu0 %v1038
        %8256 = vmatmul.mubr.bf16.gmra.mxu0 %v1037
        %v8257 = vpop.f32.mrf.mxu0
        %v8258 = vadd.f32 %v2106, %v8257
        %v8259 = vpop.f32.mrf.mxu0
        %v8260 = vadd.f32 %v2110, %v8259
        %v8261 = vpop.f32.mrf.mxu0
        %v8262 = vpop.f32.mrf.mxu0
        %8263 = vdwg.mxu0
        %8264 = vmatprep.subr.bf16.mxu0 %v5382
        %8265 = vmatpush1.bf16.msra.mxu0 %v5381
        %8266 = vmatprep.subr.bf16.mxu0 %v5374
        %8267 = vmatpush1.bf16.msra.mxu0 %v5373
        %8268 = vmatprep.subr.bf16.mxu0 %v5366
        %8269 = vmatpush1.bf16.msra.mxu0 %v5365
        %8270 = vmatprep.subr.bf16.mxu0 %v5358
        %8271 = vmatpush1.bf16.msra.mxu0 %v5357
        %8272 = vmatprep.subr.bf16.mxu0 %v5350
        %8273 = vmatpush1.bf16.msra.mxu0 %v5349
        %8274 = vmatprep.subr.bf16.mxu0 %v5342
        %8275 = vmatpush1.bf16.msra.mxu0 %v5341
        %8276 = vmatprep.subr.bf16.mxu0 %v5334
        %8277 = vmatpush1.bf16.msra.mxu0 %v5333
        %8278 = vmatprep.subr.bf16.mxu0 %v5326
        %8279 = vmatpush1.bf16.msra.mxu0 %v5325
        %8280 = vmatprep.subr.bf16.mxu0 %v5446
        %8281 = vmatpush2.bf16.msra.mxu0 %v5445
        %8282 = vmatprep.subr.bf16.mxu0 %v5438
        %8283 = vmatpush2.bf16.msra.mxu0 %v5437
        %8284 = vmatprep.subr.bf16.mxu0 %v5430
        %8285 = vmatpush2.bf16.msra.mxu0 %v5429
        %8286 = vmatprep.subr.bf16.mxu0 %v5422
        %8287 = vmatpush2.bf16.msra.mxu0 %v5421
        %8288 = vmatprep.subr.bf16.mxu0 %v5414
        %8289 = vmatpush2.bf16.msra.mxu0 %v5413
        %8290 = vmatprep.subr.bf16.mxu0 %v5406
        %8291 = vmatpush2.bf16.msra.mxu0 %v5405
        %8292 = vmatprep.subr.bf16.mxu0 %v5398
        %8293 = vmatpush2.bf16.msra.mxu0 %v5397
        %8294 = vmatprep.subr.bf16.mxu0 %v5390
        %8295 = vmatpush2.bf16.msra.mxu0 %v5389
        %8296 = vmatprep.mubr.bf16.mxu0 %v1040
        %8297 = vmatmul.mubr.bf16.gmra.mxu0 %v1039
        %v8298 = vpop.f32.mrf.mxu0
        %v8299 = vadd.f32 %v8258, %v8298
        %v8300 = vpop.f32.mrf.mxu0
        %v8301 = vadd.f32 %v8260, %v8300
        %v8302 = vpop.f32.mrf.mxu0
        %v8303 = vpop.f32.mrf.mxu0
        %8304 = vdwg.mxu0
        %8305 = vmatprep.subr.bf16.mxu0 %v5510
        %8306 = vmatpush1.bf16.msra.mxu0 %v5509
        %8307 = vmatprep.subr.bf16.mxu0 %v5502
        %8308 = vmatpush1.bf16.msra.mxu0 %v5501
        %8309 = vmatprep.subr.bf16.mxu0 %v5494
        %8310 = vmatpush1.bf16.msra.mxu0 %v5493
        %8311 = vmatprep.subr.bf16.mxu0 %v5486
        %8312 = vmatpush1.bf16.msra.mxu0 %v5485
        %8313 = vmatprep.subr.bf16.mxu0 %v5478
        %8314 = vmatpush1.bf16.msra.mxu0 %v5477
        %8315 = vmatprep.subr.bf16.mxu0 %v5470
        %8316 = vmatpush1.bf16.msra.mxu0 %v5469
        %8317 = vmatprep.subr.bf16.mxu0 %v5462
        %8318 = vmatpush1.bf16.msra.mxu0 %v5461
        %8319 = vmatprep.subr.bf16.mxu0 %v5454
        %8320 = vmatpush1.bf16.msra.mxu0 %v5453
        %8321 = vmatprep.subr.bf16.mxu0 %v5574
        %8322 = vmatpush2.bf16.msra.mxu0 %v5573
        %8323 = vmatprep.subr.bf16.mxu0 %v5566
        %8324 = vmatpush2.bf16.msra.mxu0 %v5565
        %8325 = vmatprep.subr.bf16.mxu0 %v5558
        %8326 = vmatpush2.bf16.msra.mxu0 %v5557
        %8327 = vmatprep.subr.bf16.mxu0 %v5550
        %8328 = vmatpush2.bf16.msra.mxu0 %v5549
        %8329 = vmatprep.subr.bf16.mxu0 %v5542
        %8330 = vmatpush2.bf16.msra.mxu0 %v5541
        %8331 = vmatprep.subr.bf16.mxu0 %v5534
        %8332 = vmatpush2.bf16.msra.mxu0 %v5533
        %8333 = vmatprep.subr.bf16.mxu0 %v5526
        %8334 = vmatpush2.bf16.msra.mxu0 %v5525
        %8335 = vmatprep.subr.bf16.mxu0 %v5518
        %8336 = vmatpush2.bf16.msra.mxu0 %v5517
        %8337 = vmatprep.mubr.bf16.mxu0 %v1042
        %8338 = vmatmul.mubr.bf16.gmra.mxu0 %v1041
        %v8339 = vpop.f32.mrf.mxu0
        %v8340 = vadd.f32 %v8299, %v8339
        %v8341 = vpop.f32.mrf.mxu0
        %v8342 = vadd.f32 %v8301, %v8341
        %v8343 = vpop.f32.mrf.mxu0
        %v8344 = vpop.f32.mrf.mxu0
        %8345 = vdwg.mxu0
        %8346 = vmatprep.subr.bf16.mxu0 %v5638
        %8347 = vmatpush1.bf16.msra.mxu0 %v5637
        %8348 = vmatprep.subr.bf16.mxu0 %v5630
        %8349 = vmatpush1.bf16.msra.mxu0 %v5629
        %8350 = vmatprep.subr.bf16.mxu0 %v5622
        %8351 = vmatpush1.bf16.msra.mxu0 %v5621
        %8352 = vmatprep.subr.bf16.mxu0 %v5614
        %8353 = vmatpush1.bf16.msra.mxu0 %v5613
        %8354 = vmatprep.subr.bf16.mxu0 %v5606
        %8355 = vmatpush1.bf16.msra.mxu0 %v5605
        %8356 = vmatprep.subr.bf16.mxu0 %v5598
        %8357 = vmatpush1.bf16.msra.mxu0 %v5597
        %8358 = vmatprep.subr.bf16.mxu0 %v5590
        %8359 = vmatpush1.bf16.msra.mxu0 %v5589
        %8360 = vmatprep.subr.bf16.mxu0 %v5582
        %8361 = vmatpush1.bf16.msra.mxu0 %v5581
        %8362 = vmatprep.subr.bf16.mxu0 %v5702
        %8363 = vmatpush2.bf16.msra.mxu0 %v5701
        %8364 = vmatprep.subr.bf16.mxu0 %v5694
        %8365 = vmatpush2.bf16.msra.mxu0 %v5693
        %8366 = vmatprep.subr.bf16.mxu0 %v5686
        %8367 = vmatpush2.bf16.msra.mxu0 %v5685
        %8368 = vmatprep.subr.bf16.mxu0 %v5678
        %8369 = vmatpush2.bf16.msra.mxu0 %v5677
        %8370 = vmatprep.subr.bf16.mxu0 %v5670
        %8371 = vmatpush2.bf16.msra.mxu0 %v5669
        %8372 = vmatprep.subr.bf16.mxu0 %v5662
        %8373 = vmatpush2.bf16.msra.mxu0 %v5661
        %8374 = vmatprep.subr.bf16.mxu0 %v5654
        %8375 = vmatpush2.bf16.msra.mxu0 %v5653
        %8376 = vmatprep.subr.bf16.mxu0 %v5646
        %8377 = vmatpush2.bf16.msra.mxu0 %v5645
        %8378 = vmatprep.mubr.bf16.mxu0 %v1044
        %8379 = vmatmul.mubr.bf16.gmra.mxu0 %v1043
        %v8380 = vpop.f32.mrf.mxu0
        %v8381 = vadd.f32 %v8340, %v8380
        %v8382 = vpop.f32.mrf.mxu0
        %v8383 = vadd.f32 %v8342, %v8382
        %v8384 = vpop.f32.mrf.mxu0
        %v8385 = vpop.f32.mrf.mxu0
        %8386 = vdwg.mxu0
        %8387 = vmatprep.subr.bf16.mxu0 %v5766
        %8388 = vmatpush1.bf16.msra.mxu0 %v5765
        %8389 = vmatprep.subr.bf16.mxu0 %v5758
        %8390 = vmatpush1.bf16.msra.mxu0 %v5757
        %8391 = vmatprep.subr.bf16.mxu0 %v5750
        %8392 = vmatpush1.bf16.msra.mxu0 %v5749
        %8393 = vmatprep.subr.bf16.mxu0 %v5742
        %8394 = vmatpush1.bf16.msra.mxu0 %v5741
        %8395 = vmatprep.subr.bf16.mxu0 %v5734
        %8396 = vmatpush1.bf16.msra.mxu0 %v5733
        %8397 = vmatprep.subr.bf16.mxu0 %v5726
        %8398 = vmatpush1.bf16.msra.mxu0 %v5725
        %8399 = vmatprep.subr.bf16.mxu0 %v5718
        %8400 = vmatpush1.bf16.msra.mxu0 %v5717
        %8401 = vmatprep.subr.bf16.mxu0 %v5710
        %8402 = vmatpush1.bf16.msra.mxu0 %v5709
        %8403 = vmatprep.subr.bf16.mxu0 %v5830
        %8404 = vmatpush2.bf16.msra.mxu0 %v5829
        %8405 = vmatprep.subr.bf16.mxu0 %v5822
        %8406 = vmatpush2.bf16.msra.mxu0 %v5821
        %8407 = vmatprep.subr.bf16.mxu0 %v5814
        %8408 = vmatpush2.bf16.msra.mxu0 %v5813
        %8409 = vmatprep.subr.bf16.mxu0 %v5806
        %8410 = vmatpush2.bf16.msra.mxu0 %v5805
        %8411 = vmatprep.subr.bf16.mxu0 %v5798
        %8412 = vmatpush2.bf16.msra.mxu0 %v5797
        %8413 = vmatprep.subr.bf16.mxu0 %v5790
        %8414 = vmatpush2.bf16.msra.mxu0 %v5789
        %8415 = vmatprep.subr.bf16.mxu0 %v5782
        %8416 = vmatpush2.bf16.msra.mxu0 %v5781
        %8417 = vmatprep.subr.bf16.mxu0 %v5774
        %8418 = vmatpush2.bf16.msra.mxu0 %v5773
        %8419 = vmatprep.mubr.bf16.mxu0 %v1046
        %8420 = vmatmul.mubr.bf16.gmra.mxu0 %v1045
        %v8421 = vpop.f32.mrf.mxu0
        %v8422 = vadd.f32 %v8381, %v8421
        %v8423 = vpop.f32.mrf.mxu0
        %v8424 = vadd.f32 %v8383, %v8423
        %v8425 = vpop.f32.mrf.mxu0
        %v8426 = vpop.f32.mrf.mxu0
        %8427 = vdwg.mxu0
        %8428 = vmatprep.subr.bf16.mxu0 %v5894
        %8429 = vmatpush1.bf16.msra.mxu0 %v5893
        %8430 = vmatprep.subr.bf16.mxu0 %v5886
        %8431 = vmatpush1.bf16.msra.mxu0 %v5885
        %8432 = vmatprep.subr.bf16.mxu0 %v5878
        %8433 = vmatpush1.bf16.msra.mxu0 %v5877
        %8434 = vmatprep.subr.bf16.mxu0 %v5870
        %8435 = vmatpush1.bf16.msra.mxu0 %v5869
        %8436 = vmatprep.subr.bf16.mxu0 %v5862
        %8437 = vmatpush1.bf16.msra.mxu0 %v5861
        %8438 = vmatprep.subr.bf16.mxu0 %v5854
        %8439 = vmatpush1.bf16.msra.mxu0 %v5853
        %8440 = vmatprep.subr.bf16.mxu0 %v5846
        %8441 = vmatpush1.bf16.msra.mxu0 %v5845
        %8442 = vmatprep.subr.bf16.mxu0 %v5838
        %8443 = vmatpush1.bf16.msra.mxu0 %v5837
        %8444 = vmatprep.subr.bf16.mxu0 %v5958
        %8445 = vmatpush2.bf16.msra.mxu0 %v5957
        %8446 = vmatprep.subr.bf16.mxu0 %v5950
        %8447 = vmatpush2.bf16.msra.mxu0 %v5949
        %8448 = vmatprep.subr.bf16.mxu0 %v5942
        %8449 = vmatpush2.bf16.msra.mxu0 %v5941
        %8450 = vmatprep.subr.bf16.mxu0 %v5934
        %8451 = vmatpush2.bf16.msra.mxu0 %v5933
        %8452 = vmatprep.subr.bf16.mxu0 %v5926
        %8453 = vmatpush2.bf16.msra.mxu0 %v5925
        %8454 = vmatprep.subr.bf16.mxu0 %v5918
        %8455 = vmatpush2.bf16.msra.mxu0 %v5917
        %8456 = vmatprep.subr.bf16.mxu0 %v5910
        %8457 = vmatpush2.bf16.msra.mxu0 %v5909
        %8458 = vmatprep.subr.bf16.mxu0 %v5902
        %8459 = vmatpush2.bf16.msra.mxu0 %v5901
        %8460 = vmatprep.mubr.bf16.mxu0 %v1048
        %8461 = vmatmul.mubr.bf16.gmra.mxu0 %v1047
        %v8462 = vpop.f32.mrf.mxu0
        %v8463 = vadd.f32 %v8422, %v8462
        %v8464 = vpop.f32.mrf.mxu0
        %v8465 = vadd.f32 %v8424, %v8464
        %v8466 = vpop.f32.mrf.mxu0
        %v8467 = vpop.f32.mrf.mxu0
        %8468 = vdwg.mxu0
        %8469 = vmatprep.subr.bf16.mxu0 %v6022
        %8470 = vmatpush1.bf16.msra.mxu0 %v6021
        %8471 = vmatprep.subr.bf16.mxu0 %v6014
        %8472 = vmatpush1.bf16.msra.mxu0 %v6013
        %8473 = vmatprep.subr.bf16.mxu0 %v6006
        %8474 = vmatpush1.bf16.msra.mxu0 %v6005
        %8475 = vmatprep.subr.bf16.mxu0 %v5998
        %8476 = vmatpush1.bf16.msra.mxu0 %v5997
        %8477 = vmatprep.subr.bf16.mxu0 %v5990
        %8478 = vmatpush1.bf16.msra.mxu0 %v5989
        %8479 = vmatprep.subr.bf16.mxu0 %v5982
        %8480 = vmatpush1.bf16.msra.mxu0 %v5981
        %8481 = vmatprep.subr.bf16.mxu0 %v5974
        %8482 = vmatpush1.bf16.msra.mxu0 %v5973
        %8483 = vmatprep.subr.bf16.mxu0 %v5966
        %8484 = vmatpush1.bf16.msra.mxu0 %v5965
        %8485 = vmatprep.subr.bf16.mxu0 %v6086
        %8486 = vmatpush2.bf16.msra.mxu0 %v6085
        %8487 = vmatprep.subr.bf16.mxu0 %v6078
        %8488 = vmatpush2.bf16.msra.mxu0 %v6077
        %8489 = vmatprep.subr.bf16.mxu0 %v6070
        %8490 = vmatpush2.bf16.msra.mxu0 %v6069
        %8491 = vmatprep.subr.bf16.mxu0 %v6062
        %8492 = vmatpush2.bf16.msra.mxu0 %v6061
        %8493 = vmatprep.subr.bf16.mxu0 %v6054
        %8494 = vmatpush2.bf16.msra.mxu0 %v6053
        %8495 = vmatprep.subr.bf16.mxu0 %v6046
        %8496 = vmatpush2.bf16.msra.mxu0 %v6045
        %8497 = vmatprep.subr.bf16.mxu0 %v6038
        %8498 = vmatpush2.bf16.msra.mxu0 %v6037
        %8499 = vmatprep.subr.bf16.mxu0 %v6030
        %8500 = vmatpush2.bf16.msra.mxu0 %v6029
        %8501 = vmatprep.mubr.bf16.mxu0 %v1050
        %8502 = vmatmul.mubr.bf16.gmra.mxu0 %v1049
        %v8503 = vpop.f32.mrf.mxu0
        %v8504 = vadd.f32 %v8463, %v8503
        %v8505 = vpop.f32.mrf.mxu0
        %v8506 = vadd.f32 %v8465, %v8505
        %v8507 = vpop.f32.mrf.mxu0
        %v8508 = vpop.f32.mrf.mxu0
        %8509 = vdwg.mxu0
        %8510 = vmatprep.subr.bf16.mxu0 %v6150
        %8511 = vmatpush1.bf16.msra.mxu0 %v6149
        %8512 = vmatprep.subr.bf16.mxu0 %v6142
        %8513 = vmatpush1.bf16.msra.mxu0 %v6141
        %8514 = vmatprep.subr.bf16.mxu0 %v6134
        %8515 = vmatpush1.bf16.msra.mxu0 %v6133
        %8516 = vmatprep.subr.bf16.mxu0 %v6126
        %8517 = vmatpush1.bf16.msra.mxu0 %v6125
        %8518 = vmatprep.subr.bf16.mxu0 %v6118
        %8519 = vmatpush1.bf16.msra.mxu0 %v6117
        %8520 = vmatprep.subr.bf16.mxu0 %v6110
        %8521 = vmatpush1.bf16.msra.mxu0 %v6109
        %8522 = vmatprep.subr.bf16.mxu0 %v6102
        %8523 = vmatpush1.bf16.msra.mxu0 %v6101
        %8524 = vmatprep.subr.bf16.mxu0 %v6094
        %8525 = vmatpush1.bf16.msra.mxu0 %v6093
        %8526 = vmatprep.subr.bf16.mxu0 %v6214
        %8527 = vmatpush2.bf16.msra.mxu0 %v6213
        %8528 = vmatprep.subr.bf16.mxu0 %v6206
        %8529 = vmatpush2.bf16.msra.mxu0 %v6205
        %8530 = vmatprep.subr.bf16.mxu0 %v6198
        %8531 = vmatpush2.bf16.msra.mxu0 %v6197
        %8532 = vmatprep.subr.bf16.mxu0 %v6190
        %8533 = vmatpush2.bf16.msra.mxu0 %v6189
        %8534 = vmatprep.subr.bf16.mxu0 %v6182
        %8535 = vmatpush2.bf16.msra.mxu0 %v6181
        %8536 = vmatprep.subr.bf16.mxu0 %v6174
        %8537 = vmatpush2.bf16.msra.mxu0 %v6173
        %8538 = vmatprep.subr.bf16.mxu0 %v6166
        %8539 = vmatpush2.bf16.msra.mxu0 %v6165
        %8540 = vmatprep.subr.bf16.mxu0 %v6158
        %8541 = vmatpush2.bf16.msra.mxu0 %v6157
        %8542 = vmatprep.mubr.bf16.mxu0 %v1052
        %8543 = vmatmul.mubr.bf16.gmra.mxu0 %v1051
        %v8544 = vpop.f32.mrf.mxu0
        %v8545 = vadd.f32 %v8504, %v8544
        %v8546 = vpop.f32.mrf.mxu0
        %v8547 = vadd.f32 %v8506, %v8546
        %v8548 = vpop.f32.mrf.mxu0
        %v8549 = vpop.f32.mrf.mxu0
        %8550 = vdwg.mxu0
        %v8551 = vmax.f32 %v7561, 0.0
        %v8552 = vmax.f32 %v7563, 0.0
        %v8553 = vmax.f32 %v7889, 0.0
        %v8554 = vmax.f32 %v7891, 0.0
        %v8555 = vmax.f32 %v8217, 0.0
        %v8556 = vmax.f32 %v8219, 0.0
        %v8557 = vmax.f32 %v8545, 0.0
        %v8558 = vmax.f32 %v8547, 0.0
        %v8559 = vld [vmem:[#allocation2] sm:$0xff]
        %v8560 = vpack.c.bf16 %v8551, %v8551
        %v8561 = vpack.c.bf16 %v8552, %v8552
        %v8562 = vpack.c.bf16 %v8553, %v8553
        %v8563 = vpack.c.bf16 %v8554, %v8554
        %v8564 = vpack.c.bf16 %v8555, %v8555
        %v8565 = vpack.c.bf16 %v8556, %v8556
        %v8566 = vpack.c.bf16 %v8557, %v8557
        %v8567 = vpack.c.bf16 %v8558, %v8558
        %v8568 = vld [vmem:[%s444] sm:$0xff]
        %v8569 = vld [vmem:[%s444 + $0x8] sm:$0xff]
        %v8570 = vld [vmem:[%s444 + $0x10] sm:$0xff]
        %v8571 = vld [vmem:[%s444 + $0x18] sm:$0xff]
        %v8576 = vunpack.c.l.b16 %v8568
        %v8577 = vunpack.c.h.b16 %v8568
        %v8578 = vunpack.c.l.b16 %v8569
        %v8579 = vunpack.c.h.b16 %v8569
        %v8580 = vunpack.c.l.b16 %v8570
        %v8581 = vunpack.c.h.b16 %v8570
        %v8582 = vunpack.c.l.b16 %v8571
        %v8583 = vunpack.c.h.b16 %v8571
        %v8584 = vpack.c.b16 %v8576, %v8576
        %v8585 = vpack.c.b16 %v8577, %v8577
        %v8586 = vpack.c.b16 %v8578, %v8578
        %v8587 = vpack.c.b16 %v8579, %v8579
        %v8588 = vpack.c.b16 %v8580, %v8580
        %v8589 = vpack.c.b16 %v8581, %v8581
        %v8590 = vpack.c.b16 %v8582, %v8582
        %v8591 = vpack.c.b16 %v8583, %v8583
        %8600 = vmatprep.subr.bf16.mxu0 0
        %8601 = vmatpush1.bf16.xpose.msra.mxu0 0
        %8602 = vmatprep.subr.bf16.mxu0 0
        %8603 = vmatpush1.bf16.xpose.msra.mxu0 0
        %8604 = vmatprep.subr.bf16.mxu0 0
        %8605 = vmatpush1.bf16.xpose.msra.mxu0 0
        %8606 = vmatprep.subr.bf16.mxu0 0
        %8607 = vmatpush1.bf16.xpose.msra.mxu0 0
        %8608 = vmatprep.subr.bf16.mxu0 0
        %8609 = vmatpush1.bf16.xpose.msra.mxu0 0
        %8610 = vmatprep.subr.bf16.mxu0 0
        %8611 = vmatpush1.bf16.xpose.msra.mxu0 0
        %8612 = vmatprep.subr.bf16.mxu0 0
        %8613 = vmatpush1.bf16.xpose.msra.mxu0 0
        %8614 = vmatprep.subr.bf16.mxu0 %v8585
        %8615 = vmatpush1.bf16.xpose.msra.mxu0 %v8584
        %8616 = vmatprep.subr.bf16.mxu0 0
        %8617 = vmatpush2.bf16.xpose.msra.mxu0 0
        %8618 = vmatprep.subr.bf16.mxu0 0
        %8619 = vmatpush2.bf16.xpose.msra.mxu0 0
        %8620 = vmatprep.subr.bf16.mxu0 0
        %8621 = vmatpush2.bf16.xpose.msra.mxu0 0
        %8622 = vmatprep.subr.bf16.mxu0 0
        %8623 = vmatpush2.bf16.xpose.msra.mxu0 0
        %8624 = vmatprep.subr.bf16.mxu0 0
        %8625 = vmatpush2.bf16.xpose.msra.mxu0 0
        %8626 = vmatprep.subr.bf16.mxu0 0
        %8627 = vmatpush2.bf16.xpose.msra.mxu0 0
        %8628 = vmatprep.subr.bf16.mxu0 0
        %8629 = vmatpush2.bf16.xpose.msra.mxu0 0
        %8630 = vmatprep.subr.bf16.mxu0 0
        %8631 = vmatpush2.bf16.xpose.msra.mxu0 0
        %8632 = vmatprep.mubr.bf16.mxu0 %v8561
        %8633 = vmatmul.mubr.bf16.gmra.mxu0 %v8560
        %v8634 = vpop.f32.mrf.mxu0
        %v8635 = vadd.f32 0.0, %v8634
        %v8636 = vpop.f32.mrf.mxu0
        %v8637 = vpop.f32.mrf.mxu0
        %v8638 = vpop.f32.mrf.mxu0
        %8639 = vdwg.mxu0
        %8640 = vmatprep.subr.bf16.mxu0 0
        %8641 = vmatpush1.bf16.xpose.msra.mxu0 0
        %8642 = vmatprep.subr.bf16.mxu0 0
        %8643 = vmatpush1.bf16.xpose.msra.mxu0 0
        %8644 = vmatprep.subr.bf16.mxu0 0
        %8645 = vmatpush1.bf16.xpose.msra.mxu0 0
        %8646 = vmatprep.subr.bf16.mxu0 0
        %8647 = vmatpush1.bf16.xpose.msra.mxu0 0
        %8648 = vmatprep.subr.bf16.mxu0 0
        %8649 = vmatpush1.bf16.xpose.msra.mxu0 0
        %8650 = vmatprep.subr.bf16.mxu0 0
        %8651 = vmatpush1.bf16.xpose.msra.mxu0 0
        %8652 = vmatprep.subr.bf16.mxu0 0
        %8653 = vmatpush1.bf16.xpose.msra.mxu0 0
        %8654 = vmatprep.subr.bf16.mxu0 %v8587
        %8655 = vmatpush1.bf16.xpose.msra.mxu0 %v8586
        %8656 = vmatprep.subr.bf16.mxu0 0
        %8657 = vmatpush2.bf16.xpose.msra.mxu0 0
        %8658 = vmatprep.subr.bf16.mxu0 0
        %8659 = vmatpush2.bf16.xpose.msra.mxu0 0
        %8660 = vmatprep.subr.bf16.mxu0 0
        %8661 = vmatpush2.bf16.xpose.msra.mxu0 0
        %8662 = vmatprep.subr.bf16.mxu0 0
        %8663 = vmatpush2.bf16.xpose.msra.mxu0 0
        %8664 = vmatprep.subr.bf16.mxu0 0
        %8665 = vmatpush2.bf16.xpose.msra.mxu0 0
        %8666 = vmatprep.subr.bf16.mxu0 0
        %8667 = vmatpush2.bf16.xpose.msra.mxu0 0
        %8668 = vmatprep.subr.bf16.mxu0 0
        %8669 = vmatpush2.bf16.xpose.msra.mxu0 0
        %8670 = vmatprep.subr.bf16.mxu0 0
        %8671 = vmatpush2.bf16.xpose.msra.mxu0 0
        %8672 = vmatprep.mubr.bf16.mxu0 %v8563
        %8673 = vmatmul.mubr.bf16.gmra.mxu0 %v8562
        %v8674 = vpop.f32.mrf.mxu0
        %v8675 = vadd.f32 %v8635, %v8674
        %v8676 = vpop.f32.mrf.mxu0
        %v8677 = vpop.f32.mrf.mxu0
        %v8678 = vpop.f32.mrf.mxu0
        %8679 = vdwg.mxu0
        %8680 = vmatprep.subr.bf16.mxu0 0
        %8681 = vmatpush1.bf16.xpose.msra.mxu0 0
        %8682 = vmatprep.subr.bf16.mxu0 0
        %8683 = vmatpush1.bf16.xpose.msra.mxu0 0
        %8684 = vmatprep.subr.bf16.mxu0 0
        %8685 = vmatpush1.bf16.xpose.msra.mxu0 0
        %8686 = vmatprep.subr.bf16.mxu0 0
        %8687 = vmatpush1.bf16.xpose.msra.mxu0 0
        %8688 = vmatprep.subr.bf16.mxu0 0
        %8689 = vmatpush1.bf16.xpose.msra.mxu0 0
        %8690 = vmatprep.subr.bf16.mxu0 0
        %8691 = vmatpush1.bf16.xpose.msra.mxu0 0
        %8692 = vmatprep.subr.bf16.mxu0 0
        %8693 = vmatpush1.bf16.xpose.msra.mxu0 0
        %8694 = vmatprep.subr.bf16.mxu0 %v8589
        %8695 = vmatpush1.bf16.xpose.msra.mxu0 %v8588
        %8696 = vmatprep.subr.bf16.mxu0 0
        %8697 = vmatpush2.bf16.xpose.msra.mxu0 0
        %8698 = vmatprep.subr.bf16.mxu0 0
        %8699 = vmatpush2.bf16.xpose.msra.mxu0 0
        %8700 = vmatprep.subr.bf16.mxu0 0
        %8701 = vmatpush2.bf16.xpose.msra.mxu0 0
        %8702 = vmatprep.subr.bf16.mxu0 0
        %8703 = vmatpush2.bf16.xpose.msra.mxu0 0
        %8704 = vmatprep.subr.bf16.mxu0 0
        %8705 = vmatpush2.bf16.xpose.msra.mxu0 0
        %8706 = vmatprep.subr.bf16.mxu0 0
        %8707 = vmatpush2.bf16.xpose.msra.mxu0 0
        %8708 = vmatprep.subr.bf16.mxu0 0
        %8709 = vmatpush2.bf16.xpose.msra.mxu0 0
        %8710 = vmatprep.subr.bf16.mxu0 0
        %8711 = vmatpush2.bf16.xpose.msra.mxu0 0
        %8712 = vmatprep.mubr.bf16.mxu0 %v8565
        %8713 = vmatmul.mubr.bf16.gmra.mxu0 %v8564
        %v8714 = vpop.f32.mrf.mxu0
        %v8715 = vadd.f32 %v8675, %v8714
        %v8716 = vpop.f32.mrf.mxu0
        %v8717 = vpop.f32.mrf.mxu0
        %v8718 = vpop.f32.mrf.mxu0
        %8719 = vdwg.mxu0
        %8720 = vmatprep.subr.bf16.mxu0 0
        %8721 = vmatpush1.bf16.xpose.msra.mxu0 0
        %8722 = vmatprep.subr.bf16.mxu0 0
        %8723 = vmatpush1.bf16.xpose.msra.mxu0 0
        %8724 = vmatprep.subr.bf16.mxu0 0
        %8725 = vmatpush1.bf16.xpose.msra.mxu0 0
        %8726 = vmatprep.subr.bf16.mxu0 0
        %8727 = vmatpush1.bf16.xpose.msra.mxu0 0
        %8728 = vmatprep.subr.bf16.mxu0 0
        %8729 = vmatpush1.bf16.xpose.msra.mxu0 0
        %8730 = vmatprep.subr.bf16.mxu0 0
        %8731 = vmatpush1.bf16.xpose.msra.mxu0 0
        %8732 = vmatprep.subr.bf16.mxu0 0
        %8733 = vmatpush1.bf16.xpose.msra.mxu0 0
        %8734 = vmatprep.subr.bf16.mxu0 %v8591
        %8735 = vmatpush1.bf16.xpose.msra.mxu0 %v8590
        %8736 = vmatprep.subr.bf16.mxu0 0
        %8737 = vmatpush2.bf16.xpose.msra.mxu0 0
        %8738 = vmatprep.subr.bf16.mxu0 0
        %8739 = vmatpush2.bf16.xpose.msra.mxu0 0
        %8740 = vmatprep.subr.bf16.mxu0 0
        %8741 = vmatpush2.bf16.xpose.msra.mxu0 0
        %8742 = vmatprep.subr.bf16.mxu0 0
        %8743 = vmatpush2.bf16.xpose.msra.mxu0 0
        %8744 = vmatprep.subr.bf16.mxu0 0
        %8745 = vmatpush2.bf16.xpose.msra.mxu0 0
        %8746 = vmatprep.subr.bf16.mxu0 0
        %8747 = vmatpush2.bf16.xpose.msra.mxu0 0
        %8748 = vmatprep.subr.bf16.mxu0 0
        %8749 = vmatpush2.bf16.xpose.msra.mxu0 0
        %8750 = vmatprep.subr.bf16.mxu0 0
        %8751 = vmatpush2.bf16.xpose.msra.mxu0 0
        %8752 = vmatprep.mubr.bf16.mxu0 %v8567
        %8753 = vmatmul.mubr.bf16.gmra.mxu0 %v8566
        %v8754 = vpop.f32.mrf.mxu0
        %v8755 = vadd.f32 %v8715, %v8754
        %v8756 = vpop.f32.mrf.mxu0
        %v8757 = vpop.f32.mrf.mxu0
        %v8758 = vpop.f32.mrf.mxu0
        %8759 = vdwg.mxu0
        %v8760 = vadd.f32 %v8559, %v8755
        %vm8761 = vcmask 64512
        %8762 = vst.msk [vmem:[#allocation2] sm:$0xff] %vm8761, %v8760
        %p8763 = scmp.eq.s32.totalorder %s25, 1
        // Predicated region
        $region97: #{dqn_experts_forward.1} parent=59 // pred_check
          %p8764 = pneg %p8763
        $region98: #{dqn_experts_forward.1} parent=59 // pred_check_branch
          %8766 = sbr.rel (%p8764) target = $region100
        $region99: #{dqn_experts_forward.1} parent=59 // pred_region
          %v8767 = vld [vmem:[#allocation2] sm:$0xff]
          %v8768 = vld [vmem:[#allocation11] sm:$0x1]
          %v8770 = vlaneseq
          %v8771 = vshrl.u32 %v8770, 7
          %v8772 = vsub.s32 0, %v8771
          %v8773 = vrot.slane %v8768, %v8772
          %v8775 = vadd.f32 %v8767, %v8773
          %v8776 = vld [vmem:[#allocation12] sm:$0x3]
          %v8777 = vld [vmem:[%s8] sm:$0xff]
          %v8778 = vld [vmem:[%s8 + $0x8] sm:$0xff]
          %v8779 = vld [vmem:[%s8 + $0x10] sm:$0xff]
          %v8780 = vld [vmem:[%s8 + $0x18] sm:$0xff]
          %v8781 = vld [vmem:[%s8 + $0x20] sm:$0xff]
          %v8782 = vld [vmem:[%s8 + $0x28] sm:$0xff]
          %v8783 = vld [vmem:[%s8 + $0x30] sm:$0xff]
          %v8784 = vld [vmem:[%s8 + $0x38] sm:$0xff]
          %v8785 = vld [vmem:[#allocation14] sm:$0x1]
          %v8787 = vlaneseq
          %v8788 = vshrl.u32 %v8787, 7
          %v8789 = vsub.s32 0, %v8788
          %v8790 = vrot.slane %v8785, %v8789
          %vm8792 = vcmask 523264
          %v8794 = vsel %vm8792, %v8776, 0
          %8796 = vmatprep.subr.mxu0 0.0
          %8797 = vmatpush1.msra.mxu0 0.0
          %8798 = vmatprep.subr.mxu0 0.0
          %8799 = vmatpush1.msra.mxu0 0.0
          %8800 = vmatprep.subr.mxu0 0.0
          %8801 = vmatpush1.msra.mxu0 0.0
          %8802 = vmatprep.subr.mxu0 0.0
          %8803 = vmatpush1.msra.mxu0 0.0
          %8804 = vmatprep.subr.mxu0 0.0
          %8805 = vmatpush1.msra.mxu0 0.0
          %8806 = vmatprep.subr.mxu0 0.0
          %8807 = vmatpush1.msra.mxu0 0.0
          %8808 = vmatprep.subr.mxu0 0.0
          %8809 = vmatpush1.msra.mxu0 0.0
          %8810 = vmatprep.subr.mxu0 0.0
          %8811 = vmatpush1.msra.mxu0 0.0
          %8812 = vmatprep.subr.mxu0 0.0
          %8813 = vmatpush1.msra.mxu0 %v8784
          %8814 = vmatprep.subr.mxu0 0.0
          %8815 = vmatpush1.msra.mxu0 %v8783
          %8816 = vmatprep.subr.mxu0 0.0
          %8817 = vmatpush1.msra.mxu0 %v8782
          %8818 = vmatprep.subr.mxu0 0.0
          %8819 = vmatpush1.msra.mxu0 %v8781
          %8820 = vmatprep.subr.mxu0 0.0
          %8821 = vmatpush1.msra.mxu0 %v8780
          %8822 = vmatprep.subr.mxu0 0.0
          %8823 = vmatpush1.msra.mxu0 %v8779
          %8824 = vmatprep.subr.mxu0 0.0
          %8825 = vmatpush1.msra.mxu0 %v8778
          %8826 = vmatprep.subr.mxu0 0.0
          %8827 = vmatpush1.msra.mxu0 %v8777
          %8828 = vmatprep.subr.mxu0 0.0
          %8829 = vmatpush2.msra.mxu0 0.0
          %8830 = vmatprep.subr.mxu0 0.0
          %8831 = vmatpush2.msra.mxu0 0.0
          %8832 = vmatprep.subr.mxu0 0.0
          %8833 = vmatpush2.msra.mxu0 0.0
          %8834 = vmatprep.subr.mxu0 0.0
          %8835 = vmatpush2.msra.mxu0 0.0
          %8836 = vmatprep.subr.mxu0 0.0
          %8837 = vmatpush2.msra.mxu0 0.0
          %8838 = vmatprep.subr.mxu0 0.0
          %8839 = vmatpush2.msra.mxu0 0.0
          %8840 = vmatprep.subr.mxu0 0.0
          %8841 = vmatpush2.msra.mxu0 0.0
          %8842 = vmatprep.subr.mxu0 0.0
          %8843 = vmatpush2.msra.mxu0 0.0
          %8844 = vmatprep.subr.mxu0 0.0
          %8845 = vmatpush2.msra.mxu0 0.0
          %8846 = vmatprep.subr.mxu0 0.0
          %8847 = vmatpush2.msra.mxu0 0.0
          %8848 = vmatprep.subr.mxu0 0.0
          %8849 = vmatpush2.msra.mxu0 0.0
          %8850 = vmatprep.subr.mxu0 0.0
          %8851 = vmatpush2.msra.mxu0 0.0
          %8852 = vmatprep.subr.mxu0 0.0
          %8853 = vmatpush2.msra.mxu0 0.0
          %8854 = vmatprep.subr.mxu0 0.0
          %8855 = vmatpush2.msra.mxu0 0.0
          %8856 = vmatprep.subr.mxu0 0.0
          %8857 = vmatpush2.msra.mxu0 0.0
          %8858 = vmatprep.subr.mxu0 0.0
          %8859 = vmatpush2.msra.mxu0 0.0
          %8860 = vmatprep.mubr.f32.mxu0 0.0
          %8861 = vmatmul.mubr.f32.gmra.mxu0 %v8794
          %v8862 = vpop.f32.mrf.mxu0
          %v8863 = vadd.f32 %v8790, %v8862
          %v8864 = vpop.f32.mrf.mxu0
          %8865 = vdwg.mxu0
          %vm8866 = vcmask 25600
          %v8867 = vsel %vm8866, %v8863, -inf
          %8868 = vmax.xlane.f32.xlu0 %v8867
          %v8869 = vpop.xlane.xlu0 %8868
          %v8870 = vsub.f32 %v8863, %v8869
          %v8871 = vmul.f32 %v8870, 1.442695
          %v8872 = vpow.pop %v8871
          %v8873 = vsel %vm8866, %v8872, 0.0
          %8874 = vadd.xlane.f32.xlu0 %v8873
          %v8875 = vpop.xlane.xlu0 %8874
          %v8876 = vrcp.pop %v8875
          %v8877 = vmul.f32 %v8872, %v8876
          %v8879 = vcombine.high %v8775, %v8775
          %8882 = vset.pattern.permute.xlu0 0
          %8883 = vperm.xlu0 %8882, %v8877
          %v8884 = vpop.permute.xlu0 %8883
          %v8886 = vunpack.c.l.s4 839922192
          %v8887 = vunpack.c.0.s8 %v8886
          %v8888 = vlaneseq
          %v8889 = vshrl.u32 %v8888, 7
          %v8890 = vsub.s32 %v8887, %v8889
          %v8891 = vrot.slane %v8884, %v8890
          %v8892 = vrot.slane %v8891, 1
          %v8895 = vmul.f32 %v8775, %v8891
          %v8896 = vmul.f32 %v8879, %v8892
          %v8897 = vadd.f32 %v8895, 0.0
          %v8898 = vadd.f32 %v8896, 0.0
          %8899 = vset.pattern.permute.xlu0 1
          %8900 = vperm.xlu0 %8899, %v8877
          %v8901 = vpop.permute.xlu0 %8900
          %v8903 = vunpack.c.l.s4 839922192
          %v8904 = vunpack.c.0.s8 %v8903
          %v8905 = vlaneseq
          %v8906 = vshrl.u32 %v8905, 7
          %v8907 = vsub.s32 %v8904, %v8906
          %v8908 = vrot.slane %v8901, %v8907
          %v8909 = vrot.slane %v8908, 7
          %v8912 = vmul.f32 %v8775, %v8909
          %v8913 = vmul.f32 %v8879, %v8908
          %v8916 = vrot.slane %v8912, 5
          %v8917 = vrot.slane %v8916, 4
          %v8918 = vrot.slane %v8913, 5
          %v8919 = vrot.slane %v8918, 4
          %v8922 = vadd.f32 %v8897, %v8917
          %v8923 = vadd.f32 %v8898, %v8919
          %8924 = vset.pattern.permute.xlu0 2
          %8925 = vperm.xlu0 %8924, %v8877
          %v8926 = vpop.permute.xlu0 %8925
          %v8928 = vunpack.c.l.s4 839922192
          %v8929 = vunpack.c.0.s8 %v8928
          %v8930 = vlaneseq
          %v8931 = vshrl.u32 %v8930, 7
          %v8932 = vsub.s32 %v8929, %v8931
          %v8933 = vrot.slane %v8926, %v8932
          %v8934 = vrot.slane %v8933, 6
          %v8935 = vrot.slane %v8933, 7
          %v8938 = vmul.f32 %v8775, %v8934
          %v8939 = vmul.f32 %v8879, %v8935
          %v8942 = vrot.slane %v8938, 6
          %v8943 = vrot.slane %v8942, 4
          %v8944 = vrot.slane %v8939, 6
          %v8945 = vrot.slane %v8944, 4
          %v8948 = vadd.f32 %v8922, %v8943
          %v8949 = vadd.f32 %v8923, %v8945
          %8950 = vset.pattern.permute.xlu0 3
          %8951 = vperm.xlu0 %8950, %v8877
          %v8952 = vpop.permute.xlu0 %8951
          %v8954 = vunpack.c.l.s4 839922192
          %v8955 = vunpack.c.0.s8 %v8954
          %v8956 = vlaneseq
          %v8957 = vshrl.u32 %v8956, 7
          %v8958 = vsub.s32 %v8955, %v8957
          %v8959 = vrot.slane %v8952, %v8958
          %v8960 = vrot.slane %v8959, 5
          %v8961 = vrot.slane %v8959, 6
          %v8964 = vmul.f32 %v8775, %v8960
          %v8965 = vmul.f32 %v8879, %v8961
          %v8968 = vrot.slane %v8964, 7
          %v8969 = vrot.slane %v8968, 4
          %v8970 = vrot.slane %v8965, 7
          %v8971 = vrot.slane %v8970, 4
          %v8974 = vadd.f32 %v8948, %v8969
          %v8975 = vadd.f32 %v8949, %v8971
          %v8978 = vlaneseq
          %v8979 = vshrl.u32 %v8978, 7
          %v8980 = vsub.s32 0, %v8979
          %v8981 = vrot.slane %v8974, %v8980
          %v8982 = vlaneseq
          %v8983 = vshrl.u32 %v8982, 7
          %v8984 = vsub.s32 0, %v8983
          %v8985 = vrot.slane %v8975, %v8984
          %vm8986 = vcmask 1041409
          %v8987 = vsel %vm8986, %v8985, %v8981
          %vm8989 = vcmask 58368
          %8990 = vst.msk [vmem:[#allocation15] sm:$0x3] %vm8989, %v8987
        $region100: #{dqn_experts_forward.1} parent=59 // pred_fallthru
          _
        // Predicated region
        $region101: #{dqn_experts_forward.1} parent=59 // pred_check
          %p8991 = pneg %p263
        $region102: #{dqn_experts_forward.1} parent=59 // pred_check_branch
          %8993 = sbr.rel (%p8991) target = $region104
        $region103: #{dqn_experts_forward.1} parent=59 // pred_region
          %s8995 = ssub.s32 32, 32
          %8996 = vsyncadd [#allocation5], %s8995
          %s8998 = sshll.u32 [#allocation15], 4
          %s8999 = int_to_ptr.vmem [resolvable:$true] %s8998
          %9001 = dma.vmem_to_hbm [thread:$0]  %s8999, 32, %s10, [#allocation5]
        $region104: #{dqn_experts_forward.1} parent=59 // pred_fallthru
          _
        // Predicated region
        $region105: #{dqn_experts_forward.1} parent=59 // pred_check
          %p9002 = pneg %p263
        $region106: #{dqn_experts_forward.1} parent=59 // pred_check_branch
          %9004 = sbr.rel (%p9002) target = $region108
        $region107: #{dqn_experts_forward.1} parent=59 // pred_region
          %9005 = dma.done [#allocation5], 32
        $region108: #{dqn_experts_forward.1} parent=59 // pred_fallthru
          _
      $region60: #{dqn_experts_forward.1} parent=5 // pred_fallthru
        _
      %p9006 = scmp.le.s32.totalorder 2, %s20
      // Predicated region
      $region109: #{dqn_experts_forward.1} parent=5 // pred_check
        %p9007 = pneg %p9006
      $region110: #{dqn_experts_forward.1} parent=5 // pred_check_branch
        %9009 = sbr.rel (%p9007) target = $region112
      $region111: #{dqn_experts_forward.1} parent=5 // pred_region
        %s9010 = ssub.s32 %s20, 2
      $region112: #{dqn_experts_forward.1} parent=5 // pred_fallthru
        _
    $region6: #{dqn_experts_forward.1} parent=1 // loop_footer
      %s24 = sadd.s32 1, %s20
    $region7: #{dqn_experts_forward.1} parent=1 // loop_footer_branch
      %19 = sbr.rel target = $region3
    $region8: #{dqn_experts_forward.1} parent=1 // loop_exit
      _
    %9011 = vsyncpa [#allocation4], 1
    %s9012 = scalar_lea.sflag [#allocation4], 1
    %9013 = vsyncpa %s9012, 1
    %9014 = vsyncpa [#allocation7], 1
    %9015 = vsyncpa [#allocation13], 1
    %9016 = vsyncpa [#allocation5], 1
    %s9017 = scalar_lea.sflag [#allocation5], 1
    %9018 = vsyncpa %s9017, 1

</llo_original>
